<compile_context>
chip_gen: v6e
topology: v6e:2x2x1
jax: 0.10.0
libtpu: 0.0.40
codegen_flags: <defaults>
</compile_context>

<pallas_src>
import math

import jax
import jax.numpy as jnp
from jax.experimental import pallas as pl
from jax.experimental.pallas import tpu as pltpu


def _video_encoder_kernel(
    app_ref, mot_ref,                       # (T, B, 2H) bf16 each
    w1a_ref, u1a_ref, b1a_ref,              # appearance layer 1
    w2a_ref, u2a_ref, b2a_ref,              # appearance layer 2
    w1m_ref, u1m_ref, b1m_ref,              # motion layer 1
    w2m_ref, u2m_ref, b2m_ref,              # motion layer 2
    out_a_ref, out_m_ref):                  # (T, B, H) f32 each
  """Single invocation: full batch, both streams, all T recurrence steps.

  Weights are loaded into VMEM once and reused by every step (the dominant
  per-call cost of this op is that one weight DMA + launch overhead).
  """
  T, B, _ = app_ref.shape
  H = out_a_ref.shape[-1]

  def lstm_cell(x_bf16, h, c, w_ref, u_ref, b_ref):
    # Two native bf16 MXU dots, f32 accumulation (PyTorch LSTMCell math,
    # gate order i, f, g, o; b = b_ih + b_hh pre-fused in the wrapper).
    gates = (jnp.dot(x_bf16, w_ref[...], preferred_element_type=jnp.float32)
             + jnp.dot(h.astype(jnp.bfloat16), u_ref[...],
                       preferred_element_type=jnp.float32)
             + b_ref[...])                                  # (B, 4H) f32
    i = jax.nn.sigmoid(gates[:, 0 * H:1 * H])
    f = jax.nn.sigmoid(gates[:, 1 * H:2 * H])
    g = jnp.tanh(gates[:, 2 * H:3 * H])
    o = jax.nn.sigmoid(gates[:, 3 * H:4 * H])
    c_new = f * c + i * g
    h_new = o * jnp.tanh(c_new)
    return h_new, c_new

  zeros = jnp.zeros((B, H), jnp.float32)        # init_hiddens(): all zeros
  h1a = c1a = h2a = c2a = zeros
  h1m = c1m = h2m = c2m = zeros

  # T is small and static -> unrolled python loop (full LLO scheduling
  # visibility; state carried in vregs, no scratch needed at this size).
  for t in range(T):
    # appearance stream: stacked LSTMCells 1a -> 2a
    h1a, c1a = lstm_cell(app_ref[t], h1a, c1a, w1a_ref, u1a_ref, b1a_ref)
    h2a, c2a = lstm_cell(h1a.astype(jnp.bfloat16), h2a, c2a,
                         w2a_ref, u2a_ref, b2a_ref)
    out_a_ref[t] = h2a.astype(out_a_ref.dtype)

    # motion stream: stacked LSTMCells 1m -> 2m
    h1m, c1m = lstm_cell(mot_ref[t], h1m, c1m, w1m_ref, u1m_ref, b1m_ref)
    h2m, c2m = lstm_cell(h1m.astype(jnp.bfloat16), h2m, c2m,
                         w2m_ref, u2m_ref, b2m_ref)
    out_m_ref[t] = h2m.astype(out_m_ref.dtype)


@jax.jit
def video_encoder_memory(apperances, motions, packed):
  """Batched VideoEncoderMemory forward up to (and excluding) mrm_vid.

  apperances, motions: (B, T, 2H) f32.  Returns (sV_l2a, sV_l2m), each
  (B, T, H) f32 -- the stacked layer-2 hidden states of the two streams.
  """
  B, T, D = apperances.shape
  H = packed["b1a"].shape[-1] // 4

  # Layout plumbing only (time-major for per-step slicing, bf16 MXU operands).
  app_t = jnp.transpose(apperances, (1, 0, 2)).astype(jnp.bfloat16)  # (T,B,2H)
  mot_t = jnp.transpose(motions, (1, 0, 2)).astype(jnp.bfloat16)

  vmem = pl.BlockSpec(memory_space=pltpu.MemorySpace.VMEM)

  # Advisory cost hint: DMA/latency bound, tiny FLOPs.
  matmul_flops = 2 * T * 2 * B * (5 * H) * (4 * H)        # 2 streams, K=5H tot
  transcendentals = 2 * T * 2 * B * (5 * H)               # 3 sigmoid + 2 tanh
  weight_bytes = 2 * ((2 * H + H) * 4 * H + (H + H) * 4 * H) * 2   # bf16
  bias_bytes = 4 * 4 * H * 4
  io_bytes = 2 * T * B * 2 * H * 2 + 2 * T * B * H * 4
  cost = pl.CostEstimate(flops=matmul_flops,
                         transcendentals=transcendentals,
                         bytes_accessed=weight_bytes + bias_bytes + io_bytes)

  # Grid-free: ~0.1 MB of live data.  For large B, switch to
  # grid=(cdiv(B, tb),) with dimension_semantics=("parallel",) and
  # constant-indexed weight BlockSpecs (weights stay resident) so v7x's two
  # TensorCores split the batch; size tb for 64 MiB (v7x) vs 128 MiB VMEM.
  out_a, out_m = pl.pallas_call(
      _video_encoder_kernel,
      in_specs=[vmem] * 14,
      out_specs=(vmem, vmem),
      out_shape=(jax.ShapeDtypeStruct((T, B, H), jnp.float32),
                 jax.ShapeDtypeStruct((T, B, H), jnp.float32)),
      cost_estimate=cost,
  )(
      app_t, mot_t,
      packed["w1a"], packed["u1a"], packed["b1a"],
      packed["w2a"], packed["u2a"], packed["b2a"],
      packed["w1m"], packed["u1m"], packed["b1m"],
      packed["w2m"], packed["u2m"], packed["b2m"],
  )

  sV_l2a = jnp.transpose(out_a, (1, 0, 2))   # (B, T, H)
  sV_l2m = jnp.transpose(out_m, (1, 0, 2))
  # TODO(synk): memory_ram_vid = mrm_vid(sV_l2a[b], sV_l2m[b], T) per batch --
  # MemoryRamTwoStreamModule source not provided, so not implemented here.
  return sV_l2a, sV_l2m


def init_params(key, hidden):
  """PyTorch nn.LSTMCell default init: U(-1/sqrt(H), 1/sqrt(H)) everywhere.

  Raw (PyTorch-layout) params for the four cells: lstm_video_{1a,2a,1m,2m}.
  """
  stdv = 1.0 / math.sqrt(hidden)
  ins = {"1a": 2 * hidden, "2a": hidden, "1m": 2 * hidden, "2m": hidden}
  ks = jax.random.split(key, 16)
  p, idx = {}, 0
  for n in ("1a", "2a", "1m", "2m"):
    p[f"w_ih_{n}"] = jax.random.uniform(
        ks[idx], (4 * hidden, ins[n]), jnp.float32, -stdv, stdv); idx += 1
    p[f"w_hh_{n}"] = jax.random.uniform(
        ks[idx], (4 * hidden, hidden), jnp.float32, -stdv, stdv); idx += 1
    p[f"b_ih_{n}"] = jax.random.uniform(
        ks[idx], (4 * hidden,), jnp.float32, -stdv, stdv); idx += 1
    p[f"b_hh_{n}"] = jax.random.uniform(
        ks[idx], (4 * hidden,), jnp.float32, -stdv, stdv); idx += 1
  return p


def pack_params(raw):
  """One-time weight repacking (outside the jitted per-call path).

  Weights transposed to (in, 4H) and stored bf16 (native MXU operands, half
  the HBM->VMEM DMA); biases fused (b_ih + b_hh) and kept f32.
  """
  packed = {}
  for n in ("1a", "2a", "1m", "2m"):
    packed[f"w{n}"] = jnp.asarray(raw[f"w_ih_{n}"].T, jnp.bfloat16)
    packed[f"u{n}"] = jnp.asarray(raw[f"w_hh_{n}"].T, jnp.bfloat16)
    packed[f"b{n}"] = (raw[f"b_ih_{n}"] + raw[f"b_hh_{n}"]
                       ).reshape(1, -1).astype(jnp.float32)
  return packed


def reference(apperances, motions, raw):
  """Pure-JAX f32 reference mirroring the PyTorch forward (up to mrm_vid)."""
  B, T, _ = apperances.shape
  H = raw["w_hh_1a"].shape[1]

  def cell(x, h, c, n):
    gates = (x @ raw[f"w_ih_{n}"].T + raw[f"b_ih_{n}"]
             + h @ raw[f"w_hh_{n}"].T + raw[f"b_hh_{n}"])
    i, f, g, o = jnp.split(gates, 4, axis=-1)
    c = jax.nn.sigmoid(f) * c + jax.nn.sigmoid(i) * jnp.tanh(g)
    h = jax.nn.sigmoid(o) * jnp.tanh(c)
    return h, c

  z = jnp.zeros((B, H), jnp.float32)
  h1a = c1a = h2a = c2a = z
  h1m = c1m = h2m = c2m = z
  outs_a, outs_m = [], []
  for t in range(T):
    h1a, c1a = cell(apperances[:, t], h1a, c1a, "1a")
    h2a, c2a = cell(h1a, h2a, c2a, "2a")
    outs_a.append(h2a)
    h1m, c1m = cell(motions[:, t], h1m, c1m, "1m")
    h2m, c2m = cell(h1m, h2m, c2m, "2m")
    outs_m.append(h2m)
  return jnp.stack(outs_a, axis=1), jnp.stack(outs_m, axis=1)


if __name__ == "__main__":
  B, T, H = 2, 8, 32          # batch_size, input_number, hidden_size

  key = jax.random.PRNGKey(0)
  kp, ka, km = jax.random.split(key, 3)
  raw = init_params(kp, H)
  packed = pack_params(raw)   # done once, not in the per-call jitted path

  apperances = jax.random.normal(ka, (B, T, 2 * H), jnp.float32)
  motions = jax.random.normal(km, (B, T, 2 * H), jnp.float32)

  sV_l2a, sV_l2m = video_encoder_memory(apperances, motions, packed)
  jax.block_until_ready((sV_l2a, sV_l2m))

  ref_a, ref_m = reference(apperances, motions, raw)
  assert sV_l2a.shape == (B, T, H)
  assert sV_l2m.shape == (B, T, H)
  # bf16 MXU operands (per perf review) -> documented 2e-2 tolerance vs the
  # pure-f32 reference; elementwise recurrence itself is f32 in the kernel.
  assert jnp.allclose(sV_l2a, ref_a, rtol=2e-2, atol=2e-2)
  assert jnp.allclose(sV_l2m, ref_m, rtol=2e-2, atol=2e-2)

  print("KERNEL_OK")
</pallas_src>

<mosaic_0001>
module attributes {stable_mosaic.version = 11 : i64} {
  func.func @_video_encoder_kernel(%arg0: memref<8x2x64xbf16, #tpu.memory_space<vmem>>, %arg1: memref<8x2x64xbf16, #tpu.memory_space<vmem>>, %arg2: memref<64x128xbf16, #tpu.memory_space<vmem>>, %arg3: memref<32x128xbf16, #tpu.memory_space<vmem>>, %arg4: memref<1x128xf32, #tpu.memory_space<vmem>>, %arg5: memref<32x128xbf16, #tpu.memory_space<vmem>>, %arg6: memref<32x128xbf16, #tpu.memory_space<vmem>>, %arg7: memref<1x128xf32, #tpu.memory_space<vmem>>, %arg8: memref<64x128xbf16, #tpu.memory_space<vmem>>, %arg9: memref<32x128xbf16, #tpu.memory_space<vmem>>, %arg10: memref<1x128xf32, #tpu.memory_space<vmem>>, %arg11: memref<32x128xbf16, #tpu.memory_space<vmem>>, %arg12: memref<32x128xbf16, #tpu.memory_space<vmem>>, %arg13: memref<1x128xf32, #tpu.memory_space<vmem>>, %arg14: memref<8x2x32xf32, #tpu.memory_space<vmem>>, %arg15: memref<8x2x32xf32, #tpu.memory_space<vmem>>) attributes {dimension_semantics = [], scalar_prefetch = 0 : i64, scratch_operands = 0 : i64, tpu.core_type = #tpu.core_type<tc>} {
    %cst = arith.constant 0.000000e+00 : f32
    %0 = vector.broadcast %cst : f32 to vector<2x32xf32>
    %c0 = arith.constant 0 : index
    %c0_0 = arith.constant 0 : index
    %c0_1 = arith.constant 0 : index
    %1 = vector.load %arg0[%c0, %c0_0, %c0_1] : memref<8x2x64xbf16, #tpu.memory_space<vmem>>, vector<1x2x64xbf16>
    %2 = vector.shape_cast %1 : vector<1x2x64xbf16> to vector<2x64xbf16>
    %c0_2 = arith.constant 0 : index
    %c0_3 = arith.constant 0 : index
    %3 = vector.load %arg2[%c0_2, %c0_3] : memref<64x128xbf16, #tpu.memory_space<vmem>>, vector<64x128xbf16>
    %cst_4 = arith.constant dense<0.000000e+00> : vector<2x128xf32>
    %4 = tpu.matmul %2, %3, %cst_4 {dimension_numbers = #tpu.dot_dimension_numbers<[1], [0], [0], [1], [0, 0, 1, 1], [], []>} : vector<2x64xbf16>, vector<64x128xbf16>, vector<2x128xf32> -> vector<2x128xf32>
    %5 = arith.truncf %0 : vector<2x32xf32> to vector<2x32xbf16>
    %c0_5 = arith.constant 0 : index
    %c0_6 = arith.constant 0 : index
    %6 = vector.load %arg3[%c0_5, %c0_6] : memref<32x128xbf16, #tpu.memory_space<vmem>>, vector<32x128xbf16>
    %cst_7 = arith.constant dense<0.000000e+00> : vector<2x128xf32>
    %7 = tpu.matmul %5, %6, %cst_7 {dimension_numbers = #tpu.dot_dimension_numbers<[1], [0], [0], [1], [0, 0, 1, 1], [], []>} : vector<2x32xbf16>, vector<32x128xbf16>, vector<2x128xf32> -> vector<2x128xf32>
    %8 = arith.addf %4, %7 : vector<2x128xf32>
    %c0_8 = arith.constant 0 : index
    %c0_9 = arith.constant 0 : index
    %9 = vector.load %arg4[%c0_8, %c0_9] : memref<1x128xf32, #tpu.memory_space<vmem>>, vector<1x128xf32>
    %10 = vector.broadcast %9 : vector<1x128xf32> to vector<2x128xf32>
    %11 = arith.addf %8, %10 : vector<2x128xf32>
    %12 = vector.extract_strided_slice %11 {offsets = [0, 0], sizes = [2, 32], strides = [1, 1]} : vector<2x128xf32> to vector<2x32xf32>
    %13 = arith.negf %12 : vector<2x32xf32>
    %14 = math.exp %13 : vector<2x32xf32>
    %cst_10 = arith.constant 1.000000e+00 : f32
    %15 = vector.broadcast %cst_10 : f32 to vector<2x32xf32>
    %16 = arith.addf %15, %14 : vector<2x32xf32>
    %17 = arith.divf %15, %16 : vector<2x32xf32>
    %18 = vector.extract_strided_slice %11 {offsets = [0, 32], sizes = [2, 32], strides = [1, 1]} : vector<2x128xf32> to vector<2x32xf32>
    %19 = arith.negf %18 : vector<2x32xf32>
    %20 = math.exp %19 : vector<2x32xf32>
    %cst_11 = arith.constant 1.000000e+00 : f32
    %21 = vector.broadcast %cst_11 : f32 to vector<2x32xf32>
    %22 = arith.addf %21, %20 : vector<2x32xf32>
    %23 = arith.divf %21, %22 : vector<2x32xf32>
    %24 = vector.extract_strided_slice %11 {offsets = [0, 64], sizes = [2, 32], strides = [1, 1]} : vector<2x128xf32> to vector<2x32xf32>
    %25 = math.tanh %24 : vector<2x32xf32>
    %26 = vector.extract_strided_slice %11 {offsets = [0, 96], sizes = [2, 32], strides = [1, 1]} : vector<2x128xf32> to vector<2x32xf32>
    %27 = arith.negf %26 : vector<2x32xf32>
    %28 = math.exp %27 : vector<2x32xf32>
    %cst_12 = arith.constant 1.000000e+00 : f32
    %29 = vector.broadcast %cst_12 : f32 to vector<2x32xf32>
    %30 = arith.addf %29, %28 : vector<2x32xf32>
    %31 = arith.divf %29, %30 : vector<2x32xf32>
    %32 = arith.mulf %23, %0 : vector<2x32xf32>
    %33 = arith.mulf %17, %25 : vector<2x32xf32>
    %34 = arith.addf %32, %33 : vector<2x32xf32>
    %35 = math.tanh %34 : vector<2x32xf32>
    %36 = arith.mulf %31, %35 : vector<2x32xf32>
    %37 = arith.truncf %36 : vector<2x32xf32> to vector<2x32xbf16>
    %c0_13 = arith.constant 0 : index
    %c0_14 = arith.constant 0 : index
    %38 = vector.load %arg5[%c0_13, %c0_14] : memref<32x128xbf16, #tpu.memory_space<vmem>>, vector<32x128xbf16>
    %cst_15 = arith.constant dense<0.000000e+00> : vector<2x128xf32>
    %39 = tpu.matmul %37, %38, %cst_15 {dimension_numbers = #tpu.dot_dimension_numbers<[1], [0], [0], [1], [0, 0, 1, 1], [], []>} : vector<2x32xbf16>, vector<32x128xbf16>, vector<2x128xf32> -> vector<2x128xf32>
    %40 = arith.truncf %0 : vector<2x32xf32> to vector<2x32xbf16>
    %c0_16 = arith.constant 0 : index
    %c0_17 = arith.constant 0 : index
    %41 = vector.load %arg6[%c0_16, %c0_17] : memref<32x128xbf16, #tpu.memory_space<vmem>>, vector<32x128xbf16>
    %cst_18 = arith.constant dense<0.000000e+00> : vector<2x128xf32>
    %42 = tpu.matmul %40, %41, %cst_18 {dimension_numbers = #tpu.dot_dimension_numbers<[1], [0], [0], [1], [0, 0, 1, 1], [], []>} : vector<2x32xbf16>, vector<32x128xbf16>, vector<2x128xf32> -> vector<2x128xf32>
    %43 = arith.addf %39, %42 : vector<2x128xf32>
    %c0_19 = arith.constant 0 : index
    %c0_20 = arith.constant 0 : index
    %44 = vector.load %arg7[%c0_19, %c0_20] : memref<1x128xf32, #tpu.memory_space<vmem>>, vector<1x128xf32>
    %45 = vector.broadcast %44 : vector<1x128xf32> to vector<2x128xf32>
    %46 = arith.addf %43, %45 : vector<2x128xf32>
    %47 = vector.extract_strided_slice %46 {offsets = [0, 0], sizes = [2, 32], strides = [1, 1]} : vector<2x128xf32> to vector<2x32xf32>
    %48 = arith.negf %47 : vector<2x32xf32>
    %49 = math.exp %48 : vector<2x32xf32>
    %cst_21 = arith.constant 1.000000e+00 : f32
    %50 = vector.broadcast %cst_21 : f32 to vector<2x32xf32>
    %51 = arith.addf %50, %49 : vector<2x32xf32>
    %52 = arith.divf %50, %51 : vector<2x32xf32>
    %53 = vector.extract_strided_slice %46 {offsets = [0, 32], sizes = [2, 32], strides = [1, 1]} : vector<2x128xf32> to vector<2x32xf32>
    %54 = arith.negf %53 : vector<2x32xf32>
    %55 = math.exp %54 : vector<2x32xf32>
    %cst_22 = arith.constant 1.000000e+00 : f32
    %56 = vector.broadcast %cst_22 : f32 to vector<2x32xf32>
    %57 = arith.addf %56, %55 : vector<2x32xf32>
    %58 = arith.divf %56, %57 : vector<2x32xf32>
    %59 = vector.extract_strided_slice %46 {offsets = [0, 64], sizes = [2, 32], strides = [1, 1]} : vector<2x128xf32> to vector<2x32xf32>
    %60 = math.tanh %59 : vector<2x32xf32>
    %61 = vector.extract_strided_slice %46 {offsets = [0, 96], sizes = [2, 32], strides = [1, 1]} : vector<2x128xf32> to vector<2x32xf32>
    %62 = arith.negf %61 : vector<2x32xf32>
    %63 = math.exp %62 : vector<2x32xf32>
    %cst_23 = arith.constant 1.000000e+00 : f32
    %64 = vector.broadcast %cst_23 : f32 to vector<2x32xf32>
    %65 = arith.addf %64, %63 : vector<2x32xf32>
    %66 = arith.divf %64, %65 : vector<2x32xf32>
    %67 = arith.mulf %58, %0 : vector<2x32xf32>
    %68 = arith.mulf %52, %60 : vector<2x32xf32>
    %69 = arith.addf %67, %68 : vector<2x32xf32>
    %70 = math.tanh %69 : vector<2x32xf32>
    %71 = arith.mulf %66, %70 : vector<2x32xf32>
    %c0_24 = arith.constant 0 : index
    %c0_25 = arith.constant 0 : index
    %c0_26 = arith.constant 0 : index
    %72 = vector.load %arg14[%c0_24, %c0_25, %c0_26] : memref<8x2x32xf32, #tpu.memory_space<vmem>>, vector<1x2x32xf32>
    %73 = vector.shape_cast %72 : vector<1x2x32xf32> to vector<2x32xf32>
    %74 = vector.shape_cast %71 : vector<2x32xf32> to vector<1x2x32xf32>
    tpu.vector_store %arg14[%c0_24, %c0_25, %c0_26], %74 {strides = array<i32>} : memref<8x2x32xf32, #tpu.memory_space<vmem>>, vector<1x2x32xf32>,
    %c0_27 = arith.constant 0 : index
    %c0_28 = arith.constant 0 : index
    %c0_29 = arith.constant 0 : index
    %75 = vector.load %arg1[%c0_27, %c0_28, %c0_29] : memref<8x2x64xbf16, #tpu.memory_space<vmem>>, vector<1x2x64xbf16>
    %76 = vector.shape_cast %75 : vector<1x2x64xbf16> to vector<2x64xbf16>
    %c0_30 = arith.constant 0 : index
    %c0_31 = arith.constant 0 : index
    %77 = vector.load %arg8[%c0_30, %c0_31] : memref<64x128xbf16, #tpu.memory_space<vmem>>, vector<64x128xbf16>
    %cst_32 = arith.constant dense<0.000000e+00> : vector<2x128xf32>
    %78 = tpu.matmul %76, %77, %cst_32 {dimension_numbers = #tpu.dot_dimension_numbers<[1], [0], [0], [1], [0, 0, 1, 1], [], []>} : vector<2x64xbf16>, vector<64x128xbf16>, vector<2x128xf32> -> vector<2x128xf32>
    %79 = arith.truncf %0 : vector<2x32xf32> to vector<2x32xbf16>
    %c0_33 = arith.constant 0 : index
    %c0_34 = arith.constant 0 : index
    %80 = vector.load %arg9[%c0_33, %c0_34] : memref<32x128xbf16, #tpu.memory_space<vmem>>, vector<32x128xbf16>
    %cst_35 = arith.constant dense<0.000000e+00> : vector<2x128xf32>
    %81 = tpu.matmul %79, %80, %cst_35 {dimension_numbers = #tpu.dot_dimension_numbers<[1], [0], [0], [1], [0, 0, 1, 1], [], []>} : vector<2x32xbf16>, vector<32x128xbf16>, vector<2x128xf32> -> vector<2x128xf32>
    %82 = arith.addf %78, %81 : vector<2x128xf32>
    %c0_36 = arith.constant 0 : index
    %c0_37 = arith.constant 0 : index
    %83 = vector.load %arg10[%c0_36, %c0_37] : memref<1x128xf32, #tpu.memory_space<vmem>>, vector<1x128xf32>
    %84 = vector.broadcast %83 : vector<1x128xf32> to vector<2x128xf32>
    %85 = arith.addf %82, %84 : vector<2x128xf32>
    %86 = vector.extract_strided_slice %85 {offsets = [0, 0], sizes = [2, 32], strides = [1, 1]} : vector<2x128xf32> to vector<2x32xf32>
    %87 = arith.negf %86 : vector<2x32xf32>
    %88 = math.exp %87 : vector<2x32xf32>
    %cst_38 = arith.constant 1.000000e+00 : f32
    %89 = vector.broadcast %cst_38 : f32 to vector<2x32xf32>
    %90 = arith.addf %89, %88 : vector<2x32xf32>
    %91 = arith.divf %89, %90 : vector<2x32xf32>
    %92 = vector.extract_strided_slice %85 {offsets = [0, 32], sizes = [2, 32], strides = [1, 1]} : vector<2x128xf32> to vector<2x32xf32>
    %93 = arith.negf %92 : vector<2x32xf32>
    %94 = math.exp %93 : vector<2x32xf32>
    %cst_39 = arith.constant 1.000000e+00 : f32
    %95 = vector.broadcast %cst_39 : f32 to vector<2x32xf32>
    %96 = arith.addf %95, %94 : vector<2x32xf32>
    %97 = arith.divf %95, %96 : vector<2x32xf32>
    %98 = vector.extract_strided_slice %85 {offsets = [0, 64], sizes = [2, 32], strides = [1, 1]} : vector<2x128xf32> to vector<2x32xf32>
    %99 = math.tanh %98 : vector<2x32xf32>
    %100 = vector.extract_strided_slice %85 {offsets = [0, 96], sizes = [2, 32], strides = [1, 1]} : vector<2x128xf32> to vector<2x32xf32>
    %101 = arith.negf %100 : vector<2x32xf32>
    %102 = math.exp %101 : vector<2x32xf32>
    %cst_40 = arith.constant 1.000000e+00 : f32
    %103 = vector.broadcast %cst_40 : f32 to vector<2x32xf32>
    %104 = arith.addf %103, %102 : vector<2x32xf32>
    %105 = arith.divf %103, %104 : vector<2x32xf32>
    %106 = arith.mulf %97, %0 : vector<2x32xf32>
    %107 = arith.mulf %91, %99 : vector<2x32xf32>
    %108 = arith.addf %106, %107 : vector<2x32xf32>
    %109 = math.tanh %108 : vector<2x32xf32>
    %110 = arith.mulf %105, %109 : vector<2x32xf32>
    %111 = arith.truncf %110 : vector<2x32xf32> to vector<2x32xbf16>
    %c0_41 = arith.constant 0 : index
    %c0_42 = arith.constant 0 : index
    %112 = vector.load %arg11[%c0_41, %c0_42] : memref<32x128xbf16, #tpu.memory_space<vmem>>, vector<32x128xbf16>
    %cst_43 = arith.constant dense<0.000000e+00> : vector<2x128xf32>
    %113 = tpu.matmul %111, %112, %cst_43 {dimension_numbers = #tpu.dot_dimension_numbers<[1], [0], [0], [1], [0, 0, 1, 1], [], []>} : vector<2x32xbf16>, vector<32x128xbf16>, vector<2x128xf32> -> vector<2x128xf32>
    %114 = arith.truncf %0 : vector<2x32xf32> to vector<2x32xbf16>
    %c0_44 = arith.constant 0 : index
    %c0_45 = arith.constant 0 : index
    %115 = vector.load %arg12[%c0_44, %c0_45] : memref<32x128xbf16, #tpu.memory_space<vmem>>, vector<32x128xbf16>
    %cst_46 = arith.constant dense<0.000000e+00> : vector<2x128xf32>
    %116 = tpu.matmul %114, %115, %cst_46 {dimension_numbers = #tpu.dot_dimension_numbers<[1], [0], [0], [1], [0, 0, 1, 1], [], []>} : vector<2x32xbf16>, vector<32x128xbf16>, vector<2x128xf32> -> vector<2x128xf32>
    %117 = arith.addf %113, %116 : vector<2x128xf32>
    %c0_47 = arith.constant 0 : index
    %c0_48 = arith.constant 0 : index
    %118 = vector.load %arg13[%c0_47, %c0_48] : memref<1x128xf32, #tpu.memory_space<vmem>>, vector<1x128xf32>
    %119 = vector.broadcast %118 : vector<1x128xf32> to vector<2x128xf32>
    %120 = arith.addf %117, %119 : vector<2x128xf32>
    %121 = vector.extract_strided_slice %120 {offsets = [0, 0], sizes = [2, 32], strides = [1, 1]} : vector<2x128xf32> to vector<2x32xf32>
    %122 = arith.negf %121 : vector<2x32xf32>
    %123 = math.exp %122 : vector<2x32xf32>
    %cst_49 = arith.constant 1.000000e+00 : f32
    %124 = vector.broadcast %cst_49 : f32 to vector<2x32xf32>
    %125 = arith.addf %124, %123 : vector<2x32xf32>
    %126 = arith.divf %124, %125 : vector<2x32xf32>
    %127 = vector.extract_strided_slice %120 {offsets = [0, 32], sizes = [2, 32], strides = [1, 1]} : vector<2x128xf32> to vector<2x32xf32>
    %128 = arith.negf %127 : vector<2x32xf32>
    %129 = math.exp %128 : vector<2x32xf32>
    %cst_50 = arith.constant 1.000000e+00 : f32
    %130 = vector.broadcast %cst_50 : f32 to vector<2x32xf32>
    %131 = arith.addf %130, %129 : vector<2x32xf32>
    %132 = arith.divf %130, %131 : vector<2x32xf32>
    %133 = vector.extract_strided_slice %120 {offsets = [0, 64], sizes = [2, 32], strides = [1, 1]} : vector<2x128xf32> to vector<2x32xf32>
    %134 = math.tanh %133 : vector<2x32xf32>
    %135 = vector.extract_strided_slice %120 {offsets = [0, 96], sizes = [2, 32], strides = [1, 1]} : vector<2x128xf32> to vector<2x32xf32>
    %136 = arith.negf %135 : vector<2x32xf32>
    %137 = math.exp %136 : vector<2x32xf32>
    %cst_51 = arith.constant 1.000000e+00 : f32
    %138 = vector.broadcast %cst_51 : f32 to vector<2x32xf32>
    %139 = arith.addf %138, %137 : vector<2x32xf32>
    %140 = arith.divf %138, %139 : vector<2x32xf32>
    %141 = arith.mulf %132, %0 : vector<2x32xf32>
    %142 = arith.mulf %126, %134 : vector<2x32xf32>
    %143 = arith.addf %141, %142 : vector<2x32xf32>
    %144 = math.tanh %143 : vector<2x32xf32>
    %145 = arith.mulf %140, %144 : vector<2x32xf32>
    %c0_52 = arith.constant 0 : index
    %c0_53 = arith.constant 0 : index
    %c0_54 = arith.constant 0 : index
    %146 = vector.load %arg15[%c0_52, %c0_53, %c0_54] : memref<8x2x32xf32, #tpu.memory_space<vmem>>, vector<1x2x32xf32>
    %147 = vector.shape_cast %146 : vector<1x2x32xf32> to vector<2x32xf32>
    %148 = vector.shape_cast %145 : vector<2x32xf32> to vector<1x2x32xf32>
    tpu.vector_store %arg15[%c0_52, %c0_53, %c0_54], %148 {strides = array<i32>} : memref<8x2x32xf32, #tpu.memory_space<vmem>>, vector<1x2x32xf32>,
    %c1 = arith.constant 1 : index
    %c0_55 = arith.constant 0 : index
    %c0_56 = arith.constant 0 : index
    %149 = vector.load %arg0[%c1, %c0_55, %c0_56] : memref<8x2x64xbf16, #tpu.memory_space<vmem>>, vector<1x2x64xbf16>
    %150 = vector.shape_cast %149 : vector<1x2x64xbf16> to vector<2x64xbf16>
    %c0_57 = arith.constant 0 : index
    %c0_58 = arith.constant 0 : index
    %151 = vector.load %arg2[%c0_57, %c0_58] : memref<64x128xbf16, #tpu.memory_space<vmem>>, vector<64x128xbf16>
    %cst_59 = arith.constant dense<0.000000e+00> : vector<2x128xf32>
    %152 = tpu.matmul %150, %151, %cst_59 {dimension_numbers = #tpu.dot_dimension_numbers<[1], [0], [0], [1], [0, 0, 1, 1], [], []>} : vector<2x64xbf16>, vector<64x128xbf16>, vector<2x128xf32> -> vector<2x128xf32>
    %153 = arith.truncf %36 : vector<2x32xf32> to vector<2x32xbf16>
    %c0_60 = arith.constant 0 : index
    %c0_61 = arith.constant 0 : index
    %154 = vector.load %arg3[%c0_60, %c0_61] : memref<32x128xbf16, #tpu.memory_space<vmem>>, vector<32x128xbf16>
    %cst_62 = arith.constant dense<0.000000e+00> : vector<2x128xf32>
    %155 = tpu.matmul %153, %154, %cst_62 {dimension_numbers = #tpu.dot_dimension_numbers<[1], [0], [0], [1], [0, 0, 1, 1], [], []>} : vector<2x32xbf16>, vector<32x128xbf16>, vector<2x128xf32> -> vector<2x128xf32>
    %156 = arith.addf %152, %155 : vector<2x128xf32>
    %c0_63 = arith.constant 0 : index
    %c0_64 = arith.constant 0 : index
    %157 = vector.load %arg4[%c0_63, %c0_64] : memref<1x128xf32, #tpu.memory_space<vmem>>, vector<1x128xf32>
    %158 = vector.broadcast %157 : vector<1x128xf32> to vector<2x128xf32>
    %159 = arith.addf %156, %158 : vector<2x128xf32>
    %160 = vector.extract_strided_slice %159 {offsets = [0, 0], sizes = [2, 32], strides = [1, 1]} : vector<2x128xf32> to vector<2x32xf32>
    %161 = arith.negf %160 : vector<2x32xf32>
    %162 = math.exp %161 : vector<2x32xf32>
    %cst_65 = arith.constant 1.000000e+00 : f32
    %163 = vector.broadcast %cst_65 : f32 to vector<2x32xf32>
    %164 = arith.addf %163, %162 : vector<2x32xf32>
    %165 = arith.divf %163, %164 : vector<2x32xf32>
    %166 = vector.extract_strided_slice %159 {offsets = [0, 32], sizes = [2, 32], strides = [1, 1]} : vector<2x128xf32> to vector<2x32xf32>
    %167 = arith.negf %166 : vector<2x32xf32>
    %168 = math.exp %167 : vector<2x32xf32>
    %cst_66 = arith.constant 1.000000e+00 : f32
    %169 = vector.broadcast %cst_66 : f32 to vector<2x32xf32>
    %170 = arith.addf %169, %168 : vector<2x32xf32>
    %171 = arith.divf %169, %170 : vector<2x32xf32>
    %172 = vector.extract_strided_slice %159 {offsets = [0, 64], sizes = [2, 32], strides = [1, 1]} : vector<2x128xf32> to vector<2x32xf32>
    %173 = math.tanh %172 : vector<2x32xf32>
    %174 = vector.extract_strided_slice %159 {offsets = [0, 96], sizes = [2, 32], strides = [1, 1]} : vector<2x128xf32> to vector<2x32xf32>
    %175 = arith.negf %174 : vector<2x32xf32>
    %176 = math.exp %175 : vector<2x32xf32>
    %cst_67 = arith.constant 1.000000e+00 : f32
    %177 = vector.broadcast %cst_67 : f32 to vector<2x32xf32>
    %178 = arith.addf %177, %176 : vector<2x32xf32>
    %179 = arith.divf %177, %178 : vector<2x32xf32>
    %180 = arith.mulf %171, %34 : vector<2x32xf32>
    %181 = arith.mulf %165, %173 : vector<2x32xf32>
    %182 = arith.addf %180, %181 : vector<2x32xf32>
    %183 = math.tanh %182 : vector<2x32xf32>
    %184 = arith.mulf %179, %183 : vector<2x32xf32>
    %185 = arith.truncf %184 : vector<2x32xf32> to vector<2x32xbf16>
    %c0_68 = arith.constant 0 : index
    %c0_69 = arith.constant 0 : index
    %186 = vector.load %arg5[%c0_68, %c0_69] : memref<32x128xbf16, #tpu.memory_space<vmem>>, vector<32x128xbf16>
    %cst_70 = arith.constant dense<0.000000e+00> : vector<2x128xf32>
    %187 = tpu.matmul %185, %186, %cst_70 {dimension_numbers = #tpu.dot_dimension_numbers<[1], [0], [0], [1], [0, 0, 1, 1], [], []>} : vector<2x32xbf16>, vector<32x128xbf16>, vector<2x128xf32> -> vector<2x128xf32>
    %188 = arith.truncf %71 : vector<2x32xf32> to vector<2x32xbf16>
    %c0_71 = arith.constant 0 : index
    %c0_72 = arith.constant 0 : index
    %189 = vector.load %arg6[%c0_71, %c0_72] : memref<32x128xbf16, #tpu.memory_space<vmem>>, vector<32x128xbf16>
    %cst_73 = arith.constant dense<0.000000e+00> : vector<2x128xf32>
    %190 = tpu.matmul %188, %189, %cst_73 {dimension_numbers = #tpu.dot_dimension_numbers<[1], [0], [0], [1], [0, 0, 1, 1], [], []>} : vector<2x32xbf16>, vector<32x128xbf16>, vector<2x128xf32> -> vector<2x128xf32>
    %191 = arith.addf %187, %190 : vector<2x128xf32>
    %c0_74 = arith.constant 0 : index
    %c0_75 = arith.constant 0 : index
    %192 = vector.load %arg7[%c0_74, %c0_75] : memref<1x128xf32, #tpu.memory_space<vmem>>, vector<1x128xf32>
    %193 = vector.broadcast %192 : vector<1x128xf32> to vector<2x128xf32>
    %194 = arith.addf %191, %193 : vector<2x128xf32>
    %195 = vector.extract_strided_slice %194 {offsets = [0, 0], sizes = [2, 32], strides = [1, 1]} : vector<2x128xf32> to vector<2x32xf32>
    %196 = arith.negf %195 : vector<2x32xf32>
    %197 = math.exp %196 : vector<2x32xf32>
    %cst_76 = arith.constant 1.000000e+00 : f32
    %198 = vector.broadcast %cst_76 : f32 to vector<2x32xf32>
    %199 = arith.addf %198, %197 : vector<2x32xf32>
    %200 = arith.divf %198, %199 : vector<2x32xf32>
    %201 = vector.extract_strided_slice %194 {offsets = [0, 32], sizes = [2, 32], strides = [1, 1]} : vector<2x128xf32> to vector<2x32xf32>
    %202 = arith.negf %201 : vector<2x32xf32>
    %203 = math.exp %202 : vector<2x32xf32>
    %cst_77 = arith.constant 1.000000e+00 : f32
    %204 = vector.broadcast %cst_77 : f32 to vector<2x32xf32>
    %205 = arith.addf %204, %203 : vector<2x32xf32>
    %206 = arith.divf %204, %205 : vector<2x32xf32>
    %207 = vector.extract_strided_slice %194 {offsets = [0, 64], sizes = [2, 32], strides = [1, 1]} : vector<2x128xf32> to vector<2x32xf32>
    %208 = math.tanh %207 : vector<2x32xf32>
    %209 = vector.extract_strided_slice %194 {offsets = [0, 96], sizes = [2, 32], strides = [1, 1]} : vector<2x128xf32> to vector<2x32xf32>
    %210 = arith.negf %209 : vector<2x32xf32>
    %211 = math.exp %210 : vector<2x32xf32>
    %cst_78 = arith.constant 1.000000e+00 : f32
    %212 = vector.broadcast %cst_78 : f32 to vector<2x32xf32>
    %213 = arith.addf %212, %211 : vector<2x32xf32>
    %214 = arith.divf %212, %213 : vector<2x32xf32>
    %215 = arith.mulf %206, %69 : vector<2x32xf32>
    %216 = arith.mulf %200, %208 : vector<2x32xf32>
    %217 = arith.addf %215, %216 : vector<2x32xf32>
    %218 = math.tanh %217 : vector<2x32xf32>
    %219 = arith.mulf %214, %218 : vector<2x32xf32>
    %c1_79 = arith.constant 1 : index
    %c0_80 = arith.constant 0 : index
    %c0_81 = arith.constant 0 : index
    %220 = vector.load %arg14[%c1_79, %c0_80, %c0_81] : memref<8x2x32xf32, #tpu.memory_space<vmem>>, vector<1x2x32xf32>
    %221 = vector.shape_cast %220 : vector<1x2x32xf32> to vector<2x32xf32>
    %222 = vector.shape_cast %219 : vector<2x32xf32> to vector<1x2x32xf32>
    tpu.vector_store %arg14[%c1_79, %c0_80, %c0_81], %222 {strides = array<i32>} : memref<8x2x32xf32, #tpu.memory_space<vmem>>, vector<1x2x32xf32>,
    %c1_82 = arith.constant 1 : index
    %c0_83 = arith.constant 0 : index
    %c0_84 = arith.constant 0 : index
    %223 = vector.load %arg1[%c1_82, %c0_83, %c0_84] : memref<8x2x64xbf16, #tpu.memory_space<vmem>>, vector<1x2x64xbf16>
    %224 = vector.shape_cast %223 : vector<1x2x64xbf16> to vector<2x64xbf16>
    %c0_85 = arith.constant 0 : index
    %c0_86 = arith.constant 0 : index
    %225 = vector.load %arg8[%c0_85, %c0_86] : memref<64x128xbf16, #tpu.memory_space<vmem>>, vector<64x128xbf16>
    %cst_87 = arith.constant dense<0.000000e+00> : vector<2x128xf32>
    %226 = tpu.matmul %224, %225, %cst_87 {dimension_numbers = #tpu.dot_dimension_numbers<[1], [0], [0], [1], [0, 0, 1, 1], [], []>} : vector<2x64xbf16>, vector<64x128xbf16>, vector<2x128xf32> -> vector<2x128xf32>
    %227 = arith.truncf %110 : vector<2x32xf32> to vector<2x32xbf16>
    %c0_88 = arith.constant 0 : index
    %c0_89 = arith.constant 0 : index
    %228 = vector.load %arg9[%c0_88, %c0_89] : memref<32x128xbf16, #tpu.memory_space<vmem>>, vector<32x128xbf16>
    %cst_90 = arith.constant dense<0.000000e+00> : vector<2x128xf32>
    %229 = tpu.matmul %227, %228, %cst_90 {dimension_numbers = #tpu.dot_dimension_numbers<[1], [0], [0], [1], [0, 0, 1, 1], [], []>} : vector<2x32xbf16>, vector<32x128xbf16>, vector<2x128xf32> -> vector<2x128xf32>
    %230 = arith.addf %226, %229 : vector<2x128xf32>
    %c0_91 = arith.constant 0 : index
    %c0_92 = arith.constant 0 : index
    %231 = vector.load %arg10[%c0_91, %c0_92] : memref<1x128xf32, #tpu.memory_space<vmem>>, vector<1x128xf32>
    %232 = vector.broadcast %231 : vector<1x128xf32> to vector<2x128xf32>
    %233 = arith.addf %230, %232 : vector<2x128xf32>
    %234 = vector.extract_strided_slice %233 {offsets = [0, 0], sizes = [2, 32], strides = [1, 1]} : vector<2x128xf32> to vector<2x32xf32>
    %235 = arith.negf %234 : vector<2x32xf32>
    %236 = math.exp %235 : vector<2x32xf32>
    %cst_93 = arith.constant 1.000000e+00 : f32
    %237 = vector.broadcast %cst_93 : f32 to vector<2x32xf32>
    %238 = arith.addf %237, %236 : vector<2x32xf32>
    %239 = arith.divf %237, %238 : vector<2x32xf32>
    %240 = vector.extract_strided_slice %233 {offsets = [0, 32], sizes = [2, 32], strides = [1, 1]} : vector<2x128xf32> to vector<2x32xf32>
    %241 = arith.negf %240 : vector<2x32xf32>
    %242 = math.exp %241 : vector<2x32xf32>
    %cst_94 = arith.constant 1.000000e+00 : f32
    %243 = vector.broadcast %cst_94 : f32 to vector<2x32xf32>
    %244 = arith.addf %243, %242 : vector<2x32xf32>
    %245 = arith.divf %243, %244 : vector<2x32xf32>
    %246 = vector.extract_strided_slice %233 {offsets = [0, 64], sizes = [2, 32], strides = [1, 1]} : vector<2x128xf32> to vector<2x32xf32>
    %247 = math.tanh %246 : vector<2x32xf32>
    %248 = vector.extract_strided_slice %233 {offsets = [0, 96], sizes = [2, 32], strides = [1, 1]} : vector<2x128xf32> to vector<2x32xf32>
    %249 = arith.negf %248 : vector<2x32xf32>
    %250 = math.exp %249 : vector<2x32xf32>
    %cst_95 = arith.constant 1.000000e+00 : f32
    %251 = vector.broadcast %cst_95 : f32 to vector<2x32xf32>
    %252 = arith.addf %251, %250 : vector<2x32xf32>
    %253 = arith.divf %251, %252 : vector<2x32xf32>
    %254 = arith.mulf %245, %108 : vector<2x32xf32>
    %255 = arith.mulf %239, %247 : vector<2x32xf32>
    %256 = arith.addf %254, %255 : vector<2x32xf32>
    %257 = math.tanh %256 : vector<2x32xf32>
    %258 = arith.mulf %253, %257 : vector<2x32xf32>
    %259 = arith.truncf %258 : vector<2x32xf32> to vector<2x32xbf16>
    %c0_96 = arith.constant 0 : index
    %c0_97 = arith.constant 0 : index
    %260 = vector.load %arg11[%c0_96, %c0_97] : memref<32x128xbf16, #tpu.memory_space<vmem>>, vector<32x128xbf16>
    %cst_98 = arith.constant dense<0.000000e+00> : vector<2x128xf32>
    %261 = tpu.matmul %259, %260, %cst_98 {dimension_numbers = #tpu.dot_dimension_numbers<[1], [0], [0], [1], [0, 0, 1, 1], [], []>} : vector<2x32xbf16>, vector<32x128xbf16>, vector<2x128xf32> -> vector<2x128xf32>
    %262 = arith.truncf %145 : vector<2x32xf32> to vector<2x32xbf16>
    %c0_99 = arith.constant 0 : index
    %c0_100 = arith.constant 0 : index
    %263 = vector.load %arg12[%c0_99, %c0_100] : memref<32x128xbf16, #tpu.memory_space<vmem>>, vector<32x128xbf16>
    %cst_101 = arith.constant dense<0.000000e+00> : vector<2x128xf32>
    %264 = tpu.matmul %262, %263, %cst_101 {dimension_numbers = #tpu.dot_dimension_numbers<[1], [0], [0], [1], [0, 0, 1, 1], [], []>} : vector<2x32xbf16>, vector<32x128xbf16>, vector<2x128xf32> -> vector<2x128xf32>
    %265 = arith.addf %261, %264 : vector<2x128xf32>
    %c0_102 = arith.constant 0 : index
    %c0_103 = arith.constant 0 : index
    %266 = vector.load %arg13[%c0_102, %c0_103] : memref<1x128xf32, #tpu.memory_space<vmem>>, vector<1x128xf32>
    %267 = vector.broadcast %266 : vector<1x128xf32> to vector<2x128xf32>
    %268 = arith.addf %265, %267 : vector<2x128xf32>
    %269 = vector.extract_strided_slice %268 {offsets = [0, 0], sizes = [2, 32], strides = [1, 1]} : vector<2x128xf32> to vector<2x32xf32>
    %270 = arith.negf %269 : vector<2x32xf32>
    %271 = math.exp %270 : vector<2x32xf32>
    %cst_104 = arith.constant 1.000000e+00 : f32
    %272 = vector.broadcast %cst_104 : f32 to vector<2x32xf32>
    %273 = arith.addf %272, %271 : vector<2x32xf32>
    %274 = arith.divf %272, %273 : vector<2x32xf32>
    %275 = vector.extract_strided_slice %268 {offsets = [0, 32], sizes = [2, 32], strides = [1, 1]} : vector<2x128xf32> to vector<2x32xf32>
    %276 = arith.negf %275 : vector<2x32xf32>
    %277 = math.exp %276 : vector<2x32xf32>
    %cst_105 = arith.constant 1.000000e+00 : f32
    %278 = vector.broadcast %cst_105 : f32 to vector<2x32xf32>
    %279 = arith.addf %278, %277 : vector<2x32xf32>
    %280 = arith.divf %278, %279 : vector<2x32xf32>
    %281 = vector.extract_strided_slice %268 {offsets = [0, 64], sizes = [2, 32], strides = [1, 1]} : vector<2x128xf32> to vector<2x32xf32>
    %282 = math.tanh %281 : vector<2x32xf32>
    %283 = vector.extract_strided_slice %268 {offsets = [0, 96], sizes = [2, 32], strides = [1, 1]} : vector<2x128xf32> to vector<2x32xf32>
    %284 = arith.negf %283 : vector<2x32xf32>
    %285 = math.exp %284 : vector<2x32xf32>
    %cst_106 = arith.constant 1.000000e+00 : f32
    %286 = vector.broadcast %cst_106 : f32 to vector<2x32xf32>
    %287 = arith.addf %286, %285 : vector<2x32xf32>
    %288 = arith.divf %286, %287 : vector<2x32xf32>
    %289 = arith.mulf %280, %143 : vector<2x32xf32>
    %290 = arith.mulf %274, %282 : vector<2x32xf32>
    %291 = arith.addf %289, %290 : vector<2x32xf32>
    %292 = math.tanh %291 : vector<2x32xf32>
    %293 = arith.mulf %288, %292 : vector<2x32xf32>
    %c1_107 = arith.constant 1 : index
    %c0_108 = arith.constant 0 : index
    %c0_109 = arith.constant 0 : index
    %294 = vector.load %arg15[%c1_107, %c0_108, %c0_109] : memref<8x2x32xf32, #tpu.memory_space<vmem>>, vector<1x2x32xf32>
    %295 = vector.shape_cast %294 : vector<1x2x32xf32> to vector<2x32xf32>
    %296 = vector.shape_cast %293 : vector<2x32xf32> to vector<1x2x32xf32>
    tpu.vector_store %arg15[%c1_107, %c0_108, %c0_109], %296 {strides = array<i32>} : memref<8x2x32xf32, #tpu.memory_space<vmem>>, vector<1x2x32xf32>,
    %c2 = arith.constant 2 : index
    %c0_110 = arith.constant 0 : index
    %c0_111 = arith.constant 0 : index
    %297 = vector.load %arg0[%c2, %c0_110, %c0_111] : memref<8x2x64xbf16, #tpu.memory_space<vmem>>, vector<1x2x64xbf16>
    %298 = vector.shape_cast %297 : vector<1x2x64xbf16> to vector<2x64xbf16>
    %c0_112 = arith.constant 0 : index
    %c0_113 = arith.constant 0 : index
    %299 = vector.load %arg2[%c0_112, %c0_113] : memref<64x128xbf16, #tpu.memory_space<vmem>>, vector<64x128xbf16>
    %cst_114 = arith.constant dense<0.000000e+00> : vector<2x128xf32>
    %300 = tpu.matmul %298, %299, %cst_114 {dimension_numbers = #tpu.dot_dimension_numbers<[1], [0], [0], [1], [0, 0, 1, 1], [], []>} : vector<2x64xbf16>, vector<64x128xbf16>, vector<2x128xf32> -> vector<2x128xf32>
    %301 = arith.truncf %184 : vector<2x32xf32> to vector<2x32xbf16>
    %c0_115 = arith.constant 0 : index
    %c0_116 = arith.constant 0 : index
    %302 = vector.load %arg3[%c0_115, %c0_116] : memref<32x128xbf16, #tpu.memory_space<vmem>>, vector<32x128xbf16>
    %cst_117 = arith.constant dense<0.000000e+00> : vector<2x128xf32>
    %303 = tpu.matmul %301, %302, %cst_117 {dimension_numbers = #tpu.dot_dimension_numbers<[1], [0], [0], [1], [0, 0, 1, 1], [], []>} : vector<2x32xbf16>, vector<32x128xbf16>, vector<2x128xf32> -> vector<2x128xf32>
    %304 = arith.addf %300, %303 : vector<2x128xf32>
    %c0_118 = arith.constant 0 : index
    %c0_119 = arith.constant 0 : index
    %305 = vector.load %arg4[%c0_118, %c0_119] : memref<1x128xf32, #tpu.memory_space<vmem>>, vector<1x128xf32>
    %306 = vector.broadcast %305 : vector<1x128xf32> to vector<2x128xf32>
    %307 = arith.addf %304, %306 : vector<2x128xf32>
    %308 = vector.extract_strided_slice %307 {offsets = [0, 0], sizes = [2, 32], strides = [1, 1]} : vector<2x128xf32> to vector<2x32xf32>
    %309 = arith.negf %308 : vector<2x32xf32>
    %310 = math.exp %309 : vector<2x32xf32>
    %cst_120 = arith.constant 1.000000e+00 : f32
    %311 = vector.broadcast %cst_120 : f32 to vector<2x32xf32>
    %312 = arith.addf %311, %310 : vector<2x32xf32>
    %313 = arith.divf %311, %312 : vector<2x32xf32>
    %314 = vector.extract_strided_slice %307 {offsets = [0, 32], sizes = [2, 32], strides = [1, 1]} : vector<2x128xf32> to vector<2x32xf32>
    %315 = arith.negf %314 : vector<2x32xf32>
    %316 = math.exp %315 : vector<2x32xf32>
    %cst_121 = arith.constant 1.000000e+00 : f32
    %317 = vector.broadcast %cst_121 : f32 to vector<2x32xf32>
    %318 = arith.addf %317, %316 : vector<2x32xf32>
    %319 = arith.divf %317, %318 : vector<2x32xf32>
    %320 = vector.extract_strided_slice %307 {offsets = [0, 64], sizes = [2, 32], strides = [1, 1]} : vector<2x128xf32> to vector<2x32xf32>
    %321 = math.tanh %320 : vector<2x32xf32>
    %322 = vector.extract_strided_slice %307 {offsets = [0, 96], sizes = [2, 32], strides = [1, 1]} : vector<2x128xf32> to vector<2x32xf32>
    %323 = arith.negf %322 : vector<2x32xf32>
    %324 = math.exp %323 : vector<2x32xf32>
    %cst_122 = arith.constant 1.000000e+00 : f32
    %325 = vector.broadcast %cst_122 : f32 to vector<2x32xf32>
    %326 = arith.addf %325, %324 : vector<2x32xf32>
    %327 = arith.divf %325, %326 : vector<2x32xf32>
    %328 = arith.mulf %319, %182 : vector<2x32xf32>
    %329 = arith.mulf %313, %321 : vector<2x32xf32>
    %330 = arith.addf %328, %329 : vector<2x32xf32>
    %331 = math.tanh %330 : vector<2x32xf32>
    %332 = arith.mulf %327, %331 : vector<2x32xf32>
    %333 = arith.truncf %332 : vector<2x32xf32> to vector<2x32xbf16>
    %c0_123 = arith.constant 0 : index
    %c0_124 = arith.constant 0 : index
    %334 = vector.load %arg5[%c0_123, %c0_124] : memref<32x128xbf16, #tpu.memory_space<vmem>>, vector<32x128xbf16>
    %cst_125 = arith.constant dense<0.000000e+00> : vector<2x128xf32>
    %335 = tpu.matmul %333, %334, %cst_125 {dimension_numbers = #tpu.dot_dimension_numbers<[1], [0], [0], [1], [0, 0, 1, 1], [], []>} : vector<2x32xbf16>, vector<32x128xbf16>, vector<2x128xf32> -> vector<2x128xf32>
    %336 = arith.truncf %219 : vector<2x32xf32> to vector<2x32xbf16>
    %c0_126 = arith.constant 0 : index
    %c0_127 = arith.constant 0 : index
    %337 = vector.load %arg6[%c0_126, %c0_127] : memref<32x128xbf16, #tpu.memory_space<vmem>>, vector<32x128xbf16>
    %cst_128 = arith.constant dense<0.000000e+00> : vector<2x128xf32>
    %338 = tpu.matmul %336, %337, %cst_128 {dimension_numbers = #tpu.dot_dimension_numbers<[1], [0], [0], [1], [0, 0, 1, 1], [], []>} : vector<2x32xbf16>, vector<32x128xbf16>, vector<2x128xf32> -> vector<2x128xf32>
    %339 = arith.addf %335, %338 : vector<2x128xf32>
    %c0_129 = arith.constant 0 : index
    %c0_130 = arith.constant 0 : index
    %340 = vector.load %arg7[%c0_129, %c0_130] : memref<1x128xf32, #tpu.memory_space<vmem>>, vector<1x128xf32>
    %341 = vector.broadcast %340 : vector<1x128xf32> to vector<2x128xf32>
    %342 = arith.addf %339, %341 : vector<2x128xf32>
    %343 = vector.extract_strided_slice %342 {offsets = [0, 0], sizes = [2, 32], strides = [1, 1]} : vector<2x128xf32> to vector<2x32xf32>
    %344 = arith.negf %343 : vector<2x32xf32>
    %345 = math.exp %344 : vector<2x32xf32>
    %cst_131 = arith.constant 1.000000e+00 : f32
    %346 = vector.broadcast %cst_131 : f32 to vector<2x32xf32>
    %347 = arith.addf %346, %345 : vector<2x32xf32>
    %348 = arith.divf %346, %347 : vector<2x32xf32>
    %349 = vector.extract_strided_slice %342 {offsets = [0, 32], sizes = [2, 32], strides = [1, 1]} : vector<2x128xf32> to vector<2x32xf32>
    %350 = arith.negf %349 : vector<2x32xf32>
    %351 = math.exp %350 : vector<2x32xf32>
    %cst_132 = arith.constant 1.000000e+00 : f32
    %352 = vector.broadcast %cst_132 : f32 to vector<2x32xf32>
    %353 = arith.addf %352, %351 : vector<2x32xf32>
    %354 = arith.divf %352, %353 : vector<2x32xf32>
    %355 = vector.extract_strided_slice %342 {offsets = [0, 64], sizes = [2, 32], strides = [1, 1]} : vector<2x128xf32> to vector<2x32xf32>
    %356 = math.tanh %355 : vector<2x32xf32>
    %357 = vector.extract_strided_slice %342 {offsets = [0, 96], sizes = [2, 32], strides = [1, 1]} : vector<2x128xf32> to vector<2x32xf32>
    %358 = arith.negf %357 : vector<2x32xf32>
    %359 = math.exp %358 : vector<2x32xf32>
    %cst_133 = arith.constant 1.000000e+00 : f32
    %360 = vector.broadcast %cst_133 : f32 to vector<2x32xf32>
    %361 = arith.addf %360, %359 : vector<2x32xf32>
    %362 = arith.divf %360, %361 : vector<2x32xf32>
    %363 = arith.mulf %354, %217 : vector<2x32xf32>
    %364 = arith.mulf %348, %356 : vector<2x32xf32>
    %365 = arith.addf %363, %364 : vector<2x32xf32>
    %366 = math.tanh %365 : vector<2x32xf32>
    %367 = arith.mulf %362, %366 : vector<2x32xf32>
    %c2_134 = arith.constant 2 : index
    %c0_135 = arith.constant 0 : index
    %c0_136 = arith.constant 0 : index
    %368 = vector.load %arg14[%c2_134, %c0_135, %c0_136] : memref<8x2x32xf32, #tpu.memory_space<vmem>>, vector<1x2x32xf32>
    %369 = vector.shape_cast %368 : vector<1x2x32xf32> to vector<2x32xf32>
    %370 = vector.shape_cast %367 : vector<2x32xf32> to vector<1x2x32xf32>
    tpu.vector_store %arg14[%c2_134, %c0_135, %c0_136], %370 {strides = array<i32>} : memref<8x2x32xf32, #tpu.memory_space<vmem>>, vector<1x2x32xf32>,
    %c2_137 = arith.constant 2 : index
    %c0_138 = arith.constant 0 : index
    %c0_139 = arith.constant 0 : index
    %371 = vector.load %arg1[%c2_137, %c0_138, %c0_139] : memref<8x2x64xbf16, #tpu.memory_space<vmem>>, vector<1x2x64xbf16>
    %372 = vector.shape_cast %371 : vector<1x2x64xbf16> to vector<2x64xbf16>
    %c0_140 = arith.constant 0 : index
    %c0_141 = arith.constant 0 : index
    %373 = vector.load %arg8[%c0_140, %c0_141] : memref<64x128xbf16, #tpu.memory_space<vmem>>, vector<64x128xbf16>
    %cst_142 = arith.constant dense<0.000000e+00> : vector<2x128xf32>
    %374 = tpu.matmul %372, %373, %cst_142 {dimension_numbers = #tpu.dot_dimension_numbers<[1], [0], [0], [1], [0, 0, 1, 1], [], []>} : vector<2x64xbf16>, vector<64x128xbf16>, vector<2x128xf32> -> vector<2x128xf32>
    %375 = arith.truncf %258 : vector<2x32xf32> to vector<2x32xbf16>
    %c0_143 = arith.constant 0 : index
    %c0_144 = arith.constant 0 : index
    %376 = vector.load %arg9[%c0_143, %c0_144] : memref<32x128xbf16, #tpu.memory_space<vmem>>, vector<32x128xbf16>
    %cst_145 = arith.constant dense<0.000000e+00> : vector<2x128xf32>
    %377 = tpu.matmul %375, %376, %cst_145 {dimension_numbers = #tpu.dot_dimension_numbers<[1], [0], [0], [1], [0, 0, 1, 1], [], []>} : vector<2x32xbf16>, vector<32x128xbf16>, vector<2x128xf32> -> vector<2x128xf32>
    %378 = arith.addf %374, %377 : vector<2x128xf32>
    %c0_146 = arith.constant 0 : index
    %c0_147 = arith.constant 0 : index
    %379 = vector.load %arg10[%c0_146, %c0_147] : memref<1x128xf32, #tpu.memory_space<vmem>>, vector<1x128xf32>
    %380 = vector.broadcast %379 : vector<1x128xf32> to vector<2x128xf32>
    %381 = arith.addf %378, %380 : vector<2x128xf32>
    %382 = vector.extract_strided_slice %381 {offsets = [0, 0], sizes = [2, 32], strides = [1, 1]} : vector<2x128xf32> to vector<2x32xf32>
    %383 = arith.negf %382 : vector<2x32xf32>
    %384 = math.exp %383 : vector<2x32xf32>
    %cst_148 = arith.constant 1.000000e+00 : f32
    %385 = vector.broadcast %cst_148 : f32 to vector<2x32xf32>
    %386 = arith.addf %385, %384 : vector<2x32xf32>
    %387 = arith.divf %385, %386 : vector<2x32xf32>
    %388 = vector.extract_strided_slice %381 {offsets = [0, 32], sizes = [2, 32], strides = [1, 1]} : vector<2x128xf32> to vector<2x32xf32>
    %389 = arith.negf %388 : vector<2x32xf32>
    %390 = math.exp %389 : vector<2x32xf32>
    %cst_149 = arith.constant 1.000000e+00 : f32
    %391 = vector.broadcast %cst_149 : f32 to vector<2x32xf32>
    %392 = arith.addf %391, %390 : vector<2x32xf32>
    %393 = arith.divf %391, %392 : vector<2x32xf32>
    %394 = vector.extract_strided_slice %381 {offsets = [0, 64], sizes = [2, 32], strides = [1, 1]} : vector<2x128xf32> to vector<2x32xf32>
    %395 = math.tanh %394 : vector<2x32xf32>
    %396 = vector.extract_strided_slice %381 {offsets = [0, 96], sizes = [2, 32], strides = [1, 1]} : vector<2x128xf32> to vector<2x32xf32>
    %397 = arith.negf %396 : vector<2x32xf32>
    %398 = math.exp %397 : vector<2x32xf32>
    %cst_150 = arith.constant 1.000000e+00 : f32
    %399 = vector.broadcast %cst_150 : f32 to vector<2x32xf32>
    %400 = arith.addf %399, %398 : vector<2x32xf32>
    %401 = arith.divf %399, %400 : vector<2x32xf32>
    %402 = arith.mulf %393, %256 : vector<2x32xf32>
    %403 = arith.mulf %387, %395 : vector<2x32xf32>
    %404 = arith.addf %402, %403 : vector<2x32xf32>
    %405 = math.tanh %404 : vector<2x32xf32>
    %406 = arith.mulf %401, %405 : vector<2x32xf32>
    %407 = arith.truncf %406 : vector<2x32xf32> to vector<2x32xbf16>
    %c0_151 = arith.constant 0 : index
    %c0_152 = arith.constant 0 : index
    %408 = vector.load %arg11[%c0_151, %c0_152] : memref<32x128xbf16, #tpu.memory_space<vmem>>, vector<32x128xbf16>
    %cst_153 = arith.constant dense<0.000000e+00> : vector<2x128xf32>
    %409 = tpu.matmul %407, %408, %cst_153 {dimension_numbers = #tpu.dot_dimension_numbers<[1], [0], [0], [1], [0, 0, 1, 1], [], []>} : vector<2x32xbf16>, vector<32x128xbf16>, vector<2x128xf32> -> vector<2x128xf32>
    %410 = arith.truncf %293 : vector<2x32xf32> to vector<2x32xbf16>
    %c0_154 = arith.constant 0 : index
    %c0_155 = arith.constant 0 : index
    %411 = vector.load %arg12[%c0_154, %c0_155] : memref<32x128xbf16, #tpu.memory_space<vmem>>, vector<32x128xbf16>
    %cst_156 = arith.constant dense<0.000000e+00> : vector<2x128xf32>
    %412 = tpu.matmul %410, %411, %cst_156 {dimension_numbers = #tpu.dot_dimension_numbers<[1], [0], [0], [1], [0, 0, 1, 1], [], []>} : vector<2x32xbf16>, vector<32x128xbf16>, vector<2x128xf32> -> vector<2x128xf32>
    %413 = arith.addf %409, %412 : vector<2x128xf32>
    %c0_157 = arith.constant 0 : index
    %c0_158 = arith.constant 0 : index
    %414 = vector.load %arg13[%c0_157, %c0_158] : memref<1x128xf32, #tpu.memory_space<vmem>>, vector<1x128xf32>
    %415 = vector.broadcast %414 : vector<1x128xf32> to vector<2x128xf32>
    %416 = arith.addf %413, %415 : vector<2x128xf32>
    %417 = vector.extract_strided_slice %416 {offsets = [0, 0], sizes = [2, 32], strides = [1, 1]} : vector<2x128xf32> to vector<2x32xf32>
    %418 = arith.negf %417 : vector<2x32xf32>
    %419 = math.exp %418 : vector<2x32xf32>
    %cst_159 = arith.constant 1.000000e+00 : f32
    %420 = vector.broadcast %cst_159 : f32 to vector<2x32xf32>
    %421 = arith.addf %420, %419 : vector<2x32xf32>
    %422 = arith.divf %420, %421 : vector<2x32xf32>
    %423 = vector.extract_strided_slice %416 {offsets = [0, 32], sizes = [2, 32], strides = [1, 1]} : vector<2x128xf32> to vector<2x32xf32>
    %424 = arith.negf %423 : vector<2x32xf32>
    %425 = math.exp %424 : vector<2x32xf32>
    %cst_160 = arith.constant 1.000000e+00 : f32
    %426 = vector.broadcast %cst_160 : f32 to vector<2x32xf32>
    %427 = arith.addf %426, %425 : vector<2x32xf32>
    %428 = arith.divf %426, %427 : vector<2x32xf32>
    %429 = vector.extract_strided_slice %416 {offsets = [0, 64], sizes = [2, 32], strides = [1, 1]} : vector<2x128xf32> to vector<2x32xf32>
    %430 = math.tanh %429 : vector<2x32xf32>
    %431 = vector.extract_strided_slice %416 {offsets = [0, 96], sizes = [2, 32], strides = [1, 1]} : vector<2x128xf32> to vector<2x32xf32>
    %432 = arith.negf %431 : vector<2x32xf32>
    %433 = math.exp %432 : vector<2x32xf32>
    %cst_161 = arith.constant 1.000000e+00 : f32
    %434 = vector.broadcast %cst_161 : f32 to vector<2x32xf32>
    %435 = arith.addf %434, %433 : vector<2x32xf32>
    %436 = arith.divf %434, %435 : vector<2x32xf32>
    %437 = arith.mulf %428, %291 : vector<2x32xf32>
    %438 = arith.mulf %422, %430 : vector<2x32xf32>
    %439 = arith.addf %437, %438 : vector<2x32xf32>
    %440 = math.tanh %439 : vector<2x32xf32>
    %441 = arith.mulf %436, %440 : vector<2x32xf32>
    %c2_162 = arith.constant 2 : index
    %c0_163 = arith.constant 0 : index
    %c0_164 = arith.constant 0 : index
    %442 = vector.load %arg15[%c2_162, %c0_163, %c0_164] : memref<8x2x32xf32, #tpu.memory_space<vmem>>, vector<1x2x32xf32>
    %443 = vector.shape_cast %442 : vector<1x2x32xf32> to vector<2x32xf32>
    %444 = vector.shape_cast %441 : vector<2x32xf32> to vector<1x2x32xf32>
    tpu.vector_store %arg15[%c2_162, %c0_163, %c0_164], %444 {strides = array<i32>} : memref<8x2x32xf32, #tpu.memory_space<vmem>>, vector<1x2x32xf32>,
    %c3 = arith.constant 3 : index
    %c0_165 = arith.constant 0 : index
    %c0_166 = arith.constant 0 : index
    %445 = vector.load %arg0[%c3, %c0_165, %c0_166] : memref<8x2x64xbf16, #tpu.memory_space<vmem>>, vector<1x2x64xbf16>
    %446 = vector.shape_cast %445 : vector<1x2x64xbf16> to vector<2x64xbf16>
    %c0_167 = arith.constant 0 : index
    %c0_168 = arith.constant 0 : index
    %447 = vector.load %arg2[%c0_167, %c0_168] : memref<64x128xbf16, #tpu.memory_space<vmem>>, vector<64x128xbf16>
    %cst_169 = arith.constant dense<0.000000e+00> : vector<2x128xf32>
    %448 = tpu.matmul %446, %447, %cst_169 {dimension_numbers = #tpu.dot_dimension_numbers<[1], [0], [0], [1], [0, 0, 1, 1], [], []>} : vector<2x64xbf16>, vector<64x128xbf16>, vector<2x128xf32> -> vector<2x128xf32>
    %449 = arith.truncf %332 : vector<2x32xf32> to vector<2x32xbf16>
    %c0_170 = arith.constant 0 : index
    %c0_171 = arith.constant 0 : index
    %450 = vector.load %arg3[%c0_170, %c0_171] : memref<32x128xbf16, #tpu.memory_space<vmem>>, vector<32x128xbf16>
    %cst_172 = arith.constant dense<0.000000e+00> : vector<2x128xf32>
    %451 = tpu.matmul %449, %450, %cst_172 {dimension_numbers = #tpu.dot_dimension_numbers<[1], [0], [0], [1], [0, 0, 1, 1], [], []>} : vector<2x32xbf16>, vector<32x128xbf16>, vector<2x128xf32> -> vector<2x128xf32>
    %452 = arith.addf %448, %451 : vector<2x128xf32>
    %c0_173 = arith.constant 0 : index
    %c0_174 = arith.constant 0 : index
    %453 = vector.load %arg4[%c0_173, %c0_174] : memref<1x128xf32, #tpu.memory_space<vmem>>, vector<1x128xf32>
    %454 = vector.broadcast %453 : vector<1x128xf32> to vector<2x128xf32>
    %455 = arith.addf %452, %454 : vector<2x128xf32>
    %456 = vector.extract_strided_slice %455 {offsets = [0, 0], sizes = [2, 32], strides = [1, 1]} : vector<2x128xf32> to vector<2x32xf32>
    %457 = arith.negf %456 : vector<2x32xf32>
    %458 = math.exp %457 : vector<2x32xf32>
    %cst_175 = arith.constant 1.000000e+00 : f32
    %459 = vector.broadcast %cst_175 : f32 to vector<2x32xf32>
    %460 = arith.addf %459, %458 : vector<2x32xf32>
    %461 = arith.divf %459, %460 : vector<2x32xf32>
    %462 = vector.extract_strided_slice %455 {offsets = [0, 32], sizes = [2, 32], strides = [1, 1]} : vector<2x128xf32> to vector<2x32xf32>
    %463 = arith.negf %462 : vector<2x32xf32>
    %464 = math.exp %463 : vector<2x32xf32>
    %cst_176 = arith.constant 1.000000e+00 : f32
    %465 = vector.broadcast %cst_176 : f32 to vector<2x32xf32>
    %466 = arith.addf %465, %464 : vector<2x32xf32>
    %467 = arith.divf %465, %466 : vector<2x32xf32>
    %468 = vector.extract_strided_slice %455 {offsets = [0, 64], sizes = [2, 32], strides = [1, 1]} : vector<2x128xf32> to vector<2x32xf32>
    %469 = math.tanh %468 : vector<2x32xf32>
    %470 = vector.extract_strided_slice %455 {offsets = [0, 96], sizes = [2, 32], strides = [1, 1]} : vector<2x128xf32> to vector<2x32xf32>
    %471 = arith.negf %470 : vector<2x32xf32>
    %472 = math.exp %471 : vector<2x32xf32>
    %cst_177 = arith.constant 1.000000e+00 : f32
    %473 = vector.broadcast %cst_177 : f32 to vector<2x32xf32>
    %474 = arith.addf %473, %472 : vector<2x32xf32>
    %475 = arith.divf %473, %474 : vector<2x32xf32>
    %476 = arith.mulf %467, %330 : vector<2x32xf32>
    %477 = arith.mulf %461, %469 : vector<2x32xf32>
    %478 = arith.addf %476, %477 : vector<2x32xf32>
    %479 = math.tanh %478 : vector<2x32xf32>
    %480 = arith.mulf %475, %479 : vector<2x32xf32>
    %481 = arith.truncf %480 : vector<2x32xf32> to vector<2x32xbf16>
    %c0_178 = arith.constant 0 : index
    %c0_179 = arith.constant 0 : index
    %482 = vector.load %arg5[%c0_178, %c0_179] : memref<32x128xbf16, #tpu.memory_space<vmem>>, vector<32x128xbf16>
    %cst_180 = arith.constant dense<0.000000e+00> : vector<2x128xf32>
    %483 = tpu.matmul %481, %482, %cst_180 {dimension_numbers = #tpu.dot_dimension_numbers<[1], [0], [0], [1], [0, 0, 1, 1], [], []>} : vector<2x32xbf16>, vector<32x128xbf16>, vector<2x128xf32> -> vector<2x128xf32>
    %484 = arith.truncf %367 : vector<2x32xf32> to vector<2x32xbf16>
    %c0_181 = arith.constant 0 : index
    %c0_182 = arith.constant 0 : index
    %485 = vector.load %arg6[%c0_181, %c0_182] : memref<32x128xbf16, #tpu.memory_space<vmem>>, vector<32x128xbf16>
    %cst_183 = arith.constant dense<0.000000e+00> : vector<2x128xf32>
    %486 = tpu.matmul %484, %485, %cst_183 {dimension_numbers = #tpu.dot_dimension_numbers<[1], [0], [0], [1], [0, 0, 1, 1], [], []>} : vector<2x32xbf16>, vector<32x128xbf16>, vector<2x128xf32> -> vector<2x128xf32>
    %487 = arith.addf %483, %486 : vector<2x128xf32>
    %c0_184 = arith.constant 0 : index
    %c0_185 = arith.constant 0 : index
    %488 = vector.load %arg7[%c0_184, %c0_185] : memref<1x128xf32, #tpu.memory_space<vmem>>, vector<1x128xf32>
    %489 = vector.broadcast %488 : vector<1x128xf32> to vector<2x128xf32>
    %490 = arith.addf %487, %489 : vector<2x128xf32>
    %491 = vector.extract_strided_slice %490 {offsets = [0, 0], sizes = [2, 32], strides = [1, 1]} : vector<2x128xf32> to vector<2x32xf32>
    %492 = arith.negf %491 : vector<2x32xf32>
    %493 = math.exp %492 : vector<2x32xf32>
    %cst_186 = arith.constant 1.000000e+00 : f32
    %494 = vector.broadcast %cst_186 : f32 to vector<2x32xf32>
    %495 = arith.addf %494, %493 : vector<2x32xf32>
    %496 = arith.divf %494, %495 : vector<2x32xf32>
    %497 = vector.extract_strided_slice %490 {offsets = [0, 32], sizes = [2, 32], strides = [1, 1]} : vector<2x128xf32> to vector<2x32xf32>
    %498 = arith.negf %497 : vector<2x32xf32>
    %499 = math.exp %498 : vector<2x32xf32>
    %cst_187 = arith.constant 1.000000e+00 : f32
    %500 = vector.broadcast %cst_187 : f32 to vector<2x32xf32>
    %501 = arith.addf %500, %499 : vector<2x32xf32>
    %502 = arith.divf %500, %501 : vector<2x32xf32>
    %503 = vector.extract_strided_slice %490 {offsets = [0, 64], sizes = [2, 32], strides = [1, 1]} : vector<2x128xf32> to vector<2x32xf32>
    %504 = math.tanh %503 : vector<2x32xf32>
    %505 = vector.extract_strided_slice %490 {offsets = [0, 96], sizes = [2, 32], strides = [1, 1]} : vector<2x128xf32> to vector<2x32xf32>
    %506 = arith.negf %505 : vector<2x32xf32>
    %507 = math.exp %506 : vector<2x32xf32>
    %cst_188 = arith.constant 1.000000e+00 : f32
    %508 = vector.broadcast %cst_188 : f32 to vector<2x32xf32>
    %509 = arith.addf %508, %507 : vector<2x32xf32>
    %510 = arith.divf %508, %509 : vector<2x32xf32>
    %511 = arith.mulf %502, %365 : vector<2x32xf32>
    %512 = arith.mulf %496, %504 : vector<2x32xf32>
    %513 = arith.addf %511, %512 : vector<2x32xf32>
    %514 = math.tanh %513 : vector<2x32xf32>
    %515 = arith.mulf %510, %514 : vector<2x32xf32>
    %c3_189 = arith.constant 3 : index
    %c0_190 = arith.constant 0 : index
    %c0_191 = arith.constant 0 : index
    %516 = vector.load %arg14[%c3_189, %c0_190, %c0_191] : memref<8x2x32xf32, #tpu.memory_space<vmem>>, vector<1x2x32xf32>
    %517 = vector.shape_cast %516 : vector<1x2x32xf32> to vector<2x32xf32>
    %518 = vector.shape_cast %515 : vector<2x32xf32> to vector<1x2x32xf32>
    tpu.vector_store %arg14[%c3_189, %c0_190, %c0_191], %518 {strides = array<i32>} : memref<8x2x32xf32, #tpu.memory_space<vmem>>, vector<1x2x32xf32>,
    %c3_192 = arith.constant 3 : index
    %c0_193 = arith.constant 0 : index
    %c0_194 = arith.constant 0 : index
    %519 = vector.load %arg1[%c3_192, %c0_193, %c0_194] : memref<8x2x64xbf16, #tpu.memory_space<vmem>>, vector<1x2x64xbf16>
    %520 = vector.shape_cast %519 : vector<1x2x64xbf16> to vector<2x64xbf16>
    %c0_195 = arith.constant 0 : index
    %c0_196 = arith.constant 0 : index
    %521 = vector.load %arg8[%c0_195, %c0_196] : memref<64x128xbf16, #tpu.memory_space<vmem>>, vector<64x128xbf16>
    %cst_197 = arith.constant dense<0.000000e+00> : vector<2x128xf32>
    %522 = tpu.matmul %520, %521, %cst_197 {dimension_numbers = #tpu.dot_dimension_numbers<[1], [0], [0], [1], [0, 0, 1, 1], [], []>} : vector<2x64xbf16>, vector<64x128xbf16>, vector<2x128xf32> -> vector<2x128xf32>
    %523 = arith.truncf %406 : vector<2x32xf32> to vector<2x32xbf16>
    %c0_198 = arith.constant 0 : index
    %c0_199 = arith.constant 0 : index
    %524 = vector.load %arg9[%c0_198, %c0_199] : memref<32x128xbf16, #tpu.memory_space<vmem>>, vector<32x128xbf16>
    %cst_200 = arith.constant dense<0.000000e+00> : vector<2x128xf32>
    %525 = tpu.matmul %523, %524, %cst_200 {dimension_numbers = #tpu.dot_dimension_numbers<[1], [0], [0], [1], [0, 0, 1, 1], [], []>} : vector<2x32xbf16>, vector<32x128xbf16>, vector<2x128xf32> -> vector<2x128xf32>
    %526 = arith.addf %522, %525 : vector<2x128xf32>
    %c0_201 = arith.constant 0 : index
    %c0_202 = arith.constant 0 : index
    %527 = vector.load %arg10[%c0_201, %c0_202] : memref<1x128xf32, #tpu.memory_space<vmem>>, vector<1x128xf32>
    %528 = vector.broadcast %527 : vector<1x128xf32> to vector<2x128xf32>
    %529 = arith.addf %526, %528 : vector<2x128xf32>
    %530 = vector.extract_strided_slice %529 {offsets = [0, 0], sizes = [2, 32], strides = [1, 1]} : vector<2x128xf32> to vector<2x32xf32>
    %531 = arith.negf %530 : vector<2x32xf32>
    %532 = math.exp %531 : vector<2x32xf32>
    %cst_203 = arith.constant 1.000000e+00 : f32
    %533 = vector.broadcast %cst_203 : f32 to vector<2x32xf32>
    %534 = arith.addf %533, %532 : vector<2x32xf32>
    %535 = arith.divf %533, %534 : vector<2x32xf32>
    %536 = vector.extract_strided_slice %529 {offsets = [0, 32], sizes = [2, 32], strides = [1, 1]} : vector<2x128xf32> to vector<2x32xf32>
    %537 = arith.negf %536 : vector<2x32xf32>
    %538 = math.exp %537 : vector<2x32xf32>
    %cst_204 = arith.constant 1.000000e+00 : f32
    %539 = vector.broadcast %cst_204 : f32 to vector<2x32xf32>
    %540 = arith.addf %539, %538 : vector<2x32xf32>
    %541 = arith.divf %539, %540 : vector<2x32xf32>
    %542 = vector.extract_strided_slice %529 {offsets = [0, 64], sizes = [2, 32], strides = [1, 1]} : vector<2x128xf32> to vector<2x32xf32>
    %543 = math.tanh %542 : vector<2x32xf32>
    %544 = vector.extract_strided_slice %529 {offsets = [0, 96], sizes = [2, 32], strides = [1, 1]} : vector<2x128xf32> to vector<2x32xf32>
    %545 = arith.negf %544 : vector<2x32xf32>
    %546 = math.exp %545 : vector<2x32xf32>
    %cst_205 = arith.constant 1.000000e+00 : f32
    %547 = vector.broadcast %cst_205 : f32 to vector<2x32xf32>
    %548 = arith.addf %547, %546 : vector<2x32xf32>
    %549 = arith.divf %547, %548 : vector<2x32xf32>
    %550 = arith.mulf %541, %404 : vector<2x32xf32>
    %551 = arith.mulf %535, %543 : vector<2x32xf32>
    %552 = arith.addf %550, %551 : vector<2x32xf32>
    %553 = math.tanh %552 : vector<2x32xf32>
    %554 = arith.mulf %549, %553 : vector<2x32xf32>
    %555 = arith.truncf %554 : vector<2x32xf32> to vector<2x32xbf16>
    %c0_206 = arith.constant 0 : index
    %c0_207 = arith.constant 0 : index
    %556 = vector.load %arg11[%c0_206, %c0_207] : memref<32x128xbf16, #tpu.memory_space<vmem>>, vector<32x128xbf16>
    %cst_208 = arith.constant dense<0.000000e+00> : vector<2x128xf32>
    %557 = tpu.matmul %555, %556, %cst_208 {dimension_numbers = #tpu.dot_dimension_numbers<[1], [0], [0], [1], [0, 0, 1, 1], [], []>} : vector<2x32xbf16>, vector<32x128xbf16>, vector<2x128xf32> -> vector<2x128xf32>
    %558 = arith.truncf %441 : vector<2x32xf32> to vector<2x32xbf16>
    %c0_209 = arith.constant 0 : index
    %c0_210 = arith.constant 0 : index
    %559 = vector.load %arg12[%c0_209, %c0_210] : memref<32x128xbf16, #tpu.memory_space<vmem>>, vector<32x128xbf16>
    %cst_211 = arith.constant dense<0.000000e+00> : vector<2x128xf32>
    %560 = tpu.matmul %558, %559, %cst_211 {dimension_numbers = #tpu.dot_dimension_numbers<[1], [0], [0], [1], [0, 0, 1, 1], [], []>} : vector<2x32xbf16>, vector<32x128xbf16>, vector<2x128xf32> -> vector<2x128xf32>
    %561 = arith.addf %557, %560 : vector<2x128xf32>
    %c0_212 = arith.constant 0 : index
    %c0_213 = arith.constant 0 : index
    %562 = vector.load %arg13[%c0_212, %c0_213] : memref<1x128xf32, #tpu.memory_space<vmem>>, vector<1x128xf32>
    %563 = vector.broadcast %562 : vector<1x128xf32> to vector<2x128xf32>
    %564 = arith.addf %561, %563 : vector<2x128xf32>
    %565 = vector.extract_strided_slice %564 {offsets = [0, 0], sizes = [2, 32], strides = [1, 1]} : vector<2x128xf32> to vector<2x32xf32>
    %566 = arith.negf %565 : vector<2x32xf32>
    %567 = math.exp %566 : vector<2x32xf32>
    %cst_214 = arith.constant 1.000000e+00 : f32
    %568 = vector.broadcast %cst_214 : f32 to vector<2x32xf32>
    %569 = arith.addf %568, %567 : vector<2x32xf32>
    %570 = arith.divf %568, %569 : vector<2x32xf32>
    %571 = vector.extract_strided_slice %564 {offsets = [0, 32], sizes = [2, 32], strides = [1, 1]} : vector<2x128xf32> to vector<2x32xf32>
    %572 = arith.negf %571 : vector<2x32xf32>
    %573 = math.exp %572 : vector<2x32xf32>
    %cst_215 = arith.constant 1.000000e+00 : f32
    %574 = vector.broadcast %cst_215 : f32 to vector<2x32xf32>
    %575 = arith.addf %574, %573 : vector<2x32xf32>
    %576 = arith.divf %574, %575 : vector<2x32xf32>
    %577 = vector.extract_strided_slice %564 {offsets = [0, 64], sizes = [2, 32], strides = [1, 1]} : vector<2x128xf32> to vector<2x32xf32>
    %578 = math.tanh %577 : vector<2x32xf32>
    %579 = vector.extract_strided_slice %564 {offsets = [0, 96], sizes = [2, 32], strides = [1, 1]} : vector<2x128xf32> to vector<2x32xf32>
    %580 = arith.negf %579 : vector<2x32xf32>
    %581 = math.exp %580 : vector<2x32xf32>
    %cst_216 = arith.constant 1.000000e+00 : f32
    %582 = vector.broadcast %cst_216 : f32 to vector<2x32xf32>
    %583 = arith.addf %582, %581 : vector<2x32xf32>
    %584 = arith.divf %582, %583 : vector<2x32xf32>
    %585 = arith.mulf %576, %439 : vector<2x32xf32>
    %586 = arith.mulf %570, %578 : vector<2x32xf32>
    %587 = arith.addf %585, %586 : vector<2x32xf32>
    %588 = math.tanh %587 : vector<2x32xf32>
    %589 = arith.mulf %584, %588 : vector<2x32xf32>
    %c3_217 = arith.constant 3 : index
    %c0_218 = arith.constant 0 : index
    %c0_219 = arith.constant 0 : index
    %590 = vector.load %arg15[%c3_217, %c0_218, %c0_219] : memref<8x2x32xf32, #tpu.memory_space<vmem>>, vector<1x2x32xf32>
    %591 = vector.shape_cast %590 : vector<1x2x32xf32> to vector<2x32xf32>
    %592 = vector.shape_cast %589 : vector<2x32xf32> to vector<1x2x32xf32>
    tpu.vector_store %arg15[%c3_217, %c0_218, %c0_219], %592 {strides = array<i32>} : memref<8x2x32xf32, #tpu.memory_space<vmem>>, vector<1x2x32xf32>,
    %c4 = arith.constant 4 : index
    %c0_220 = arith.constant 0 : index
    %c0_221 = arith.constant 0 : index
    %593 = vector.load %arg0[%c4, %c0_220, %c0_221] : memref<8x2x64xbf16, #tpu.memory_space<vmem>>, vector<1x2x64xbf16>
    %594 = vector.shape_cast %593 : vector<1x2x64xbf16> to vector<2x64xbf16>
    %c0_222 = arith.constant 0 : index
    %c0_223 = arith.constant 0 : index
    %595 = vector.load %arg2[%c0_222, %c0_223] : memref<64x128xbf16, #tpu.memory_space<vmem>>, vector<64x128xbf16>
    %cst_224 = arith.constant dense<0.000000e+00> : vector<2x128xf32>
    %596 = tpu.matmul %594, %595, %cst_224 {dimension_numbers = #tpu.dot_dimension_numbers<[1], [0], [0], [1], [0, 0, 1, 1], [], []>} : vector<2x64xbf16>, vector<64x128xbf16>, vector<2x128xf32> -> vector<2x128xf32>
    %597 = arith.truncf %480 : vector<2x32xf32> to vector<2x32xbf16>
    %c0_225 = arith.constant 0 : index
    %c0_226 = arith.constant 0 : index
    %598 = vector.load %arg3[%c0_225, %c0_226] : memref<32x128xbf16, #tpu.memory_space<vmem>>, vector<32x128xbf16>
    %cst_227 = arith.constant dense<0.000000e+00> : vector<2x128xf32>
    %599 = tpu.matmul %597, %598, %cst_227 {dimension_numbers = #tpu.dot_dimension_numbers<[1], [0], [0], [1], [0, 0, 1, 1], [], []>} : vector<2x32xbf16>, vector<32x128xbf16>, vector<2x128xf32> -> vector<2x128xf32>
    %600 = arith.addf %596, %599 : vector<2x128xf32>
    %c0_228 = arith.constant 0 : index
    %c0_229 = arith.constant 0 : index
    %601 = vector.load %arg4[%c0_228, %c0_229] : memref<1x128xf32, #tpu.memory_space<vmem>>, vector<1x128xf32>
    %602 = vector.broadcast %601 : vector<1x128xf32> to vector<2x128xf32>
    %603 = arith.addf %600, %602 : vector<2x128xf32>
    %604 = vector.extract_strided_slice %603 {offsets = [0, 0], sizes = [2, 32], strides = [1, 1]} : vector<2x128xf32> to vector<2x32xf32>
    %605 = arith.negf %604 : vector<2x32xf32>
    %606 = math.exp %605 : vector<2x32xf32>
    %cst_230 = arith.constant 1.000000e+00 : f32
    %607 = vector.broadcast %cst_230 : f32 to vector<2x32xf32>
    %608 = arith.addf %607, %606 : vector<2x32xf32>
    %609 = arith.divf %607, %608 : vector<2x32xf32>
    %610 = vector.extract_strided_slice %603 {offsets = [0, 32], sizes = [2, 32], strides = [1, 1]} : vector<2x128xf32> to vector<2x32xf32>
    %611 = arith.negf %610 : vector<2x32xf32>
    %612 = math.exp %611 : vector<2x32xf32>
    %cst_231 = arith.constant 1.000000e+00 : f32
    %613 = vector.broadcast %cst_231 : f32 to vector<2x32xf32>
    %614 = arith.addf %613, %612 : vector<2x32xf32>
    %615 = arith.divf %613, %614 : vector<2x32xf32>
    %616 = vector.extract_strided_slice %603 {offsets = [0, 64], sizes = [2, 32], strides = [1, 1]} : vector<2x128xf32> to vector<2x32xf32>
    %617 = math.tanh %616 : vector<2x32xf32>
    %618 = vector.extract_strided_slice %603 {offsets = [0, 96], sizes = [2, 32], strides = [1, 1]} : vector<2x128xf32> to vector<2x32xf32>
    %619 = arith.negf %618 : vector<2x32xf32>
    %620 = math.exp %619 : vector<2x32xf32>
    %cst_232 = arith.constant 1.000000e+00 : f32
    %621 = vector.broadcast %cst_232 : f32 to vector<2x32xf32>
    %622 = arith.addf %621, %620 : vector<2x32xf32>
    %623 = arith.divf %621, %622 : vector<2x32xf32>
    %624 = arith.mulf %615, %478 : vector<2x32xf32>
    %625 = arith.mulf %609, %617 : vector<2x32xf32>
    %626 = arith.addf %624, %625 : vector<2x32xf32>
    %627 = math.tanh %626 : vector<2x32xf32>
    %628 = arith.mulf %623, %627 : vector<2x32xf32>
    %629 = arith.truncf %628 : vector<2x32xf32> to vector<2x32xbf16>
    %c0_233 = arith.constant 0 : index
    %c0_234 = arith.constant 0 : index
    %630 = vector.load %arg5[%c0_233, %c0_234] : memref<32x128xbf16, #tpu.memory_space<vmem>>, vector<32x128xbf16>
    %cst_235 = arith.constant dense<0.000000e+00> : vector<2x128xf32>
    %631 = tpu.matmul %629, %630, %cst_235 {dimension_numbers = #tpu.dot_dimension_numbers<[1], [0], [0], [1], [0, 0, 1, 1], [], []>} : vector<2x32xbf16>, vector<32x128xbf16>, vector<2x128xf32> -> vector<2x128xf32>
    %632 = arith.truncf %515 : vector<2x32xf32> to vector<2x32xbf16>
    %c0_236 = arith.constant 0 : index
    %c0_237 = arith.constant 0 : index
    %633 = vector.load %arg6[%c0_236, %c0_237] : memref<32x128xbf16, #tpu.memory_space<vmem>>, vector<32x128xbf16>
    %cst_238 = arith.constant dense<0.000000e+00> : vector<2x128xf32>
    %634 = tpu.matmul %632, %633, %cst_238 {dimension_numbers = #tpu.dot_dimension_numbers<[1], [0], [0], [1], [0, 0, 1, 1], [], []>} : vector<2x32xbf16>, vector<32x128xbf16>, vector<2x128xf32> -> vector<2x128xf32>
    %635 = arith.addf %631, %634 : vector<2x128xf32>
    %c0_239 = arith.constant 0 : index
    %c0_240 = arith.constant 0 : index
    %636 = vector.load %arg7[%c0_239, %c0_240] : memref<1x128xf32, #tpu.memory_space<vmem>>, vector<1x128xf32>
    %637 = vector.broadcast %636 : vector<1x128xf32> to vector<2x128xf32>
    %638 = arith.addf %635, %637 : vector<2x128xf32>
    %639 = vector.extract_strided_slice %638 {offsets = [0, 0], sizes = [2, 32], strides = [1, 1]} : vector<2x128xf32> to vector<2x32xf32>
    %640 = arith.negf %639 : vector<2x32xf32>
    %641 = math.exp %640 : vector<2x32xf32>
    %cst_241 = arith.constant 1.000000e+00 : f32
    %642 = vector.broadcast %cst_241 : f32 to vector<2x32xf32>
    %643 = arith.addf %642, %641 : vector<2x32xf32>
    %644 = arith.divf %642, %643 : vector<2x32xf32>
    %645 = vector.extract_strided_slice %638 {offsets = [0, 32], sizes = [2, 32], strides = [1, 1]} : vector<2x128xf32> to vector<2x32xf32>
    %646 = arith.negf %645 : vector<2x32xf32>
    %647 = math.exp %646 : vector<2x32xf32>
    %cst_242 = arith.constant 1.000000e+00 : f32
    %648 = vector.broadcast %cst_242 : f32 to vector<2x32xf32>
    %649 = arith.addf %648, %647 : vector<2x32xf32>
    %650 = arith.divf %648, %649 : vector<2x32xf32>
    %651 = vector.extract_strided_slice %638 {offsets = [0, 64], sizes = [2, 32], strides = [1, 1]} : vector<2x128xf32> to vector<2x32xf32>
    %652 = math.tanh %651 : vector<2x32xf32>
    %653 = vector.extract_strided_slice %638 {offsets = [0, 96], sizes = [2, 32], strides = [1, 1]} : vector<2x128xf32> to vector<2x32xf32>
    %654 = arith.negf %653 : vector<2x32xf32>
    %655 = math.exp %654 : vector<2x32xf32>
    %cst_243 = arith.constant 1.000000e+00 : f32
    %656 = vector.broadcast %cst_243 : f32 to vector<2x32xf32>
    %657 = arith.addf %656, %655 : vector<2x32xf32>
    %658 = arith.divf %656, %657 : vector<2x32xf32>
    %659 = arith.mulf %650, %513 : vector<2x32xf32>
    %660 = arith.mulf %644, %652 : vector<2x32xf32>
    %661 = arith.addf %659, %660 : vector<2x32xf32>
    %662 = math.tanh %661 : vector<2x32xf32>
    %663 = arith.mulf %658, %662 : vector<2x32xf32>
    %c4_244 = arith.constant 4 : index
    %c0_245 = arith.constant 0 : index
    %c0_246 = arith.constant 0 : index
    %664 = vector.load %arg14[%c4_244, %c0_245, %c0_246] : memref<8x2x32xf32, #tpu.memory_space<vmem>>, vector<1x2x32xf32>
    %665 = vector.shape_cast %664 : vector<1x2x32xf32> to vector<2x32xf32>
    %666 = vector.shape_cast %663 : vector<2x32xf32> to vector<1x2x32xf32>
    tpu.vector_store %arg14[%c4_244, %c0_245, %c0_246], %666 {strides = array<i32>} : memref<8x2x32xf32, #tpu.memory_space<vmem>>, vector<1x2x32xf32>,
    %c4_247 = arith.constant 4 : index
    %c0_248 = arith.constant 0 : index
    %c0_249 = arith.constant 0 : index
    %667 = vector.load %arg1[%c4_247, %c0_248, %c0_249] : memref<8x2x64xbf16, #tpu.memory_space<vmem>>, vector<1x2x64xbf16>
    %668 = vector.shape_cast %667 : vector<1x2x64xbf16> to vector<2x64xbf16>
    %c0_250 = arith.constant 0 : index
    %c0_251 = arith.constant 0 : index
    %669 = vector.load %arg8[%c0_250, %c0_251] : memref<64x128xbf16, #tpu.memory_space<vmem>>, vector<64x128xbf16>
    %cst_252 = arith.constant dense<0.000000e+00> : vector<2x128xf32>
    %670 = tpu.matmul %668, %669, %cst_252 {dimension_numbers = #tpu.dot_dimension_numbers<[1], [0], [0], [1], [0, 0, 1, 1], [], []>} : vector<2x64xbf16>, vector<64x128xbf16>, vector<2x128xf32> -> vector<2x128xf32>
    %671 = arith.truncf %554 : vector<2x32xf32> to vector<2x32xbf16>
    %c0_253 = arith.constant 0 : index
    %c0_254 = arith.constant 0 : index
    %672 = vector.load %arg9[%c0_253, %c0_254] : memref<32x128xbf16, #tpu.memory_space<vmem>>, vector<32x128xbf16>
    %cst_255 = arith.constant dense<0.000000e+00> : vector<2x128xf32>
    %673 = tpu.matmul %671, %672, %cst_255 {dimension_numbers = #tpu.dot_dimension_numbers<[1], [0], [0], [1], [0, 0, 1, 1], [], []>} : vector<2x32xbf16>, vector<32x128xbf16>, vector<2x128xf32> -> vector<2x128xf32>
    %674 = arith.addf %670, %673 : vector<2x128xf32>
    %c0_256 = arith.constant 0 : index
    %c0_257 = arith.constant 0 : index
    %675 = vector.load %arg10[%c0_256, %c0_257] : memref<1x128xf32, #tpu.memory_space<vmem>>, vector<1x128xf32>
    %676 = vector.broadcast %675 : vector<1x128xf32> to vector<2x128xf32>
    %677 = arith.addf %674, %676 : vector<2x128xf32>
    %678 = vector.extract_strided_slice %677 {offsets = [0, 0], sizes = [2, 32], strides = [1, 1]} : vector<2x128xf32> to vector<2x32xf32>
    %679 = arith.negf %678 : vector<2x32xf32>
    %680 = math.exp %679 : vector<2x32xf32>
    %cst_258 = arith.constant 1.000000e+00 : f32
    %681 = vector.broadcast %cst_258 : f32 to vector<2x32xf32>
    %682 = arith.addf %681, %680 : vector<2x32xf32>
    %683 = arith.divf %681, %682 : vector<2x32xf32>
    %684 = vector.extract_strided_slice %677 {offsets = [0, 32], sizes = [2, 32], strides = [1, 1]} : vector<2x128xf32> to vector<2x32xf32>
    %685 = arith.negf %684 : vector<2x32xf32>
    %686 = math.exp %685 : vector<2x32xf32>
    %cst_259 = arith.constant 1.000000e+00 : f32
    %687 = vector.broadcast %cst_259 : f32 to vector<2x32xf32>
    %688 = arith.addf %687, %686 : vector<2x32xf32>
    %689 = arith.divf %687, %688 : vector<2x32xf32>
    %690 = vector.extract_strided_slice %677 {offsets = [0, 64], sizes = [2, 32], strides = [1, 1]} : vector<2x128xf32> to vector<2x32xf32>
    %691 = math.tanh %690 : vector<2x32xf32>
    %692 = vector.extract_strided_slice %677 {offsets = [0, 96], sizes = [2, 32], strides = [1, 1]} : vector<2x128xf32> to vector<2x32xf32>
    %693 = arith.negf %692 : vector<2x32xf32>
    %694 = math.exp %693 : vector<2x32xf32>
    %cst_260 = arith.constant 1.000000e+00 : f32
    %695 = vector.broadcast %cst_260 : f32 to vector<2x32xf32>
    %696 = arith.addf %695, %694 : vector<2x32xf32>
    %697 = arith.divf %695, %696 : vector<2x32xf32>
    %698 = arith.mulf %689, %552 : vector<2x32xf32>
    %699 = arith.mulf %683, %691 : vector<2x32xf32>
    %700 = arith.addf %698, %699 : vector<2x32xf32>
    %701 = math.tanh %700 : vector<2x32xf32>
    %702 = arith.mulf %697, %701 : vector<2x32xf32>
    %703 = arith.truncf %702 : vector<2x32xf32> to vector<2x32xbf16>
    %c0_261 = arith.constant 0 : index
    %c0_262 = arith.constant 0 : index
    %704 = vector.load %arg11[%c0_261, %c0_262] : memref<32x128xbf16, #tpu.memory_space<vmem>>, vector<32x128xbf16>
    %cst_263 = arith.constant dense<0.000000e+00> : vector<2x128xf32>
    %705 = tpu.matmul %703, %704, %cst_263 {dimension_numbers = #tpu.dot_dimension_numbers<[1], [0], [0], [1], [0, 0, 1, 1], [], []>} : vector<2x32xbf16>, vector<32x128xbf16>, vector<2x128xf32> -> vector<2x128xf32>
    %706 = arith.truncf %589 : vector<2x32xf32> to vector<2x32xbf16>
    %c0_264 = arith.constant 0 : index
    %c0_265 = arith.constant 0 : index
    %707 = vector.load %arg12[%c0_264, %c0_265] : memref<32x128xbf16, #tpu.memory_space<vmem>>, vector<32x128xbf16>
    %cst_266 = arith.constant dense<0.000000e+00> : vector<2x128xf32>
    %708 = tpu.matmul %706, %707, %cst_266 {dimension_numbers = #tpu.dot_dimension_numbers<[1], [0], [0], [1], [0, 0, 1, 1], [], []>} : vector<2x32xbf16>, vector<32x128xbf16>, vector<2x128xf32> -> vector<2x128xf32>
    %709 = arith.addf %705, %708 : vector<2x128xf32>
    %c0_267 = arith.constant 0 : index
    %c0_268 = arith.constant 0 : index
    %710 = vector.load %arg13[%c0_267, %c0_268] : memref<1x128xf32, #tpu.memory_space<vmem>>, vector<1x128xf32>
    %711 = vector.broadcast %710 : vector<1x128xf32> to vector<2x128xf32>
    %712 = arith.addf %709, %711 : vector<2x128xf32>
    %713 = vector.extract_strided_slice %712 {offsets = [0, 0], sizes = [2, 32], strides = [1, 1]} : vector<2x128xf32> to vector<2x32xf32>
    %714 = arith.negf %713 : vector<2x32xf32>
    %715 = math.exp %714 : vector<2x32xf32>
    %cst_269 = arith.constant 1.000000e+00 : f32
    %716 = vector.broadcast %cst_269 : f32 to vector<2x32xf32>
    %717 = arith.addf %716, %715 : vector<2x32xf32>
    %718 = arith.divf %716, %717 : vector<2x32xf32>
    %719 = vector.extract_strided_slice %712 {offsets = [0, 32], sizes = [2, 32], strides = [1, 1]} : vector<2x128xf32> to vector<2x32xf32>
    %720 = arith.negf %719 : vector<2x32xf32>
    %721 = math.exp %720 : vector<2x32xf32>
    %cst_270 = arith.constant 1.000000e+00 : f32
    %722 = vector.broadcast %cst_270 : f32 to vector<2x32xf32>
    %723 = arith.addf %722, %721 : vector<2x32xf32>
    %724 = arith.divf %722, %723 : vector<2x32xf32>
    %725 = vector.extract_strided_slice %712 {offsets = [0, 64], sizes = [2, 32], strides = [1, 1]} : vector<2x128xf32> to vector<2x32xf32>
    %726 = math.tanh %725 : vector<2x32xf32>
    %727 = vector.extract_strided_slice %712 {offsets = [0, 96], sizes = [2, 32], strides = [1, 1]} : vector<2x128xf32> to vector<2x32xf32>
    %728 = arith.negf %727 : vector<2x32xf32>
    %729 = math.exp %728 : vector<2x32xf32>
    %cst_271 = arith.constant 1.000000e+00 : f32
    %730 = vector.broadcast %cst_271 : f32 to vector<2x32xf32>
    %731 = arith.addf %730, %729 : vector<2x32xf32>
    %732 = arith.divf %730, %731 : vector<2x32xf32>
    %733 = arith.mulf %724, %587 : vector<2x32xf32>
    %734 = arith.mulf %718, %726 : vector<2x32xf32>
    %735 = arith.addf %733, %734 : vector<2x32xf32>
    %736 = math.tanh %735 : vector<2x32xf32>
    %737 = arith.mulf %732, %736 : vector<2x32xf32>
    %c4_272 = arith.constant 4 : index
    %c0_273 = arith.constant 0 : index
    %c0_274 = arith.constant 0 : index
    %738 = vector.load %arg15[%c4_272, %c0_273, %c0_274] : memref<8x2x32xf32, #tpu.memory_space<vmem>>, vector<1x2x32xf32>
    %739 = vector.shape_cast %738 : vector<1x2x32xf32> to vector<2x32xf32>
    %740 = vector.shape_cast %737 : vector<2x32xf32> to vector<1x2x32xf32>
    tpu.vector_store %arg15[%c4_272, %c0_273, %c0_274], %740 {strides = array<i32>} : memref<8x2x32xf32, #tpu.memory_space<vmem>>, vector<1x2x32xf32>,
    %c5 = arith.constant 5 : index
    %c0_275 = arith.constant 0 : index
    %c0_276 = arith.constant 0 : index
    %741 = vector.load %arg0[%c5, %c0_275, %c0_276] : memref<8x2x64xbf16, #tpu.memory_space<vmem>>, vector<1x2x64xbf16>
    %742 = vector.shape_cast %741 : vector<1x2x64xbf16> to vector<2x64xbf16>
    %c0_277 = arith.constant 0 : index
    %c0_278 = arith.constant 0 : index
    %743 = vector.load %arg2[%c0_277, %c0_278] : memref<64x128xbf16, #tpu.memory_space<vmem>>, vector<64x128xbf16>
    %cst_279 = arith.constant dense<0.000000e+00> : vector<2x128xf32>
    %744 = tpu.matmul %742, %743, %cst_279 {dimension_numbers = #tpu.dot_dimension_numbers<[1], [0], [0], [1], [0, 0, 1, 1], [], []>} : vector<2x64xbf16>, vector<64x128xbf16>, vector<2x128xf32> -> vector<2x128xf32>
    %745 = arith.truncf %628 : vector<2x32xf32> to vector<2x32xbf16>
    %c0_280 = arith.constant 0 : index
    %c0_281 = arith.constant 0 : index
    %746 = vector.load %arg3[%c0_280, %c0_281] : memref<32x128xbf16, #tpu.memory_space<vmem>>, vector<32x128xbf16>
    %cst_282 = arith.constant dense<0.000000e+00> : vector<2x128xf32>
    %747 = tpu.matmul %745, %746, %cst_282 {dimension_numbers = #tpu.dot_dimension_numbers<[1], [0], [0], [1], [0, 0, 1, 1], [], []>} : vector<2x32xbf16>, vector<32x128xbf16>, vector<2x128xf32> -> vector<2x128xf32>
    %748 = arith.addf %744, %747 : vector<2x128xf32>
    %c0_283 = arith.constant 0 : index
    %c0_284 = arith.constant 0 : index
    %749 = vector.load %arg4[%c0_283, %c0_284] : memref<1x128xf32, #tpu.memory_space<vmem>>, vector<1x128xf32>
    %750 = vector.broadcast %749 : vector<1x128xf32> to vector<2x128xf32>
    %751 = arith.addf %748, %750 : vector<2x128xf32>
    %752 = vector.extract_strided_slice %751 {offsets = [0, 0], sizes = [2, 32], strides = [1, 1]} : vector<2x128xf32> to vector<2x32xf32>
    %753 = arith.negf %752 : vector<2x32xf32>
    %754 = math.exp %753 : vector<2x32xf32>
    %cst_285 = arith.constant 1.000000e+00 : f32
    %755 = vector.broadcast %cst_285 : f32 to vector<2x32xf32>
    %756 = arith.addf %755, %754 : vector<2x32xf32>
    %757 = arith.divf %755, %756 : vector<2x32xf32>
    %758 = vector.extract_strided_slice %751 {offsets = [0, 32], sizes = [2, 32], strides = [1, 1]} : vector<2x128xf32> to vector<2x32xf32>
    %759 = arith.negf %758 : vector<2x32xf32>
    %760 = math.exp %759 : vector<2x32xf32>
    %cst_286 = arith.constant 1.000000e+00 : f32
    %761 = vector.broadcast %cst_286 : f32 to vector<2x32xf32>
    %762 = arith.addf %761, %760 : vector<2x32xf32>
    %763 = arith.divf %761, %762 : vector<2x32xf32>
    %764 = vector.extract_strided_slice %751 {offsets = [0, 64], sizes = [2, 32], strides = [1, 1]} : vector<2x128xf32> to vector<2x32xf32>
    %765 = math.tanh %764 : vector<2x32xf32>
    %766 = vector.extract_strided_slice %751 {offsets = [0, 96], sizes = [2, 32], strides = [1, 1]} : vector<2x128xf32> to vector<2x32xf32>
    %767 = arith.negf %766 : vector<2x32xf32>
    %768 = math.exp %767 : vector<2x32xf32>
    %cst_287 = arith.constant 1.000000e+00 : f32
    %769 = vector.broadcast %cst_287 : f32 to vector<2x32xf32>
    %770 = arith.addf %769, %768 : vector<2x32xf32>
    %771 = arith.divf %769, %770 : vector<2x32xf32>
    %772 = arith.mulf %763, %626 : vector<2x32xf32>
    %773 = arith.mulf %757, %765 : vector<2x32xf32>
    %774 = arith.addf %772, %773 : vector<2x32xf32>
    %775 = math.tanh %774 : vector<2x32xf32>
    %776 = arith.mulf %771, %775 : vector<2x32xf32>
    %777 = arith.truncf %776 : vector<2x32xf32> to vector<2x32xbf16>
    %c0_288 = arith.constant 0 : index
    %c0_289 = arith.constant 0 : index
    %778 = vector.load %arg5[%c0_288, %c0_289] : memref<32x128xbf16, #tpu.memory_space<vmem>>, vector<32x128xbf16>
    %cst_290 = arith.constant dense<0.000000e+00> : vector<2x128xf32>
    %779 = tpu.matmul %777, %778, %cst_290 {dimension_numbers = #tpu.dot_dimension_numbers<[1], [0], [0], [1], [0, 0, 1, 1], [], []>} : vector<2x32xbf16>, vector<32x128xbf16>, vector<2x128xf32> -> vector<2x128xf32>
    %780 = arith.truncf %663 : vector<2x32xf32> to vector<2x32xbf16>
    %c0_291 = arith.constant 0 : index
    %c0_292 = arith.constant 0 : index
    %781 = vector.load %arg6[%c0_291, %c0_292] : memref<32x128xbf16, #tpu.memory_space<vmem>>, vector<32x128xbf16>
    %cst_293 = arith.constant dense<0.000000e+00> : vector<2x128xf32>
    %782 = tpu.matmul %780, %781, %cst_293 {dimension_numbers = #tpu.dot_dimension_numbers<[1], [0], [0], [1], [0, 0, 1, 1], [], []>} : vector<2x32xbf16>, vector<32x128xbf16>, vector<2x128xf32> -> vector<2x128xf32>
    %783 = arith.addf %779, %782 : vector<2x128xf32>
    %c0_294 = arith.constant 0 : index
    %c0_295 = arith.constant 0 : index
    %784 = vector.load %arg7[%c0_294, %c0_295] : memref<1x128xf32, #tpu.memory_space<vmem>>, vector<1x128xf32>
    %785 = vector.broadcast %784 : vector<1x128xf32> to vector<2x128xf32>
    %786 = arith.addf %783, %785 : vector<2x128xf32>
    %787 = vector.extract_strided_slice %786 {offsets = [0, 0], sizes = [2, 32], strides = [1, 1]} : vector<2x128xf32> to vector<2x32xf32>
    %788 = arith.negf %787 : vector<2x32xf32>
    %789 = math.exp %788 : vector<2x32xf32>
    %cst_296 = arith.constant 1.000000e+00 : f32
    %790 = vector.broadcast %cst_296 : f32 to vector<2x32xf32>
    %791 = arith.addf %790, %789 : vector<2x32xf32>
    %792 = arith.divf %790, %791 : vector<2x32xf32>
    %793 = vector.extract_strided_slice %786 {offsets = [0, 32], sizes = [2, 32], strides = [1, 1]} : vector<2x128xf32> to vector<2x32xf32>
    %794 = arith.negf %793 : vector<2x32xf32>
    %795 = math.exp %794 : vector<2x32xf32>
    %cst_297 = arith.constant 1.000000e+00 : f32
    %796 = vector.broadcast %cst_297 : f32 to vector<2x32xf32>
    %797 = arith.addf %796, %795 : vector<2x32xf32>
    %798 = arith.divf %796, %797 : vector<2x32xf32>
    %799 = vector.extract_strided_slice %786 {offsets = [0, 64], sizes = [2, 32], strides = [1, 1]} : vector<2x128xf32> to vector<2x32xf32>
    %800 = math.tanh %799 : vector<2x32xf32>
    %801 = vector.extract_strided_slice %786 {offsets = [0, 96], sizes = [2, 32], strides = [1, 1]} : vector<2x128xf32> to vector<2x32xf32>
    %802 = arith.negf %801 : vector<2x32xf32>
    %803 = math.exp %802 : vector<2x32xf32>
    %cst_298 = arith.constant 1.000000e+00 : f32
    %804 = vector.broadcast %cst_298 : f32 to vector<2x32xf32>
    %805 = arith.addf %804, %803 : vector<2x32xf32>
    %806 = arith.divf %804, %805 : vector<2x32xf32>
    %807 = arith.mulf %798, %661 : vector<2x32xf32>
    %808 = arith.mulf %792, %800 : vector<2x32xf32>
    %809 = arith.addf %807, %808 : vector<2x32xf32>
    %810 = math.tanh %809 : vector<2x32xf32>
    %811 = arith.mulf %806, %810 : vector<2x32xf32>
    %c5_299 = arith.constant 5 : index
    %c0_300 = arith.constant 0 : index
    %c0_301 = arith.constant 0 : index
    %812 = vector.load %arg14[%c5_299, %c0_300, %c0_301] : memref<8x2x32xf32, #tpu.memory_space<vmem>>, vector<1x2x32xf32>
    %813 = vector.shape_cast %812 : vector<1x2x32xf32> to vector<2x32xf32>
    %814 = vector.shape_cast %811 : vector<2x32xf32> to vector<1x2x32xf32>
    tpu.vector_store %arg14[%c5_299, %c0_300, %c0_301], %814 {strides = array<i32>} : memref<8x2x32xf32, #tpu.memory_space<vmem>>, vector<1x2x32xf32>,
    %c5_302 = arith.constant 5 : index
    %c0_303 = arith.constant 0 : index
    %c0_304 = arith.constant 0 : index
    %815 = vector.load %arg1[%c5_302, %c0_303, %c0_304] : memref<8x2x64xbf16, #tpu.memory_space<vmem>>, vector<1x2x64xbf16>
    %816 = vector.shape_cast %815 : vector<1x2x64xbf16> to vector<2x64xbf16>
    %c0_305 = arith.constant 0 : index
    %c0_306 = arith.constant 0 : index
    %817 = vector.load %arg8[%c0_305, %c0_306] : memref<64x128xbf16, #tpu.memory_space<vmem>>, vector<64x128xbf16>
    %cst_307 = arith.constant dense<0.000000e+00> : vector<2x128xf32>
    %818 = tpu.matmul %816, %817, %cst_307 {dimension_numbers = #tpu.dot_dimension_numbers<[1], [0], [0], [1], [0, 0, 1, 1], [], []>} : vector<2x64xbf16>, vector<64x128xbf16>, vector<2x128xf32> -> vector<2x128xf32>
    %819 = arith.truncf %702 : vector<2x32xf32> to vector<2x32xbf16>
    %c0_308 = arith.constant 0 : index
    %c0_309 = arith.constant 0 : index
    %820 = vector.load %arg9[%c0_308, %c0_309] : memref<32x128xbf16, #tpu.memory_space<vmem>>, vector<32x128xbf16>
    %cst_310 = arith.constant dense<0.000000e+00> : vector<2x128xf32>
    %821 = tpu.matmul %819, %820, %cst_310 {dimension_numbers = #tpu.dot_dimension_numbers<[1], [0], [0], [1], [0, 0, 1, 1], [], []>} : vector<2x32xbf16>, vector<32x128xbf16>, vector<2x128xf32> -> vector<2x128xf32>
    %822 = arith.addf %818, %821 : vector<2x128xf32>
    %c0_311 = arith.constant 0 : index
    %c0_312 = arith.constant 0 : index
    %823 = vector.load %arg10[%c0_311, %c0_312] : memref<1x128xf32, #tpu.memory_space<vmem>>, vector<1x128xf32>
    %824 = vector.broadcast %823 : vector<1x128xf32> to vector<2x128xf32>
    %825 = arith.addf %822, %824 : vector<2x128xf32>
    %826 = vector.extract_strided_slice %825 {offsets = [0, 0], sizes = [2, 32], strides = [1, 1]} : vector<2x128xf32> to vector<2x32xf32>
    %827 = arith.negf %826 : vector<2x32xf32>
    %828 = math.exp %827 : vector<2x32xf32>
    %cst_313 = arith.constant 1.000000e+00 : f32
    %829 = vector.broadcast %cst_313 : f32 to vector<2x32xf32>
    %830 = arith.addf %829, %828 : vector<2x32xf32>
    %831 = arith.divf %829, %830 : vector<2x32xf32>
    %832 = vector.extract_strided_slice %825 {offsets = [0, 32], sizes = [2, 32], strides = [1, 1]} : vector<2x128xf32> to vector<2x32xf32>
    %833 = arith.negf %832 : vector<2x32xf32>
    %834 = math.exp %833 : vector<2x32xf32>
    %cst_314 = arith.constant 1.000000e+00 : f32
    %835 = vector.broadcast %cst_314 : f32 to vector<2x32xf32>
    %836 = arith.addf %835, %834 : vector<2x32xf32>
    %837 = arith.divf %835, %836 : vector<2x32xf32>
    %838 = vector.extract_strided_slice %825 {offsets = [0, 64], sizes = [2, 32], strides = [1, 1]} : vector<2x128xf32> to vector<2x32xf32>
    %839 = math.tanh %838 : vector<2x32xf32>
    %840 = vector.extract_strided_slice %825 {offsets = [0, 96], sizes = [2, 32], strides = [1, 1]} : vector<2x128xf32> to vector<2x32xf32>
    %841 = arith.negf %840 : vector<2x32xf32>
    %842 = math.exp %841 : vector<2x32xf32>
    %cst_315 = arith.constant 1.000000e+00 : f32
    %843 = vector.broadcast %cst_315 : f32 to vector<2x32xf32>
    %844 = arith.addf %843, %842 : vector<2x32xf32>
    %845 = arith.divf %843, %844 : vector<2x32xf32>
    %846 = arith.mulf %837, %700 : vector<2x32xf32>
    %847 = arith.mulf %831, %839 : vector<2x32xf32>
    %848 = arith.addf %846, %847 : vector<2x32xf32>
    %849 = math.tanh %848 : vector<2x32xf32>
    %850 = arith.mulf %845, %849 : vector<2x32xf32>
    %851 = arith.truncf %850 : vector<2x32xf32> to vector<2x32xbf16>
    %c0_316 = arith.constant 0 : index
    %c0_317 = arith.constant 0 : index
    %852 = vector.load %arg11[%c0_316, %c0_317] : memref<32x128xbf16, #tpu.memory_space<vmem>>, vector<32x128xbf16>
    %cst_318 = arith.constant dense<0.000000e+00> : vector<2x128xf32>
    %853 = tpu.matmul %851, %852, %cst_318 {dimension_numbers = #tpu.dot_dimension_numbers<[1], [0], [0], [1], [0, 0, 1, 1], [], []>} : vector<2x32xbf16>, vector<32x128xbf16>, vector<2x128xf32> -> vector<2x128xf32>
    %854 = arith.truncf %737 : vector<2x32xf32> to vector<2x32xbf16>
    %c0_319 = arith.constant 0 : index
    %c0_320 = arith.constant 0 : index
    %855 = vector.load %arg12[%c0_319, %c0_320] : memref<32x128xbf16, #tpu.memory_space<vmem>>, vector<32x128xbf16>
    %cst_321 = arith.constant dense<0.000000e+00> : vector<2x128xf32>
    %856 = tpu.matmul %854, %855, %cst_321 {dimension_numbers = #tpu.dot_dimension_numbers<[1], [0], [0], [1], [0, 0, 1, 1], [], []>} : vector<2x32xbf16>, vector<32x128xbf16>, vector<2x128xf32> -> vector<2x128xf32>
    %857 = arith.addf %853, %856 : vector<2x128xf32>
    %c0_322 = arith.constant 0 : index
    %c0_323 = arith.constant 0 : index
    %858 = vector.load %arg13[%c0_322, %c0_323] : memref<1x128xf32, #tpu.memory_space<vmem>>, vector<1x128xf32>
    %859 = vector.broadcast %858 : vector<1x128xf32> to vector<2x128xf32>
    %860 = arith.addf %857, %859 : vector<2x128xf32>
    %861 = vector.extract_strided_slice %860 {offsets = [0, 0], sizes = [2, 32], strides = [1, 1]} : vector<2x128xf32> to vector<2x32xf32>
    %862 = arith.negf %861 : vector<2x32xf32>
    %863 = math.exp %862 : vector<2x32xf32>
    %cst_324 = arith.constant 1.000000e+00 : f32
    %864 = vector.broadcast %cst_324 : f32 to vector<2x32xf32>
    %865 = arith.addf %864, %863 : vector<2x32xf32>
    %866 = arith.divf %864, %865 : vector<2x32xf32>
    %867 = vector.extract_strided_slice %860 {offsets = [0, 32], sizes = [2, 32], strides = [1, 1]} : vector<2x128xf32> to vector<2x32xf32>
    %868 = arith.negf %867 : vector<2x32xf32>
    %869 = math.exp %868 : vector<2x32xf32>
    %cst_325 = arith.constant 1.000000e+00 : f32
    %870 = vector.broadcast %cst_325 : f32 to vector<2x32xf32>
    %871 = arith.addf %870, %869 : vector<2x32xf32>
    %872 = arith.divf %870, %871 : vector<2x32xf32>
    %873 = vector.extract_strided_slice %860 {offsets = [0, 64], sizes = [2, 32], strides = [1, 1]} : vector<2x128xf32> to vector<2x32xf32>
    %874 = math.tanh %873 : vector<2x32xf32>
    %875 = vector.extract_strided_slice %860 {offsets = [0, 96], sizes = [2, 32], strides = [1, 1]} : vector<2x128xf32> to vector<2x32xf32>
    %876 = arith.negf %875 : vector<2x32xf32>
    %877 = math.exp %876 : vector<2x32xf32>
    %cst_326 = arith.constant 1.000000e+00 : f32
    %878 = vector.broadcast %cst_326 : f32 to vector<2x32xf32>
    %879 = arith.addf %878, %877 : vector<2x32xf32>
    %880 = arith.divf %878, %879 : vector<2x32xf32>
    %881 = arith.mulf %872, %735 : vector<2x32xf32>
    %882 = arith.mulf %866, %874 : vector<2x32xf32>
    %883 = arith.addf %881, %882 : vector<2x32xf32>
    %884 = math.tanh %883 : vector<2x32xf32>
    %885 = arith.mulf %880, %884 : vector<2x32xf32>
    %c5_327 = arith.constant 5 : index
    %c0_328 = arith.constant 0 : index
    %c0_329 = arith.constant 0 : index
    %886 = vector.load %arg15[%c5_327, %c0_328, %c0_329] : memref<8x2x32xf32, #tpu.memory_space<vmem>>, vector<1x2x32xf32>
    %887 = vector.shape_cast %886 : vector<1x2x32xf32> to vector<2x32xf32>
    %888 = vector.shape_cast %885 : vector<2x32xf32> to vector<1x2x32xf32>
    tpu.vector_store %arg15[%c5_327, %c0_328, %c0_329], %888 {strides = array<i32>} : memref<8x2x32xf32, #tpu.memory_space<vmem>>, vector<1x2x32xf32>,
    %c6 = arith.constant 6 : index
    %c0_330 = arith.constant 0 : index
    %c0_331 = arith.constant 0 : index
    %889 = vector.load %arg0[%c6, %c0_330, %c0_331] : memref<8x2x64xbf16, #tpu.memory_space<vmem>>, vector<1x2x64xbf16>
    %890 = vector.shape_cast %889 : vector<1x2x64xbf16> to vector<2x64xbf16>
    %c0_332 = arith.constant 0 : index
    %c0_333 = arith.constant 0 : index
    %891 = vector.load %arg2[%c0_332, %c0_333] : memref<64x128xbf16, #tpu.memory_space<vmem>>, vector<64x128xbf16>
    %cst_334 = arith.constant dense<0.000000e+00> : vector<2x128xf32>
    %892 = tpu.matmul %890, %891, %cst_334 {dimension_numbers = #tpu.dot_dimension_numbers<[1], [0], [0], [1], [0, 0, 1, 1], [], []>} : vector<2x64xbf16>, vector<64x128xbf16>, vector<2x128xf32> -> vector<2x128xf32>
    %893 = arith.truncf %776 : vector<2x32xf32> to vector<2x32xbf16>
    %c0_335 = arith.constant 0 : index
    %c0_336 = arith.constant 0 : index
    %894 = vector.load %arg3[%c0_335, %c0_336] : memref<32x128xbf16, #tpu.memory_space<vmem>>, vector<32x128xbf16>
    %cst_337 = arith.constant dense<0.000000e+00> : vector<2x128xf32>
    %895 = tpu.matmul %893, %894, %cst_337 {dimension_numbers = #tpu.dot_dimension_numbers<[1], [0], [0], [1], [0, 0, 1, 1], [], []>} : vector<2x32xbf16>, vector<32x128xbf16>, vector<2x128xf32> -> vector<2x128xf32>
    %896 = arith.addf %892, %895 : vector<2x128xf32>
    %c0_338 = arith.constant 0 : index
    %c0_339 = arith.constant 0 : index
    %897 = vector.load %arg4[%c0_338, %c0_339] : memref<1x128xf32, #tpu.memory_space<vmem>>, vector<1x128xf32>
    %898 = vector.broadcast %897 : vector<1x128xf32> to vector<2x128xf32>
    %899 = arith.addf %896, %898 : vector<2x128xf32>
    %900 = vector.extract_strided_slice %899 {offsets = [0, 0], sizes = [2, 32], strides = [1, 1]} : vector<2x128xf32> to vector<2x32xf32>
    %901 = arith.negf %900 : vector<2x32xf32>
    %902 = math.exp %901 : vector<2x32xf32>
    %cst_340 = arith.constant 1.000000e+00 : f32
    %903 = vector.broadcast %cst_340 : f32 to vector<2x32xf32>
    %904 = arith.addf %903, %902 : vector<2x32xf32>
    %905 = arith.divf %903, %904 : vector<2x32xf32>
    %906 = vector.extract_strided_slice %899 {offsets = [0, 32], sizes = [2, 32], strides = [1, 1]} : vector<2x128xf32> to vector<2x32xf32>
    %907 = arith.negf %906 : vector<2x32xf32>
    %908 = math.exp %907 : vector<2x32xf32>
    %cst_341 = arith.constant 1.000000e+00 : f32
    %909 = vector.broadcast %cst_341 : f32 to vector<2x32xf32>
    %910 = arith.addf %909, %908 : vector<2x32xf32>
    %911 = arith.divf %909, %910 : vector<2x32xf32>
    %912 = vector.extract_strided_slice %899 {offsets = [0, 64], sizes = [2, 32], strides = [1, 1]} : vector<2x128xf32> to vector<2x32xf32>
    %913 = math.tanh %912 : vector<2x32xf32>
    %914 = vector.extract_strided_slice %899 {offsets = [0, 96], sizes = [2, 32], strides = [1, 1]} : vector<2x128xf32> to vector<2x32xf32>
    %915 = arith.negf %914 : vector<2x32xf32>
    %916 = math.exp %915 : vector<2x32xf32>
    %cst_342 = arith.constant 1.000000e+00 : f32
    %917 = vector.broadcast %cst_342 : f32 to vector<2x32xf32>
    %918 = arith.addf %917, %916 : vector<2x32xf32>
    %919 = arith.divf %917, %918 : vector<2x32xf32>
    %920 = arith.mulf %911, %774 : vector<2x32xf32>
    %921 = arith.mulf %905, %913 : vector<2x32xf32>
    %922 = arith.addf %920, %921 : vector<2x32xf32>
    %923 = math.tanh %922 : vector<2x32xf32>
    %924 = arith.mulf %919, %923 : vector<2x32xf32>
    %925 = arith.truncf %924 : vector<2x32xf32> to vector<2x32xbf16>
    %c0_343 = arith.constant 0 : index
    %c0_344 = arith.constant 0 : index
    %926 = vector.load %arg5[%c0_343, %c0_344] : memref<32x128xbf16, #tpu.memory_space<vmem>>, vector<32x128xbf16>
    %cst_345 = arith.constant dense<0.000000e+00> : vector<2x128xf32>
    %927 = tpu.matmul %925, %926, %cst_345 {dimension_numbers = #tpu.dot_dimension_numbers<[1], [0], [0], [1], [0, 0, 1, 1], [], []>} : vector<2x32xbf16>, vector<32x128xbf16>, vector<2x128xf32> -> vector<2x128xf32>
    %928 = arith.truncf %811 : vector<2x32xf32> to vector<2x32xbf16>
    %c0_346 = arith.constant 0 : index
    %c0_347 = arith.constant 0 : index
    %929 = vector.load %arg6[%c0_346, %c0_347] : memref<32x128xbf16, #tpu.memory_space<vmem>>, vector<32x128xbf16>
    %cst_348 = arith.constant dense<0.000000e+00> : vector<2x128xf32>
    %930 = tpu.matmul %928, %929, %cst_348 {dimension_numbers = #tpu.dot_dimension_numbers<[1], [0], [0], [1], [0, 0, 1, 1], [], []>} : vector<2x32xbf16>, vector<32x128xbf16>, vector<2x128xf32> -> vector<2x128xf32>
    %931 = arith.addf %927, %930 : vector<2x128xf32>
    %c0_349 = arith.constant 0 : index
    %c0_350 = arith.constant 0 : index
    %932 = vector.load %arg7[%c0_349, %c0_350] : memref<1x128xf32, #tpu.memory_space<vmem>>, vector<1x128xf32>
    %933 = vector.broadcast %932 : vector<1x128xf32> to vector<2x128xf32>
    %934 = arith.addf %931, %933 : vector<2x128xf32>
    %935 = vector.extract_strided_slice %934 {offsets = [0, 0], sizes = [2, 32], strides = [1, 1]} : vector<2x128xf32> to vector<2x32xf32>
    %936 = arith.negf %935 : vector<2x32xf32>
    %937 = math.exp %936 : vector<2x32xf32>
    %cst_351 = arith.constant 1.000000e+00 : f32
    %938 = vector.broadcast %cst_351 : f32 to vector<2x32xf32>
    %939 = arith.addf %938, %937 : vector<2x32xf32>
    %940 = arith.divf %938, %939 : vector<2x32xf32>
    %941 = vector.extract_strided_slice %934 {offsets = [0, 32], sizes = [2, 32], strides = [1, 1]} : vector<2x128xf32> to vector<2x32xf32>
    %942 = arith.negf %941 : vector<2x32xf32>
    %943 = math.exp %942 : vector<2x32xf32>
    %cst_352 = arith.constant 1.000000e+00 : f32
    %944 = vector.broadcast %cst_352 : f32 to vector<2x32xf32>
    %945 = arith.addf %944, %943 : vector<2x32xf32>
    %946 = arith.divf %944, %945 : vector<2x32xf32>
    %947 = vector.extract_strided_slice %934 {offsets = [0, 64], sizes = [2, 32], strides = [1, 1]} : vector<2x128xf32> to vector<2x32xf32>
    %948 = math.tanh %947 : vector<2x32xf32>
    %949 = vector.extract_strided_slice %934 {offsets = [0, 96], sizes = [2, 32], strides = [1, 1]} : vector<2x128xf32> to vector<2x32xf32>
    %950 = arith.negf %949 : vector<2x32xf32>
    %951 = math.exp %950 : vector<2x32xf32>
    %cst_353 = arith.constant 1.000000e+00 : f32
    %952 = vector.broadcast %cst_353 : f32 to vector<2x32xf32>
    %953 = arith.addf %952, %951 : vector<2x32xf32>
    %954 = arith.divf %952, %953 : vector<2x32xf32>
    %955 = arith.mulf %946, %809 : vector<2x32xf32>
    %956 = arith.mulf %940, %948 : vector<2x32xf32>
    %957 = arith.addf %955, %956 : vector<2x32xf32>
    %958 = math.tanh %957 : vector<2x32xf32>
    %959 = arith.mulf %954, %958 : vector<2x32xf32>
    %c6_354 = arith.constant 6 : index
    %c0_355 = arith.constant 0 : index
    %c0_356 = arith.constant 0 : index
    %960 = vector.load %arg14[%c6_354, %c0_355, %c0_356] : memref<8x2x32xf32, #tpu.memory_space<vmem>>, vector<1x2x32xf32>
    %961 = vector.shape_cast %960 : vector<1x2x32xf32> to vector<2x32xf32>
    %962 = vector.shape_cast %959 : vector<2x32xf32> to vector<1x2x32xf32>
    tpu.vector_store %arg14[%c6_354, %c0_355, %c0_356], %962 {strides = array<i32>} : memref<8x2x32xf32, #tpu.memory_space<vmem>>, vector<1x2x32xf32>,
    %c6_357 = arith.constant 6 : index
    %c0_358 = arith.constant 0 : index
    %c0_359 = arith.constant 0 : index
    %963 = vector.load %arg1[%c6_357, %c0_358, %c0_359] : memref<8x2x64xbf16, #tpu.memory_space<vmem>>, vector<1x2x64xbf16>
    %964 = vector.shape_cast %963 : vector<1x2x64xbf16> to vector<2x64xbf16>
    %c0_360 = arith.constant 0 : index
    %c0_361 = arith.constant 0 : index
    %965 = vector.load %arg8[%c0_360, %c0_361] : memref<64x128xbf16, #tpu.memory_space<vmem>>, vector<64x128xbf16>
    %cst_362 = arith.constant dense<0.000000e+00> : vector<2x128xf32>
    %966 = tpu.matmul %964, %965, %cst_362 {dimension_numbers = #tpu.dot_dimension_numbers<[1], [0], [0], [1], [0, 0, 1, 1], [], []>} : vector<2x64xbf16>, vector<64x128xbf16>, vector<2x128xf32> -> vector<2x128xf32>
    %967 = arith.truncf %850 : vector<2x32xf32> to vector<2x32xbf16>
    %c0_363 = arith.constant 0 : index
    %c0_364 = arith.constant 0 : index
    %968 = vector.load %arg9[%c0_363, %c0_364] : memref<32x128xbf16, #tpu.memory_space<vmem>>, vector<32x128xbf16>
    %cst_365 = arith.constant dense<0.000000e+00> : vector<2x128xf32>
    %969 = tpu.matmul %967, %968, %cst_365 {dimension_numbers = #tpu.dot_dimension_numbers<[1], [0], [0], [1], [0, 0, 1, 1], [], []>} : vector<2x32xbf16>, vector<32x128xbf16>, vector<2x128xf32> -> vector<2x128xf32>
    %970 = arith.addf %966, %969 : vector<2x128xf32>
    %c0_366 = arith.constant 0 : index
    %c0_367 = arith.constant 0 : index
    %971 = vector.load %arg10[%c0_366, %c0_367] : memref<1x128xf32, #tpu.memory_space<vmem>>, vector<1x128xf32>
    %972 = vector.broadcast %971 : vector<1x128xf32> to vector<2x128xf32>
    %973 = arith.addf %970, %972 : vector<2x128xf32>
    %974 = vector.extract_strided_slice %973 {offsets = [0, 0], sizes = [2, 32], strides = [1, 1]} : vector<2x128xf32> to vector<2x32xf32>
    %975 = arith.negf %974 : vector<2x32xf32>
    %976 = math.exp %975 : vector<2x32xf32>
    %cst_368 = arith.constant 1.000000e+00 : f32
    %977 = vector.broadcast %cst_368 : f32 to vector<2x32xf32>
    %978 = arith.addf %977, %976 : vector<2x32xf32>
    %979 = arith.divf %977, %978 : vector<2x32xf32>
    %980 = vector.extract_strided_slice %973 {offsets = [0, 32], sizes = [2, 32], strides = [1, 1]} : vector<2x128xf32> to vector<2x32xf32>
    %981 = arith.negf %980 : vector<2x32xf32>
    %982 = math.exp %981 : vector<2x32xf32>
    %cst_369 = arith.constant 1.000000e+00 : f32
    %983 = vector.broadcast %cst_369 : f32 to vector<2x32xf32>
    %984 = arith.addf %983, %982 : vector<2x32xf32>
    %985 = arith.divf %983, %984 : vector<2x32xf32>
    %986 = vector.extract_strided_slice %973 {offsets = [0, 64], sizes = [2, 32], strides = [1, 1]} : vector<2x128xf32> to vector<2x32xf32>
    %987 = math.tanh %986 : vector<2x32xf32>
    %988 = vector.extract_strided_slice %973 {offsets = [0, 96], sizes = [2, 32], strides = [1, 1]} : vector<2x128xf32> to vector<2x32xf32>
    %989 = arith.negf %988 : vector<2x32xf32>
    %990 = math.exp %989 : vector<2x32xf32>
    %cst_370 = arith.constant 1.000000e+00 : f32
    %991 = vector.broadcast %cst_370 : f32 to vector<2x32xf32>
    %992 = arith.addf %991, %990 : vector<2x32xf32>
    %993 = arith.divf %991, %992 : vector<2x32xf32>
    %994 = arith.mulf %985, %848 : vector<2x32xf32>
    %995 = arith.mulf %979, %987 : vector<2x32xf32>
    %996 = arith.addf %994, %995 : vector<2x32xf32>
    %997 = math.tanh %996 : vector<2x32xf32>
    %998 = arith.mulf %993, %997 : vector<2x32xf32>
    %999 = arith.truncf %998 : vector<2x32xf32> to vector<2x32xbf16>
    %c0_371 = arith.constant 0 : index
    %c0_372 = arith.constant 0 : index
    %1000 = vector.load %arg11[%c0_371, %c0_372] : memref<32x128xbf16, #tpu.memory_space<vmem>>, vector<32x128xbf16>
    %cst_373 = arith.constant dense<0.000000e+00> : vector<2x128xf32>
    %1001 = tpu.matmul %999, %1000, %cst_373 {dimension_numbers = #tpu.dot_dimension_numbers<[1], [0], [0], [1], [0, 0, 1, 1], [], []>} : vector<2x32xbf16>, vector<32x128xbf16>, vector<2x128xf32> -> vector<2x128xf32>
    %1002 = arith.truncf %885 : vector<2x32xf32> to vector<2x32xbf16>
    %c0_374 = arith.constant 0 : index
    %c0_375 = arith.constant 0 : index
    %1003 = vector.load %arg12[%c0_374, %c0_375] : memref<32x128xbf16, #tpu.memory_space<vmem>>, vector<32x128xbf16>
    %cst_376 = arith.constant dense<0.000000e+00> : vector<2x128xf32>
    %1004 = tpu.matmul %1002, %1003, %cst_376 {dimension_numbers = #tpu.dot_dimension_numbers<[1], [0], [0], [1], [0, 0, 1, 1], [], []>} : vector<2x32xbf16>, vector<32x128xbf16>, vector<2x128xf32> -> vector<2x128xf32>
    %1005 = arith.addf %1001, %1004 : vector<2x128xf32>
    %c0_377 = arith.constant 0 : index
    %c0_378 = arith.constant 0 : index
    %1006 = vector.load %arg13[%c0_377, %c0_378] : memref<1x128xf32, #tpu.memory_space<vmem>>, vector<1x128xf32>
    %1007 = vector.broadcast %1006 : vector<1x128xf32> to vector<2x128xf32>
    %1008 = arith.addf %1005, %1007 : vector<2x128xf32>
    %1009 = vector.extract_strided_slice %1008 {offsets = [0, 0], sizes = [2, 32], strides = [1, 1]} : vector<2x128xf32> to vector<2x32xf32>
    %1010 = arith.negf %1009 : vector<2x32xf32>
    %1011 = math.exp %1010 : vector<2x32xf32>
    %cst_379 = arith.constant 1.000000e+00 : f32
    %1012 = vector.broadcast %cst_379 : f32 to vector<2x32xf32>
    %1013 = arith.addf %1012, %1011 : vector<2x32xf32>
    %1014 = arith.divf %1012, %1013 : vector<2x32xf32>
    %1015 = vector.extract_strided_slice %1008 {offsets = [0, 32], sizes = [2, 32], strides = [1, 1]} : vector<2x128xf32> to vector<2x32xf32>
    %1016 = arith.negf %1015 : vector<2x32xf32>
    %1017 = math.exp %1016 : vector<2x32xf32>
    %cst_380 = arith.constant 1.000000e+00 : f32
    %1018 = vector.broadcast %cst_380 : f32 to vector<2x32xf32>
    %1019 = arith.addf %1018, %1017 : vector<2x32xf32>
    %1020 = arith.divf %1018, %1019 : vector<2x32xf32>
    %1021 = vector.extract_strided_slice %1008 {offsets = [0, 64], sizes = [2, 32], strides = [1, 1]} : vector<2x128xf32> to vector<2x32xf32>
    %1022 = math.tanh %1021 : vector<2x32xf32>
    %1023 = vector.extract_strided_slice %1008 {offsets = [0, 96], sizes = [2, 32], strides = [1, 1]} : vector<2x128xf32> to vector<2x32xf32>
    %1024 = arith.negf %1023 : vector<2x32xf32>
    %1025 = math.exp %1024 : vector<2x32xf32>
    %cst_381 = arith.constant 1.000000e+00 : f32
    %1026 = vector.broadcast %cst_381 : f32 to vector<2x32xf32>
    %1027 = arith.addf %1026, %1025 : vector<2x32xf32>
    %1028 = arith.divf %1026, %1027 : vector<2x32xf32>
    %1029 = arith.mulf %1020, %883 : vector<2x32xf32>
    %1030 = arith.mulf %1014, %1022 : vector<2x32xf32>
    %1031 = arith.addf %1029, %1030 : vector<2x32xf32>
    %1032 = math.tanh %1031 : vector<2x32xf32>
    %1033 = arith.mulf %1028, %1032 : vector<2x32xf32>
    %c6_382 = arith.constant 6 : index
    %c0_383 = arith.constant 0 : index
    %c0_384 = arith.constant 0 : index
    %1034 = vector.load %arg15[%c6_382, %c0_383, %c0_384] : memref<8x2x32xf32, #tpu.memory_space<vmem>>, vector<1x2x32xf32>
    %1035 = vector.shape_cast %1034 : vector<1x2x32xf32> to vector<2x32xf32>
    %1036 = vector.shape_cast %1033 : vector<2x32xf32> to vector<1x2x32xf32>
    tpu.vector_store %arg15[%c6_382, %c0_383, %c0_384], %1036 {strides = array<i32>} : memref<8x2x32xf32, #tpu.memory_space<vmem>>, vector<1x2x32xf32>,
    %c7 = arith.constant 7 : index
    %c0_385 = arith.constant 0 : index
    %c0_386 = arith.constant 0 : index
    %1037 = vector.load %arg0[%c7, %c0_385, %c0_386] : memref<8x2x64xbf16, #tpu.memory_space<vmem>>, vector<1x2x64xbf16>
    %1038 = vector.shape_cast %1037 : vector<1x2x64xbf16> to vector<2x64xbf16>
    %c0_387 = arith.constant 0 : index
    %c0_388 = arith.constant 0 : index
    %1039 = vector.load %arg2[%c0_387, %c0_388] : memref<64x128xbf16, #tpu.memory_space<vmem>>, vector<64x128xbf16>
    %cst_389 = arith.constant dense<0.000000e+00> : vector<2x128xf32>
    %1040 = tpu.matmul %1038, %1039, %cst_389 {dimension_numbers = #tpu.dot_dimension_numbers<[1], [0], [0], [1], [0, 0, 1, 1], [], []>} : vector<2x64xbf16>, vector<64x128xbf16>, vector<2x128xf32> -> vector<2x128xf32>
    %1041 = arith.truncf %924 : vector<2x32xf32> to vector<2x32xbf16>
    %c0_390 = arith.constant 0 : index
    %c0_391 = arith.constant 0 : index
    %1042 = vector.load %arg3[%c0_390, %c0_391] : memref<32x128xbf16, #tpu.memory_space<vmem>>, vector<32x128xbf16>
    %cst_392 = arith.constant dense<0.000000e+00> : vector<2x128xf32>
    %1043 = tpu.matmul %1041, %1042, %cst_392 {dimension_numbers = #tpu.dot_dimension_numbers<[1], [0], [0], [1], [0, 0, 1, 1], [], []>} : vector<2x32xbf16>, vector<32x128xbf16>, vector<2x128xf32> -> vector<2x128xf32>
    %1044 = arith.addf %1040, %1043 : vector<2x128xf32>
    %c0_393 = arith.constant 0 : index
    %c0_394 = arith.constant 0 : index
    %1045 = vector.load %arg4[%c0_393, %c0_394] : memref<1x128xf32, #tpu.memory_space<vmem>>, vector<1x128xf32>
    %1046 = vector.broadcast %1045 : vector<1x128xf32> to vector<2x128xf32>
    %1047 = arith.addf %1044, %1046 : vector<2x128xf32>
    %1048 = vector.extract_strided_slice %1047 {offsets = [0, 0], sizes = [2, 32], strides = [1, 1]} : vector<2x128xf32> to vector<2x32xf32>
    %1049 = arith.negf %1048 : vector<2x32xf32>
    %1050 = math.exp %1049 : vector<2x32xf32>
    %cst_395 = arith.constant 1.000000e+00 : f32
    %1051 = vector.broadcast %cst_395 : f32 to vector<2x32xf32>
    %1052 = arith.addf %1051, %1050 : vector<2x32xf32>
    %1053 = arith.divf %1051, %1052 : vector<2x32xf32>
    %1054 = vector.extract_strided_slice %1047 {offsets = [0, 32], sizes = [2, 32], strides = [1, 1]} : vector<2x128xf32> to vector<2x32xf32>
    %1055 = arith.negf %1054 : vector<2x32xf32>
    %1056 = math.exp %1055 : vector<2x32xf32>
    %cst_396 = arith.constant 1.000000e+00 : f32
    %1057 = vector.broadcast %cst_396 : f32 to vector<2x32xf32>
    %1058 = arith.addf %1057, %1056 : vector<2x32xf32>
    %1059 = arith.divf %1057, %1058 : vector<2x32xf32>
    %1060 = vector.extract_strided_slice %1047 {offsets = [0, 64], sizes = [2, 32], strides = [1, 1]} : vector<2x128xf32> to vector<2x32xf32>
    %1061 = math.tanh %1060 : vector<2x32xf32>
    %1062 = vector.extract_strided_slice %1047 {offsets = [0, 96], sizes = [2, 32], strides = [1, 1]} : vector<2x128xf32> to vector<2x32xf32>
    %1063 = arith.negf %1062 : vector<2x32xf32>
    %1064 = math.exp %1063 : vector<2x32xf32>
    %cst_397 = arith.constant 1.000000e+00 : f32
    %1065 = vector.broadcast %cst_397 : f32 to vector<2x32xf32>
    %1066 = arith.addf %1065, %1064 : vector<2x32xf32>
    %1067 = arith.divf %1065, %1066 : vector<2x32xf32>
    %1068 = arith.mulf %1059, %922 : vector<2x32xf32>
    %1069 = arith.mulf %1053, %1061 : vector<2x32xf32>
    %1070 = arith.addf %1068, %1069 : vector<2x32xf32>
    %1071 = math.tanh %1070 : vector<2x32xf32>
    %1072 = arith.mulf %1067, %1071 : vector<2x32xf32>
    %1073 = arith.truncf %1072 : vector<2x32xf32> to vector<2x32xbf16>
    %c0_398 = arith.constant 0 : index
    %c0_399 = arith.constant 0 : index
    %1074 = vector.load %arg5[%c0_398, %c0_399] : memref<32x128xbf16, #tpu.memory_space<vmem>>, vector<32x128xbf16>
    %cst_400 = arith.constant dense<0.000000e+00> : vector<2x128xf32>
    %1075 = tpu.matmul %1073, %1074, %cst_400 {dimension_numbers = #tpu.dot_dimension_numbers<[1], [0], [0], [1], [0, 0, 1, 1], [], []>} : vector<2x32xbf16>, vector<32x128xbf16>, vector<2x128xf32> -> vector<2x128xf32>
    %1076 = arith.truncf %959 : vector<2x32xf32> to vector<2x32xbf16>
    %c0_401 = arith.constant 0 : index
    %c0_402 = arith.constant 0 : index
    %1077 = vector.load %arg6[%c0_401, %c0_402] : memref<32x128xbf16, #tpu.memory_space<vmem>>, vector<32x128xbf16>
    %cst_403 = arith.constant dense<0.000000e+00> : vector<2x128xf32>
    %1078 = tpu.matmul %1076, %1077, %cst_403 {dimension_numbers = #tpu.dot_dimension_numbers<[1], [0], [0], [1], [0, 0, 1, 1], [], []>} : vector<2x32xbf16>, vector<32x128xbf16>, vector<2x128xf32> -> vector<2x128xf32>
    %1079 = arith.addf %1075, %1078 : vector<2x128xf32>
    %c0_404 = arith.constant 0 : index
    %c0_405 = arith.constant 0 : index
    %1080 = vector.load %arg7[%c0_404, %c0_405] : memref<1x128xf32, #tpu.memory_space<vmem>>, vector<1x128xf32>
    %1081 = vector.broadcast %1080 : vector<1x128xf32> to vector<2x128xf32>
    %1082 = arith.addf %1079, %1081 : vector<2x128xf32>
    %1083 = vector.extract_strided_slice %1082 {offsets = [0, 0], sizes = [2, 32], strides = [1, 1]} : vector<2x128xf32> to vector<2x32xf32>
    %1084 = arith.negf %1083 : vector<2x32xf32>
    %1085 = math.exp %1084 : vector<2x32xf32>
    %cst_406 = arith.constant 1.000000e+00 : f32
    %1086 = vector.broadcast %cst_406 : f32 to vector<2x32xf32>
    %1087 = arith.addf %1086, %1085 : vector<2x32xf32>
    %1088 = arith.divf %1086, %1087 : vector<2x32xf32>
    %1089 = vector.extract_strided_slice %1082 {offsets = [0, 32], sizes = [2, 32], strides = [1, 1]} : vector<2x128xf32> to vector<2x32xf32>
    %1090 = arith.negf %1089 : vector<2x32xf32>
    %1091 = math.exp %1090 : vector<2x32xf32>
    %cst_407 = arith.constant 1.000000e+00 : f32
    %1092 = vector.broadcast %cst_407 : f32 to vector<2x32xf32>
    %1093 = arith.addf %1092, %1091 : vector<2x32xf32>
    %1094 = arith.divf %1092, %1093 : vector<2x32xf32>
    %1095 = vector.extract_strided_slice %1082 {offsets = [0, 64], sizes = [2, 32], strides = [1, 1]} : vector<2x128xf32> to vector<2x32xf32>
    %1096 = math.tanh %1095 : vector<2x32xf32>
    %1097 = vector.extract_strided_slice %1082 {offsets = [0, 96], sizes = [2, 32], strides = [1, 1]} : vector<2x128xf32> to vector<2x32xf32>
    %1098 = arith.negf %1097 : vector<2x32xf32>
    %1099 = math.exp %1098 : vector<2x32xf32>
    %cst_408 = arith.constant 1.000000e+00 : f32
    %1100 = vector.broadcast %cst_408 : f32 to vector<2x32xf32>
    %1101 = arith.addf %1100, %1099 : vector<2x32xf32>
    %1102 = arith.divf %1100, %1101 : vector<2x32xf32>
    %1103 = arith.mulf %1094, %957 : vector<2x32xf32>
    %1104 = arith.mulf %1088, %1096 : vector<2x32xf32>
    %1105 = arith.addf %1103, %1104 : vector<2x32xf32>
    %1106 = math.tanh %1105 : vector<2x32xf32>
    %1107 = arith.mulf %1102, %1106 : vector<2x32xf32>
    %c7_409 = arith.constant 7 : index
    %c0_410 = arith.constant 0 : index
    %c0_411 = arith.constant 0 : index
    %1108 = vector.load %arg14[%c7_409, %c0_410, %c0_411] : memref<8x2x32xf32, #tpu.memory_space<vmem>>, vector<1x2x32xf32>
    %1109 = vector.shape_cast %1108 : vector<1x2x32xf32> to vector<2x32xf32>
    %1110 = vector.shape_cast %1107 : vector<2x32xf32> to vector<1x2x32xf32>
    tpu.vector_store %arg14[%c7_409, %c0_410, %c0_411], %1110 {strides = array<i32>} : memref<8x2x32xf32, #tpu.memory_space<vmem>>, vector<1x2x32xf32>,
    %c7_412 = arith.constant 7 : index
    %c0_413 = arith.constant 0 : index
    %c0_414 = arith.constant 0 : index
    %1111 = vector.load %arg1[%c7_412, %c0_413, %c0_414] : memref<8x2x64xbf16, #tpu.memory_space<vmem>>, vector<1x2x64xbf16>
    %1112 = vector.shape_cast %1111 : vector<1x2x64xbf16> to vector<2x64xbf16>
    %c0_415 = arith.constant 0 : index
    %c0_416 = arith.constant 0 : index
    %1113 = vector.load %arg8[%c0_415, %c0_416] : memref<64x128xbf16, #tpu.memory_space<vmem>>, vector<64x128xbf16>
    %cst_417 = arith.constant dense<0.000000e+00> : vector<2x128xf32>
    %1114 = tpu.matmul %1112, %1113, %cst_417 {dimension_numbers = #tpu.dot_dimension_numbers<[1], [0], [0], [1], [0, 0, 1, 1], [], []>} : vector<2x64xbf16>, vector<64x128xbf16>, vector<2x128xf32> -> vector<2x128xf32>
    %1115 = arith.truncf %998 : vector<2x32xf32> to vector<2x32xbf16>
    %c0_418 = arith.constant 0 : index
    %c0_419 = arith.constant 0 : index
    %1116 = vector.load %arg9[%c0_418, %c0_419] : memref<32x128xbf16, #tpu.memory_space<vmem>>, vector<32x128xbf16>
    %cst_420 = arith.constant dense<0.000000e+00> : vector<2x128xf32>
    %1117 = tpu.matmul %1115, %1116, %cst_420 {dimension_numbers = #tpu.dot_dimension_numbers<[1], [0], [0], [1], [0, 0, 1, 1], [], []>} : vector<2x32xbf16>, vector<32x128xbf16>, vector<2x128xf32> -> vector<2x128xf32>
    %1118 = arith.addf %1114, %1117 : vector<2x128xf32>
    %c0_421 = arith.constant 0 : index
    %c0_422 = arith.constant 0 : index
    %1119 = vector.load %arg10[%c0_421, %c0_422] : memref<1x128xf32, #tpu.memory_space<vmem>>, vector<1x128xf32>
    %1120 = vector.broadcast %1119 : vector<1x128xf32> to vector<2x128xf32>
    %1121 = arith.addf %1118, %1120 : vector<2x128xf32>
    %1122 = vector.extract_strided_slice %1121 {offsets = [0, 0], sizes = [2, 32], strides = [1, 1]} : vector<2x128xf32> to vector<2x32xf32>
    %1123 = arith.negf %1122 : vector<2x32xf32>
    %1124 = math.exp %1123 : vector<2x32xf32>
    %cst_423 = arith.constant 1.000000e+00 : f32
    %1125 = vector.broadcast %cst_423 : f32 to vector<2x32xf32>
    %1126 = arith.addf %1125, %1124 : vector<2x32xf32>
    %1127 = arith.divf %1125, %1126 : vector<2x32xf32>
    %1128 = vector.extract_strided_slice %1121 {offsets = [0, 32], sizes = [2, 32], strides = [1, 1]} : vector<2x128xf32> to vector<2x32xf32>
    %1129 = arith.negf %1128 : vector<2x32xf32>
    %1130 = math.exp %1129 : vector<2x32xf32>
    %cst_424 = arith.constant 1.000000e+00 : f32
    %1131 = vector.broadcast %cst_424 : f32 to vector<2x32xf32>
    %1132 = arith.addf %1131, %1130 : vector<2x32xf32>
    %1133 = arith.divf %1131, %1132 : vector<2x32xf32>
    %1134 = vector.extract_strided_slice %1121 {offsets = [0, 64], sizes = [2, 32], strides = [1, 1]} : vector<2x128xf32> to vector<2x32xf32>
    %1135 = math.tanh %1134 : vector<2x32xf32>
    %1136 = vector.extract_strided_slice %1121 {offsets = [0, 96], sizes = [2, 32], strides = [1, 1]} : vector<2x128xf32> to vector<2x32xf32>
    %1137 = arith.negf %1136 : vector<2x32xf32>
    %1138 = math.exp %1137 : vector<2x32xf32>
    %cst_425 = arith.constant 1.000000e+00 : f32
    %1139 = vector.broadcast %cst_425 : f32 to vector<2x32xf32>
    %1140 = arith.addf %1139, %1138 : vector<2x32xf32>
    %1141 = arith.divf %1139, %1140 : vector<2x32xf32>
    %1142 = arith.mulf %1133, %996 : vector<2x32xf32>
    %1143 = arith.mulf %1127, %1135 : vector<2x32xf32>
    %1144 = arith.addf %1142, %1143 : vector<2x32xf32>
    %1145 = math.tanh %1144 : vector<2x32xf32>
    %1146 = arith.mulf %1141, %1145 : vector<2x32xf32>
    %1147 = arith.truncf %1146 : vector<2x32xf32> to vector<2x32xbf16>
    %c0_426 = arith.constant 0 : index
    %c0_427 = arith.constant 0 : index
    %1148 = vector.load %arg11[%c0_426, %c0_427] : memref<32x128xbf16, #tpu.memory_space<vmem>>, vector<32x128xbf16>
    %cst_428 = arith.constant dense<0.000000e+00> : vector<2x128xf32>
    %1149 = tpu.matmul %1147, %1148, %cst_428 {dimension_numbers = #tpu.dot_dimension_numbers<[1], [0], [0], [1], [0, 0, 1, 1], [], []>} : vector<2x32xbf16>, vector<32x128xbf16>, vector<2x128xf32> -> vector<2x128xf32>
    %1150 = arith.truncf %1033 : vector<2x32xf32> to vector<2x32xbf16>
    %c0_429 = arith.constant 0 : index
    %c0_430 = arith.constant 0 : index
    %1151 = vector.load %arg12[%c0_429, %c0_430] : memref<32x128xbf16, #tpu.memory_space<vmem>>, vector<32x128xbf16>
    %cst_431 = arith.constant dense<0.000000e+00> : vector<2x128xf32>
    %1152 = tpu.matmul %1150, %1151, %cst_431 {dimension_numbers = #tpu.dot_dimension_numbers<[1], [0], [0], [1], [0, 0, 1, 1], [], []>} : vector<2x32xbf16>, vector<32x128xbf16>, vector<2x128xf32> -> vector<2x128xf32>
    %1153 = arith.addf %1149, %1152 : vector<2x128xf32>
    %c0_432 = arith.constant 0 : index
    %c0_433 = arith.constant 0 : index
    %1154 = vector.load %arg13[%c0_432, %c0_433] : memref<1x128xf32, #tpu.memory_space<vmem>>, vector<1x128xf32>
    %1155 = vector.broadcast %1154 : vector<1x128xf32> to vector<2x128xf32>
    %1156 = arith.addf %1153, %1155 : vector<2x128xf32>
    %1157 = vector.extract_strided_slice %1156 {offsets = [0, 0], sizes = [2, 32], strides = [1, 1]} : vector<2x128xf32> to vector<2x32xf32>
    %1158 = arith.negf %1157 : vector<2x32xf32>
    %1159 = math.exp %1158 : vector<2x32xf32>
    %cst_434 = arith.constant 1.000000e+00 : f32
    %1160 = vector.broadcast %cst_434 : f32 to vector<2x32xf32>
    %1161 = arith.addf %1160, %1159 : vector<2x32xf32>
    %1162 = arith.divf %1160, %1161 : vector<2x32xf32>
    %1163 = vector.extract_strided_slice %1156 {offsets = [0, 32], sizes = [2, 32], strides = [1, 1]} : vector<2x128xf32> to vector<2x32xf32>
    %1164 = arith.negf %1163 : vector<2x32xf32>
    %1165 = math.exp %1164 : vector<2x32xf32>
    %cst_435 = arith.constant 1.000000e+00 : f32
    %1166 = vector.broadcast %cst_435 : f32 to vector<2x32xf32>
    %1167 = arith.addf %1166, %1165 : vector<2x32xf32>
    %1168 = arith.divf %1166, %1167 : vector<2x32xf32>
    %1169 = vector.extract_strided_slice %1156 {offsets = [0, 64], sizes = [2, 32], strides = [1, 1]} : vector<2x128xf32> to vector<2x32xf32>
    %1170 = math.tanh %1169 : vector<2x32xf32>
    %1171 = vector.extract_strided_slice %1156 {offsets = [0, 96], sizes = [2, 32], strides = [1, 1]} : vector<2x128xf32> to vector<2x32xf32>
    %1172 = arith.negf %1171 : vector<2x32xf32>
    %1173 = math.exp %1172 : vector<2x32xf32>
    %cst_436 = arith.constant 1.000000e+00 : f32
    %1174 = vector.broadcast %cst_436 : f32 to vector<2x32xf32>
    %1175 = arith.addf %1174, %1173 : vector<2x32xf32>
    %1176 = arith.divf %1174, %1175 : vector<2x32xf32>
    %1177 = arith.mulf %1168, %1031 : vector<2x32xf32>
    %1178 = arith.mulf %1162, %1170 : vector<2x32xf32>
    %1179 = arith.addf %1177, %1178 : vector<2x32xf32>
    %1180 = math.tanh %1179 : vector<2x32xf32>
    %1181 = arith.mulf %1176, %1180 : vector<2x32xf32>
    %c7_437 = arith.constant 7 : index
    %c0_438 = arith.constant 0 : index
    %c0_439 = arith.constant 0 : index
    %1182 = vector.load %arg15[%c7_437, %c0_438, %c0_439] : memref<8x2x32xf32, #tpu.memory_space<vmem>>, vector<1x2x32xf32>
    %1183 = vector.shape_cast %1182 : vector<1x2x32xf32> to vector<2x32xf32>
    %1184 = vector.shape_cast %1181 : vector<2x32xf32> to vector<1x2x32xf32>
    tpu.vector_store %arg15[%c7_437, %c0_438, %c0_439], %1184 {strides = array<i32>} : memref<8x2x32xf32, #tpu.memory_space<vmem>>, vector<1x2x32xf32>,
    return
  }
}

</mosaic_0001>

<llo_original>
// kernel: video_encoder_memory.1
$region0: #{video_encoder_memory.1}
  #allocation0 [shape = 'u32[]', space=smem, size = 0x4, offset = 0x4, fixed_abs, tag = 'smem constant byte address 0x4 - core index']
  #allocation1 [shape = 'u32[144,128]{1,0:T(1,128)}', space=vmem, size = 0x12000, scoped, tag = 'internal scratch']
  %s0 = inlined_call_operand.vmem [shape: bf16[8,2,64], index: 0, kind: input, shape index: {}]
  %s1 = inlined_call_operand.vmem [shape: bf16[8,2,64], index: 1, kind: input, shape index: {}]
  %s2 = inlined_call_operand.vmem [shape: bf16[64,128], index: 2, kind: input, shape index: {}]
  %s3 = inlined_call_operand.hbm [shape: bf16[32,128], index: 3, kind: input, shape index: {}]
  %s4 = inlined_call_operand.hbm [shape: f32[1,128], index: 4, kind: input, shape index: {}]
  %s5 = inlined_call_operand.hbm [shape: bf16[32,128], index: 5, kind: input, shape index: {}]
  %s6 = inlined_call_operand.hbm [shape: bf16[32,128], index: 6, kind: input, shape index: {}]
  %s7 = inlined_call_operand.hbm [shape: f32[1,128], index: 7, kind: input, shape index: {}]
  %s8 = inlined_call_operand.vmem [shape: bf16[64,128], index: 8, kind: input, shape index: {}]
  %s9 = inlined_call_operand.hbm [shape: bf16[32,128], index: 9, kind: input, shape index: {}]
  %s10 = inlined_call_operand.hbm [shape: f32[1,128], index: 10, kind: input, shape index: {}]
  %s11 = inlined_call_operand.hbm [shape: bf16[32,128], index: 11, kind: input, shape index: {}]
  %s12 = inlined_call_operand.hbm [shape: bf16[32,128], index: 12, kind: input, shape index: {}]
  %s13 = inlined_call_operand.hbm [shape: f32[1,128], index: 13, kind: input, shape index: {}]
  %s14 = inlined_call_operand.vmem [shape: f32[8,2,32], index: 14, kind: output, shape index: {0}]
  %s15 = inlined_call_operand.vmem [shape: f32[8,2,32], index: 15, kind: output, shape index: {1}]
  %16 = xla_tuple %s14, %s15
  %s17 = sld [smem:[#allocation0]]
  $region114: #{video_encoder_memory.1} parent=0
    _
  %s19 = ssub.s32 1, %s17
  %s20 = scalar_select 0, %s19, %s17
  $region1: #{video_encoder_memory.1} parent=0
    #allocation2 [shape = 'u8[8192]{0}', space=vmem, size = 0x2000, scoped, tag = 'input window, operand 3, single buffered']
    #allocation3 [shape = 's32[1]{0}', space=sflag, size = 0x4, scoped, tag = 'scoped memory for video_encoder_memory.1']
    #allocation4 [shape = 'u8[512]{0}', space=vmem, size = 0x400, scoped, tag = 'input window, operand 4, single buffered']
    #allocation5 [shape = 's32[1]{0}', space=sflag, size = 0x4, scoped, tag = 'scoped memory for video_encoder_memory.1']
    #allocation6 [shape = 'u8[8192]{0}', space=vmem, size = 0x2000, scoped, tag = 'input window, operand 5, single buffered']
    #allocation7 [shape = 'u8[8192]{0}', space=vmem, size = 0x2000, scoped, tag = 'input window, operand 6, single buffered']
    #allocation8 [shape = 's32[1]{0}', space=sflag, size = 0x4, scoped, tag = 'scoped memory for video_encoder_memory.1']
    #allocation9 [shape = 'u8[512]{0}', space=vmem, size = 0x400, scoped, tag = 'input window, operand 7, single buffered']
    #allocation10 [shape = 'u8[8192]{0}', space=vmem, size = 0x2000, scoped, tag = 'input window, operand 9, single buffered']
    #allocation11 [shape = 's32[1]{0}', space=sflag, size = 0x4, scoped, tag = 'scoped memory for video_encoder_memory.1']
    #allocation12 [shape = 'u8[512]{0}', space=vmem, size = 0x400, scoped, tag = 'input window, operand 10, single buffered']
    #allocation13 [shape = 'u8[8192]{0}', space=vmem, size = 0x2000, scoped, tag = 'input window, operand 11, single buffered']
    #allocation14 [shape = 's32[1]{0}', space=sflag, size = 0x4, scoped, tag = 'scoped memory for video_encoder_memory.1']
    #allocation15 [shape = 'u8[8192]{0}', space=vmem, size = 0x2000, scoped, tag = 'input window, operand 12, single buffered']
    #allocation16 [shape = 'u8[512]{0}', space=vmem, size = 0x400, scoped, tag = 'input window, operand 13, single buffered']
    #allocation17 [shape = 's32[1]{0}', space=sflag, size = 0x4, scoped, tag = 'scoped memory for video_encoder_memory.1']
    %21 = vsyncpa [#allocation3], 0
    %22 = vsyncpa [#allocation5], 0
    %23 = vsyncpa [#allocation8], 0
    %24 = vsyncpa [#allocation11], 0
    %25 = vsyncpa [#allocation14], 0
    %26 = vsyncpa [#allocation17], 0
    // Predicated region
    $region2: #{video_encoder_memory.1} parent=1 // pred_check
      _
    $region3: #{video_encoder_memory.1} parent=1 // pred_check_branch
      %28 = sbr.rel (0) target = $region5
    $region4: #{video_encoder_memory.1} parent=1 // pred_region
      _
    $region5: #{video_encoder_memory.1} parent=1 // pred_fallthru
      _
    // Predicated region
    $region6: #{video_encoder_memory.1} parent=1 // pred_check
      _
    $region7: #{video_encoder_memory.1} parent=1 // pred_check_branch
      %30 = sbr.rel (0) target = $region9
    $region8: #{video_encoder_memory.1} parent=1 // pred_region
      _
    $region9: #{video_encoder_memory.1} parent=1 // pred_fallthru
      _
    // Predicated region
    $region10: #{video_encoder_memory.1} parent=1 // pred_check
      _
    $region11: #{video_encoder_memory.1} parent=1 // pred_check_branch
      %32 = sbr.rel (0) target = $region13
    $region12: #{video_encoder_memory.1} parent=1 // pred_region
      _
    $region13: #{video_encoder_memory.1} parent=1 // pred_fallthru
      _
    // Predicated region
    $region14: #{video_encoder_memory.1} parent=1 // pred_check
      _
    $region15: #{video_encoder_memory.1} parent=1 // pred_check_branch
      %34 = sbr.rel (0) target = $region17
    $region16: #{video_encoder_memory.1} parent=1 // pred_region
      %s36 = ssub.s32 256, 256
      %37 = vsyncadd [#allocation3], %s36
      %s38 = sshll.u32 [#allocation2], 4
      %s39 = int_to_ptr.vmem [resolvable:$true] %s38
      %44 = dma.hbm_to_vmem [thread:$0]  %s3, 256, %s39, [#allocation3], 64, 64, 4
    $region17: #{video_encoder_memory.1} parent=1 // pred_fallthru
      _
    // Predicated region
    $region18: #{video_encoder_memory.1} parent=1 // pred_check
      _
    $region19: #{video_encoder_memory.1} parent=1 // pred_check_branch
      %46 = sbr.rel (0) target = $region21
    $region20: #{video_encoder_memory.1} parent=1 // pred_region
      %s48 = ssub.s32 16, 16
      %49 = vsyncadd [#allocation5], %s48
      %s51 = sshll.u32 [#allocation4], 4
      %s52 = int_to_ptr.vmem [resolvable:$true] %s51
      %54 = dma.hbm_to_vmem [thread:$0]  %s4, 16, %s52, [#allocation5]
    $region21: #{video_encoder_memory.1} parent=1 // pred_fallthru
      _
    // Predicated region
    $region22: #{video_encoder_memory.1} parent=1 // pred_check
      _
    $region23: #{video_encoder_memory.1} parent=1 // pred_check_branch
      %56 = sbr.rel (0) target = $region25
    $region24: #{video_encoder_memory.1} parent=1 // pred_region
      %s58 = ssub.s32 256, 256
      %59 = vsyncadd [#allocation5], %s58
      %s60 = sshll.u32 [#allocation6], 4
      %s61 = int_to_ptr.vmem [resolvable:$true] %s60
      %66 = dma.hbm_to_vmem [thread:$0]  %s5, 256, %s61, [#allocation5], 64, 64, 4
    $region25: #{video_encoder_memory.1} parent=1 // pred_fallthru
      _
    // Predicated region
    $region26: #{video_encoder_memory.1} parent=1 // pred_check
      _
    $region27: #{video_encoder_memory.1} parent=1 // pred_check_branch
      %68 = sbr.rel (0) target = $region29
    $region28: #{video_encoder_memory.1} parent=1 // pred_region
      %s70 = ssub.s32 256, 256
      %71 = vsyncadd [#allocation8], %s70
      %s72 = sshll.u32 [#allocation7], 4
      %s73 = int_to_ptr.vmem [resolvable:$true] %s72
      %78 = dma.hbm_to_vmem [thread:$0]  %s6, 256, %s73, [#allocation8], 64, 64, 4
    $region29: #{video_encoder_memory.1} parent=1 // pred_fallthru
      _
    // Predicated region
    $region30: #{video_encoder_memory.1} parent=1 // pred_check
      _
    $region31: #{video_encoder_memory.1} parent=1 // pred_check_branch
      %80 = sbr.rel (0) target = $region33
    $region32: #{video_encoder_memory.1} parent=1 // pred_region
      %s82 = ssub.s32 16, 16
      %83 = vsyncadd [#allocation8], %s82
      %s85 = sshll.u32 [#allocation9], 4
      %s86 = int_to_ptr.vmem [resolvable:$true] %s85
      %88 = dma.hbm_to_vmem [thread:$0]  %s7, 16, %s86, [#allocation8]
    $region33: #{video_encoder_memory.1} parent=1 // pred_fallthru
      _
    // Predicated region
    $region34: #{video_encoder_memory.1} parent=1 // pred_check
      _
    $region35: #{video_encoder_memory.1} parent=1 // pred_check_branch
      %90 = sbr.rel (0) target = $region37
    $region36: #{video_encoder_memory.1} parent=1 // pred_region
      _
    $region37: #{video_encoder_memory.1} parent=1 // pred_fallthru
      _
    // Predicated region
    $region38: #{video_encoder_memory.1} parent=1 // pred_check
      _
    $region39: #{video_encoder_memory.1} parent=1 // pred_check_branch
      %92 = sbr.rel (0) target = $region41
    $region40: #{video_encoder_memory.1} parent=1 // pred_region
      %s94 = ssub.s32 256, 256
      %95 = vsyncadd [#allocation11], %s94
      %s96 = sshll.u32 [#allocation10], 4
      %s97 = int_to_ptr.vmem [resolvable:$true] %s96
      %102 = dma.hbm_to_vmem [thread:$0]  %s9, 256, %s97, [#allocation11], 64, 64, 4
    $region41: #{video_encoder_memory.1} parent=1 // pred_fallthru
      _
    // Predicated region
    $region42: #{video_encoder_memory.1} parent=1 // pred_check
      _
    $region43: #{video_encoder_memory.1} parent=1 // pred_check_branch
      %104 = sbr.rel (0) target = $region45
    $region44: #{video_encoder_memory.1} parent=1 // pred_region
      %s106 = ssub.s32 16, 16
      %107 = vsyncadd [#allocation11], %s106
      %s109 = sshll.u32 [#allocation12], 4
      %s110 = int_to_ptr.vmem [resolvable:$true] %s109
      %112 = dma.hbm_to_vmem [thread:$0]  %s10, 16, %s110, [#allocation11]
    $region45: #{video_encoder_memory.1} parent=1 // pred_fallthru
      _
    // Predicated region
    $region46: #{video_encoder_memory.1} parent=1 // pred_check
      _
    $region47: #{video_encoder_memory.1} parent=1 // pred_check_branch
      %114 = sbr.rel (0) target = $region49
    $region48: #{video_encoder_memory.1} parent=1 // pred_region
      %s116 = ssub.s32 256, 256
      %117 = vsyncadd [#allocation14], %s116
      %s118 = sshll.u32 [#allocation13], 4
      %s119 = int_to_ptr.vmem [resolvable:$true] %s118
      %124 = dma.hbm_to_vmem [thread:$0]  %s11, 256, %s119, [#allocation14], 64, 64, 4
    $region49: #{video_encoder_memory.1} parent=1 // pred_fallthru
      _
    // Predicated region
    $region50: #{video_encoder_memory.1} parent=1 // pred_check
      _
    $region51: #{video_encoder_memory.1} parent=1 // pred_check_branch
      %126 = sbr.rel (0) target = $region53
    $region52: #{video_encoder_memory.1} parent=1 // pred_region
      %s128 = ssub.s32 256, 256
      %129 = vsyncadd [#allocation14], %s128
      %s130 = sshll.u32 [#allocation15], 4
      %s131 = int_to_ptr.vmem [resolvable:$true] %s130
      %136 = dma.hbm_to_vmem [thread:$0]  %s12, 256, %s131, [#allocation14], 64, 64, 4
    $region53: #{video_encoder_memory.1} parent=1 // pred_fallthru
      _
    // Predicated region
    $region54: #{video_encoder_memory.1} parent=1 // pred_check
      _
    $region55: #{video_encoder_memory.1} parent=1 // pred_check_branch
      %138 = sbr.rel (0) target = $region57
    $region56: #{video_encoder_memory.1} parent=1 // pred_region
      %s140 = ssub.s32 16, 16
      %141 = vsyncadd [#allocation17], %s140
      %s143 = sshll.u32 [#allocation16], 4
      %s144 = int_to_ptr.vmem [resolvable:$true] %s143
      %146 = dma.hbm_to_vmem [thread:$0]  %s13, 16, %s144, [#allocation17]
    $region57: #{video_encoder_memory.1} parent=1 // pred_fallthru
      _
    // Predicated region
    $region58: #{video_encoder_memory.1} parent=1 // pred_check
      _
    $region59: #{video_encoder_memory.1} parent=1 // pred_check_branch
      %148 = sbr.rel (0) target = $region61
    $region60: #{video_encoder_memory.1} parent=1 // pred_region
      %149 = dma.done [#allocation3], 256
    $region61: #{video_encoder_memory.1} parent=1 // pred_fallthru
      _
    // Predicated region
    $region62: #{video_encoder_memory.1} parent=1 // pred_check
      _
    $region63: #{video_encoder_memory.1} parent=1 // pred_check_branch
      %151 = sbr.rel (0) target = $region65
    $region64: #{video_encoder_memory.1} parent=1 // pred_region
      %152 = dma.done [#allocation5], 16
    $region65: #{video_encoder_memory.1} parent=1 // pred_fallthru
      _
    // Predicated region
    $region66: #{video_encoder_memory.1} parent=1 // pred_check
      _
    $region67: #{video_encoder_memory.1} parent=1 // pred_check_branch
      %154 = sbr.rel (0) target = $region69
    $region68: #{video_encoder_memory.1} parent=1 // pred_region
      %155 = dma.done [#allocation5], 256
    $region69: #{video_encoder_memory.1} parent=1 // pred_fallthru
      _
    // Predicated region
    $region70: #{video_encoder_memory.1} parent=1 // pred_check
      _
    $region71: #{video_encoder_memory.1} parent=1 // pred_check_branch
      %157 = sbr.rel (0) target = $region73
    $region72: #{video_encoder_memory.1} parent=1 // pred_region
      %158 = dma.done [#allocation8], 256
    $region73: #{video_encoder_memory.1} parent=1 // pred_fallthru
      _
    // Predicated region
    $region74: #{video_encoder_memory.1} parent=1 // pred_check
      _
    $region75: #{video_encoder_memory.1} parent=1 // pred_check_branch
      %160 = sbr.rel (0) target = $region77
    $region76: #{video_encoder_memory.1} parent=1 // pred_region
      %161 = dma.done [#allocation8], 16
    $region77: #{video_encoder_memory.1} parent=1 // pred_fallthru
      _
    // Predicated region
    $region78: #{video_encoder_memory.1} parent=1 // pred_check
      _
    $region79: #{video_encoder_memory.1} parent=1 // pred_check_branch
      %163 = sbr.rel (0) target = $region81
    $region80: #{video_encoder_memory.1} parent=1 // pred_region
      %164 = dma.done [#allocation11], 256
    $region81: #{video_encoder_memory.1} parent=1 // pred_fallthru
      _
    // Predicated region
    $region82: #{video_encoder_memory.1} parent=1 // pred_check
      _
    $region83: #{video_encoder_memory.1} parent=1 // pred_check_branch
      %166 = sbr.rel (0) target = $region85
    $region84: #{video_encoder_memory.1} parent=1 // pred_region
      %167 = dma.done [#allocation11], 16
    $region85: #{video_encoder_memory.1} parent=1 // pred_fallthru
      _
    // Predicated region
    $region86: #{video_encoder_memory.1} parent=1 // pred_check
      _
    $region87: #{video_encoder_memory.1} parent=1 // pred_check_branch
      %169 = sbr.rel (0) target = $region89
    $region88: #{video_encoder_memory.1} parent=1 // pred_region
      %170 = dma.done [#allocation14], 256
    $region89: #{video_encoder_memory.1} parent=1 // pred_fallthru
      _
    // Predicated region
    $region90: #{video_encoder_memory.1} parent=1 // pred_check
      _
    $region91: #{video_encoder_memory.1} parent=1 // pred_check_branch
      %172 = sbr.rel (0) target = $region93
    $region92: #{video_encoder_memory.1} parent=1 // pred_region
      %173 = dma.done [#allocation14], 256
    $region93: #{video_encoder_memory.1} parent=1 // pred_fallthru
      _
    // Predicated region
    $region94: #{video_encoder_memory.1} parent=1 // pred_check
      _
    $region95: #{video_encoder_memory.1} parent=1 // pred_check_branch
      %175 = sbr.rel (0) target = $region97
    $region96: #{video_encoder_memory.1} parent=1 // pred_region
      %176 = dma.done [#allocation17], 16
    $region97: #{video_encoder_memory.1} parent=1 // pred_fallthru
      _
    %v178 = vld [vmem:[%s0] sm:$0x1]
    %v179 = vld [vmem:[%s2] sm:$0xf]
    %v180 = vld [vmem:[%s2 + $0x4] sm:$0xf]
    %v181 = vld [vmem:[%s2 + $0x8] sm:$0xf]
    %v182 = vld [vmem:[%s2 + $0xc] sm:$0xf]
    %v183 = vld [vmem:[%s2 + $0x10] sm:$0xf]
    %v184 = vld [vmem:[%s2 + $0x14] sm:$0xf]
    %v185 = vld [vmem:[%s2 + $0x18] sm:$0xf]
    %v186 = vld [vmem:[%s2 + $0x1c] sm:$0xf]
    %v187 = vld [vmem:[#allocation2] sm:$0xf]
    %v188 = vld [vmem:[#allocation2 + $0x4] sm:$0xf]
    %v189 = vld [vmem:[#allocation2 + $0x8] sm:$0xf]
    %v190 = vld [vmem:[#allocation2 + $0xc] sm:$0xf]
    %v195 = vunpack.c.l.b16 %v187
    %v196 = vunpack.c.l.b16 %v188
    %v197 = vunpack.c.l.b16 %v189
    %v198 = vunpack.c.l.b16 %v190
    %v199 = vpack.c.b16 %v196, %v195
    %v200 = vpack.c.b16 %v198, %v197
    %vm203 = vcmask 261120
    %v205 = vsel %vm203, 0, 0
    %207 = vmatprep.subr.bf16.mxu0 0
    %208 = vmatpush1.bf16.msra.mxu0 0
    %209 = vmatprep.subr.bf16.mxu0 0
    %210 = vmatpush1.bf16.msra.mxu0 0
    %211 = vmatprep.subr.bf16.mxu0 0
    %212 = vmatpush1.bf16.msra.mxu0 0
    %213 = vmatprep.subr.bf16.mxu0 0
    %214 = vmatpush1.bf16.msra.mxu0 0
    %215 = vmatprep.subr.bf16.mxu0 0
    %216 = vmatpush1.bf16.msra.mxu0 0
    %217 = vmatprep.subr.bf16.mxu0 0
    %218 = vmatpush1.bf16.msra.mxu0 0
    %219 = vmatprep.subr.bf16.mxu0 0
    %220 = vmatpush1.bf16.msra.mxu0 %v200
    %221 = vmatprep.subr.bf16.mxu0 0
    %222 = vmatpush1.bf16.msra.mxu0 %v199
    %223 = vmatprep.subr.bf16.mxu0 0
    %224 = vmatpush2.bf16.msra.mxu0 0
    %225 = vmatprep.subr.bf16.mxu0 0
    %226 = vmatpush2.bf16.msra.mxu0 0
    %227 = vmatprep.subr.bf16.mxu0 0
    %228 = vmatpush2.bf16.msra.mxu0 0
    %229 = vmatprep.subr.bf16.mxu0 0
    %230 = vmatpush2.bf16.msra.mxu0 0
    %231 = vmatprep.subr.bf16.mxu0 0
    %232 = vmatpush2.bf16.msra.mxu0 0
    %233 = vmatprep.subr.bf16.mxu0 0
    %234 = vmatpush2.bf16.msra.mxu0 0
    %235 = vmatprep.subr.bf16.mxu0 0
    %236 = vmatpush2.bf16.msra.mxu0 0
    %237 = vmatprep.subr.bf16.mxu0 0
    %238 = vmatpush2.bf16.msra.mxu0 0
    %239 = vmatprep.mubr.bf16.mxu0 0
    %240 = vmatmul.mubr.bf16.gmra.mxu0 %v205
    %v241 = vpop.f32.mrf.mxu0
    %v242 = vadd.f32 0.0, %v241
    %v243 = vpop.f32.mrf.mxu0
    %v244 = vpop.f32.mrf.mxu0
    %v245 = vpop.f32.mrf.mxu0
    %246 = vdwg.mxu0
    %v255 = vunpack.c.l.b16 %v179
    %v256 = vunpack.c.l.b16 %v180
    %v257 = vunpack.c.l.b16 %v181
    %v258 = vunpack.c.l.b16 %v182
    %v259 = vunpack.c.l.b16 %v183
    %v260 = vunpack.c.l.b16 %v184
    %v261 = vunpack.c.l.b16 %v185
    %v262 = vunpack.c.l.b16 %v186
    %v263 = vpack.c.b16 %v256, %v255
    %v264 = vpack.c.b16 %v258, %v257
    %v265 = vpack.c.b16 %v260, %v259
    %v266 = vpack.c.b16 %v262, %v261
    %vm271 = vcmask 523264
    %v273 = vsel %vm271, %v178, 0
    %275 = vmatprep.subr.bf16.mxu0 0
    %276 = vmatpush1.bf16.msra.mxu0 0
    %277 = vmatprep.subr.bf16.mxu0 0
    %278 = vmatpush1.bf16.msra.mxu0 0
    %279 = vmatprep.subr.bf16.mxu0 0
    %280 = vmatpush1.bf16.msra.mxu0 0
    %281 = vmatprep.subr.bf16.mxu0 0
    %282 = vmatpush1.bf16.msra.mxu0 0
    %283 = vmatprep.subr.bf16.mxu0 0
    %284 = vmatpush1.bf16.msra.mxu0 %v266
    %285 = vmatprep.subr.bf16.mxu0 0
    %286 = vmatpush1.bf16.msra.mxu0 %v265
    %287 = vmatprep.subr.bf16.mxu0 0
    %288 = vmatpush1.bf16.msra.mxu0 %v264
    %289 = vmatprep.subr.bf16.mxu0 0
    %290 = vmatpush1.bf16.msra.mxu0 %v263
    %291 = vmatprep.subr.bf16.mxu0 0
    %292 = vmatpush2.bf16.msra.mxu0 0
    %293 = vmatprep.subr.bf16.mxu0 0
    %294 = vmatpush2.bf16.msra.mxu0 0
    %295 = vmatprep.subr.bf16.mxu0 0
    %296 = vmatpush2.bf16.msra.mxu0 0
    %297 = vmatprep.subr.bf16.mxu0 0
    %298 = vmatpush2.bf16.msra.mxu0 0
    %299 = vmatprep.subr.bf16.mxu0 0
    %300 = vmatpush2.bf16.msra.mxu0 0
    %301 = vmatprep.subr.bf16.mxu0 0
    %302 = vmatpush2.bf16.msra.mxu0 0
    %303 = vmatprep.subr.bf16.mxu0 0
    %304 = vmatpush2.bf16.msra.mxu0 0
    %305 = vmatprep.subr.bf16.mxu0 0
    %306 = vmatpush2.bf16.msra.mxu0 0
    %307 = vmatprep.mubr.bf16.mxu0 0
    %308 = vmatmul.mubr.bf16.gmra.mxu0 %v273
    %v309 = vpop.f32.mrf.mxu0
    %v310 = vadd.f32 %v242, %v309
    %v311 = vpop.f32.mrf.mxu0
    %v312 = vpop.f32.mrf.mxu0
    %v313 = vpop.f32.mrf.mxu0
    %314 = vdwg.mxu0
    %v315 = vld [vmem:[#allocation4] sm:$0x1]
    %v317 = vlaneseq
    %v318 = vshrl.u32 %v317, 7
    %v319 = vsub.s32 0, %v318
    %v320 = vrot.slane %v315, %v319
    %v322 = vadd.f32 %v310, %v320
    %v323 = vxor.u32 %v322, 2147483648
    %v324 = vmul.f32 %v323, 1.442695
    %v325 = vpow.pop %v324
    %v326 = vadd.f32 %v325, 1.0
    %v327 = vrcp.pop %v326
    %v328 = vmul.f32 1.0, %v327
    %v329 = vtanh.pop %v322
    %v330 = vmul.f32 %v328, 0.0
    %332 = vrot.lane.b32.xlu0 %v329, 64
    %v333 = vpop.permute.xlu0 %332
    %v335 = vmul.f32 %v328, %v333
    %337 = vrot.lane.b32.xlu0 %v335, 32
    %v338 = vpop.permute.xlu0 %337
    %v340 = vadd.f32 %v330, %v338
    %v341 = vtanh.pop %v340
    %343 = vrot.lane.b32.xlu0 %v341, 64
    %v344 = vpop.permute.xlu0 %343
    %v346 = vmul.f32 %v328, %v344
    %v347 = vpack.c.bf16 %v346, %v346
    %v348 = vld [vmem:[#allocation6] sm:$0xf]
    %v349 = vld [vmem:[#allocation6 + $0x4] sm:$0xf]
    %v350 = vld [vmem:[#allocation6 + $0x8] sm:$0xf]
    %v351 = vld [vmem:[#allocation6 + $0xc] sm:$0xf]
    %v352 = vld [vmem:[#allocation7] sm:$0xf]
    %v353 = vld [vmem:[#allocation7 + $0x4] sm:$0xf]
    %v354 = vld [vmem:[#allocation7 + $0x8] sm:$0xf]
    %v355 = vld [vmem:[#allocation7 + $0xc] sm:$0xf]
    %v360 = vunpack.c.l.b16 %v352
    %v361 = vunpack.c.l.b16 %v353
    %v362 = vunpack.c.l.b16 %v354
    %v363 = vunpack.c.l.b16 %v355
    %v364 = vpack.c.b16 %v361, %v360
    %v365 = vpack.c.b16 %v363, %v362
    %368 = vmatprep.subr.bf16.mxu0 0
    %369 = vmatpush1.bf16.msra.mxu0 0
    %370 = vmatprep.subr.bf16.mxu0 0
    %371 = vmatpush1.bf16.msra.mxu0 0
    %372 = vmatprep.subr.bf16.mxu0 0
    %373 = vmatpush1.bf16.msra.mxu0 0
    %374 = vmatprep.subr.bf16.mxu0 0
    %375 = vmatpush1.bf16.msra.mxu0 0
    %376 = vmatprep.subr.bf16.mxu0 0
    %377 = vmatpush1.bf16.msra.mxu0 0
    %378 = vmatprep.subr.bf16.mxu0 0
    %379 = vmatpush1.bf16.msra.mxu0 0
    %380 = vmatprep.subr.bf16.mxu0 0
    %381 = vmatpush1.bf16.msra.mxu0 %v365
    %382 = vmatprep.subr.bf16.mxu0 0
    %383 = vmatpush1.bf16.msra.mxu0 %v364
    %384 = vmatprep.subr.bf16.mxu0 0
    %385 = vmatpush2.bf16.msra.mxu0 0
    %386 = vmatprep.subr.bf16.mxu0 0
    %387 = vmatpush2.bf16.msra.mxu0 0
    %388 = vmatprep.subr.bf16.mxu0 0
    %389 = vmatpush2.bf16.msra.mxu0 0
    %390 = vmatprep.subr.bf16.mxu0 0
    %391 = vmatpush2.bf16.msra.mxu0 0
    %392 = vmatprep.subr.bf16.mxu0 0
    %393 = vmatpush2.bf16.msra.mxu0 0
    %394 = vmatprep.subr.bf16.mxu0 0
    %395 = vmatpush2.bf16.msra.mxu0 0
    %396 = vmatprep.subr.bf16.mxu0 0
    %397 = vmatpush2.bf16.msra.mxu0 0
    %398 = vmatprep.subr.bf16.mxu0 0
    %399 = vmatpush2.bf16.msra.mxu0 0
    %400 = vmatprep.mubr.bf16.mxu0 0
    %401 = vmatmul.mubr.bf16.gmra.mxu0 %v205
    %v402 = vpop.f32.mrf.mxu0
    %v403 = vadd.f32 0.0, %v402
    %v404 = vpop.f32.mrf.mxu0
    %v405 = vpop.f32.mrf.mxu0
    %v406 = vpop.f32.mrf.mxu0
    %407 = vdwg.mxu0
    %409 = vrot.lane.b32.xlu0 %v347, 32
    %v410 = vpop.permute.xlu0 %409
    %v415 = vunpack.c.l.b16 %v348
    %v416 = vunpack.c.l.b16 %v349
    %v417 = vunpack.c.l.b16 %v350
    %v418 = vunpack.c.l.b16 %v351
    %v419 = vpack.c.b16 %v416, %v415
    %v420 = vpack.c.b16 %v418, %v417
    %v424 = vsel %vm203, %v410, 0
    %426 = vmatprep.subr.bf16.mxu0 0
    %427 = vmatpush1.bf16.msra.mxu0 0
    %428 = vmatprep.subr.bf16.mxu0 0
    %429 = vmatpush1.bf16.msra.mxu0 0
    %430 = vmatprep.subr.bf16.mxu0 0
    %431 = vmatpush1.bf16.msra.mxu0 0
    %432 = vmatprep.subr.bf16.mxu0 0
    %433 = vmatpush1.bf16.msra.mxu0 0
    %434 = vmatprep.subr.bf16.mxu0 0
    %435 = vmatpush1.bf16.msra.mxu0 0
    %436 = vmatprep.subr.bf16.mxu0 0
    %437 = vmatpush1.bf16.msra.mxu0 0
    %438 = vmatprep.subr.bf16.mxu0 0
    %439 = vmatpush1.bf16.msra.mxu0 %v420
    %440 = vmatprep.subr.bf16.mxu0 0
    %441 = vmatpush1.bf16.msra.mxu0 %v419
    %442 = vmatprep.subr.bf16.mxu0 0
    %443 = vmatpush2.bf16.msra.mxu0 0
    %444 = vmatprep.subr.bf16.mxu0 0
    %445 = vmatpush2.bf16.msra.mxu0 0
    %446 = vmatprep.subr.bf16.mxu0 0
    %447 = vmatpush2.bf16.msra.mxu0 0
    %448 = vmatprep.subr.bf16.mxu0 0
    %449 = vmatpush2.bf16.msra.mxu0 0
    %450 = vmatprep.subr.bf16.mxu0 0
    %451 = vmatpush2.bf16.msra.mxu0 0
    %452 = vmatprep.subr.bf16.mxu0 0
    %453 = vmatpush2.bf16.msra.mxu0 0
    %454 = vmatprep.subr.bf16.mxu0 0
    %455 = vmatpush2.bf16.msra.mxu0 0
    %456 = vmatprep.subr.bf16.mxu0 0
    %457 = vmatpush2.bf16.msra.mxu0 0
    %458 = vmatprep.mubr.bf16.mxu0 0
    %459 = vmatmul.mubr.bf16.gmra.mxu0 %v424
    %v460 = vpop.f32.mrf.mxu0
    %v461 = vadd.f32 %v403, %v460
    %v462 = vpop.f32.mrf.mxu0
    %v463 = vpop.f32.mrf.mxu0
    %v464 = vpop.f32.mrf.mxu0
    %465 = vdwg.mxu0
    %v466 = vld [vmem:[#allocation9] sm:$0x1]
    %v468 = vlaneseq
    %v469 = vshrl.u32 %v468, 7
    %v470 = vsub.s32 0, %v469
    %v471 = vrot.slane %v466, %v470
    %v473 = vadd.f32 %v461, %v471
    %v474 = vxor.u32 %v473, 2147483648
    %v475 = vmul.f32 %v474, 1.442695
    %v476 = vpow.pop %v475
    %v477 = vadd.f32 %v476, 1.0
    %v478 = vrcp.pop %v477
    %v479 = vmul.f32 1.0, %v478
    %v480 = vtanh.pop %v473
    %v481 = vmul.f32 %v479, 0.0
    %483 = vrot.lane.b32.xlu0 %v480, 64
    %v484 = vpop.permute.xlu0 %483
    %v486 = vmul.f32 %v479, %v484
    %488 = vrot.lane.b32.xlu0 %v486, 32
    %v489 = vpop.permute.xlu0 %488
    %v491 = vadd.f32 %v481, %v489
    %v492 = vtanh.pop %v491
    %494 = vrot.lane.b32.xlu0 %v492, 64
    %v495 = vpop.permute.xlu0 %494
    %v497 = vmul.f32 %v479, %v495
    %499 = vrot.lane.b32.xlu0 %v497, 32
    %v500 = vpop.permute.xlu0 %499
    %vm502 = vcmask 254976
    %503 = vst.msk [vmem:[%s14] sm:$0x3] %vm502, %v500
    %v504 = vld [vmem:[%s1] sm:$0x1]
    %v505 = vld [vmem:[%s8] sm:$0xf]
    %v506 = vld [vmem:[%s8 + $0x4] sm:$0xf]
    %v507 = vld [vmem:[%s8 + $0x8] sm:$0xf]
    %v508 = vld [vmem:[%s8 + $0xc] sm:$0xf]
    %v509 = vld [vmem:[%s8 + $0x10] sm:$0xf]
    %v510 = vld [vmem:[%s8 + $0x14] sm:$0xf]
    %v511 = vld [vmem:[%s8 + $0x18] sm:$0xf]
    %v512 = vld [vmem:[%s8 + $0x1c] sm:$0xf]
    %v513 = vld [vmem:[#allocation10] sm:$0xf]
    %v514 = vld [vmem:[#allocation10 + $0x4] sm:$0xf]
    %v515 = vld [vmem:[#allocation10 + $0x8] sm:$0xf]
    %v516 = vld [vmem:[#allocation10 + $0xc] sm:$0xf]
    %v521 = vunpack.c.l.b16 %v513
    %v522 = vunpack.c.l.b16 %v514
    %v523 = vunpack.c.l.b16 %v515
    %v524 = vunpack.c.l.b16 %v516
    %v525 = vpack.c.b16 %v522, %v521
    %v526 = vpack.c.b16 %v524, %v523
    %529 = vmatprep.subr.bf16.mxu0 0
    %530 = vmatpush1.bf16.msra.mxu0 0
    %531 = vmatprep.subr.bf16.mxu0 0
    %532 = vmatpush1.bf16.msra.mxu0 0
    %533 = vmatprep.subr.bf16.mxu0 0
    %534 = vmatpush1.bf16.msra.mxu0 0
    %535 = vmatprep.subr.bf16.mxu0 0
    %536 = vmatpush1.bf16.msra.mxu0 0
    %537 = vmatprep.subr.bf16.mxu0 0
    %538 = vmatpush1.bf16.msra.mxu0 0
    %539 = vmatprep.subr.bf16.mxu0 0
    %540 = vmatpush1.bf16.msra.mxu0 0
    %541 = vmatprep.subr.bf16.mxu0 0
    %542 = vmatpush1.bf16.msra.mxu0 %v526
    %543 = vmatprep.subr.bf16.mxu0 0
    %544 = vmatpush1.bf16.msra.mxu0 %v525
    %545 = vmatprep.subr.bf16.mxu0 0
    %546 = vmatpush2.bf16.msra.mxu0 0
    %547 = vmatprep.subr.bf16.mxu0 0
    %548 = vmatpush2.bf16.msra.mxu0 0
    %549 = vmatprep.subr.bf16.mxu0 0
    %550 = vmatpush2.bf16.msra.mxu0 0
    %551 = vmatprep.subr.bf16.mxu0 0
    %552 = vmatpush2.bf16.msra.mxu0 0
    %553 = vmatprep.subr.bf16.mxu0 0
    %554 = vmatpush2.bf16.msra.mxu0 0
    %555 = vmatprep.subr.bf16.mxu0 0
    %556 = vmatpush2.bf16.msra.mxu0 0
    %557 = vmatprep.subr.bf16.mxu0 0
    %558 = vmatpush2.bf16.msra.mxu0 0
    %559 = vmatprep.subr.bf16.mxu0 0
    %560 = vmatpush2.bf16.msra.mxu0 0
    %561 = vmatprep.mubr.bf16.mxu0 0
    %562 = vmatmul.mubr.bf16.gmra.mxu0 %v205
    %v563 = vpop.f32.mrf.mxu0
    %v564 = vadd.f32 0.0, %v563
    %v565 = vpop.f32.mrf.mxu0
    %v566 = vpop.f32.mrf.mxu0
    %v567 = vpop.f32.mrf.mxu0
    %568 = vdwg.mxu0
    %v577 = vunpack.c.l.b16 %v505
    %v578 = vunpack.c.l.b16 %v506
    %v579 = vunpack.c.l.b16 %v507
    %v580 = vunpack.c.l.b16 %v508
    %v581 = vunpack.c.l.b16 %v509
    %v582 = vunpack.c.l.b16 %v510
    %v583 = vunpack.c.l.b16 %v511
    %v584 = vunpack.c.l.b16 %v512
    %v585 = vpack.c.b16 %v578, %v577
    %v586 = vpack.c.b16 %v580, %v579
    %v587 = vpack.c.b16 %v582, %v581
    %v588 = vpack.c.b16 %v584, %v583
    %v594 = vsel %vm271, %v504, 0
    %596 = vmatprep.subr.bf16.mxu0 0
    %597 = vmatpush1.bf16.msra.mxu0 0
    %598 = vmatprep.subr.bf16.mxu0 0
    %599 = vmatpush1.bf16.msra.mxu0 0
    %600 = vmatprep.subr.bf16.mxu0 0
    %601 = vmatpush1.bf16.msra.mxu0 0
    %602 = vmatprep.subr.bf16.mxu0 0
    %603 = vmatpush1.bf16.msra.mxu0 0
    %604 = vmatprep.subr.bf16.mxu0 0
    %605 = vmatpush1.bf16.msra.mxu0 %v588
    %606 = vmatprep.subr.bf16.mxu0 0
    %607 = vmatpush1.bf16.msra.mxu0 %v587
    %608 = vmatprep.subr.bf16.mxu0 0
    %609 = vmatpush1.bf16.msra.mxu0 %v586
    %610 = vmatprep.subr.bf16.mxu0 0
    %611 = vmatpush1.bf16.msra.mxu0 %v585
    %612 = vmatprep.subr.bf16.mxu0 0
    %613 = vmatpush2.bf16.msra.mxu0 0
    %614 = vmatprep.subr.bf16.mxu0 0
    %615 = vmatpush2.bf16.msra.mxu0 0
    %616 = vmatprep.subr.bf16.mxu0 0
    %617 = vmatpush2.bf16.msra.mxu0 0
    %618 = vmatprep.subr.bf16.mxu0 0
    %619 = vmatpush2.bf16.msra.mxu0 0
    %620 = vmatprep.subr.bf16.mxu0 0
    %621 = vmatpush2.bf16.msra.mxu0 0
    %622 = vmatprep.subr.bf16.mxu0 0
    %623 = vmatpush2.bf16.msra.mxu0 0
    %624 = vmatprep.subr.bf16.mxu0 0
    %625 = vmatpush2.bf16.msra.mxu0 0
    %626 = vmatprep.subr.bf16.mxu0 0
    %627 = vmatpush2.bf16.msra.mxu0 0
    %628 = vmatprep.mubr.bf16.mxu0 0
    %629 = vmatmul.mubr.bf16.gmra.mxu0 %v594
    %v630 = vpop.f32.mrf.mxu0
    %v631 = vadd.f32 %v564, %v630
    %v632 = vpop.f32.mrf.mxu0
    %v633 = vpop.f32.mrf.mxu0
    %v634 = vpop.f32.mrf.mxu0
    %635 = vdwg.mxu0
    %v636 = vld [vmem:[#allocation12] sm:$0x1]
    %v638 = vlaneseq
    %v639 = vshrl.u32 %v638, 7
    %v640 = vsub.s32 0, %v639
    %v641 = vrot.slane %v636, %v640
    %v643 = vadd.f32 %v631, %v641
    %v644 = vxor.u32 %v643, 2147483648
    %v645 = vmul.f32 %v644, 1.442695
    %v646 = vpow.pop %v645
    %v647 = vadd.f32 %v646, 1.0
    %v648 = vrcp.pop %v647
    %v649 = vmul.f32 1.0, %v648
    %v650 = vtanh.pop %v643
    %v651 = vmul.f32 %v649, 0.0
    %653 = vrot.lane.b32.xlu0 %v650, 64
    %v654 = vpop.permute.xlu0 %653
    %v656 = vmul.f32 %v649, %v654
    %658 = vrot.lane.b32.xlu0 %v656, 32
    %v659 = vpop.permute.xlu0 %658
    %v661 = vadd.f32 %v651, %v659
    %v662 = vtanh.pop %v661
    %664 = vrot.lane.b32.xlu0 %v662, 64
    %v665 = vpop.permute.xlu0 %664
    %v667 = vmul.f32 %v649, %v665
    %v668 = vpack.c.bf16 %v667, %v667
    %v669 = vld [vmem:[#allocation13] sm:$0xf]
    %v670 = vld [vmem:[#allocation13 + $0x4] sm:$0xf]
    %v671 = vld [vmem:[#allocation13 + $0x8] sm:$0xf]
    %v672 = vld [vmem:[#allocation13 + $0xc] sm:$0xf]
    %v673 = vld [vmem:[#allocation15] sm:$0xf]
    %v674 = vld [vmem:[#allocation15 + $0x4] sm:$0xf]
    %v675 = vld [vmem:[#allocation15 + $0x8] sm:$0xf]
    %v676 = vld [vmem:[#allocation15 + $0xc] sm:$0xf]
    %v681 = vunpack.c.l.b16 %v673
    %v682 = vunpack.c.l.b16 %v674
    %v683 = vunpack.c.l.b16 %v675
    %v684 = vunpack.c.l.b16 %v676
    %v685 = vpack.c.b16 %v682, %v681
    %v686 = vpack.c.b16 %v684, %v683
    %689 = vmatprep.subr.bf16.mxu0 0
    %690 = vmatpush1.bf16.msra.mxu0 0
    %691 = vmatprep.subr.bf16.mxu0 0
    %692 = vmatpush1.bf16.msra.mxu0 0
    %693 = vmatprep.subr.bf16.mxu0 0
    %694 = vmatpush1.bf16.msra.mxu0 0
    %695 = vmatprep.subr.bf16.mxu0 0
    %696 = vmatpush1.bf16.msra.mxu0 0
    %697 = vmatprep.subr.bf16.mxu0 0
    %698 = vmatpush1.bf16.msra.mxu0 0
    %699 = vmatprep.subr.bf16.mxu0 0
    %700 = vmatpush1.bf16.msra.mxu0 0
    %701 = vmatprep.subr.bf16.mxu0 0
    %702 = vmatpush1.bf16.msra.mxu0 %v686
    %703 = vmatprep.subr.bf16.mxu0 0
    %704 = vmatpush1.bf16.msra.mxu0 %v685
    %705 = vmatprep.subr.bf16.mxu0 0
    %706 = vmatpush2.bf16.msra.mxu0 0
    %707 = vmatprep.subr.bf16.mxu0 0
    %708 = vmatpush2.bf16.msra.mxu0 0
    %709 = vmatprep.subr.bf16.mxu0 0
    %710 = vmatpush2.bf16.msra.mxu0 0
    %711 = vmatprep.subr.bf16.mxu0 0
    %712 = vmatpush2.bf16.msra.mxu0 0
    %713 = vmatprep.subr.bf16.mxu0 0
    %714 = vmatpush2.bf16.msra.mxu0 0
    %715 = vmatprep.subr.bf16.mxu0 0
    %716 = vmatpush2.bf16.msra.mxu0 0
    %717 = vmatprep.subr.bf16.mxu0 0
    %718 = vmatpush2.bf16.msra.mxu0 0
    %719 = vmatprep.subr.bf16.mxu0 0
    %720 = vmatpush2.bf16.msra.mxu0 0
    %721 = vmatprep.mubr.bf16.mxu0 0
    %722 = vmatmul.mubr.bf16.gmra.mxu0 %v205
    %v723 = vpop.f32.mrf.mxu0
    %v724 = vadd.f32 0.0, %v723
    %v725 = vpop.f32.mrf.mxu0
    %v726 = vpop.f32.mrf.mxu0
    %v727 = vpop.f32.mrf.mxu0
    %728 = vdwg.mxu0
    %730 = vrot.lane.b32.xlu0 %v668, 32
    %v731 = vpop.permute.xlu0 %730
    %v736 = vunpack.c.l.b16 %v669
    %v737 = vunpack.c.l.b16 %v670
    %v738 = vunpack.c.l.b16 %v671
    %v739 = vunpack.c.l.b16 %v672
    %v740 = vpack.c.b16 %v737, %v736
    %v741 = vpack.c.b16 %v739, %v738
    %v745 = vsel %vm203, %v731, 0
    %747 = vmatprep.subr.bf16.mxu0 0
    %748 = vmatpush1.bf16.msra.mxu0 0
    %749 = vmatprep.subr.bf16.mxu0 0
    %750 = vmatpush1.bf16.msra.mxu0 0
    %751 = vmatprep.subr.bf16.mxu0 0
    %752 = vmatpush1.bf16.msra.mxu0 0
    %753 = vmatprep.subr.bf16.mxu0 0
    %754 = vmatpush1.bf16.msra.mxu0 0
    %755 = vmatprep.subr.bf16.mxu0 0
    %756 = vmatpush1.bf16.msra.mxu0 0
    %757 = vmatprep.subr.bf16.mxu0 0
    %758 = vmatpush1.bf16.msra.mxu0 0
    %759 = vmatprep.subr.bf16.mxu0 0
    %760 = vmatpush1.bf16.msra.mxu0 %v741
    %761 = vmatprep.subr.bf16.mxu0 0
    %762 = vmatpush1.bf16.msra.mxu0 %v740
    %763 = vmatprep.subr.bf16.mxu0 0
    %764 = vmatpush2.bf16.msra.mxu0 0
    %765 = vmatprep.subr.bf16.mxu0 0
    %766 = vmatpush2.bf16.msra.mxu0 0
    %767 = vmatprep.subr.bf16.mxu0 0
    %768 = vmatpush2.bf16.msra.mxu0 0
    %769 = vmatprep.subr.bf16.mxu0 0
    %770 = vmatpush2.bf16.msra.mxu0 0
    %771 = vmatprep.subr.bf16.mxu0 0
    %772 = vmatpush2.bf16.msra.mxu0 0
    %773 = vmatprep.subr.bf16.mxu0 0
    %774 = vmatpush2.bf16.msra.mxu0 0
    %775 = vmatprep.subr.bf16.mxu0 0
    %776 = vmatpush2.bf16.msra.mxu0 0
    %777 = vmatprep.subr.bf16.mxu0 0
    %778 = vmatpush2.bf16.msra.mxu0 0
    %779 = vmatprep.mubr.bf16.mxu0 0
    %780 = vmatmul.mubr.bf16.gmra.mxu0 %v745
    %v781 = vpop.f32.mrf.mxu0
    %v782 = vadd.f32 %v724, %v781
    %v783 = vpop.f32.mrf.mxu0
    %v784 = vpop.f32.mrf.mxu0
    %v785 = vpop.f32.mrf.mxu0
    %786 = vdwg.mxu0
    %v787 = vld [vmem:[#allocation16] sm:$0x1]
    %v789 = vlaneseq
    %v790 = vshrl.u32 %v789, 7
    %v791 = vsub.s32 0, %v790
    %v792 = vrot.slane %v787, %v791
    %v794 = vadd.f32 %v782, %v792
    %v795 = vxor.u32 %v794, 2147483648
    %v796 = vmul.f32 %v795, 1.442695
    %v797 = vpow.pop %v796
    %v798 = vadd.f32 %v797, 1.0
    %v799 = vrcp.pop %v798
    %v800 = vmul.f32 1.0, %v799
    %v801 = vtanh.pop %v794
    %v802 = vmul.f32 %v800, 0.0
    %804 = vrot.lane.b32.xlu0 %v801, 64
    %v805 = vpop.permute.xlu0 %804
    %v807 = vmul.f32 %v800, %v805
    %809 = vrot.lane.b32.xlu0 %v807, 32
    %v810 = vpop.permute.xlu0 %809
    %v812 = vadd.f32 %v802, %v810
    %v813 = vtanh.pop %v812
    %815 = vrot.lane.b32.xlu0 %v813, 64
    %v816 = vpop.permute.xlu0 %815
    %v818 = vmul.f32 %v800, %v816
    %820 = vrot.lane.b32.xlu0 %v818, 32
    %v821 = vpop.permute.xlu0 %820
    %823 = vst.msk [vmem:[%s15] sm:$0x3] %vm502, %v821
    %s824 = scalar_lea.vmem %s0, 1
    %v825 = vld [vmem:[%s824] sm:$0x1]
    %v826 = vld [vmem:[%s2] sm:$0xf]
    %v827 = vld [vmem:[%s2 + $0x4] sm:$0xf]
    %v828 = vld [vmem:[%s2 + $0x8] sm:$0xf]
    %v829 = vld [vmem:[%s2 + $0xc] sm:$0xf]
    %v830 = vld [vmem:[%s2 + $0x10] sm:$0xf]
    %v831 = vld [vmem:[%s2 + $0x14] sm:$0xf]
    %v832 = vld [vmem:[%s2 + $0x18] sm:$0xf]
    %v833 = vld [vmem:[%s2 + $0x1c] sm:$0xf]
    %v834 = vld [vmem:[#allocation2] sm:$0xf]
    %v835 = vld [vmem:[#allocation2 + $0x4] sm:$0xf]
    %v836 = vld [vmem:[#allocation2 + $0x8] sm:$0xf]
    %v837 = vld [vmem:[#allocation2 + $0xc] sm:$0xf]
    %v842 = vunpack.c.l.b16 %v834
    %v843 = vunpack.c.l.b16 %v835
    %v844 = vunpack.c.l.b16 %v836
    %v845 = vunpack.c.l.b16 %v837
    %v846 = vpack.c.b16 %v843, %v842
    %v847 = vpack.c.b16 %v845, %v844
    %850 = vmatprep.subr.bf16.mxu0 0
    %851 = vmatpush1.bf16.msra.mxu0 0
    %852 = vmatprep.subr.bf16.mxu0 0
    %853 = vmatpush1.bf16.msra.mxu0 0
    %854 = vmatprep.subr.bf16.mxu0 0
    %855 = vmatpush1.bf16.msra.mxu0 0
    %856 = vmatprep.subr.bf16.mxu0 0
    %857 = vmatpush1.bf16.msra.mxu0 0
    %858 = vmatprep.subr.bf16.mxu0 0
    %859 = vmatpush1.bf16.msra.mxu0 0
    %860 = vmatprep.subr.bf16.mxu0 0
    %861 = vmatpush1.bf16.msra.mxu0 0
    %862 = vmatprep.subr.bf16.mxu0 0
    %863 = vmatpush1.bf16.msra.mxu0 %v847
    %864 = vmatprep.subr.bf16.mxu0 0
    %865 = vmatpush1.bf16.msra.mxu0 %v846
    %866 = vmatprep.subr.bf16.mxu0 0
    %867 = vmatpush2.bf16.msra.mxu0 0
    %868 = vmatprep.subr.bf16.mxu0 0
    %869 = vmatpush2.bf16.msra.mxu0 0
    %870 = vmatprep.subr.bf16.mxu0 0
    %871 = vmatpush2.bf16.msra.mxu0 0
    %872 = vmatprep.subr.bf16.mxu0 0
    %873 = vmatpush2.bf16.msra.mxu0 0
    %874 = vmatprep.subr.bf16.mxu0 0
    %875 = vmatpush2.bf16.msra.mxu0 0
    %876 = vmatprep.subr.bf16.mxu0 0
    %877 = vmatpush2.bf16.msra.mxu0 0
    %878 = vmatprep.subr.bf16.mxu0 0
    %879 = vmatpush2.bf16.msra.mxu0 0
    %880 = vmatprep.subr.bf16.mxu0 0
    %881 = vmatpush2.bf16.msra.mxu0 0
    %882 = vmatprep.mubr.bf16.mxu0 0
    %883 = vmatmul.mubr.bf16.gmra.mxu0 %v424
    %v884 = vpop.f32.mrf.mxu0
    %v885 = vadd.f32 0.0, %v884
    %v886 = vpop.f32.mrf.mxu0
    %v887 = vpop.f32.mrf.mxu0
    %v888 = vpop.f32.mrf.mxu0
    %889 = vdwg.mxu0
    %v898 = vunpack.c.l.b16 %v826
    %v899 = vunpack.c.l.b16 %v827
    %v900 = vunpack.c.l.b16 %v828
    %v901 = vunpack.c.l.b16 %v829
    %v902 = vunpack.c.l.b16 %v830
    %v903 = vunpack.c.l.b16 %v831
    %v904 = vunpack.c.l.b16 %v832
    %v905 = vunpack.c.l.b16 %v833
    %v906 = vpack.c.b16 %v899, %v898
    %v907 = vpack.c.b16 %v901, %v900
    %v908 = vpack.c.b16 %v903, %v902
    %v909 = vpack.c.b16 %v905, %v904
    %v915 = vsel %vm271, %v825, 0
    %917 = vmatprep.subr.bf16.mxu0 0
    %918 = vmatpush1.bf16.msra.mxu0 0
    %919 = vmatprep.subr.bf16.mxu0 0
    %920 = vmatpush1.bf16.msra.mxu0 0
    %921 = vmatprep.subr.bf16.mxu0 0
    %922 = vmatpush1.bf16.msra.mxu0 0
    %923 = vmatprep.subr.bf16.mxu0 0
    %924 = vmatpush1.bf16.msra.mxu0 0
    %925 = vmatprep.subr.bf16.mxu0 0
    %926 = vmatpush1.bf16.msra.mxu0 %v909
    %927 = vmatprep.subr.bf16.mxu0 0
    %928 = vmatpush1.bf16.msra.mxu0 %v908
    %929 = vmatprep.subr.bf16.mxu0 0
    %930 = vmatpush1.bf16.msra.mxu0 %v907
    %931 = vmatprep.subr.bf16.mxu0 0
    %932 = vmatpush1.bf16.msra.mxu0 %v906
    %933 = vmatprep.subr.bf16.mxu0 0
    %934 = vmatpush2.bf16.msra.mxu0 0
    %935 = vmatprep.subr.bf16.mxu0 0
    %936 = vmatpush2.bf16.msra.mxu0 0
    %937 = vmatprep.subr.bf16.mxu0 0
    %938 = vmatpush2.bf16.msra.mxu0 0
    %939 = vmatprep.subr.bf16.mxu0 0
    %940 = vmatpush2.bf16.msra.mxu0 0
    %941 = vmatprep.subr.bf16.mxu0 0
    %942 = vmatpush2.bf16.msra.mxu0 0
    %943 = vmatprep.subr.bf16.mxu0 0
    %944 = vmatpush2.bf16.msra.mxu0 0
    %945 = vmatprep.subr.bf16.mxu0 0
    %946 = vmatpush2.bf16.msra.mxu0 0
    %947 = vmatprep.subr.bf16.mxu0 0
    %948 = vmatpush2.bf16.msra.mxu0 0
    %949 = vmatprep.mubr.bf16.mxu0 0
    %950 = vmatmul.mubr.bf16.gmra.mxu0 %v915
    %v951 = vpop.f32.mrf.mxu0
    %v952 = vadd.f32 %v885, %v951
    %v953 = vpop.f32.mrf.mxu0
    %v954 = vpop.f32.mrf.mxu0
    %v955 = vpop.f32.mrf.mxu0
    %956 = vdwg.mxu0
    %v957 = vld [vmem:[#allocation4] sm:$0x1]
    %v959 = vlaneseq
    %v960 = vshrl.u32 %v959, 7
    %v961 = vsub.s32 0, %v960
    %v962 = vrot.slane %v957, %v961
    %v964 = vadd.f32 %v952, %v962
    %v965 = vxor.u32 %v964, 2147483648
    %v966 = vmul.f32 %v965, 1.442695
    %v967 = vpow.pop %v966
    %v968 = vadd.f32 %v967, 1.0
    %v969 = vrcp.pop %v968
    %v970 = vmul.f32 1.0, %v969
    %v971 = vtanh.pop %v964
    %v972 = vmul.f32 %v970, %v340
    %974 = vrot.lane.b32.xlu0 %v971, 64
    %v975 = vpop.permute.xlu0 %974
    %v977 = vmul.f32 %v970, %v975
    %979 = vrot.lane.b32.xlu0 %v977, 32
    %v980 = vpop.permute.xlu0 %979
    %v982 = vadd.f32 %v972, %v980
    %v983 = vtanh.pop %v982
    %985 = vrot.lane.b32.xlu0 %v983, 64
    %v986 = vpop.permute.xlu0 %985
    %v988 = vmul.f32 %v970, %v986
    %v989 = vpack.c.bf16 %v988, %v988
    %v990 = vld [vmem:[#allocation6] sm:$0xf]
    %v991 = vld [vmem:[#allocation6 + $0x4] sm:$0xf]
    %v992 = vld [vmem:[#allocation6 + $0x8] sm:$0xf]
    %v993 = vld [vmem:[#allocation6 + $0xc] sm:$0xf]
    %v994 = vpack.c.bf16 %v497, %v497
    %v995 = vld [vmem:[#allocation7] sm:$0xf]
    %v996 = vld [vmem:[#allocation7 + $0x4] sm:$0xf]
    %v997 = vld [vmem:[#allocation7 + $0x8] sm:$0xf]
    %v998 = vld [vmem:[#allocation7 + $0xc] sm:$0xf]
    %1000 = vrot.lane.b32.xlu0 %v994, 32
    %v1001 = vpop.permute.xlu0 %1000
    %v1006 = vunpack.c.l.b16 %v995
    %v1007 = vunpack.c.l.b16 %v996
    %v1008 = vunpack.c.l.b16 %v997
    %v1009 = vunpack.c.l.b16 %v998
    %v1010 = vpack.c.b16 %v1007, %v1006
    %v1011 = vpack.c.b16 %v1009, %v1008
    %v1015 = vsel %vm203, %v1001, 0
    %1017 = vmatprep.subr.bf16.mxu0 0
    %1018 = vmatpush1.bf16.msra.mxu0 0
    %1019 = vmatprep.subr.bf16.mxu0 0
    %1020 = vmatpush1.bf16.msra.mxu0 0
    %1021 = vmatprep.subr.bf16.mxu0 0
    %1022 = vmatpush1.bf16.msra.mxu0 0
    %1023 = vmatprep.subr.bf16.mxu0 0
    %1024 = vmatpush1.bf16.msra.mxu0 0
    %1025 = vmatprep.subr.bf16.mxu0 0
    %1026 = vmatpush1.bf16.msra.mxu0 0
    %1027 = vmatprep.subr.bf16.mxu0 0
    %1028 = vmatpush1.bf16.msra.mxu0 0
    %1029 = vmatprep.subr.bf16.mxu0 0
    %1030 = vmatpush1.bf16.msra.mxu0 %v1011
    %1031 = vmatprep.subr.bf16.mxu0 0
    %1032 = vmatpush1.bf16.msra.mxu0 %v1010
    %1033 = vmatprep.subr.bf16.mxu0 0
    %1034 = vmatpush2.bf16.msra.mxu0 0
    %1035 = vmatprep.subr.bf16.mxu0 0
    %1036 = vmatpush2.bf16.msra.mxu0 0
    %1037 = vmatprep.subr.bf16.mxu0 0
    %1038 = vmatpush2.bf16.msra.mxu0 0
    %1039 = vmatprep.subr.bf16.mxu0 0
    %1040 = vmatpush2.bf16.msra.mxu0 0
    %1041 = vmatprep.subr.bf16.mxu0 0
    %1042 = vmatpush2.bf16.msra.mxu0 0
    %1043 = vmatprep.subr.bf16.mxu0 0
    %1044 = vmatpush2.bf16.msra.mxu0 0
    %1045 = vmatprep.subr.bf16.mxu0 0
    %1046 = vmatpush2.bf16.msra.mxu0 0
    %1047 = vmatprep.subr.bf16.mxu0 0
    %1048 = vmatpush2.bf16.msra.mxu0 0
    %1049 = vmatprep.mubr.bf16.mxu0 0
    %1050 = vmatmul.mubr.bf16.gmra.mxu0 %v1015
    %v1051 = vpop.f32.mrf.mxu0
    %v1052 = vadd.f32 0.0, %v1051
    %v1053 = vpop.f32.mrf.mxu0
    %v1054 = vpop.f32.mrf.mxu0
    %v1055 = vpop.f32.mrf.mxu0
    %1056 = vdwg.mxu0
    %1058 = vrot.lane.b32.xlu0 %v989, 32
    %v1059 = vpop.permute.xlu0 %1058
    %v1064 = vunpack.c.l.b16 %v990
    %v1065 = vunpack.c.l.b16 %v991
    %v1066 = vunpack.c.l.b16 %v992
    %v1067 = vunpack.c.l.b16 %v993
    %v1068 = vpack.c.b16 %v1065, %v1064
    %v1069 = vpack.c.b16 %v1067, %v1066
    %v1073 = vsel %vm203, %v1059, 0
    %1075 = vmatprep.subr.bf16.mxu0 0
    %1076 = vmatpush1.bf16.msra.mxu0 0
    %1077 = vmatprep.subr.bf16.mxu0 0
    %1078 = vmatpush1.bf16.msra.mxu0 0
    %1079 = vmatprep.subr.bf16.mxu0 0
    %1080 = vmatpush1.bf16.msra.mxu0 0
    %1081 = vmatprep.subr.bf16.mxu0 0
    %1082 = vmatpush1.bf16.msra.mxu0 0
    %1083 = vmatprep.subr.bf16.mxu0 0
    %1084 = vmatpush1.bf16.msra.mxu0 0
    %1085 = vmatprep.subr.bf16.mxu0 0
    %1086 = vmatpush1.bf16.msra.mxu0 0
    %1087 = vmatprep.subr.bf16.mxu0 0
    %1088 = vmatpush1.bf16.msra.mxu0 %v1069
    %1089 = vmatprep.subr.bf16.mxu0 0
    %1090 = vmatpush1.bf16.msra.mxu0 %v1068
    %1091 = vmatprep.subr.bf16.mxu0 0
    %1092 = vmatpush2.bf16.msra.mxu0 0
    %1093 = vmatprep.subr.bf16.mxu0 0
    %1094 = vmatpush2.bf16.msra.mxu0 0
    %1095 = vmatprep.subr.bf16.mxu0 0
    %1096 = vmatpush2.bf16.msra.mxu0 0
    %1097 = vmatprep.subr.bf16.mxu0 0
    %1098 = vmatpush2.bf16.msra.mxu0 0
    %1099 = vmatprep.subr.bf16.mxu0 0
    %1100 = vmatpush2.bf16.msra.mxu0 0
    %1101 = vmatprep.subr.bf16.mxu0 0
    %1102 = vmatpush2.bf16.msra.mxu0 0
    %1103 = vmatprep.subr.bf16.mxu0 0
    %1104 = vmatpush2.bf16.msra.mxu0 0
    %1105 = vmatprep.subr.bf16.mxu0 0
    %1106 = vmatpush2.bf16.msra.mxu0 0
    %1107 = vmatprep.mubr.bf16.mxu0 0
    %1108 = vmatmul.mubr.bf16.gmra.mxu0 %v1073
    %v1109 = vpop.f32.mrf.mxu0
    %v1110 = vadd.f32 %v1052, %v1109
    %v1111 = vpop.f32.mrf.mxu0
    %v1112 = vpop.f32.mrf.mxu0
    %v1113 = vpop.f32.mrf.mxu0
    %1114 = vdwg.mxu0
    %v1115 = vld [vmem:[#allocation9] sm:$0x1]
    %v1117 = vlaneseq
    %v1118 = vshrl.u32 %v1117, 7
    %v1119 = vsub.s32 0, %v1118
    %v1120 = vrot.slane %v1115, %v1119
    %v1122 = vadd.f32 %v1110, %v1120
    %v1123 = vxor.u32 %v1122, 2147483648
    %v1124 = vmul.f32 %v1123, 1.442695
    %v1125 = vpow.pop %v1124
    %v1126 = vadd.f32 %v1125, 1.0
    %v1127 = vrcp.pop %v1126
    %v1128 = vmul.f32 1.0, %v1127
    %v1129 = vtanh.pop %v1122
    %v1130 = vmul.f32 %v1128, %v491
    %1132 = vrot.lane.b32.xlu0 %v1129, 64
    %v1133 = vpop.permute.xlu0 %1132
    %v1135 = vmul.f32 %v1128, %v1133
    %1137 = vrot.lane.b32.xlu0 %v1135, 32
    %v1138 = vpop.permute.xlu0 %1137
    %v1140 = vadd.f32 %v1130, %v1138
    %v1141 = vtanh.pop %v1140
    %1143 = vrot.lane.b32.xlu0 %v1141, 64
    %v1144 = vpop.permute.xlu0 %1143
    %v1146 = vmul.f32 %v1128, %v1144
    %1148 = vrot.lane.b32.xlu0 %v1146, 32
    %v1149 = vpop.permute.xlu0 %1148
    %s1151 = scalar_lea.vmem %s14, 2
    %1152 = vst.msk [vmem:[%s1151] sm:$0x3] %vm502, %v1149
    %s1153 = scalar_lea.vmem %s1, 1
    %v1154 = vld [vmem:[%s1153] sm:$0x1]
    %v1155 = vld [vmem:[%s8] sm:$0xf]
    %v1156 = vld [vmem:[%s8 + $0x4] sm:$0xf]
    %v1157 = vld [vmem:[%s8 + $0x8] sm:$0xf]
    %v1158 = vld [vmem:[%s8 + $0xc] sm:$0xf]
    %v1159 = vld [vmem:[%s8 + $0x10] sm:$0xf]
    %v1160 = vld [vmem:[%s8 + $0x14] sm:$0xf]
    %v1161 = vld [vmem:[%s8 + $0x18] sm:$0xf]
    %v1162 = vld [vmem:[%s8 + $0x1c] sm:$0xf]
    %v1163 = vld [vmem:[#allocation10] sm:$0xf]
    %v1164 = vld [vmem:[#allocation10 + $0x4] sm:$0xf]
    %v1165 = vld [vmem:[#allocation10 + $0x8] sm:$0xf]
    %v1166 = vld [vmem:[#allocation10 + $0xc] sm:$0xf]
    %v1171 = vunpack.c.l.b16 %v1163
    %v1172 = vunpack.c.l.b16 %v1164
    %v1173 = vunpack.c.l.b16 %v1165
    %v1174 = vunpack.c.l.b16 %v1166
    %v1175 = vpack.c.b16 %v1172, %v1171
    %v1176 = vpack.c.b16 %v1174, %v1173
    %1179 = vmatprep.subr.bf16.mxu0 0
    %1180 = vmatpush1.bf16.msra.mxu0 0
    %1181 = vmatprep.subr.bf16.mxu0 0
    %1182 = vmatpush1.bf16.msra.mxu0 0
    %1183 = vmatprep.subr.bf16.mxu0 0
    %1184 = vmatpush1.bf16.msra.mxu0 0
    %1185 = vmatprep.subr.bf16.mxu0 0
    %1186 = vmatpush1.bf16.msra.mxu0 0
    %1187 = vmatprep.subr.bf16.mxu0 0
    %1188 = vmatpush1.bf16.msra.mxu0 0
    %1189 = vmatprep.subr.bf16.mxu0 0
    %1190 = vmatpush1.bf16.msra.mxu0 0
    %1191 = vmatprep.subr.bf16.mxu0 0
    %1192 = vmatpush1.bf16.msra.mxu0 %v1176
    %1193 = vmatprep.subr.bf16.mxu0 0
    %1194 = vmatpush1.bf16.msra.mxu0 %v1175
    %1195 = vmatprep.subr.bf16.mxu0 0
    %1196 = vmatpush2.bf16.msra.mxu0 0
    %1197 = vmatprep.subr.bf16.mxu0 0
    %1198 = vmatpush2.bf16.msra.mxu0 0
    %1199 = vmatprep.subr.bf16.mxu0 0
    %1200 = vmatpush2.bf16.msra.mxu0 0
    %1201 = vmatprep.subr.bf16.mxu0 0
    %1202 = vmatpush2.bf16.msra.mxu0 0
    %1203 = vmatprep.subr.bf16.mxu0 0
    %1204 = vmatpush2.bf16.msra.mxu0 0
    %1205 = vmatprep.subr.bf16.mxu0 0
    %1206 = vmatpush2.bf16.msra.mxu0 0
    %1207 = vmatprep.subr.bf16.mxu0 0
    %1208 = vmatpush2.bf16.msra.mxu0 0
    %1209 = vmatprep.subr.bf16.mxu0 0
    %1210 = vmatpush2.bf16.msra.mxu0 0
    %1211 = vmatprep.mubr.bf16.mxu0 0
    %1212 = vmatmul.mubr.bf16.gmra.mxu0 %v745
    %v1213 = vpop.f32.mrf.mxu0
    %v1214 = vadd.f32 0.0, %v1213
    %v1215 = vpop.f32.mrf.mxu0
    %v1216 = vpop.f32.mrf.mxu0
    %v1217 = vpop.f32.mrf.mxu0
    %1218 = vdwg.mxu0
    %v1227 = vunpack.c.l.b16 %v1155
    %v1228 = vunpack.c.l.b16 %v1156
    %v1229 = vunpack.c.l.b16 %v1157
    %v1230 = vunpack.c.l.b16 %v1158
    %v1231 = vunpack.c.l.b16 %v1159
    %v1232 = vunpack.c.l.b16 %v1160
    %v1233 = vunpack.c.l.b16 %v1161
    %v1234 = vunpack.c.l.b16 %v1162
    %v1235 = vpack.c.b16 %v1228, %v1227
    %v1236 = vpack.c.b16 %v1230, %v1229
    %v1237 = vpack.c.b16 %v1232, %v1231
    %v1238 = vpack.c.b16 %v1234, %v1233
    %v1244 = vsel %vm271, %v1154, 0
    %1246 = vmatprep.subr.bf16.mxu0 0
    %1247 = vmatpush1.bf16.msra.mxu0 0
    %1248 = vmatprep.subr.bf16.mxu0 0
    %1249 = vmatpush1.bf16.msra.mxu0 0
    %1250 = vmatprep.subr.bf16.mxu0 0
    %1251 = vmatpush1.bf16.msra.mxu0 0
    %1252 = vmatprep.subr.bf16.mxu0 0
    %1253 = vmatpush1.bf16.msra.mxu0 0
    %1254 = vmatprep.subr.bf16.mxu0 0
    %1255 = vmatpush1.bf16.msra.mxu0 %v1238
    %1256 = vmatprep.subr.bf16.mxu0 0
    %1257 = vmatpush1.bf16.msra.mxu0 %v1237
    %1258 = vmatprep.subr.bf16.mxu0 0
    %1259 = vmatpush1.bf16.msra.mxu0 %v1236
    %1260 = vmatprep.subr.bf16.mxu0 0
    %1261 = vmatpush1.bf16.msra.mxu0 %v1235
    %1262 = vmatprep.subr.bf16.mxu0 0
    %1263 = vmatpush2.bf16.msra.mxu0 0
    %1264 = vmatprep.subr.bf16.mxu0 0
    %1265 = vmatpush2.bf16.msra.mxu0 0
    %1266 = vmatprep.subr.bf16.mxu0 0
    %1267 = vmatpush2.bf16.msra.mxu0 0
    %1268 = vmatprep.subr.bf16.mxu0 0
    %1269 = vmatpush2.bf16.msra.mxu0 0
    %1270 = vmatprep.subr.bf16.mxu0 0
    %1271 = vmatpush2.bf16.msra.mxu0 0
    %1272 = vmatprep.subr.bf16.mxu0 0
    %1273 = vmatpush2.bf16.msra.mxu0 0
    %1274 = vmatprep.subr.bf16.mxu0 0
    %1275 = vmatpush2.bf16.msra.mxu0 0
    %1276 = vmatprep.subr.bf16.mxu0 0
    %1277 = vmatpush2.bf16.msra.mxu0 0
    %1278 = vmatprep.mubr.bf16.mxu0 0
    %1279 = vmatmul.mubr.bf16.gmra.mxu0 %v1244
    %v1280 = vpop.f32.mrf.mxu0
    %v1281 = vadd.f32 %v1214, %v1280
    %v1282 = vpop.f32.mrf.mxu0
    %v1283 = vpop.f32.mrf.mxu0
    %v1284 = vpop.f32.mrf.mxu0
    %1285 = vdwg.mxu0
    %v1286 = vld [vmem:[#allocation12] sm:$0x1]
    %v1288 = vlaneseq
    %v1289 = vshrl.u32 %v1288, 7
    %v1290 = vsub.s32 0, %v1289
    %v1291 = vrot.slane %v1286, %v1290
    %v1293 = vadd.f32 %v1281, %v1291
    %v1294 = vxor.u32 %v1293, 2147483648
    %v1295 = vmul.f32 %v1294, 1.442695
    %v1296 = vpow.pop %v1295
    %v1297 = vadd.f32 %v1296, 1.0
    %v1298 = vrcp.pop %v1297
    %v1299 = vmul.f32 1.0, %v1298
    %v1300 = vtanh.pop %v1293
    %v1301 = vmul.f32 %v1299, %v661
    %1303 = vrot.lane.b32.xlu0 %v1300, 64
    %v1304 = vpop.permute.xlu0 %1303
    %v1306 = vmul.f32 %v1299, %v1304
    %1308 = vrot.lane.b32.xlu0 %v1306, 32
    %v1309 = vpop.permute.xlu0 %1308
    %v1311 = vadd.f32 %v1301, %v1309
    %v1312 = vtanh.pop %v1311
    %1314 = vrot.lane.b32.xlu0 %v1312, 64
    %v1315 = vpop.permute.xlu0 %1314
    %v1317 = vmul.f32 %v1299, %v1315
    %v1318 = vpack.c.bf16 %v1317, %v1317
    %v1319 = vld [vmem:[#allocation13] sm:$0xf]
    %v1320 = vld [vmem:[#allocation13 + $0x4] sm:$0xf]
    %v1321 = vld [vmem:[#allocation13 + $0x8] sm:$0xf]
    %v1322 = vld [vmem:[#allocation13 + $0xc] sm:$0xf]
    %v1323 = vpack.c.bf16 %v818, %v818
    %v1324 = vld [vmem:[#allocation15] sm:$0xf]
    %v1325 = vld [vmem:[#allocation15 + $0x4] sm:$0xf]
    %v1326 = vld [vmem:[#allocation15 + $0x8] sm:$0xf]
    %v1327 = vld [vmem:[#allocation15 + $0xc] sm:$0xf]
    %1329 = vrot.lane.b32.xlu0 %v1323, 32
    %v1330 = vpop.permute.xlu0 %1329
    %v1335 = vunpack.c.l.b16 %v1324
    %v1336 = vunpack.c.l.b16 %v1325
    %v1337 = vunpack.c.l.b16 %v1326
    %v1338 = vunpack.c.l.b16 %v1327
    %v1339 = vpack.c.b16 %v1336, %v1335
    %v1340 = vpack.c.b16 %v1338, %v1337
    %v1344 = vsel %vm203, %v1330, 0
    %1346 = vmatprep.subr.bf16.mxu0 0
    %1347 = vmatpush1.bf16.msra.mxu0 0
    %1348 = vmatprep.subr.bf16.mxu0 0
    %1349 = vmatpush1.bf16.msra.mxu0 0
    %1350 = vmatprep.subr.bf16.mxu0 0
    %1351 = vmatpush1.bf16.msra.mxu0 0
    %1352 = vmatprep.subr.bf16.mxu0 0
    %1353 = vmatpush1.bf16.msra.mxu0 0
    %1354 = vmatprep.subr.bf16.mxu0 0
    %1355 = vmatpush1.bf16.msra.mxu0 0
    %1356 = vmatprep.subr.bf16.mxu0 0
    %1357 = vmatpush1.bf16.msra.mxu0 0
    %1358 = vmatprep.subr.bf16.mxu0 0
    %1359 = vmatpush1.bf16.msra.mxu0 %v1340
    %1360 = vmatprep.subr.bf16.mxu0 0
    %1361 = vmatpush1.bf16.msra.mxu0 %v1339
    %1362 = vmatprep.subr.bf16.mxu0 0
    %1363 = vmatpush2.bf16.msra.mxu0 0
    %1364 = vmatprep.subr.bf16.mxu0 0
    %1365 = vmatpush2.bf16.msra.mxu0 0
    %1366 = vmatprep.subr.bf16.mxu0 0
    %1367 = vmatpush2.bf16.msra.mxu0 0
    %1368 = vmatprep.subr.bf16.mxu0 0
    %1369 = vmatpush2.bf16.msra.mxu0 0
    %1370 = vmatprep.subr.bf16.mxu0 0
    %1371 = vmatpush2.bf16.msra.mxu0 0
    %1372 = vmatprep.subr.bf16.mxu0 0
    %1373 = vmatpush2.bf16.msra.mxu0 0
    %1374 = vmatprep.subr.bf16.mxu0 0
    %1375 = vmatpush2.bf16.msra.mxu0 0
    %1376 = vmatprep.subr.bf16.mxu0 0
    %1377 = vmatpush2.bf16.msra.mxu0 0
    %1378 = vmatprep.mubr.bf16.mxu0 0
    %1379 = vmatmul.mubr.bf16.gmra.mxu0 %v1344
    %v1380 = vpop.f32.mrf.mxu0
    %v1381 = vadd.f32 0.0, %v1380
    %v1382 = vpop.f32.mrf.mxu0
    %v1383 = vpop.f32.mrf.mxu0
    %v1384 = vpop.f32.mrf.mxu0
    %1385 = vdwg.mxu0
    %1387 = vrot.lane.b32.xlu0 %v1318, 32
    %v1388 = vpop.permute.xlu0 %1387
    %v1393 = vunpack.c.l.b16 %v1319
    %v1394 = vunpack.c.l.b16 %v1320
    %v1395 = vunpack.c.l.b16 %v1321
    %v1396 = vunpack.c.l.b16 %v1322
    %v1397 = vpack.c.b16 %v1394, %v1393
    %v1398 = vpack.c.b16 %v1396, %v1395
    %v1402 = vsel %vm203, %v1388, 0
    %1404 = vmatprep.subr.bf16.mxu0 0
    %1405 = vmatpush1.bf16.msra.mxu0 0
    %1406 = vmatprep.subr.bf16.mxu0 0
    %1407 = vmatpush1.bf16.msra.mxu0 0
    %1408 = vmatprep.subr.bf16.mxu0 0
    %1409 = vmatpush1.bf16.msra.mxu0 0
    %1410 = vmatprep.subr.bf16.mxu0 0
    %1411 = vmatpush1.bf16.msra.mxu0 0
    %1412 = vmatprep.subr.bf16.mxu0 0
    %1413 = vmatpush1.bf16.msra.mxu0 0
    %1414 = vmatprep.subr.bf16.mxu0 0
    %1415 = vmatpush1.bf16.msra.mxu0 0
    %1416 = vmatprep.subr.bf16.mxu0 0
    %1417 = vmatpush1.bf16.msra.mxu0 %v1398
    %1418 = vmatprep.subr.bf16.mxu0 0
    %1419 = vmatpush1.bf16.msra.mxu0 %v1397
    %1420 = vmatprep.subr.bf16.mxu0 0
    %1421 = vmatpush2.bf16.msra.mxu0 0
    %1422 = vmatprep.subr.bf16.mxu0 0
    %1423 = vmatpush2.bf16.msra.mxu0 0
    %1424 = vmatprep.subr.bf16.mxu0 0
    %1425 = vmatpush2.bf16.msra.mxu0 0
    %1426 = vmatprep.subr.bf16.mxu0 0
    %1427 = vmatpush2.bf16.msra.mxu0 0
    %1428 = vmatprep.subr.bf16.mxu0 0
    %1429 = vmatpush2.bf16.msra.mxu0 0
    %1430 = vmatprep.subr.bf16.mxu0 0
    %1431 = vmatpush2.bf16.msra.mxu0 0
    %1432 = vmatprep.subr.bf16.mxu0 0
    %1433 = vmatpush2.bf16.msra.mxu0 0
    %1434 = vmatprep.subr.bf16.mxu0 0
    %1435 = vmatpush2.bf16.msra.mxu0 0
    %1436 = vmatprep.mubr.bf16.mxu0 0
    %1437 = vmatmul.mubr.bf16.gmra.mxu0 %v1402
    %v1438 = vpop.f32.mrf.mxu0
    %v1439 = vadd.f32 %v1381, %v1438
    %v1440 = vpop.f32.mrf.mxu0
    %v1441 = vpop.f32.mrf.mxu0
    %v1442 = vpop.f32.mrf.mxu0
    %1443 = vdwg.mxu0
    %v1444 = vld [vmem:[#allocation16] sm:$0x1]
    %v1446 = vlaneseq
    %v1447 = vshrl.u32 %v1446, 7
    %v1448 = vsub.s32 0, %v1447
    %v1449 = vrot.slane %v1444, %v1448
    %v1451 = vadd.f32 %v1439, %v1449
    %v1452 = vxor.u32 %v1451, 2147483648
    %v1453 = vmul.f32 %v1452, 1.442695
    %v1454 = vpow.pop %v1453
    %v1455 = vadd.f32 %v1454, 1.0
    %v1456 = vrcp.pop %v1455
    %v1457 = vmul.f32 1.0, %v1456
    %v1458 = vtanh.pop %v1451
    %v1459 = vmul.f32 %v1457, %v812
    %1461 = vrot.lane.b32.xlu0 %v1458, 64
    %v1462 = vpop.permute.xlu0 %1461
    %v1464 = vmul.f32 %v1457, %v1462
    %1466 = vrot.lane.b32.xlu0 %v1464, 32
    %v1467 = vpop.permute.xlu0 %1466
    %v1469 = vadd.f32 %v1459, %v1467
    %v1470 = vtanh.pop %v1469
    %1472 = vrot.lane.b32.xlu0 %v1470, 64
    %v1473 = vpop.permute.xlu0 %1472
    %v1475 = vmul.f32 %v1457, %v1473
    %1477 = vrot.lane.b32.xlu0 %v1475, 32
    %v1478 = vpop.permute.xlu0 %1477
    %s1480 = scalar_lea.vmem %s15, 2
    %1481 = vst.msk [vmem:[%s1480] sm:$0x3] %vm502, %v1478
    %s1482 = scalar_lea.vmem %s0, 2
    %v1483 = vld [vmem:[%s1482] sm:$0x1]
    %v1484 = vld [vmem:[%s2] sm:$0xf]
    %v1485 = vld [vmem:[%s2 + $0x4] sm:$0xf]
    %v1486 = vld [vmem:[%s2 + $0x8] sm:$0xf]
    %v1487 = vld [vmem:[%s2 + $0xc] sm:$0xf]
    %v1488 = vld [vmem:[%s2 + $0x10] sm:$0xf]
    %v1489 = vld [vmem:[%s2 + $0x14] sm:$0xf]
    %v1490 = vld [vmem:[%s2 + $0x18] sm:$0xf]
    %v1491 = vld [vmem:[%s2 + $0x1c] sm:$0xf]
    %v1492 = vld [vmem:[#allocation2] sm:$0xf]
    %v1493 = vld [vmem:[#allocation2 + $0x4] sm:$0xf]
    %v1494 = vld [vmem:[#allocation2 + $0x8] sm:$0xf]
    %v1495 = vld [vmem:[#allocation2 + $0xc] sm:$0xf]
    %v1500 = vunpack.c.l.b16 %v1492
    %v1501 = vunpack.c.l.b16 %v1493
    %v1502 = vunpack.c.l.b16 %v1494
    %v1503 = vunpack.c.l.b16 %v1495
    %v1504 = vpack.c.b16 %v1501, %v1500
    %v1505 = vpack.c.b16 %v1503, %v1502
    %1508 = vmatprep.subr.bf16.mxu0 0
    %1509 = vmatpush1.bf16.msra.mxu0 0
    %1510 = vmatprep.subr.bf16.mxu0 0
    %1511 = vmatpush1.bf16.msra.mxu0 0
    %1512 = vmatprep.subr.bf16.mxu0 0
    %1513 = vmatpush1.bf16.msra.mxu0 0
    %1514 = vmatprep.subr.bf16.mxu0 0
    %1515 = vmatpush1.bf16.msra.mxu0 0
    %1516 = vmatprep.subr.bf16.mxu0 0
    %1517 = vmatpush1.bf16.msra.mxu0 0
    %1518 = vmatprep.subr.bf16.mxu0 0
    %1519 = vmatpush1.bf16.msra.mxu0 0
    %1520 = vmatprep.subr.bf16.mxu0 0
    %1521 = vmatpush1.bf16.msra.mxu0 %v1505
    %1522 = vmatprep.subr.bf16.mxu0 0
    %1523 = vmatpush1.bf16.msra.mxu0 %v1504
    %1524 = vmatprep.subr.bf16.mxu0 0
    %1525 = vmatpush2.bf16.msra.mxu0 0
    %1526 = vmatprep.subr.bf16.mxu0 0
    %1527 = vmatpush2.bf16.msra.mxu0 0
    %1528 = vmatprep.subr.bf16.mxu0 0
    %1529 = vmatpush2.bf16.msra.mxu0 0
    %1530 = vmatprep.subr.bf16.mxu0 0
    %1531 = vmatpush2.bf16.msra.mxu0 0
    %1532 = vmatprep.subr.bf16.mxu0 0
    %1533 = vmatpush2.bf16.msra.mxu0 0
    %1534 = vmatprep.subr.bf16.mxu0 0
    %1535 = vmatpush2.bf16.msra.mxu0 0
    %1536 = vmatprep.subr.bf16.mxu0 0
    %1537 = vmatpush2.bf16.msra.mxu0 0
    %1538 = vmatprep.subr.bf16.mxu0 0
    %1539 = vmatpush2.bf16.msra.mxu0 0
    %1540 = vmatprep.mubr.bf16.mxu0 0
    %1541 = vmatmul.mubr.bf16.gmra.mxu0 %v1073
    %v1542 = vpop.f32.mrf.mxu0
    %v1543 = vadd.f32 0.0, %v1542
    %v1544 = vpop.f32.mrf.mxu0
    %v1545 = vpop.f32.mrf.mxu0
    %v1546 = vpop.f32.mrf.mxu0
    %1547 = vdwg.mxu0
    %v1556 = vunpack.c.l.b16 %v1484
    %v1557 = vunpack.c.l.b16 %v1485
    %v1558 = vunpack.c.l.b16 %v1486
    %v1559 = vunpack.c.l.b16 %v1487
    %v1560 = vunpack.c.l.b16 %v1488
    %v1561 = vunpack.c.l.b16 %v1489
    %v1562 = vunpack.c.l.b16 %v1490
    %v1563 = vunpack.c.l.b16 %v1491
    %v1564 = vpack.c.b16 %v1557, %v1556
    %v1565 = vpack.c.b16 %v1559, %v1558
    %v1566 = vpack.c.b16 %v1561, %v1560
    %v1567 = vpack.c.b16 %v1563, %v1562
    %v1573 = vsel %vm271, %v1483, 0
    %1575 = vmatprep.subr.bf16.mxu0 0
    %1576 = vmatpush1.bf16.msra.mxu0 0
    %1577 = vmatprep.subr.bf16.mxu0 0
    %1578 = vmatpush1.bf16.msra.mxu0 0
    %1579 = vmatprep.subr.bf16.mxu0 0
    %1580 = vmatpush1.bf16.msra.mxu0 0
    %1581 = vmatprep.subr.bf16.mxu0 0
    %1582 = vmatpush1.bf16.msra.mxu0 0
    %1583 = vmatprep.subr.bf16.mxu0 0
    %1584 = vmatpush1.bf16.msra.mxu0 %v1567
    %1585 = vmatprep.subr.bf16.mxu0 0
    %1586 = vmatpush1.bf16.msra.mxu0 %v1566
    %1587 = vmatprep.subr.bf16.mxu0 0
    %1588 = vmatpush1.bf16.msra.mxu0 %v1565
    %1589 = vmatprep.subr.bf16.mxu0 0
    %1590 = vmatpush1.bf16.msra.mxu0 %v1564
    %1591 = vmatprep.subr.bf16.mxu0 0
    %1592 = vmatpush2.bf16.msra.mxu0 0
    %1593 = vmatprep.subr.bf16.mxu0 0
    %1594 = vmatpush2.bf16.msra.mxu0 0
    %1595 = vmatprep.subr.bf16.mxu0 0
    %1596 = vmatpush2.bf16.msra.mxu0 0
    %1597 = vmatprep.subr.bf16.mxu0 0
    %1598 = vmatpush2.bf16.msra.mxu0 0
    %1599 = vmatprep.subr.bf16.mxu0 0
    %1600 = vmatpush2.bf16.msra.mxu0 0
    %1601 = vmatprep.subr.bf16.mxu0 0
    %1602 = vmatpush2.bf16.msra.mxu0 0
    %1603 = vmatprep.subr.bf16.mxu0 0
    %1604 = vmatpush2.bf16.msra.mxu0 0
    %1605 = vmatprep.subr.bf16.mxu0 0
    %1606 = vmatpush2.bf16.msra.mxu0 0
    %1607 = vmatprep.mubr.bf16.mxu0 0
    %1608 = vmatmul.mubr.bf16.gmra.mxu0 %v1573
    %v1609 = vpop.f32.mrf.mxu0
    %v1610 = vadd.f32 %v1543, %v1609
    %v1611 = vpop.f32.mrf.mxu0
    %v1612 = vpop.f32.mrf.mxu0
    %v1613 = vpop.f32.mrf.mxu0
    %1614 = vdwg.mxu0
    %v1615 = vld [vmem:[#allocation4] sm:$0x1]
    %v1617 = vlaneseq
    %v1618 = vshrl.u32 %v1617, 7
    %v1619 = vsub.s32 0, %v1618
    %v1620 = vrot.slane %v1615, %v1619
    %v1622 = vadd.f32 %v1610, %v1620
    %v1623 = vxor.u32 %v1622, 2147483648
    %v1624 = vmul.f32 %v1623, 1.442695
    %v1625 = vpow.pop %v1624
    %v1626 = vadd.f32 %v1625, 1.0
    %v1627 = vrcp.pop %v1626
    %v1628 = vmul.f32 1.0, %v1627
    %v1629 = vtanh.pop %v1622
    %v1630 = vmul.f32 %v1628, %v982
    %1632 = vrot.lane.b32.xlu0 %v1629, 64
    %v1633 = vpop.permute.xlu0 %1632
    %v1635 = vmul.f32 %v1628, %v1633
    %1637 = vrot.lane.b32.xlu0 %v1635, 32
    %v1638 = vpop.permute.xlu0 %1637
    %v1640 = vadd.f32 %v1630, %v1638
    %v1641 = vtanh.pop %v1640
    %1643 = vrot.lane.b32.xlu0 %v1641, 64
    %v1644 = vpop.permute.xlu0 %1643
    %v1646 = vmul.f32 %v1628, %v1644
    %v1647 = vpack.c.bf16 %v1646, %v1646
    %v1648 = vld [vmem:[#allocation6] sm:$0xf]
    %v1649 = vld [vmem:[#allocation6 + $0x4] sm:$0xf]
    %v1650 = vld [vmem:[#allocation6 + $0x8] sm:$0xf]
    %v1651 = vld [vmem:[#allocation6 + $0xc] sm:$0xf]
    %v1652 = vpack.c.bf16 %v1146, %v1146
    %v1653 = vld [vmem:[#allocation7] sm:$0xf]
    %v1654 = vld [vmem:[#allocation7 + $0x4] sm:$0xf]
    %v1655 = vld [vmem:[#allocation7 + $0x8] sm:$0xf]
    %v1656 = vld [vmem:[#allocation7 + $0xc] sm:$0xf]
    %1658 = vrot.lane.b32.xlu0 %v1652, 32
    %v1659 = vpop.permute.xlu0 %1658
    %v1664 = vunpack.c.l.b16 %v1653
    %v1665 = vunpack.c.l.b16 %v1654
    %v1666 = vunpack.c.l.b16 %v1655
    %v1667 = vunpack.c.l.b16 %v1656
    %v1668 = vpack.c.b16 %v1665, %v1664
    %v1669 = vpack.c.b16 %v1667, %v1666
    %v1673 = vsel %vm203, %v1659, 0
    %1675 = vmatprep.subr.bf16.mxu0 0
    %1676 = vmatpush1.bf16.msra.mxu0 0
    %1677 = vmatprep.subr.bf16.mxu0 0
    %1678 = vmatpush1.bf16.msra.mxu0 0
    %1679 = vmatprep.subr.bf16.mxu0 0
    %1680 = vmatpush1.bf16.msra.mxu0 0
    %1681 = vmatprep.subr.bf16.mxu0 0
    %1682 = vmatpush1.bf16.msra.mxu0 0
    %1683 = vmatprep.subr.bf16.mxu0 0
    %1684 = vmatpush1.bf16.msra.mxu0 0
    %1685 = vmatprep.subr.bf16.mxu0 0
    %1686 = vmatpush1.bf16.msra.mxu0 0
    %1687 = vmatprep.subr.bf16.mxu0 0
    %1688 = vmatpush1.bf16.msra.mxu0 %v1669
    %1689 = vmatprep.subr.bf16.mxu0 0
    %1690 = vmatpush1.bf16.msra.mxu0 %v1668
    %1691 = vmatprep.subr.bf16.mxu0 0
    %1692 = vmatpush2.bf16.msra.mxu0 0
    %1693 = vmatprep.subr.bf16.mxu0 0
    %1694 = vmatpush2.bf16.msra.mxu0 0
    %1695 = vmatprep.subr.bf16.mxu0 0
    %1696 = vmatpush2.bf16.msra.mxu0 0
    %1697 = vmatprep.subr.bf16.mxu0 0
    %1698 = vmatpush2.bf16.msra.mxu0 0
    %1699 = vmatprep.subr.bf16.mxu0 0
    %1700 = vmatpush2.bf16.msra.mxu0 0
    %1701 = vmatprep.subr.bf16.mxu0 0
    %1702 = vmatpush2.bf16.msra.mxu0 0
    %1703 = vmatprep.subr.bf16.mxu0 0
    %1704 = vmatpush2.bf16.msra.mxu0 0
    %1705 = vmatprep.subr.bf16.mxu0 0
    %1706 = vmatpush2.bf16.msra.mxu0 0
    %1707 = vmatprep.mubr.bf16.mxu0 0
    %1708 = vmatmul.mubr.bf16.gmra.mxu0 %v1673
    %v1709 = vpop.f32.mrf.mxu0
    %v1710 = vadd.f32 0.0, %v1709
    %v1711 = vpop.f32.mrf.mxu0
    %v1712 = vpop.f32.mrf.mxu0
    %v1713 = vpop.f32.mrf.mxu0
    %1714 = vdwg.mxu0
    %1716 = vrot.lane.b32.xlu0 %v1647, 32
    %v1717 = vpop.permute.xlu0 %1716
    %v1722 = vunpack.c.l.b16 %v1648
    %v1723 = vunpack.c.l.b16 %v1649
    %v1724 = vunpack.c.l.b16 %v1650
    %v1725 = vunpack.c.l.b16 %v1651
    %v1726 = vpack.c.b16 %v1723, %v1722
    %v1727 = vpack.c.b16 %v1725, %v1724
    %v1731 = vsel %vm203, %v1717, 0
    %1733 = vmatprep.subr.bf16.mxu0 0
    %1734 = vmatpush1.bf16.msra.mxu0 0
    %1735 = vmatprep.subr.bf16.mxu0 0
    %1736 = vmatpush1.bf16.msra.mxu0 0
    %1737 = vmatprep.subr.bf16.mxu0 0
    %1738 = vmatpush1.bf16.msra.mxu0 0
    %1739 = vmatprep.subr.bf16.mxu0 0
    %1740 = vmatpush1.bf16.msra.mxu0 0
    %1741 = vmatprep.subr.bf16.mxu0 0
    %1742 = vmatpush1.bf16.msra.mxu0 0
    %1743 = vmatprep.subr.bf16.mxu0 0
    %1744 = vmatpush1.bf16.msra.mxu0 0
    %1745 = vmatprep.subr.bf16.mxu0 0
    %1746 = vmatpush1.bf16.msra.mxu0 %v1727
    %1747 = vmatprep.subr.bf16.mxu0 0
    %1748 = vmatpush1.bf16.msra.mxu0 %v1726
    %1749 = vmatprep.subr.bf16.mxu0 0
    %1750 = vmatpush2.bf16.msra.mxu0 0
    %1751 = vmatprep.subr.bf16.mxu0 0
    %1752 = vmatpush2.bf16.msra.mxu0 0
    %1753 = vmatprep.subr.bf16.mxu0 0
    %1754 = vmatpush2.bf16.msra.mxu0 0
    %1755 = vmatprep.subr.bf16.mxu0 0
    %1756 = vmatpush2.bf16.msra.mxu0 0
    %1757 = vmatprep.subr.bf16.mxu0 0
    %1758 = vmatpush2.bf16.msra.mxu0 0
    %1759 = vmatprep.subr.bf16.mxu0 0
    %1760 = vmatpush2.bf16.msra.mxu0 0
    %1761 = vmatprep.subr.bf16.mxu0 0
    %1762 = vmatpush2.bf16.msra.mxu0 0
    %1763 = vmatprep.subr.bf16.mxu0 0
    %1764 = vmatpush2.bf16.msra.mxu0 0
    %1765 = vmatprep.mubr.bf16.mxu0 0
    %1766 = vmatmul.mubr.bf16.gmra.mxu0 %v1731
    %v1767 = vpop.f32.mrf.mxu0
    %v1768 = vadd.f32 %v1710, %v1767
    %v1769 = vpop.f32.mrf.mxu0
    %v1770 = vpop.f32.mrf.mxu0
    %v1771 = vpop.f32.mrf.mxu0
    %1772 = vdwg.mxu0
    %v1773 = vld [vmem:[#allocation9] sm:$0x1]
    %v1775 = vlaneseq
    %v1776 = vshrl.u32 %v1775, 7
    %v1777 = vsub.s32 0, %v1776
    %v1778 = vrot.slane %v1773, %v1777
    %v1780 = vadd.f32 %v1768, %v1778
    %v1781 = vxor.u32 %v1780, 2147483648
    %v1782 = vmul.f32 %v1781, 1.442695
    %v1783 = vpow.pop %v1782
    %v1784 = vadd.f32 %v1783, 1.0
    %v1785 = vrcp.pop %v1784
    %v1786 = vmul.f32 1.0, %v1785
    %v1787 = vtanh.pop %v1780
    %v1788 = vmul.f32 %v1786, %v1140
    %1790 = vrot.lane.b32.xlu0 %v1787, 64
    %v1791 = vpop.permute.xlu0 %1790
    %v1793 = vmul.f32 %v1786, %v1791
    %1795 = vrot.lane.b32.xlu0 %v1793, 32
    %v1796 = vpop.permute.xlu0 %1795
    %v1798 = vadd.f32 %v1788, %v1796
    %v1799 = vtanh.pop %v1798
    %1801 = vrot.lane.b32.xlu0 %v1799, 64
    %v1802 = vpop.permute.xlu0 %1801
    %v1804 = vmul.f32 %v1786, %v1802
    %1806 = vrot.lane.b32.xlu0 %v1804, 32
    %v1807 = vpop.permute.xlu0 %1806
    %s1809 = scalar_lea.vmem %s14, 4
    %1810 = vst.msk [vmem:[%s1809] sm:$0x3] %vm502, %v1807
    %s1811 = scalar_lea.vmem %s1, 2
    %v1812 = vld [vmem:[%s1811] sm:$0x1]
    %v1813 = vld [vmem:[%s8] sm:$0xf]
    %v1814 = vld [vmem:[%s8 + $0x4] sm:$0xf]
    %v1815 = vld [vmem:[%s8 + $0x8] sm:$0xf]
    %v1816 = vld [vmem:[%s8 + $0xc] sm:$0xf]
    %v1817 = vld [vmem:[%s8 + $0x10] sm:$0xf]
    %v1818 = vld [vmem:[%s8 + $0x14] sm:$0xf]
    %v1819 = vld [vmem:[%s8 + $0x18] sm:$0xf]
    %v1820 = vld [vmem:[%s8 + $0x1c] sm:$0xf]
    %v1821 = vld [vmem:[#allocation10] sm:$0xf]
    %v1822 = vld [vmem:[#allocation10 + $0x4] sm:$0xf]
    %v1823 = vld [vmem:[#allocation10 + $0x8] sm:$0xf]
    %v1824 = vld [vmem:[#allocation10 + $0xc] sm:$0xf]
    %v1829 = vunpack.c.l.b16 %v1821
    %v1830 = vunpack.c.l.b16 %v1822
    %v1831 = vunpack.c.l.b16 %v1823
    %v1832 = vunpack.c.l.b16 %v1824
    %v1833 = vpack.c.b16 %v1830, %v1829
    %v1834 = vpack.c.b16 %v1832, %v1831
    %1837 = vmatprep.subr.bf16.mxu0 0
    %1838 = vmatpush1.bf16.msra.mxu0 0
    %1839 = vmatprep.subr.bf16.mxu0 0
    %1840 = vmatpush1.bf16.msra.mxu0 0
    %1841 = vmatprep.subr.bf16.mxu0 0
    %1842 = vmatpush1.bf16.msra.mxu0 0
    %1843 = vmatprep.subr.bf16.mxu0 0
    %1844 = vmatpush1.bf16.msra.mxu0 0
    %1845 = vmatprep.subr.bf16.mxu0 0
    %1846 = vmatpush1.bf16.msra.mxu0 0
    %1847 = vmatprep.subr.bf16.mxu0 0
    %1848 = vmatpush1.bf16.msra.mxu0 0
    %1849 = vmatprep.subr.bf16.mxu0 0
    %1850 = vmatpush1.bf16.msra.mxu0 %v1834
    %1851 = vmatprep.subr.bf16.mxu0 0
    %1852 = vmatpush1.bf16.msra.mxu0 %v1833
    %1853 = vmatprep.subr.bf16.mxu0 0
    %1854 = vmatpush2.bf16.msra.mxu0 0
    %1855 = vmatprep.subr.bf16.mxu0 0
    %1856 = vmatpush2.bf16.msra.mxu0 0
    %1857 = vmatprep.subr.bf16.mxu0 0
    %1858 = vmatpush2.bf16.msra.mxu0 0
    %1859 = vmatprep.subr.bf16.mxu0 0
    %1860 = vmatpush2.bf16.msra.mxu0 0
    %1861 = vmatprep.subr.bf16.mxu0 0
    %1862 = vmatpush2.bf16.msra.mxu0 0
    %1863 = vmatprep.subr.bf16.mxu0 0
    %1864 = vmatpush2.bf16.msra.mxu0 0
    %1865 = vmatprep.subr.bf16.mxu0 0
    %1866 = vmatpush2.bf16.msra.mxu0 0
    %1867 = vmatprep.subr.bf16.mxu0 0
    %1868 = vmatpush2.bf16.msra.mxu0 0
    %1869 = vmatprep.mubr.bf16.mxu0 0
    %1870 = vmatmul.mubr.bf16.gmra.mxu0 %v1402
    %v1871 = vpop.f32.mrf.mxu0
    %v1872 = vadd.f32 0.0, %v1871
    %v1873 = vpop.f32.mrf.mxu0
    %v1874 = vpop.f32.mrf.mxu0
    %v1875 = vpop.f32.mrf.mxu0
    %1876 = vdwg.mxu0
    %v1885 = vunpack.c.l.b16 %v1813
    %v1886 = vunpack.c.l.b16 %v1814
    %v1887 = vunpack.c.l.b16 %v1815
    %v1888 = vunpack.c.l.b16 %v1816
    %v1889 = vunpack.c.l.b16 %v1817
    %v1890 = vunpack.c.l.b16 %v1818
    %v1891 = vunpack.c.l.b16 %v1819
    %v1892 = vunpack.c.l.b16 %v1820
    %v1893 = vpack.c.b16 %v1886, %v1885
    %v1894 = vpack.c.b16 %v1888, %v1887
    %v1895 = vpack.c.b16 %v1890, %v1889
    %v1896 = vpack.c.b16 %v1892, %v1891
    %v1902 = vsel %vm271, %v1812, 0
    %1904 = vmatprep.subr.bf16.mxu0 0
    %1905 = vmatpush1.bf16.msra.mxu0 0
    %1906 = vmatprep.subr.bf16.mxu0 0
    %1907 = vmatpush1.bf16.msra.mxu0 0
    %1908 = vmatprep.subr.bf16.mxu0 0
    %1909 = vmatpush1.bf16.msra.mxu0 0
    %1910 = vmatprep.subr.bf16.mxu0 0
    %1911 = vmatpush1.bf16.msra.mxu0 0
    %1912 = vmatprep.subr.bf16.mxu0 0
    %1913 = vmatpush1.bf16.msra.mxu0 %v1896
    %1914 = vmatprep.subr.bf16.mxu0 0
    %1915 = vmatpush1.bf16.msra.mxu0 %v1895
    %1916 = vmatprep.subr.bf16.mxu0 0
    %1917 = vmatpush1.bf16.msra.mxu0 %v1894
    %1918 = vmatprep.subr.bf16.mxu0 0
    %1919 = vmatpush1.bf16.msra.mxu0 %v1893
    %1920 = vmatprep.subr.bf16.mxu0 0
    %1921 = vmatpush2.bf16.msra.mxu0 0
    %1922 = vmatprep.subr.bf16.mxu0 0
    %1923 = vmatpush2.bf16.msra.mxu0 0
    %1924 = vmatprep.subr.bf16.mxu0 0
    %1925 = vmatpush2.bf16.msra.mxu0 0
    %1926 = vmatprep.subr.bf16.mxu0 0
    %1927 = vmatpush2.bf16.msra.mxu0 0
    %1928 = vmatprep.subr.bf16.mxu0 0
    %1929 = vmatpush2.bf16.msra.mxu0 0
    %1930 = vmatprep.subr.bf16.mxu0 0
    %1931 = vmatpush2.bf16.msra.mxu0 0
    %1932 = vmatprep.subr.bf16.mxu0 0
    %1933 = vmatpush2.bf16.msra.mxu0 0
    %1934 = vmatprep.subr.bf16.mxu0 0
    %1935 = vmatpush2.bf16.msra.mxu0 0
    %1936 = vmatprep.mubr.bf16.mxu0 0
    %1937 = vmatmul.mubr.bf16.gmra.mxu0 %v1902
    %v1938 = vpop.f32.mrf.mxu0
    %v1939 = vadd.f32 %v1872, %v1938
    %v1940 = vpop.f32.mrf.mxu0
    %v1941 = vpop.f32.mrf.mxu0
    %v1942 = vpop.f32.mrf.mxu0
    %1943 = vdwg.mxu0
    %v1944 = vld [vmem:[#allocation12] sm:$0x1]
    %v1946 = vlaneseq
    %v1947 = vshrl.u32 %v1946, 7
    %v1948 = vsub.s32 0, %v1947
    %v1949 = vrot.slane %v1944, %v1948
    %v1951 = vadd.f32 %v1939, %v1949
    %v1952 = vxor.u32 %v1951, 2147483648
    %v1953 = vmul.f32 %v1952, 1.442695
    %v1954 = vpow.pop %v1953
    %v1955 = vadd.f32 %v1954, 1.0
    %v1956 = vrcp.pop %v1955
    %v1957 = vmul.f32 1.0, %v1956
    %v1958 = vtanh.pop %v1951
    %v1959 = vmul.f32 %v1957, %v1311
    %1961 = vrot.lane.b32.xlu0 %v1958, 64
    %v1962 = vpop.permute.xlu0 %1961
    %v1964 = vmul.f32 %v1957, %v1962
    %1966 = vrot.lane.b32.xlu0 %v1964, 32
    %v1967 = vpop.permute.xlu0 %1966
    %v1969 = vadd.f32 %v1959, %v1967
    %v1970 = vtanh.pop %v1969
    %1972 = vrot.lane.b32.xlu0 %v1970, 64
    %v1973 = vpop.permute.xlu0 %1972
    %v1975 = vmul.f32 %v1957, %v1973
    %v1976 = vpack.c.bf16 %v1975, %v1975
    %v1977 = vld [vmem:[#allocation13] sm:$0xf]
    %v1978 = vld [vmem:[#allocation13 + $0x4] sm:$0xf]
    %v1979 = vld [vmem:[#allocation13 + $0x8] sm:$0xf]
    %v1980 = vld [vmem:[#allocation13 + $0xc] sm:$0xf]
    %v1981 = vpack.c.bf16 %v1475, %v1475
    %v1982 = vld [vmem:[#allocation15] sm:$0xf]
    %v1983 = vld [vmem:[#allocation15 + $0x4] sm:$0xf]
    %v1984 = vld [vmem:[#allocation15 + $0x8] sm:$0xf]
    %v1985 = vld [vmem:[#allocation15 + $0xc] sm:$0xf]
    %1987 = vrot.lane.b32.xlu0 %v1981, 32
    %v1988 = vpop.permute.xlu0 %1987
    %v1993 = vunpack.c.l.b16 %v1982
    %v1994 = vunpack.c.l.b16 %v1983
    %v1995 = vunpack.c.l.b16 %v1984
    %v1996 = vunpack.c.l.b16 %v1985
    %v1997 = vpack.c.b16 %v1994, %v1993
    %v1998 = vpack.c.b16 %v1996, %v1995
    %v2002 = vsel %vm203, %v1988, 0
    %2004 = vmatprep.subr.bf16.mxu0 0
    %2005 = vmatpush1.bf16.msra.mxu0 0
    %2006 = vmatprep.subr.bf16.mxu0 0
    %2007 = vmatpush1.bf16.msra.mxu0 0
    %2008 = vmatprep.subr.bf16.mxu0 0
    %2009 = vmatpush1.bf16.msra.mxu0 0
    %2010 = vmatprep.subr.bf16.mxu0 0
    %2011 = vmatpush1.bf16.msra.mxu0 0
    %2012 = vmatprep.subr.bf16.mxu0 0
    %2013 = vmatpush1.bf16.msra.mxu0 0
    %2014 = vmatprep.subr.bf16.mxu0 0
    %2015 = vmatpush1.bf16.msra.mxu0 0
    %2016 = vmatprep.subr.bf16.mxu0 0
    %2017 = vmatpush1.bf16.msra.mxu0 %v1998
    %2018 = vmatprep.subr.bf16.mxu0 0
    %2019 = vmatpush1.bf16.msra.mxu0 %v1997
    %2020 = vmatprep.subr.bf16.mxu0 0
    %2021 = vmatpush2.bf16.msra.mxu0 0
    %2022 = vmatprep.subr.bf16.mxu0 0
    %2023 = vmatpush2.bf16.msra.mxu0 0
    %2024 = vmatprep.subr.bf16.mxu0 0
    %2025 = vmatpush2.bf16.msra.mxu0 0
    %2026 = vmatprep.subr.bf16.mxu0 0
    %2027 = vmatpush2.bf16.msra.mxu0 0
    %2028 = vmatprep.subr.bf16.mxu0 0
    %2029 = vmatpush2.bf16.msra.mxu0 0
    %2030 = vmatprep.subr.bf16.mxu0 0
    %2031 = vmatpush2.bf16.msra.mxu0 0
    %2032 = vmatprep.subr.bf16.mxu0 0
    %2033 = vmatpush2.bf16.msra.mxu0 0
    %2034 = vmatprep.subr.bf16.mxu0 0
    %2035 = vmatpush2.bf16.msra.mxu0 0
    %2036 = vmatprep.mubr.bf16.mxu0 0
    %2037 = vmatmul.mubr.bf16.gmra.mxu0 %v2002
    %v2038 = vpop.f32.mrf.mxu0
    %v2039 = vadd.f32 0.0, %v2038
    %v2040 = vpop.f32.mrf.mxu0
    %v2041 = vpop.f32.mrf.mxu0
    %v2042 = vpop.f32.mrf.mxu0
    %2043 = vdwg.mxu0
    %2045 = vrot.lane.b32.xlu0 %v1976, 32
    %v2046 = vpop.permute.xlu0 %2045
    %v2051 = vunpack.c.l.b16 %v1977
    %v2052 = vunpack.c.l.b16 %v1978
    %v2053 = vunpack.c.l.b16 %v1979
    %v2054 = vunpack.c.l.b16 %v1980
    %v2055 = vpack.c.b16 %v2052, %v2051
    %v2056 = vpack.c.b16 %v2054, %v2053
    %v2060 = vsel %vm203, %v2046, 0
    %2062 = vmatprep.subr.bf16.mxu0 0
    %2063 = vmatpush1.bf16.msra.mxu0 0
    %2064 = vmatprep.subr.bf16.mxu0 0
    %2065 = vmatpush1.bf16.msra.mxu0 0
    %2066 = vmatprep.subr.bf16.mxu0 0
    %2067 = vmatpush1.bf16.msra.mxu0 0
    %2068 = vmatprep.subr.bf16.mxu0 0
    %2069 = vmatpush1.bf16.msra.mxu0 0
    %2070 = vmatprep.subr.bf16.mxu0 0
    %2071 = vmatpush1.bf16.msra.mxu0 0
    %2072 = vmatprep.subr.bf16.mxu0 0
    %2073 = vmatpush1.bf16.msra.mxu0 0
    %2074 = vmatprep.subr.bf16.mxu0 0
    %2075 = vmatpush1.bf16.msra.mxu0 %v2056
    %2076 = vmatprep.subr.bf16.mxu0 0
    %2077 = vmatpush1.bf16.msra.mxu0 %v2055
    %2078 = vmatprep.subr.bf16.mxu0 0
    %2079 = vmatpush2.bf16.msra.mxu0 0
    %2080 = vmatprep.subr.bf16.mxu0 0
    %2081 = vmatpush2.bf16.msra.mxu0 0
    %2082 = vmatprep.subr.bf16.mxu0 0
    %2083 = vmatpush2.bf16.msra.mxu0 0
    %2084 = vmatprep.subr.bf16.mxu0 0
    %2085 = vmatpush2.bf16.msra.mxu0 0
    %2086 = vmatprep.subr.bf16.mxu0 0
    %2087 = vmatpush2.bf16.msra.mxu0 0
    %2088 = vmatprep.subr.bf16.mxu0 0
    %2089 = vmatpush2.bf16.msra.mxu0 0
    %2090 = vmatprep.subr.bf16.mxu0 0
    %2091 = vmatpush2.bf16.msra.mxu0 0
    %2092 = vmatprep.subr.bf16.mxu0 0
    %2093 = vmatpush2.bf16.msra.mxu0 0
    %2094 = vmatprep.mubr.bf16.mxu0 0
    %2095 = vmatmul.mubr.bf16.gmra.mxu0 %v2060
    %v2096 = vpop.f32.mrf.mxu0
    %v2097 = vadd.f32 %v2039, %v2096
    %v2098 = vpop.f32.mrf.mxu0
    %v2099 = vpop.f32.mrf.mxu0
    %v2100 = vpop.f32.mrf.mxu0
    %2101 = vdwg.mxu0
    %v2102 = vld [vmem:[#allocation16] sm:$0x1]
    %v2104 = vlaneseq
    %v2105 = vshrl.u32 %v2104, 7
    %v2106 = vsub.s32 0, %v2105
    %v2107 = vrot.slane %v2102, %v2106
    %v2109 = vadd.f32 %v2097, %v2107
    %v2110 = vxor.u32 %v2109, 2147483648
    %v2111 = vmul.f32 %v2110, 1.442695
    %v2112 = vpow.pop %v2111
    %v2113 = vadd.f32 %v2112, 1.0
    %v2114 = vrcp.pop %v2113
    %v2115 = vmul.f32 1.0, %v2114
    %v2116 = vtanh.pop %v2109
    %v2117 = vmul.f32 %v2115, %v1469
    %2119 = vrot.lane.b32.xlu0 %v2116, 64
    %v2120 = vpop.permute.xlu0 %2119
    %v2122 = vmul.f32 %v2115, %v2120
    %2124 = vrot.lane.b32.xlu0 %v2122, 32
    %v2125 = vpop.permute.xlu0 %2124
    %v2127 = vadd.f32 %v2117, %v2125
    %v2128 = vtanh.pop %v2127
    %2130 = vrot.lane.b32.xlu0 %v2128, 64
    %v2131 = vpop.permute.xlu0 %2130
    %v2133 = vmul.f32 %v2115, %v2131
    %2135 = vrot.lane.b32.xlu0 %v2133, 32
    %v2136 = vpop.permute.xlu0 %2135
    %s2138 = scalar_lea.vmem %s15, 4
    %2139 = vst.msk [vmem:[%s2138] sm:$0x3] %vm502, %v2136
    %s2140 = scalar_lea.vmem %s0, 3
    %v2141 = vld [vmem:[%s2140] sm:$0x1]
    %v2142 = vld [vmem:[%s2] sm:$0xf]
    %v2143 = vld [vmem:[%s2 + $0x4] sm:$0xf]
    %v2144 = vld [vmem:[%s2 + $0x8] sm:$0xf]
    %v2145 = vld [vmem:[%s2 + $0xc] sm:$0xf]
    %v2146 = vld [vmem:[%s2 + $0x10] sm:$0xf]
    %v2147 = vld [vmem:[%s2 + $0x14] sm:$0xf]
    %v2148 = vld [vmem:[%s2 + $0x18] sm:$0xf]
    %v2149 = vld [vmem:[%s2 + $0x1c] sm:$0xf]
    %v2150 = vld [vmem:[#allocation2] sm:$0xf]
    %v2151 = vld [vmem:[#allocation2 + $0x4] sm:$0xf]
    %v2152 = vld [vmem:[#allocation2 + $0x8] sm:$0xf]
    %v2153 = vld [vmem:[#allocation2 + $0xc] sm:$0xf]
    %v2158 = vunpack.c.l.b16 %v2150
    %v2159 = vunpack.c.l.b16 %v2151
    %v2160 = vunpack.c.l.b16 %v2152
    %v2161 = vunpack.c.l.b16 %v2153
    %v2162 = vpack.c.b16 %v2159, %v2158
    %v2163 = vpack.c.b16 %v2161, %v2160
    %2166 = vmatprep.subr.bf16.mxu0 0
    %2167 = vmatpush1.bf16.msra.mxu0 0
    %2168 = vmatprep.subr.bf16.mxu0 0
    %2169 = vmatpush1.bf16.msra.mxu0 0
    %2170 = vmatprep.subr.bf16.mxu0 0
    %2171 = vmatpush1.bf16.msra.mxu0 0
    %2172 = vmatprep.subr.bf16.mxu0 0
    %2173 = vmatpush1.bf16.msra.mxu0 0
    %2174 = vmatprep.subr.bf16.mxu0 0
    %2175 = vmatpush1.bf16.msra.mxu0 0
    %2176 = vmatprep.subr.bf16.mxu0 0
    %2177 = vmatpush1.bf16.msra.mxu0 0
    %2178 = vmatprep.subr.bf16.mxu0 0
    %2179 = vmatpush1.bf16.msra.mxu0 %v2163
    %2180 = vmatprep.subr.bf16.mxu0 0
    %2181 = vmatpush1.bf16.msra.mxu0 %v2162
    %2182 = vmatprep.subr.bf16.mxu0 0
    %2183 = vmatpush2.bf16.msra.mxu0 0
    %2184 = vmatprep.subr.bf16.mxu0 0
    %2185 = vmatpush2.bf16.msra.mxu0 0
    %2186 = vmatprep.subr.bf16.mxu0 0
    %2187 = vmatpush2.bf16.msra.mxu0 0
    %2188 = vmatprep.subr.bf16.mxu0 0
    %2189 = vmatpush2.bf16.msra.mxu0 0
    %2190 = vmatprep.subr.bf16.mxu0 0
    %2191 = vmatpush2.bf16.msra.mxu0 0
    %2192 = vmatprep.subr.bf16.mxu0 0
    %2193 = vmatpush2.bf16.msra.mxu0 0
    %2194 = vmatprep.subr.bf16.mxu0 0
    %2195 = vmatpush2.bf16.msra.mxu0 0
    %2196 = vmatprep.subr.bf16.mxu0 0
    %2197 = vmatpush2.bf16.msra.mxu0 0
    %2198 = vmatprep.mubr.bf16.mxu0 0
    %2199 = vmatmul.mubr.bf16.gmra.mxu0 %v1731
    %v2200 = vpop.f32.mrf.mxu0
    %v2201 = vadd.f32 0.0, %v2200
    %v2202 = vpop.f32.mrf.mxu0
    %v2203 = vpop.f32.mrf.mxu0
    %v2204 = vpop.f32.mrf.mxu0
    %2205 = vdwg.mxu0
    %v2214 = vunpack.c.l.b16 %v2142
    %v2215 = vunpack.c.l.b16 %v2143
    %v2216 = vunpack.c.l.b16 %v2144
    %v2217 = vunpack.c.l.b16 %v2145
    %v2218 = vunpack.c.l.b16 %v2146
    %v2219 = vunpack.c.l.b16 %v2147
    %v2220 = vunpack.c.l.b16 %v2148
    %v2221 = vunpack.c.l.b16 %v2149
    %v2222 = vpack.c.b16 %v2215, %v2214
    %v2223 = vpack.c.b16 %v2217, %v2216
    %v2224 = vpack.c.b16 %v2219, %v2218
    %v2225 = vpack.c.b16 %v2221, %v2220
    %v2231 = vsel %vm271, %v2141, 0
    %2233 = vmatprep.subr.bf16.mxu0 0
    %2234 = vmatpush1.bf16.msra.mxu0 0
    %2235 = vmatprep.subr.bf16.mxu0 0
    %2236 = vmatpush1.bf16.msra.mxu0 0
    %2237 = vmatprep.subr.bf16.mxu0 0
    %2238 = vmatpush1.bf16.msra.mxu0 0
    %2239 = vmatprep.subr.bf16.mxu0 0
    %2240 = vmatpush1.bf16.msra.mxu0 0
    %2241 = vmatprep.subr.bf16.mxu0 0
    %2242 = vmatpush1.bf16.msra.mxu0 %v2225
    %2243 = vmatprep.subr.bf16.mxu0 0
    %2244 = vmatpush1.bf16.msra.mxu0 %v2224
    %2245 = vmatprep.subr.bf16.mxu0 0
    %2246 = vmatpush1.bf16.msra.mxu0 %v2223
    %2247 = vmatprep.subr.bf16.mxu0 0
    %2248 = vmatpush1.bf16.msra.mxu0 %v2222
    %2249 = vmatprep.subr.bf16.mxu0 0
    %2250 = vmatpush2.bf16.msra.mxu0 0
    %2251 = vmatprep.subr.bf16.mxu0 0
    %2252 = vmatpush2.bf16.msra.mxu0 0
    %2253 = vmatprep.subr.bf16.mxu0 0
    %2254 = vmatpush2.bf16.msra.mxu0 0
    %2255 = vmatprep.subr.bf16.mxu0 0
    %2256 = vmatpush2.bf16.msra.mxu0 0
    %2257 = vmatprep.subr.bf16.mxu0 0
    %2258 = vmatpush2.bf16.msra.mxu0 0
    %2259 = vmatprep.subr.bf16.mxu0 0
    %2260 = vmatpush2.bf16.msra.mxu0 0
    %2261 = vmatprep.subr.bf16.mxu0 0
    %2262 = vmatpush2.bf16.msra.mxu0 0
    %2263 = vmatprep.subr.bf16.mxu0 0
    %2264 = vmatpush2.bf16.msra.mxu0 0
    %2265 = vmatprep.mubr.bf16.mxu0 0
    %2266 = vmatmul.mubr.bf16.gmra.mxu0 %v2231
    %v2267 = vpop.f32.mrf.mxu0
    %v2268 = vadd.f32 %v2201, %v2267
    %v2269 = vpop.f32.mrf.mxu0
    %v2270 = vpop.f32.mrf.mxu0
    %v2271 = vpop.f32.mrf.mxu0
    %2272 = vdwg.mxu0
    %v2273 = vld [vmem:[#allocation4] sm:$0x1]
    %v2275 = vlaneseq
    %v2276 = vshrl.u32 %v2275, 7
    %v2277 = vsub.s32 0, %v2276
    %v2278 = vrot.slane %v2273, %v2277
    %v2280 = vadd.f32 %v2268, %v2278
    %v2281 = vxor.u32 %v2280, 2147483648
    %v2282 = vmul.f32 %v2281, 1.442695
    %v2283 = vpow.pop %v2282
    %v2284 = vadd.f32 %v2283, 1.0
    %v2285 = vrcp.pop %v2284
    %v2286 = vmul.f32 1.0, %v2285
    %v2287 = vtanh.pop %v2280
    %v2288 = vmul.f32 %v2286, %v1640
    %2290 = vrot.lane.b32.xlu0 %v2287, 64
    %v2291 = vpop.permute.xlu0 %2290
    %v2293 = vmul.f32 %v2286, %v2291
    %2295 = vrot.lane.b32.xlu0 %v2293, 32
    %v2296 = vpop.permute.xlu0 %2295
    %v2298 = vadd.f32 %v2288, %v2296
    %v2299 = vtanh.pop %v2298
    %2301 = vrot.lane.b32.xlu0 %v2299, 64
    %v2302 = vpop.permute.xlu0 %2301
    %v2304 = vmul.f32 %v2286, %v2302
    %v2305 = vpack.c.bf16 %v2304, %v2304
    %v2306 = vld [vmem:[#allocation6] sm:$0xf]
    %v2307 = vld [vmem:[#allocation6 + $0x4] sm:$0xf]
    %v2308 = vld [vmem:[#allocation6 + $0x8] sm:$0xf]
    %v2309 = vld [vmem:[#allocation6 + $0xc] sm:$0xf]
    %v2310 = vpack.c.bf16 %v1804, %v1804
    %v2311 = vld [vmem:[#allocation7] sm:$0xf]
    %v2312 = vld [vmem:[#allocation7 + $0x4] sm:$0xf]
    %v2313 = vld [vmem:[#allocation7 + $0x8] sm:$0xf]
    %v2314 = vld [vmem:[#allocation7 + $0xc] sm:$0xf]
    %2316 = vrot.lane.b32.xlu0 %v2310, 32
    %v2317 = vpop.permute.xlu0 %2316
    %v2322 = vunpack.c.l.b16 %v2311
    %v2323 = vunpack.c.l.b16 %v2312
    %v2324 = vunpack.c.l.b16 %v2313
    %v2325 = vunpack.c.l.b16 %v2314
    %v2326 = vpack.c.b16 %v2323, %v2322
    %v2327 = vpack.c.b16 %v2325, %v2324
    %v2331 = vsel %vm203, %v2317, 0
    %2333 = vmatprep.subr.bf16.mxu0 0
    %2334 = vmatpush1.bf16.msra.mxu0 0
    %2335 = vmatprep.subr.bf16.mxu0 0
    %2336 = vmatpush1.bf16.msra.mxu0 0
    %2337 = vmatprep.subr.bf16.mxu0 0
    %2338 = vmatpush1.bf16.msra.mxu0 0
    %2339 = vmatprep.subr.bf16.mxu0 0
    %2340 = vmatpush1.bf16.msra.mxu0 0
    %2341 = vmatprep.subr.bf16.mxu0 0
    %2342 = vmatpush1.bf16.msra.mxu0 0
    %2343 = vmatprep.subr.bf16.mxu0 0
    %2344 = vmatpush1.bf16.msra.mxu0 0
    %2345 = vmatprep.subr.bf16.mxu0 0
    %2346 = vmatpush1.bf16.msra.mxu0 %v2327
    %2347 = vmatprep.subr.bf16.mxu0 0
    %2348 = vmatpush1.bf16.msra.mxu0 %v2326
    %2349 = vmatprep.subr.bf16.mxu0 0
    %2350 = vmatpush2.bf16.msra.mxu0 0
    %2351 = vmatprep.subr.bf16.mxu0 0
    %2352 = vmatpush2.bf16.msra.mxu0 0
    %2353 = vmatprep.subr.bf16.mxu0 0
    %2354 = vmatpush2.bf16.msra.mxu0 0
    %2355 = vmatprep.subr.bf16.mxu0 0
    %2356 = vmatpush2.bf16.msra.mxu0 0
    %2357 = vmatprep.subr.bf16.mxu0 0
    %2358 = vmatpush2.bf16.msra.mxu0 0
    %2359 = vmatprep.subr.bf16.mxu0 0
    %2360 = vmatpush2.bf16.msra.mxu0 0
    %2361 = vmatprep.subr.bf16.mxu0 0
    %2362 = vmatpush2.bf16.msra.mxu0 0
    %2363 = vmatprep.subr.bf16.mxu0 0
    %2364 = vmatpush2.bf16.msra.mxu0 0
    %2365 = vmatprep.mubr.bf16.mxu0 0
    %2366 = vmatmul.mubr.bf16.gmra.mxu0 %v2331
    %v2367 = vpop.f32.mrf.mxu0
    %v2368 = vadd.f32 0.0, %v2367
    %v2369 = vpop.f32.mrf.mxu0
    %v2370 = vpop.f32.mrf.mxu0
    %v2371 = vpop.f32.mrf.mxu0
    %2372 = vdwg.mxu0
    %2374 = vrot.lane.b32.xlu0 %v2305, 32
    %v2375 = vpop.permute.xlu0 %2374
    %v2380 = vunpack.c.l.b16 %v2306
    %v2381 = vunpack.c.l.b16 %v2307
    %v2382 = vunpack.c.l.b16 %v2308
    %v2383 = vunpack.c.l.b16 %v2309
    %v2384 = vpack.c.b16 %v2381, %v2380
    %v2385 = vpack.c.b16 %v2383, %v2382
    %v2389 = vsel %vm203, %v2375, 0
    %2391 = vmatprep.subr.bf16.mxu0 0
    %2392 = vmatpush1.bf16.msra.mxu0 0
    %2393 = vmatprep.subr.bf16.mxu0 0
    %2394 = vmatpush1.bf16.msra.mxu0 0
    %2395 = vmatprep.subr.bf16.mxu0 0
    %2396 = vmatpush1.bf16.msra.mxu0 0
    %2397 = vmatprep.subr.bf16.mxu0 0
    %2398 = vmatpush1.bf16.msra.mxu0 0
    %2399 = vmatprep.subr.bf16.mxu0 0
    %2400 = vmatpush1.bf16.msra.mxu0 0
    %2401 = vmatprep.subr.bf16.mxu0 0
    %2402 = vmatpush1.bf16.msra.mxu0 0
    %2403 = vmatprep.subr.bf16.mxu0 0
    %2404 = vmatpush1.bf16.msra.mxu0 %v2385
    %2405 = vmatprep.subr.bf16.mxu0 0
    %2406 = vmatpush1.bf16.msra.mxu0 %v2384
    %2407 = vmatprep.subr.bf16.mxu0 0
    %2408 = vmatpush2.bf16.msra.mxu0 0
    %2409 = vmatprep.subr.bf16.mxu0 0
    %2410 = vmatpush2.bf16.msra.mxu0 0
    %2411 = vmatprep.subr.bf16.mxu0 0
    %2412 = vmatpush2.bf16.msra.mxu0 0
    %2413 = vmatprep.subr.bf16.mxu0 0
    %2414 = vmatpush2.bf16.msra.mxu0 0
    %2415 = vmatprep.subr.bf16.mxu0 0
    %2416 = vmatpush2.bf16.msra.mxu0 0
    %2417 = vmatprep.subr.bf16.mxu0 0
    %2418 = vmatpush2.bf16.msra.mxu0 0
    %2419 = vmatprep.subr.bf16.mxu0 0
    %2420 = vmatpush2.bf16.msra.mxu0 0
    %2421 = vmatprep.subr.bf16.mxu0 0
    %2422 = vmatpush2.bf16.msra.mxu0 0
    %2423 = vmatprep.mubr.bf16.mxu0 0
    %2424 = vmatmul.mubr.bf16.gmra.mxu0 %v2389
    %v2425 = vpop.f32.mrf.mxu0
    %v2426 = vadd.f32 %v2368, %v2425
    %v2427 = vpop.f32.mrf.mxu0
    %v2428 = vpop.f32.mrf.mxu0
    %v2429 = vpop.f32.mrf.mxu0
    %2430 = vdwg.mxu0
    %v2431 = vld [vmem:[#allocation9] sm:$0x1]
    %v2433 = vlaneseq
    %v2434 = vshrl.u32 %v2433, 7
    %v2435 = vsub.s32 0, %v2434
    %v2436 = vrot.slane %v2431, %v2435
    %v2438 = vadd.f32 %v2426, %v2436
    %v2439 = vxor.u32 %v2438, 2147483648
    %v2440 = vmul.f32 %v2439, 1.442695
    %v2441 = vpow.pop %v2440
    %v2442 = vadd.f32 %v2441, 1.0
    %v2443 = vrcp.pop %v2442
    %v2444 = vmul.f32 1.0, %v2443
    %v2445 = vtanh.pop %v2438
    %v2446 = vmul.f32 %v2444, %v1798
    %2448 = vrot.lane.b32.xlu0 %v2445, 64
    %v2449 = vpop.permute.xlu0 %2448
    %v2451 = vmul.f32 %v2444, %v2449
    %2453 = vrot.lane.b32.xlu0 %v2451, 32
    %v2454 = vpop.permute.xlu0 %2453
    %v2456 = vadd.f32 %v2446, %v2454
    %v2457 = vtanh.pop %v2456
    %2459 = vrot.lane.b32.xlu0 %v2457, 64
    %v2460 = vpop.permute.xlu0 %2459
    %v2462 = vmul.f32 %v2444, %v2460
    %2464 = vrot.lane.b32.xlu0 %v2462, 32
    %v2465 = vpop.permute.xlu0 %2464
    %s2467 = scalar_lea.vmem %s14, 6
    %2468 = vst.msk [vmem:[%s2467] sm:$0x3] %vm502, %v2465
    %s2469 = scalar_lea.vmem %s1, 3
    %v2470 = vld [vmem:[%s2469] sm:$0x1]
    %v2471 = vld [vmem:[%s8] sm:$0xf]
    %v2472 = vld [vmem:[%s8 + $0x4] sm:$0xf]
    %v2473 = vld [vmem:[%s8 + $0x8] sm:$0xf]
    %v2474 = vld [vmem:[%s8 + $0xc] sm:$0xf]
    %v2475 = vld [vmem:[%s8 + $0x10] sm:$0xf]
    %v2476 = vld [vmem:[%s8 + $0x14] sm:$0xf]
    %v2477 = vld [vmem:[%s8 + $0x18] sm:$0xf]
    %v2478 = vld [vmem:[%s8 + $0x1c] sm:$0xf]
    %v2479 = vld [vmem:[#allocation10] sm:$0xf]
    %v2480 = vld [vmem:[#allocation10 + $0x4] sm:$0xf]
    %v2481 = vld [vmem:[#allocation10 + $0x8] sm:$0xf]
    %v2482 = vld [vmem:[#allocation10 + $0xc] sm:$0xf]
    %v2487 = vunpack.c.l.b16 %v2479
    %v2488 = vunpack.c.l.b16 %v2480
    %v2489 = vunpack.c.l.b16 %v2481
    %v2490 = vunpack.c.l.b16 %v2482
    %v2491 = vpack.c.b16 %v2488, %v2487
    %v2492 = vpack.c.b16 %v2490, %v2489
    %2495 = vmatprep.subr.bf16.mxu0 0
    %2496 = vmatpush1.bf16.msra.mxu0 0
    %2497 = vmatprep.subr.bf16.mxu0 0
    %2498 = vmatpush1.bf16.msra.mxu0 0
    %2499 = vmatprep.subr.bf16.mxu0 0
    %2500 = vmatpush1.bf16.msra.mxu0 0
    %2501 = vmatprep.subr.bf16.mxu0 0
    %2502 = vmatpush1.bf16.msra.mxu0 0
    %2503 = vmatprep.subr.bf16.mxu0 0
    %2504 = vmatpush1.bf16.msra.mxu0 0
    %2505 = vmatprep.subr.bf16.mxu0 0
    %2506 = vmatpush1.bf16.msra.mxu0 0
    %2507 = vmatprep.subr.bf16.mxu0 0
    %2508 = vmatpush1.bf16.msra.mxu0 %v2492
    %2509 = vmatprep.subr.bf16.mxu0 0
    %2510 = vmatpush1.bf16.msra.mxu0 %v2491
    %2511 = vmatprep.subr.bf16.mxu0 0
    %2512 = vmatpush2.bf16.msra.mxu0 0
    %2513 = vmatprep.subr.bf16.mxu0 0
    %2514 = vmatpush2.bf16.msra.mxu0 0
    %2515 = vmatprep.subr.bf16.mxu0 0
    %2516 = vmatpush2.bf16.msra.mxu0 0
    %2517 = vmatprep.subr.bf16.mxu0 0
    %2518 = vmatpush2.bf16.msra.mxu0 0
    %2519 = vmatprep.subr.bf16.mxu0 0
    %2520 = vmatpush2.bf16.msra.mxu0 0
    %2521 = vmatprep.subr.bf16.mxu0 0
    %2522 = vmatpush2.bf16.msra.mxu0 0
    %2523 = vmatprep.subr.bf16.mxu0 0
    %2524 = vmatpush2.bf16.msra.mxu0 0
    %2525 = vmatprep.subr.bf16.mxu0 0
    %2526 = vmatpush2.bf16.msra.mxu0 0
    %2527 = vmatprep.mubr.bf16.mxu0 0
    %2528 = vmatmul.mubr.bf16.gmra.mxu0 %v2060
    %v2529 = vpop.f32.mrf.mxu0
    %v2530 = vadd.f32 0.0, %v2529
    %v2531 = vpop.f32.mrf.mxu0
    %v2532 = vpop.f32.mrf.mxu0
    %v2533 = vpop.f32.mrf.mxu0
    %2534 = vdwg.mxu0
    %v2543 = vunpack.c.l.b16 %v2471
    %v2544 = vunpack.c.l.b16 %v2472
    %v2545 = vunpack.c.l.b16 %v2473
    %v2546 = vunpack.c.l.b16 %v2474
    %v2547 = vunpack.c.l.b16 %v2475
    %v2548 = vunpack.c.l.b16 %v2476
    %v2549 = vunpack.c.l.b16 %v2477
    %v2550 = vunpack.c.l.b16 %v2478
    %v2551 = vpack.c.b16 %v2544, %v2543
    %v2552 = vpack.c.b16 %v2546, %v2545
    %v2553 = vpack.c.b16 %v2548, %v2547
    %v2554 = vpack.c.b16 %v2550, %v2549
    %v2560 = vsel %vm271, %v2470, 0
    %2562 = vmatprep.subr.bf16.mxu0 0
    %2563 = vmatpush1.bf16.msra.mxu0 0
    %2564 = vmatprep.subr.bf16.mxu0 0
    %2565 = vmatpush1.bf16.msra.mxu0 0
    %2566 = vmatprep.subr.bf16.mxu0 0
    %2567 = vmatpush1.bf16.msra.mxu0 0
    %2568 = vmatprep.subr.bf16.mxu0 0
    %2569 = vmatpush1.bf16.msra.mxu0 0
    %2570 = vmatprep.subr.bf16.mxu0 0
    %2571 = vmatpush1.bf16.msra.mxu0 %v2554
    %2572 = vmatprep.subr.bf16.mxu0 0
    %2573 = vmatpush1.bf16.msra.mxu0 %v2553
    %2574 = vmatprep.subr.bf16.mxu0 0
    %2575 = vmatpush1.bf16.msra.mxu0 %v2552
    %2576 = vmatprep.subr.bf16.mxu0 0
    %2577 = vmatpush1.bf16.msra.mxu0 %v2551
    %2578 = vmatprep.subr.bf16.mxu0 0
    %2579 = vmatpush2.bf16.msra.mxu0 0
    %2580 = vmatprep.subr.bf16.mxu0 0
    %2581 = vmatpush2.bf16.msra.mxu0 0
    %2582 = vmatprep.subr.bf16.mxu0 0
    %2583 = vmatpush2.bf16.msra.mxu0 0
    %2584 = vmatprep.subr.bf16.mxu0 0
    %2585 = vmatpush2.bf16.msra.mxu0 0
    %2586 = vmatprep.subr.bf16.mxu0 0
    %2587 = vmatpush2.bf16.msra.mxu0 0
    %2588 = vmatprep.subr.bf16.mxu0 0
    %2589 = vmatpush2.bf16.msra.mxu0 0
    %2590 = vmatprep.subr.bf16.mxu0 0
    %2591 = vmatpush2.bf16.msra.mxu0 0
    %2592 = vmatprep.subr.bf16.mxu0 0
    %2593 = vmatpush2.bf16.msra.mxu0 0
    %2594 = vmatprep.mubr.bf16.mxu0 0
    %2595 = vmatmul.mubr.bf16.gmra.mxu0 %v2560
    %v2596 = vpop.f32.mrf.mxu0
    %v2597 = vadd.f32 %v2530, %v2596
    %v2598 = vpop.f32.mrf.mxu0
    %v2599 = vpop.f32.mrf.mxu0
    %v2600 = vpop.f32.mrf.mxu0
    %2601 = vdwg.mxu0
    %v2602 = vld [vmem:[#allocation12] sm:$0x1]
    %v2604 = vlaneseq
    %v2605 = vshrl.u32 %v2604, 7
    %v2606 = vsub.s32 0, %v2605
    %v2607 = vrot.slane %v2602, %v2606
    %v2609 = vadd.f32 %v2597, %v2607
    %v2610 = vxor.u32 %v2609, 2147483648
    %v2611 = vmul.f32 %v2610, 1.442695
    %v2612 = vpow.pop %v2611
    %v2613 = vadd.f32 %v2612, 1.0
    %v2614 = vrcp.pop %v2613
    %v2615 = vmul.f32 1.0, %v2614
    %v2616 = vtanh.pop %v2609
    %v2617 = vmul.f32 %v2615, %v1969
    %2619 = vrot.lane.b32.xlu0 %v2616, 64
    %v2620 = vpop.permute.xlu0 %2619
    %v2622 = vmul.f32 %v2615, %v2620
    %2624 = vrot.lane.b32.xlu0 %v2622, 32
    %v2625 = vpop.permute.xlu0 %2624
    %v2627 = vadd.f32 %v2617, %v2625
    %v2628 = vtanh.pop %v2627
    %2630 = vrot.lane.b32.xlu0 %v2628, 64
    %v2631 = vpop.permute.xlu0 %2630
    %v2633 = vmul.f32 %v2615, %v2631
    %v2634 = vpack.c.bf16 %v2633, %v2633
    %v2635 = vld [vmem:[#allocation13] sm:$0xf]
    %v2636 = vld [vmem:[#allocation13 + $0x4] sm:$0xf]
    %v2637 = vld [vmem:[#allocation13 + $0x8] sm:$0xf]
    %v2638 = vld [vmem:[#allocation13 + $0xc] sm:$0xf]
    %v2639 = vpack.c.bf16 %v2133, %v2133
    %v2640 = vld [vmem:[#allocation15] sm:$0xf]
    %v2641 = vld [vmem:[#allocation15 + $0x4] sm:$0xf]
    %v2642 = vld [vmem:[#allocation15 + $0x8] sm:$0xf]
    %v2643 = vld [vmem:[#allocation15 + $0xc] sm:$0xf]
    %2645 = vrot.lane.b32.xlu0 %v2639, 32
    %v2646 = vpop.permute.xlu0 %2645
    %v2651 = vunpack.c.l.b16 %v2640
    %v2652 = vunpack.c.l.b16 %v2641
    %v2653 = vunpack.c.l.b16 %v2642
    %v2654 = vunpack.c.l.b16 %v2643
    %v2655 = vpack.c.b16 %v2652, %v2651
    %v2656 = vpack.c.b16 %v2654, %v2653
    %v2660 = vsel %vm203, %v2646, 0
    %2662 = vmatprep.subr.bf16.mxu0 0
    %2663 = vmatpush1.bf16.msra.mxu0 0
    %2664 = vmatprep.subr.bf16.mxu0 0
    %2665 = vmatpush1.bf16.msra.mxu0 0
    %2666 = vmatprep.subr.bf16.mxu0 0
    %2667 = vmatpush1.bf16.msra.mxu0 0
    %2668 = vmatprep.subr.bf16.mxu0 0
    %2669 = vmatpush1.bf16.msra.mxu0 0
    %2670 = vmatprep.subr.bf16.mxu0 0
    %2671 = vmatpush1.bf16.msra.mxu0 0
    %2672 = vmatprep.subr.bf16.mxu0 0
    %2673 = vmatpush1.bf16.msra.mxu0 0
    %2674 = vmatprep.subr.bf16.mxu0 0
    %2675 = vmatpush1.bf16.msra.mxu0 %v2656
    %2676 = vmatprep.subr.bf16.mxu0 0
    %2677 = vmatpush1.bf16.msra.mxu0 %v2655
    %2678 = vmatprep.subr.bf16.mxu0 0
    %2679 = vmatpush2.bf16.msra.mxu0 0
    %2680 = vmatprep.subr.bf16.mxu0 0
    %2681 = vmatpush2.bf16.msra.mxu0 0
    %2682 = vmatprep.subr.bf16.mxu0 0
    %2683 = vmatpush2.bf16.msra.mxu0 0
    %2684 = vmatprep.subr.bf16.mxu0 0
    %2685 = vmatpush2.bf16.msra.mxu0 0
    %2686 = vmatprep.subr.bf16.mxu0 0
    %2687 = vmatpush2.bf16.msra.mxu0 0
    %2688 = vmatprep.subr.bf16.mxu0 0
    %2689 = vmatpush2.bf16.msra.mxu0 0
    %2690 = vmatprep.subr.bf16.mxu0 0
    %2691 = vmatpush2.bf16.msra.mxu0 0
    %2692 = vmatprep.subr.bf16.mxu0 0
    %2693 = vmatpush2.bf16.msra.mxu0 0
    %2694 = vmatprep.mubr.bf16.mxu0 0
    %2695 = vmatmul.mubr.bf16.gmra.mxu0 %v2660
    %v2696 = vpop.f32.mrf.mxu0
    %v2697 = vadd.f32 0.0, %v2696
    %v2698 = vpop.f32.mrf.mxu0
    %v2699 = vpop.f32.mrf.mxu0
    %v2700 = vpop.f32.mrf.mxu0
    %2701 = vdwg.mxu0
    %2703 = vrot.lane.b32.xlu0 %v2634, 32
    %v2704 = vpop.permute.xlu0 %2703
    %v2709 = vunpack.c.l.b16 %v2635
    %v2710 = vunpack.c.l.b16 %v2636
    %v2711 = vunpack.c.l.b16 %v2637
    %v2712 = vunpack.c.l.b16 %v2638
    %v2713 = vpack.c.b16 %v2710, %v2709
    %v2714 = vpack.c.b16 %v2712, %v2711
    %v2718 = vsel %vm203, %v2704, 0
    %2720 = vmatprep.subr.bf16.mxu0 0
    %2721 = vmatpush1.bf16.msra.mxu0 0
    %2722 = vmatprep.subr.bf16.mxu0 0
    %2723 = vmatpush1.bf16.msra.mxu0 0
    %2724 = vmatprep.subr.bf16.mxu0 0
    %2725 = vmatpush1.bf16.msra.mxu0 0
    %2726 = vmatprep.subr.bf16.mxu0 0
    %2727 = vmatpush1.bf16.msra.mxu0 0
    %2728 = vmatprep.subr.bf16.mxu0 0
    %2729 = vmatpush1.bf16.msra.mxu0 0
    %2730 = vmatprep.subr.bf16.mxu0 0
    %2731 = vmatpush1.bf16.msra.mxu0 0
    %2732 = vmatprep.subr.bf16.mxu0 0
    %2733 = vmatpush1.bf16.msra.mxu0 %v2714
    %2734 = vmatprep.subr.bf16.mxu0 0
    %2735 = vmatpush1.bf16.msra.mxu0 %v2713
    %2736 = vmatprep.subr.bf16.mxu0 0
    %2737 = vmatpush2.bf16.msra.mxu0 0
    %2738 = vmatprep.subr.bf16.mxu0 0
    %2739 = vmatpush2.bf16.msra.mxu0 0
    %2740 = vmatprep.subr.bf16.mxu0 0
    %2741 = vmatpush2.bf16.msra.mxu0 0
    %2742 = vmatprep.subr.bf16.mxu0 0
    %2743 = vmatpush2.bf16.msra.mxu0 0
    %2744 = vmatprep.subr.bf16.mxu0 0
    %2745 = vmatpush2.bf16.msra.mxu0 0
    %2746 = vmatprep.subr.bf16.mxu0 0
    %2747 = vmatpush2.bf16.msra.mxu0 0
    %2748 = vmatprep.subr.bf16.mxu0 0
    %2749 = vmatpush2.bf16.msra.mxu0 0
    %2750 = vmatprep.subr.bf16.mxu0 0
    %2751 = vmatpush2.bf16.msra.mxu0 0
    %2752 = vmatprep.mubr.bf16.mxu0 0
    %2753 = vmatmul.mubr.bf16.gmra.mxu0 %v2718
    %v2754 = vpop.f32.mrf.mxu0
    %v2755 = vadd.f32 %v2697, %v2754
    %v2756 = vpop.f32.mrf.mxu0
    %v2757 = vpop.f32.mrf.mxu0
    %v2758 = vpop.f32.mrf.mxu0
    %2759 = vdwg.mxu0
    %v2760 = vld [vmem:[#allocation16] sm:$0x1]
    %v2762 = vlaneseq
    %v2763 = vshrl.u32 %v2762, 7
    %v2764 = vsub.s32 0, %v2763
    %v2765 = vrot.slane %v2760, %v2764
    %v2767 = vadd.f32 %v2755, %v2765
    %v2768 = vxor.u32 %v2767, 2147483648
    %v2769 = vmul.f32 %v2768, 1.442695
    %v2770 = vpow.pop %v2769
    %v2771 = vadd.f32 %v2770, 1.0
    %v2772 = vrcp.pop %v2771
    %v2773 = vmul.f32 1.0, %v2772
    %v2774 = vtanh.pop %v2767
    %v2775 = vmul.f32 %v2773, %v2127
    %2777 = vrot.lane.b32.xlu0 %v2774, 64
    %v2778 = vpop.permute.xlu0 %2777
    %v2780 = vmul.f32 %v2773, %v2778
    %2782 = vrot.lane.b32.xlu0 %v2780, 32
    %v2783 = vpop.permute.xlu0 %2782
    %v2785 = vadd.f32 %v2775, %v2783
    %v2786 = vtanh.pop %v2785
    %2788 = vrot.lane.b32.xlu0 %v2786, 64
    %v2789 = vpop.permute.xlu0 %2788
    %v2791 = vmul.f32 %v2773, %v2789
    %2793 = vrot.lane.b32.xlu0 %v2791, 32
    %v2794 = vpop.permute.xlu0 %2793
    %s2796 = scalar_lea.vmem %s15, 6
    %2797 = vst.msk [vmem:[%s2796] sm:$0x3] %vm502, %v2794
    %s2798 = scalar_lea.vmem %s0, 4
    %v2799 = vld [vmem:[%s2798] sm:$0x1]
    %v2800 = vld [vmem:[%s2] sm:$0xf]
    %v2801 = vld [vmem:[%s2 + $0x4] sm:$0xf]
    %v2802 = vld [vmem:[%s2 + $0x8] sm:$0xf]
    %v2803 = vld [vmem:[%s2 + $0xc] sm:$0xf]
    %v2804 = vld [vmem:[%s2 + $0x10] sm:$0xf]
    %v2805 = vld [vmem:[%s2 + $0x14] sm:$0xf]
    %v2806 = vld [vmem:[%s2 + $0x18] sm:$0xf]
    %v2807 = vld [vmem:[%s2 + $0x1c] sm:$0xf]
    %v2808 = vld [vmem:[#allocation2] sm:$0xf]
    %v2809 = vld [vmem:[#allocation2 + $0x4] sm:$0xf]
    %v2810 = vld [vmem:[#allocation2 + $0x8] sm:$0xf]
    %v2811 = vld [vmem:[#allocation2 + $0xc] sm:$0xf]
    %v2816 = vunpack.c.l.b16 %v2808
    %v2817 = vunpack.c.l.b16 %v2809
    %v2818 = vunpack.c.l.b16 %v2810
    %v2819 = vunpack.c.l.b16 %v2811
    %v2820 = vpack.c.b16 %v2817, %v2816
    %v2821 = vpack.c.b16 %v2819, %v2818
    %2824 = vmatprep.subr.bf16.mxu0 0
    %2825 = vmatpush1.bf16.msra.mxu0 0
    %2826 = vmatprep.subr.bf16.mxu0 0
    %2827 = vmatpush1.bf16.msra.mxu0 0
    %2828 = vmatprep.subr.bf16.mxu0 0
    %2829 = vmatpush1.bf16.msra.mxu0 0
    %2830 = vmatprep.subr.bf16.mxu0 0
    %2831 = vmatpush1.bf16.msra.mxu0 0
    %2832 = vmatprep.subr.bf16.mxu0 0
    %2833 = vmatpush1.bf16.msra.mxu0 0
    %2834 = vmatprep.subr.bf16.mxu0 0
    %2835 = vmatpush1.bf16.msra.mxu0 0
    %2836 = vmatprep.subr.bf16.mxu0 0
    %2837 = vmatpush1.bf16.msra.mxu0 %v2821
    %2838 = vmatprep.subr.bf16.mxu0 0
    %2839 = vmatpush1.bf16.msra.mxu0 %v2820
    %2840 = vmatprep.subr.bf16.mxu0 0
    %2841 = vmatpush2.bf16.msra.mxu0 0
    %2842 = vmatprep.subr.bf16.mxu0 0
    %2843 = vmatpush2.bf16.msra.mxu0 0
    %2844 = vmatprep.subr.bf16.mxu0 0
    %2845 = vmatpush2.bf16.msra.mxu0 0
    %2846 = vmatprep.subr.bf16.mxu0 0
    %2847 = vmatpush2.bf16.msra.mxu0 0
    %2848 = vmatprep.subr.bf16.mxu0 0
    %2849 = vmatpush2.bf16.msra.mxu0 0
    %2850 = vmatprep.subr.bf16.mxu0 0
    %2851 = vmatpush2.bf16.msra.mxu0 0
    %2852 = vmatprep.subr.bf16.mxu0 0
    %2853 = vmatpush2.bf16.msra.mxu0 0
    %2854 = vmatprep.subr.bf16.mxu0 0
    %2855 = vmatpush2.bf16.msra.mxu0 0
    %2856 = vmatprep.mubr.bf16.mxu0 0
    %2857 = vmatmul.mubr.bf16.gmra.mxu0 %v2389
    %v2858 = vpop.f32.mrf.mxu0
    %v2859 = vadd.f32 0.0, %v2858
    %v2860 = vpop.f32.mrf.mxu0
    %v2861 = vpop.f32.mrf.mxu0
    %v2862 = vpop.f32.mrf.mxu0
    %2863 = vdwg.mxu0
    %v2872 = vunpack.c.l.b16 %v2800
    %v2873 = vunpack.c.l.b16 %v2801
    %v2874 = vunpack.c.l.b16 %v2802
    %v2875 = vunpack.c.l.b16 %v2803
    %v2876 = vunpack.c.l.b16 %v2804
    %v2877 = vunpack.c.l.b16 %v2805
    %v2878 = vunpack.c.l.b16 %v2806
    %v2879 = vunpack.c.l.b16 %v2807
    %v2880 = vpack.c.b16 %v2873, %v2872
    %v2881 = vpack.c.b16 %v2875, %v2874
    %v2882 = vpack.c.b16 %v2877, %v2876
    %v2883 = vpack.c.b16 %v2879, %v2878
    %v2889 = vsel %vm271, %v2799, 0
    %2891 = vmatprep.subr.bf16.mxu0 0
    %2892 = vmatpush1.bf16.msra.mxu0 0
    %2893 = vmatprep.subr.bf16.mxu0 0
    %2894 = vmatpush1.bf16.msra.mxu0 0
    %2895 = vmatprep.subr.bf16.mxu0 0
    %2896 = vmatpush1.bf16.msra.mxu0 0
    %2897 = vmatprep.subr.bf16.mxu0 0
    %2898 = vmatpush1.bf16.msra.mxu0 0
    %2899 = vmatprep.subr.bf16.mxu0 0
    %2900 = vmatpush1.bf16.msra.mxu0 %v2883
    %2901 = vmatprep.subr.bf16.mxu0 0
    %2902 = vmatpush1.bf16.msra.mxu0 %v2882
    %2903 = vmatprep.subr.bf16.mxu0 0
    %2904 = vmatpush1.bf16.msra.mxu0 %v2881
    %2905 = vmatprep.subr.bf16.mxu0 0
    %2906 = vmatpush1.bf16.msra.mxu0 %v2880
    %2907 = vmatprep.subr.bf16.mxu0 0
    %2908 = vmatpush2.bf16.msra.mxu0 0
    %2909 = vmatprep.subr.bf16.mxu0 0
    %2910 = vmatpush2.bf16.msra.mxu0 0
    %2911 = vmatprep.subr.bf16.mxu0 0
    %2912 = vmatpush2.bf16.msra.mxu0 0
    %2913 = vmatprep.subr.bf16.mxu0 0
    %2914 = vmatpush2.bf16.msra.mxu0 0
    %2915 = vmatprep.subr.bf16.mxu0 0
    %2916 = vmatpush2.bf16.msra.mxu0 0
    %2917 = vmatprep.subr.bf16.mxu0 0
    %2918 = vmatpush2.bf16.msra.mxu0 0
    %2919 = vmatprep.subr.bf16.mxu0 0
    %2920 = vmatpush2.bf16.msra.mxu0 0
    %2921 = vmatprep.subr.bf16.mxu0 0
    %2922 = vmatpush2.bf16.msra.mxu0 0
    %2923 = vmatprep.mubr.bf16.mxu0 0
    %2924 = vmatmul.mubr.bf16.gmra.mxu0 %v2889
    %v2925 = vpop.f32.mrf.mxu0
    %v2926 = vadd.f32 %v2859, %v2925
    %v2927 = vpop.f32.mrf.mxu0
    %v2928 = vpop.f32.mrf.mxu0
    %v2929 = vpop.f32.mrf.mxu0
    %2930 = vdwg.mxu0
    %v2931 = vld [vmem:[#allocation4] sm:$0x1]
    %v2933 = vlaneseq
    %v2934 = vshrl.u32 %v2933, 7
    %v2935 = vsub.s32 0, %v2934
    %v2936 = vrot.slane %v2931, %v2935
    %v2938 = vadd.f32 %v2926, %v2936
    %v2939 = vxor.u32 %v2938, 2147483648
    %v2940 = vmul.f32 %v2939, 1.442695
    %v2941 = vpow.pop %v2940
    %v2942 = vadd.f32 %v2941, 1.0
    %v2943 = vrcp.pop %v2942
    %v2944 = vmul.f32 1.0, %v2943
    %v2945 = vtanh.pop %v2938
    %v2946 = vmul.f32 %v2944, %v2298
    %2948 = vrot.lane.b32.xlu0 %v2945, 64
    %v2949 = vpop.permute.xlu0 %2948
    %v2951 = vmul.f32 %v2944, %v2949
    %2953 = vrot.lane.b32.xlu0 %v2951, 32
    %v2954 = vpop.permute.xlu0 %2953
    %v2956 = vadd.f32 %v2946, %v2954
    %v2957 = vtanh.pop %v2956
    %2959 = vrot.lane.b32.xlu0 %v2957, 64
    %v2960 = vpop.permute.xlu0 %2959
    %v2962 = vmul.f32 %v2944, %v2960
    %v2963 = vpack.c.bf16 %v2962, %v2962
    %v2964 = vld [vmem:[#allocation6] sm:$0xf]
    %v2965 = vld [vmem:[#allocation6 + $0x4] sm:$0xf]
    %v2966 = vld [vmem:[#allocation6 + $0x8] sm:$0xf]
    %v2967 = vld [vmem:[#allocation6 + $0xc] sm:$0xf]
    %v2968 = vpack.c.bf16 %v2462, %v2462
    %v2969 = vld [vmem:[#allocation7] sm:$0xf]
    %v2970 = vld [vmem:[#allocation7 + $0x4] sm:$0xf]
    %v2971 = vld [vmem:[#allocation7 + $0x8] sm:$0xf]
    %v2972 = vld [vmem:[#allocation7 + $0xc] sm:$0xf]
    %2974 = vrot.lane.b32.xlu0 %v2968, 32
    %v2975 = vpop.permute.xlu0 %2974
    %v2980 = vunpack.c.l.b16 %v2969
    %v2981 = vunpack.c.l.b16 %v2970
    %v2982 = vunpack.c.l.b16 %v2971
    %v2983 = vunpack.c.l.b16 %v2972
    %v2984 = vpack.c.b16 %v2981, %v2980
    %v2985 = vpack.c.b16 %v2983, %v2982
    %v2989 = vsel %vm203, %v2975, 0
    %2991 = vmatprep.subr.bf16.mxu0 0
    %2992 = vmatpush1.bf16.msra.mxu0 0
    %2993 = vmatprep.subr.bf16.mxu0 0
    %2994 = vmatpush1.bf16.msra.mxu0 0
    %2995 = vmatprep.subr.bf16.mxu0 0
    %2996 = vmatpush1.bf16.msra.mxu0 0
    %2997 = vmatprep.subr.bf16.mxu0 0
    %2998 = vmatpush1.bf16.msra.mxu0 0
    %2999 = vmatprep.subr.bf16.mxu0 0
    %3000 = vmatpush1.bf16.msra.mxu0 0
    %3001 = vmatprep.subr.bf16.mxu0 0
    %3002 = vmatpush1.bf16.msra.mxu0 0
    %3003 = vmatprep.subr.bf16.mxu0 0
    %3004 = vmatpush1.bf16.msra.mxu0 %v2985
    %3005 = vmatprep.subr.bf16.mxu0 0
    %3006 = vmatpush1.bf16.msra.mxu0 %v2984
    %3007 = vmatprep.subr.bf16.mxu0 0
    %3008 = vmatpush2.bf16.msra.mxu0 0
    %3009 = vmatprep.subr.bf16.mxu0 0
    %3010 = vmatpush2.bf16.msra.mxu0 0
    %3011 = vmatprep.subr.bf16.mxu0 0
    %3012 = vmatpush2.bf16.msra.mxu0 0
    %3013 = vmatprep.subr.bf16.mxu0 0
    %3014 = vmatpush2.bf16.msra.mxu0 0
    %3015 = vmatprep.subr.bf16.mxu0 0
    %3016 = vmatpush2.bf16.msra.mxu0 0
    %3017 = vmatprep.subr.bf16.mxu0 0
    %3018 = vmatpush2.bf16.msra.mxu0 0
    %3019 = vmatprep.subr.bf16.mxu0 0
    %3020 = vmatpush2.bf16.msra.mxu0 0
    %3021 = vmatprep.subr.bf16.mxu0 0
    %3022 = vmatpush2.bf16.msra.mxu0 0
    %3023 = vmatprep.mubr.bf16.mxu0 0
    %3024 = vmatmul.mubr.bf16.gmra.mxu0 %v2989
    %v3025 = vpop.f32.mrf.mxu0
    %v3026 = vadd.f32 0.0, %v3025
    %v3027 = vpop.f32.mrf.mxu0
    %v3028 = vpop.f32.mrf.mxu0
    %v3029 = vpop.f32.mrf.mxu0
    %3030 = vdwg.mxu0
    %3032 = vrot.lane.b32.xlu0 %v2963, 32
    %v3033 = vpop.permute.xlu0 %3032
    %v3038 = vunpack.c.l.b16 %v2964
    %v3039 = vunpack.c.l.b16 %v2965
    %v3040 = vunpack.c.l.b16 %v2966
    %v3041 = vunpack.c.l.b16 %v2967
    %v3042 = vpack.c.b16 %v3039, %v3038
    %v3043 = vpack.c.b16 %v3041, %v3040
    %v3047 = vsel %vm203, %v3033, 0
    %3049 = vmatprep.subr.bf16.mxu0 0
    %3050 = vmatpush1.bf16.msra.mxu0 0
    %3051 = vmatprep.subr.bf16.mxu0 0
    %3052 = vmatpush1.bf16.msra.mxu0 0
    %3053 = vmatprep.subr.bf16.mxu0 0
    %3054 = vmatpush1.bf16.msra.mxu0 0
    %3055 = vmatprep.subr.bf16.mxu0 0
    %3056 = vmatpush1.bf16.msra.mxu0 0
    %3057 = vmatprep.subr.bf16.mxu0 0
    %3058 = vmatpush1.bf16.msra.mxu0 0
    %3059 = vmatprep.subr.bf16.mxu0 0
    %3060 = vmatpush1.bf16.msra.mxu0 0
    %3061 = vmatprep.subr.bf16.mxu0 0
    %3062 = vmatpush1.bf16.msra.mxu0 %v3043
    %3063 = vmatprep.subr.bf16.mxu0 0
    %3064 = vmatpush1.bf16.msra.mxu0 %v3042
    %3065 = vmatprep.subr.bf16.mxu0 0
    %3066 = vmatpush2.bf16.msra.mxu0 0
    %3067 = vmatprep.subr.bf16.mxu0 0
    %3068 = vmatpush2.bf16.msra.mxu0 0
    %3069 = vmatprep.subr.bf16.mxu0 0
    %3070 = vmatpush2.bf16.msra.mxu0 0
    %3071 = vmatprep.subr.bf16.mxu0 0
    %3072 = vmatpush2.bf16.msra.mxu0 0
    %3073 = vmatprep.subr.bf16.mxu0 0
    %3074 = vmatpush2.bf16.msra.mxu0 0
    %3075 = vmatprep.subr.bf16.mxu0 0
    %3076 = vmatpush2.bf16.msra.mxu0 0
    %3077 = vmatprep.subr.bf16.mxu0 0
    %3078 = vmatpush2.bf16.msra.mxu0 0
    %3079 = vmatprep.subr.bf16.mxu0 0
    %3080 = vmatpush2.bf16.msra.mxu0 0
    %3081 = vmatprep.mubr.bf16.mxu0 0
    %3082 = vmatmul.mubr.bf16.gmra.mxu0 %v3047
    %v3083 = vpop.f32.mrf.mxu0
    %v3084 = vadd.f32 %v3026, %v3083
    %v3085 = vpop.f32.mrf.mxu0
    %v3086 = vpop.f32.mrf.mxu0
    %v3087 = vpop.f32.mrf.mxu0
    %3088 = vdwg.mxu0
    %v3089 = vld [vmem:[#allocation9] sm:$0x1]
    %v3091 = vlaneseq
    %v3092 = vshrl.u32 %v3091, 7
    %v3093 = vsub.s32 0, %v3092
    %v3094 = vrot.slane %v3089, %v3093
    %v3096 = vadd.f32 %v3084, %v3094
    %v3097 = vxor.u32 %v3096, 2147483648
    %v3098 = vmul.f32 %v3097, 1.442695
    %v3099 = vpow.pop %v3098
    %v3100 = vadd.f32 %v3099, 1.0
    %v3101 = vrcp.pop %v3100
    %v3102 = vmul.f32 1.0, %v3101
    %v3103 = vtanh.pop %v3096
    %v3104 = vmul.f32 %v3102, %v2456
    %3106 = vrot.lane.b32.xlu0 %v3103, 64
    %v3107 = vpop.permute.xlu0 %3106
    %v3109 = vmul.f32 %v3102, %v3107
    %3111 = vrot.lane.b32.xlu0 %v3109, 32
    %v3112 = vpop.permute.xlu0 %3111
    %v3114 = vadd.f32 %v3104, %v3112
    %v3115 = vtanh.pop %v3114
    %3117 = vrot.lane.b32.xlu0 %v3115, 64
    %v3118 = vpop.permute.xlu0 %3117
    %v3120 = vmul.f32 %v3102, %v3118
    %3122 = vrot.lane.b32.xlu0 %v3120, 32
    %v3123 = vpop.permute.xlu0 %3122
    %s3125 = scalar_lea.vmem %s14, 8
    %3126 = vst.msk [vmem:[%s3125] sm:$0x3] %vm502, %v3123
    %s3127 = scalar_lea.vmem %s1, 4
    %v3128 = vld [vmem:[%s3127] sm:$0x1]
    %v3129 = vld [vmem:[%s8] sm:$0xf]
    %v3130 = vld [vmem:[%s8 + $0x4] sm:$0xf]
    %v3131 = vld [vmem:[%s8 + $0x8] sm:$0xf]
    %v3132 = vld [vmem:[%s8 + $0xc] sm:$0xf]
    %v3133 = vld [vmem:[%s8 + $0x10] sm:$0xf]
    %v3134 = vld [vmem:[%s8 + $0x14] sm:$0xf]
    %v3135 = vld [vmem:[%s8 + $0x18] sm:$0xf]
    %v3136 = vld [vmem:[%s8 + $0x1c] sm:$0xf]
    %v3137 = vld [vmem:[#allocation10] sm:$0xf]
    %v3138 = vld [vmem:[#allocation10 + $0x4] sm:$0xf]
    %v3139 = vld [vmem:[#allocation10 + $0x8] sm:$0xf]
    %v3140 = vld [vmem:[#allocation10 + $0xc] sm:$0xf]
    %v3145 = vunpack.c.l.b16 %v3137
    %v3146 = vunpack.c.l.b16 %v3138
    %v3147 = vunpack.c.l.b16 %v3139
    %v3148 = vunpack.c.l.b16 %v3140
    %v3149 = vpack.c.b16 %v3146, %v3145
    %v3150 = vpack.c.b16 %v3148, %v3147
    %3153 = vmatprep.subr.bf16.mxu0 0
    %3154 = vmatpush1.bf16.msra.mxu0 0
    %3155 = vmatprep.subr.bf16.mxu0 0
    %3156 = vmatpush1.bf16.msra.mxu0 0
    %3157 = vmatprep.subr.bf16.mxu0 0
    %3158 = vmatpush1.bf16.msra.mxu0 0
    %3159 = vmatprep.subr.bf16.mxu0 0
    %3160 = vmatpush1.bf16.msra.mxu0 0
    %3161 = vmatprep.subr.bf16.mxu0 0
    %3162 = vmatpush1.bf16.msra.mxu0 0
    %3163 = vmatprep.subr.bf16.mxu0 0
    %3164 = vmatpush1.bf16.msra.mxu0 0
    %3165 = vmatprep.subr.bf16.mxu0 0
    %3166 = vmatpush1.bf16.msra.mxu0 %v3150
    %3167 = vmatprep.subr.bf16.mxu0 0
    %3168 = vmatpush1.bf16.msra.mxu0 %v3149
    %3169 = vmatprep.subr.bf16.mxu0 0
    %3170 = vmatpush2.bf16.msra.mxu0 0
    %3171 = vmatprep.subr.bf16.mxu0 0
    %3172 = vmatpush2.bf16.msra.mxu0 0
    %3173 = vmatprep.subr.bf16.mxu0 0
    %3174 = vmatpush2.bf16.msra.mxu0 0
    %3175 = vmatprep.subr.bf16.mxu0 0
    %3176 = vmatpush2.bf16.msra.mxu0 0
    %3177 = vmatprep.subr.bf16.mxu0 0
    %3178 = vmatpush2.bf16.msra.mxu0 0
    %3179 = vmatprep.subr.bf16.mxu0 0
    %3180 = vmatpush2.bf16.msra.mxu0 0
    %3181 = vmatprep.subr.bf16.mxu0 0
    %3182 = vmatpush2.bf16.msra.mxu0 0
    %3183 = vmatprep.subr.bf16.mxu0 0
    %3184 = vmatpush2.bf16.msra.mxu0 0
    %3185 = vmatprep.mubr.bf16.mxu0 0
    %3186 = vmatmul.mubr.bf16.gmra.mxu0 %v2718
    %v3187 = vpop.f32.mrf.mxu0
    %v3188 = vadd.f32 0.0, %v3187
    %v3189 = vpop.f32.mrf.mxu0
    %v3190 = vpop.f32.mrf.mxu0
    %v3191 = vpop.f32.mrf.mxu0
    %3192 = vdwg.mxu0
    %v3201 = vunpack.c.l.b16 %v3129
    %v3202 = vunpack.c.l.b16 %v3130
    %v3203 = vunpack.c.l.b16 %v3131
    %v3204 = vunpack.c.l.b16 %v3132
    %v3205 = vunpack.c.l.b16 %v3133
    %v3206 = vunpack.c.l.b16 %v3134
    %v3207 = vunpack.c.l.b16 %v3135
    %v3208 = vunpack.c.l.b16 %v3136
    %v3209 = vpack.c.b16 %v3202, %v3201
    %v3210 = vpack.c.b16 %v3204, %v3203
    %v3211 = vpack.c.b16 %v3206, %v3205
    %v3212 = vpack.c.b16 %v3208, %v3207
    %v3218 = vsel %vm271, %v3128, 0
    %3220 = vmatprep.subr.bf16.mxu0 0
    %3221 = vmatpush1.bf16.msra.mxu0 0
    %3222 = vmatprep.subr.bf16.mxu0 0
    %3223 = vmatpush1.bf16.msra.mxu0 0
    %3224 = vmatprep.subr.bf16.mxu0 0
    %3225 = vmatpush1.bf16.msra.mxu0 0
    %3226 = vmatprep.subr.bf16.mxu0 0
    %3227 = vmatpush1.bf16.msra.mxu0 0
    %3228 = vmatprep.subr.bf16.mxu0 0
    %3229 = vmatpush1.bf16.msra.mxu0 %v3212
    %3230 = vmatprep.subr.bf16.mxu0 0
    %3231 = vmatpush1.bf16.msra.mxu0 %v3211
    %3232 = vmatprep.subr.bf16.mxu0 0
    %3233 = vmatpush1.bf16.msra.mxu0 %v3210
    %3234 = vmatprep.subr.bf16.mxu0 0
    %3235 = vmatpush1.bf16.msra.mxu0 %v3209
    %3236 = vmatprep.subr.bf16.mxu0 0
    %3237 = vmatpush2.bf16.msra.mxu0 0
    %3238 = vmatprep.subr.bf16.mxu0 0
    %3239 = vmatpush2.bf16.msra.mxu0 0
    %3240 = vmatprep.subr.bf16.mxu0 0
    %3241 = vmatpush2.bf16.msra.mxu0 0
    %3242 = vmatprep.subr.bf16.mxu0 0
    %3243 = vmatpush2.bf16.msra.mxu0 0
    %3244 = vmatprep.subr.bf16.mxu0 0
    %3245 = vmatpush2.bf16.msra.mxu0 0
    %3246 = vmatprep.subr.bf16.mxu0 0
    %3247 = vmatpush2.bf16.msra.mxu0 0
    %3248 = vmatprep.subr.bf16.mxu0 0
    %3249 = vmatpush2.bf16.msra.mxu0 0
    %3250 = vmatprep.subr.bf16.mxu0 0
    %3251 = vmatpush2.bf16.msra.mxu0 0
    %3252 = vmatprep.mubr.bf16.mxu0 0
    %3253 = vmatmul.mubr.bf16.gmra.mxu0 %v3218
    %v3254 = vpop.f32.mrf.mxu0
    %v3255 = vadd.f32 %v3188, %v3254
    %v3256 = vpop.f32.mrf.mxu0
    %v3257 = vpop.f32.mrf.mxu0
    %v3258 = vpop.f32.mrf.mxu0
    %3259 = vdwg.mxu0
    %v3260 = vld [vmem:[#allocation12] sm:$0x1]
    %v3262 = vlaneseq
    %v3263 = vshrl.u32 %v3262, 7
    %v3264 = vsub.s32 0, %v3263
    %v3265 = vrot.slane %v3260, %v3264
    %v3267 = vadd.f32 %v3255, %v3265
    %v3268 = vxor.u32 %v3267, 2147483648
    %v3269 = vmul.f32 %v3268, 1.442695
    %v3270 = vpow.pop %v3269
    %v3271 = vadd.f32 %v3270, 1.0
    %v3272 = vrcp.pop %v3271
    %v3273 = vmul.f32 1.0, %v3272
    %v3274 = vtanh.pop %v3267
    %v3275 = vmul.f32 %v3273, %v2627
    %3277 = vrot.lane.b32.xlu0 %v3274, 64
    %v3278 = vpop.permute.xlu0 %3277
    %v3280 = vmul.f32 %v3273, %v3278
    %3282 = vrot.lane.b32.xlu0 %v3280, 32
    %v3283 = vpop.permute.xlu0 %3282
    %v3285 = vadd.f32 %v3275, %v3283
    %v3286 = vtanh.pop %v3285
    %3288 = vrot.lane.b32.xlu0 %v3286, 64
    %v3289 = vpop.permute.xlu0 %3288
    %v3291 = vmul.f32 %v3273, %v3289
    %v3292 = vpack.c.bf16 %v3291, %v3291
    %v3293 = vld [vmem:[#allocation13] sm:$0xf]
    %v3294 = vld [vmem:[#allocation13 + $0x4] sm:$0xf]
    %v3295 = vld [vmem:[#allocation13 + $0x8] sm:$0xf]
    %v3296 = vld [vmem:[#allocation13 + $0xc] sm:$0xf]
    %v3297 = vpack.c.bf16 %v2791, %v2791
    %v3298 = vld [vmem:[#allocation15] sm:$0xf]
    %v3299 = vld [vmem:[#allocation15 + $0x4] sm:$0xf]
    %v3300 = vld [vmem:[#allocation15 + $0x8] sm:$0xf]
    %v3301 = vld [vmem:[#allocation15 + $0xc] sm:$0xf]
    %3303 = vrot.lane.b32.xlu0 %v3297, 32
    %v3304 = vpop.permute.xlu0 %3303
    %v3309 = vunpack.c.l.b16 %v3298
    %v3310 = vunpack.c.l.b16 %v3299
    %v3311 = vunpack.c.l.b16 %v3300
    %v3312 = vunpack.c.l.b16 %v3301
    %v3313 = vpack.c.b16 %v3310, %v3309
    %v3314 = vpack.c.b16 %v3312, %v3311
    %v3318 = vsel %vm203, %v3304, 0
    %3320 = vmatprep.subr.bf16.mxu0 0
    %3321 = vmatpush1.bf16.msra.mxu0 0
    %3322 = vmatprep.subr.bf16.mxu0 0
    %3323 = vmatpush1.bf16.msra.mxu0 0
    %3324 = vmatprep.subr.bf16.mxu0 0
    %3325 = vmatpush1.bf16.msra.mxu0 0
    %3326 = vmatprep.subr.bf16.mxu0 0
    %3327 = vmatpush1.bf16.msra.mxu0 0
    %3328 = vmatprep.subr.bf16.mxu0 0
    %3329 = vmatpush1.bf16.msra.mxu0 0
    %3330 = vmatprep.subr.bf16.mxu0 0
    %3331 = vmatpush1.bf16.msra.mxu0 0
    %3332 = vmatprep.subr.bf16.mxu0 0
    %3333 = vmatpush1.bf16.msra.mxu0 %v3314
    %3334 = vmatprep.subr.bf16.mxu0 0
    %3335 = vmatpush1.bf16.msra.mxu0 %v3313
    %3336 = vmatprep.subr.bf16.mxu0 0
    %3337 = vmatpush2.bf16.msra.mxu0 0
    %3338 = vmatprep.subr.bf16.mxu0 0
    %3339 = vmatpush2.bf16.msra.mxu0 0
    %3340 = vmatprep.subr.bf16.mxu0 0
    %3341 = vmatpush2.bf16.msra.mxu0 0
    %3342 = vmatprep.subr.bf16.mxu0 0
    %3343 = vmatpush2.bf16.msra.mxu0 0
    %3344 = vmatprep.subr.bf16.mxu0 0
    %3345 = vmatpush2.bf16.msra.mxu0 0
    %3346 = vmatprep.subr.bf16.mxu0 0
    %3347 = vmatpush2.bf16.msra.mxu0 0
    %3348 = vmatprep.subr.bf16.mxu0 0
    %3349 = vmatpush2.bf16.msra.mxu0 0
    %3350 = vmatprep.subr.bf16.mxu0 0
    %3351 = vmatpush2.bf16.msra.mxu0 0
    %3352 = vmatprep.mubr.bf16.mxu0 0
    %3353 = vmatmul.mubr.bf16.gmra.mxu0 %v3318
    %v3354 = vpop.f32.mrf.mxu0
    %v3355 = vadd.f32 0.0, %v3354
    %v3356 = vpop.f32.mrf.mxu0
    %v3357 = vpop.f32.mrf.mxu0
    %v3358 = vpop.f32.mrf.mxu0
    %3359 = vdwg.mxu0
    %3361 = vrot.lane.b32.xlu0 %v3292, 32
    %v3362 = vpop.permute.xlu0 %3361
    %v3367 = vunpack.c.l.b16 %v3293
    %v3368 = vunpack.c.l.b16 %v3294
    %v3369 = vunpack.c.l.b16 %v3295
    %v3370 = vunpack.c.l.b16 %v3296
    %v3371 = vpack.c.b16 %v3368, %v3367
    %v3372 = vpack.c.b16 %v3370, %v3369
    %v3376 = vsel %vm203, %v3362, 0
    %3378 = vmatprep.subr.bf16.mxu0 0
    %3379 = vmatpush1.bf16.msra.mxu0 0
    %3380 = vmatprep.subr.bf16.mxu0 0
    %3381 = vmatpush1.bf16.msra.mxu0 0
    %3382 = vmatprep.subr.bf16.mxu0 0
    %3383 = vmatpush1.bf16.msra.mxu0 0
    %3384 = vmatprep.subr.bf16.mxu0 0
    %3385 = vmatpush1.bf16.msra.mxu0 0
    %3386 = vmatprep.subr.bf16.mxu0 0
    %3387 = vmatpush1.bf16.msra.mxu0 0
    %3388 = vmatprep.subr.bf16.mxu0 0
    %3389 = vmatpush1.bf16.msra.mxu0 0
    %3390 = vmatprep.subr.bf16.mxu0 0
    %3391 = vmatpush1.bf16.msra.mxu0 %v3372
    %3392 = vmatprep.subr.bf16.mxu0 0
    %3393 = vmatpush1.bf16.msra.mxu0 %v3371
    %3394 = vmatprep.subr.bf16.mxu0 0
    %3395 = vmatpush2.bf16.msra.mxu0 0
    %3396 = vmatprep.subr.bf16.mxu0 0
    %3397 = vmatpush2.bf16.msra.mxu0 0
    %3398 = vmatprep.subr.bf16.mxu0 0
    %3399 = vmatpush2.bf16.msra.mxu0 0
    %3400 = vmatprep.subr.bf16.mxu0 0
    %3401 = vmatpush2.bf16.msra.mxu0 0
    %3402 = vmatprep.subr.bf16.mxu0 0
    %3403 = vmatpush2.bf16.msra.mxu0 0
    %3404 = vmatprep.subr.bf16.mxu0 0
    %3405 = vmatpush2.bf16.msra.mxu0 0
    %3406 = vmatprep.subr.bf16.mxu0 0
    %3407 = vmatpush2.bf16.msra.mxu0 0
    %3408 = vmatprep.subr.bf16.mxu0 0
    %3409 = vmatpush2.bf16.msra.mxu0 0
    %3410 = vmatprep.mubr.bf16.mxu0 0
    %3411 = vmatmul.mubr.bf16.gmra.mxu0 %v3376
    %v3412 = vpop.f32.mrf.mxu0
    %v3413 = vadd.f32 %v3355, %v3412
    %v3414 = vpop.f32.mrf.mxu0
    %v3415 = vpop.f32.mrf.mxu0
    %v3416 = vpop.f32.mrf.mxu0
    %3417 = vdwg.mxu0
    %v3418 = vld [vmem:[#allocation16] sm:$0x1]
    %v3420 = vlaneseq
    %v3421 = vshrl.u32 %v3420, 7
    %v3422 = vsub.s32 0, %v3421
    %v3423 = vrot.slane %v3418, %v3422
    %v3425 = vadd.f32 %v3413, %v3423
    %v3426 = vxor.u32 %v3425, 2147483648
    %v3427 = vmul.f32 %v3426, 1.442695
    %v3428 = vpow.pop %v3427
    %v3429 = vadd.f32 %v3428, 1.0
    %v3430 = vrcp.pop %v3429
    %v3431 = vmul.f32 1.0, %v3430
    %v3432 = vtanh.pop %v3425
    %v3433 = vmul.f32 %v3431, %v2785
    %3435 = vrot.lane.b32.xlu0 %v3432, 64
    %v3436 = vpop.permute.xlu0 %3435
    %v3438 = vmul.f32 %v3431, %v3436
    %3440 = vrot.lane.b32.xlu0 %v3438, 32
    %v3441 = vpop.permute.xlu0 %3440
    %v3443 = vadd.f32 %v3433, %v3441
    %v3444 = vtanh.pop %v3443
    %3446 = vrot.lane.b32.xlu0 %v3444, 64
    %v3447 = vpop.permute.xlu0 %3446
    %v3449 = vmul.f32 %v3431, %v3447
    %3451 = vrot.lane.b32.xlu0 %v3449, 32
    %v3452 = vpop.permute.xlu0 %3451
    %s3454 = scalar_lea.vmem %s15, 8
    %3455 = vst.msk [vmem:[%s3454] sm:$0x3] %vm502, %v3452
    %s3456 = scalar_lea.vmem %s0, 5
    %v3457 = vld [vmem:[%s3456] sm:$0x1]
    %v3458 = vld [vmem:[%s2] sm:$0xf]
    %v3459 = vld [vmem:[%s2 + $0x4] sm:$0xf]
    %v3460 = vld [vmem:[%s2 + $0x8] sm:$0xf]
    %v3461 = vld [vmem:[%s2 + $0xc] sm:$0xf]
    %v3462 = vld [vmem:[%s2 + $0x10] sm:$0xf]
    %v3463 = vld [vmem:[%s2 + $0x14] sm:$0xf]
    %v3464 = vld [vmem:[%s2 + $0x18] sm:$0xf]
    %v3465 = vld [vmem:[%s2 + $0x1c] sm:$0xf]
    %v3466 = vld [vmem:[#allocation2] sm:$0xf]
    %v3467 = vld [vmem:[#allocation2 + $0x4] sm:$0xf]
    %v3468 = vld [vmem:[#allocation2 + $0x8] sm:$0xf]
    %v3469 = vld [vmem:[#allocation2 + $0xc] sm:$0xf]
    %v3474 = vunpack.c.l.b16 %v3466
    %v3475 = vunpack.c.l.b16 %v3467
    %v3476 = vunpack.c.l.b16 %v3468
    %v3477 = vunpack.c.l.b16 %v3469
    %v3478 = vpack.c.b16 %v3475, %v3474
    %v3479 = vpack.c.b16 %v3477, %v3476
    %3482 = vmatprep.subr.bf16.mxu0 0
    %3483 = vmatpush1.bf16.msra.mxu0 0
    %3484 = vmatprep.subr.bf16.mxu0 0
    %3485 = vmatpush1.bf16.msra.mxu0 0
    %3486 = vmatprep.subr.bf16.mxu0 0
    %3487 = vmatpush1.bf16.msra.mxu0 0
    %3488 = vmatprep.subr.bf16.mxu0 0
    %3489 = vmatpush1.bf16.msra.mxu0 0
    %3490 = vmatprep.subr.bf16.mxu0 0
    %3491 = vmatpush1.bf16.msra.mxu0 0
    %3492 = vmatprep.subr.bf16.mxu0 0
    %3493 = vmatpush1.bf16.msra.mxu0 0
    %3494 = vmatprep.subr.bf16.mxu0 0
    %3495 = vmatpush1.bf16.msra.mxu0 %v3479
    %3496 = vmatprep.subr.bf16.mxu0 0
    %3497 = vmatpush1.bf16.msra.mxu0 %v3478
    %3498 = vmatprep.subr.bf16.mxu0 0
    %3499 = vmatpush2.bf16.msra.mxu0 0
    %3500 = vmatprep.subr.bf16.mxu0 0
    %3501 = vmatpush2.bf16.msra.mxu0 0
    %3502 = vmatprep.subr.bf16.mxu0 0
    %3503 = vmatpush2.bf16.msra.mxu0 0
    %3504 = vmatprep.subr.bf16.mxu0 0
    %3505 = vmatpush2.bf16.msra.mxu0 0
    %3506 = vmatprep.subr.bf16.mxu0 0
    %3507 = vmatpush2.bf16.msra.mxu0 0
    %3508 = vmatprep.subr.bf16.mxu0 0
    %3509 = vmatpush2.bf16.msra.mxu0 0
    %3510 = vmatprep.subr.bf16.mxu0 0
    %3511 = vmatpush2.bf16.msra.mxu0 0
    %3512 = vmatprep.subr.bf16.mxu0 0
    %3513 = vmatpush2.bf16.msra.mxu0 0
    %3514 = vmatprep.mubr.bf16.mxu0 0
    %3515 = vmatmul.mubr.bf16.gmra.mxu0 %v3047
    %v3516 = vpop.f32.mrf.mxu0
    %v3517 = vadd.f32 0.0, %v3516
    %v3518 = vpop.f32.mrf.mxu0
    %v3519 = vpop.f32.mrf.mxu0
    %v3520 = vpop.f32.mrf.mxu0
    %3521 = vdwg.mxu0
    %v3530 = vunpack.c.l.b16 %v3458
    %v3531 = vunpack.c.l.b16 %v3459
    %v3532 = vunpack.c.l.b16 %v3460
    %v3533 = vunpack.c.l.b16 %v3461
    %v3534 = vunpack.c.l.b16 %v3462
    %v3535 = vunpack.c.l.b16 %v3463
    %v3536 = vunpack.c.l.b16 %v3464
    %v3537 = vunpack.c.l.b16 %v3465
    %v3538 = vpack.c.b16 %v3531, %v3530
    %v3539 = vpack.c.b16 %v3533, %v3532
    %v3540 = vpack.c.b16 %v3535, %v3534
    %v3541 = vpack.c.b16 %v3537, %v3536
    %v3547 = vsel %vm271, %v3457, 0
    %3549 = vmatprep.subr.bf16.mxu0 0
    %3550 = vmatpush1.bf16.msra.mxu0 0
    %3551 = vmatprep.subr.bf16.mxu0 0
    %3552 = vmatpush1.bf16.msra.mxu0 0
    %3553 = vmatprep.subr.bf16.mxu0 0
    %3554 = vmatpush1.bf16.msra.mxu0 0
    %3555 = vmatprep.subr.bf16.mxu0 0
    %3556 = vmatpush1.bf16.msra.mxu0 0
    %3557 = vmatprep.subr.bf16.mxu0 0
    %3558 = vmatpush1.bf16.msra.mxu0 %v3541
    %3559 = vmatprep.subr.bf16.mxu0 0
    %3560 = vmatpush1.bf16.msra.mxu0 %v3540
    %3561 = vmatprep.subr.bf16.mxu0 0
    %3562 = vmatpush1.bf16.msra.mxu0 %v3539
    %3563 = vmatprep.subr.bf16.mxu0 0
    %3564 = vmatpush1.bf16.msra.mxu0 %v3538
    %3565 = vmatprep.subr.bf16.mxu0 0
    %3566 = vmatpush2.bf16.msra.mxu0 0
    %3567 = vmatprep.subr.bf16.mxu0 0
    %3568 = vmatpush2.bf16.msra.mxu0 0
    %3569 = vmatprep.subr.bf16.mxu0 0
    %3570 = vmatpush2.bf16.msra.mxu0 0
    %3571 = vmatprep.subr.bf16.mxu0 0
    %3572 = vmatpush2.bf16.msra.mxu0 0
    %3573 = vmatprep.subr.bf16.mxu0 0
    %3574 = vmatpush2.bf16.msra.mxu0 0
    %3575 = vmatprep.subr.bf16.mxu0 0
    %3576 = vmatpush2.bf16.msra.mxu0 0
    %3577 = vmatprep.subr.bf16.mxu0 0
    %3578 = vmatpush2.bf16.msra.mxu0 0
    %3579 = vmatprep.subr.bf16.mxu0 0
    %3580 = vmatpush2.bf16.msra.mxu0 0
    %3581 = vmatprep.mubr.bf16.mxu0 0
    %3582 = vmatmul.mubr.bf16.gmra.mxu0 %v3547
    %v3583 = vpop.f32.mrf.mxu0
    %v3584 = vadd.f32 %v3517, %v3583
    %v3585 = vpop.f32.mrf.mxu0
    %v3586 = vpop.f32.mrf.mxu0
    %v3587 = vpop.f32.mrf.mxu0
    %3588 = vdwg.mxu0
    %v3589 = vld [vmem:[#allocation4] sm:$0x1]
    %v3591 = vlaneseq
    %v3592 = vshrl.u32 %v3591, 7
    %v3593 = vsub.s32 0, %v3592
    %v3594 = vrot.slane %v3589, %v3593
    %v3596 = vadd.f32 %v3584, %v3594
    %v3597 = vxor.u32 %v3596, 2147483648
    %v3598 = vmul.f32 %v3597, 1.442695
    %v3599 = vpow.pop %v3598
    %v3600 = vadd.f32 %v3599, 1.0
    %v3601 = vrcp.pop %v3600
    %v3602 = vmul.f32 1.0, %v3601
    %v3603 = vtanh.pop %v3596
    %v3604 = vmul.f32 %v3602, %v2956
    %3606 = vrot.lane.b32.xlu0 %v3603, 64
    %v3607 = vpop.permute.xlu0 %3606
    %v3609 = vmul.f32 %v3602, %v3607
    %3611 = vrot.lane.b32.xlu0 %v3609, 32
    %v3612 = vpop.permute.xlu0 %3611
    %v3614 = vadd.f32 %v3604, %v3612
    %v3615 = vtanh.pop %v3614
    %3617 = vrot.lane.b32.xlu0 %v3615, 64
    %v3618 = vpop.permute.xlu0 %3617
    %v3620 = vmul.f32 %v3602, %v3618
    %v3621 = vpack.c.bf16 %v3620, %v3620
    %v3622 = vld [vmem:[#allocation6] sm:$0xf]
    %v3623 = vld [vmem:[#allocation6 + $0x4] sm:$0xf]
    %v3624 = vld [vmem:[#allocation6 + $0x8] sm:$0xf]
    %v3625 = vld [vmem:[#allocation6 + $0xc] sm:$0xf]
    %v3626 = vpack.c.bf16 %v3120, %v3120
    %v3627 = vld [vmem:[#allocation7] sm:$0xf]
    %v3628 = vld [vmem:[#allocation7 + $0x4] sm:$0xf]
    %v3629 = vld [vmem:[#allocation7 + $0x8] sm:$0xf]
    %v3630 = vld [vmem:[#allocation7 + $0xc] sm:$0xf]
    %3632 = vrot.lane.b32.xlu0 %v3626, 32
    %v3633 = vpop.permute.xlu0 %3632
    %v3638 = vunpack.c.l.b16 %v3627
    %v3639 = vunpack.c.l.b16 %v3628
    %v3640 = vunpack.c.l.b16 %v3629
    %v3641 = vunpack.c.l.b16 %v3630
    %v3642 = vpack.c.b16 %v3639, %v3638
    %v3643 = vpack.c.b16 %v3641, %v3640
    %v3647 = vsel %vm203, %v3633, 0
    %3649 = vmatprep.subr.bf16.mxu0 0
    %3650 = vmatpush1.bf16.msra.mxu0 0
    %3651 = vmatprep.subr.bf16.mxu0 0
    %3652 = vmatpush1.bf16.msra.mxu0 0
    %3653 = vmatprep.subr.bf16.mxu0 0
    %3654 = vmatpush1.bf16.msra.mxu0 0
    %3655 = vmatprep.subr.bf16.mxu0 0
    %3656 = vmatpush1.bf16.msra.mxu0 0
    %3657 = vmatprep.subr.bf16.mxu0 0
    %3658 = vmatpush1.bf16.msra.mxu0 0
    %3659 = vmatprep.subr.bf16.mxu0 0
    %3660 = vmatpush1.bf16.msra.mxu0 0
    %3661 = vmatprep.subr.bf16.mxu0 0
    %3662 = vmatpush1.bf16.msra.mxu0 %v3643
    %3663 = vmatprep.subr.bf16.mxu0 0
    %3664 = vmatpush1.bf16.msra.mxu0 %v3642
    %3665 = vmatprep.subr.bf16.mxu0 0
    %3666 = vmatpush2.bf16.msra.mxu0 0
    %3667 = vmatprep.subr.bf16.mxu0 0
    %3668 = vmatpush2.bf16.msra.mxu0 0
    %3669 = vmatprep.subr.bf16.mxu0 0
    %3670 = vmatpush2.bf16.msra.mxu0 0
    %3671 = vmatprep.subr.bf16.mxu0 0
    %3672 = vmatpush2.bf16.msra.mxu0 0
    %3673 = vmatprep.subr.bf16.mxu0 0
    %3674 = vmatpush2.bf16.msra.mxu0 0
    %3675 = vmatprep.subr.bf16.mxu0 0
    %3676 = vmatpush2.bf16.msra.mxu0 0
    %3677 = vmatprep.subr.bf16.mxu0 0
    %3678 = vmatpush2.bf16.msra.mxu0 0
    %3679 = vmatprep.subr.bf16.mxu0 0
    %3680 = vmatpush2.bf16.msra.mxu0 0
    %3681 = vmatprep.mubr.bf16.mxu0 0
    %3682 = vmatmul.mubr.bf16.gmra.mxu0 %v3647
    %v3683 = vpop.f32.mrf.mxu0
    %v3684 = vadd.f32 0.0, %v3683
    %v3685 = vpop.f32.mrf.mxu0
    %v3686 = vpop.f32.mrf.mxu0
    %v3687 = vpop.f32.mrf.mxu0
    %3688 = vdwg.mxu0
    %3690 = vrot.lane.b32.xlu0 %v3621, 32
    %v3691 = vpop.permute.xlu0 %3690
    %v3696 = vunpack.c.l.b16 %v3622
    %v3697 = vunpack.c.l.b16 %v3623
    %v3698 = vunpack.c.l.b16 %v3624
    %v3699 = vunpack.c.l.b16 %v3625
    %v3700 = vpack.c.b16 %v3697, %v3696
    %v3701 = vpack.c.b16 %v3699, %v3698
    %v3705 = vsel %vm203, %v3691, 0
    %3707 = vmatprep.subr.bf16.mxu0 0
    %3708 = vmatpush1.bf16.msra.mxu0 0
    %3709 = vmatprep.subr.bf16.mxu0 0
    %3710 = vmatpush1.bf16.msra.mxu0 0
    %3711 = vmatprep.subr.bf16.mxu0 0
    %3712 = vmatpush1.bf16.msra.mxu0 0
    %3713 = vmatprep.subr.bf16.mxu0 0
    %3714 = vmatpush1.bf16.msra.mxu0 0
    %3715 = vmatprep.subr.bf16.mxu0 0
    %3716 = vmatpush1.bf16.msra.mxu0 0
    %3717 = vmatprep.subr.bf16.mxu0 0
    %3718 = vmatpush1.bf16.msra.mxu0 0
    %3719 = vmatprep.subr.bf16.mxu0 0
    %3720 = vmatpush1.bf16.msra.mxu0 %v3701
    %3721 = vmatprep.subr.bf16.mxu0 0
    %3722 = vmatpush1.bf16.msra.mxu0 %v3700
    %3723 = vmatprep.subr.bf16.mxu0 0
    %3724 = vmatpush2.bf16.msra.mxu0 0
    %3725 = vmatprep.subr.bf16.mxu0 0
    %3726 = vmatpush2.bf16.msra.mxu0 0
    %3727 = vmatprep.subr.bf16.mxu0 0
    %3728 = vmatpush2.bf16.msra.mxu0 0
    %3729 = vmatprep.subr.bf16.mxu0 0
    %3730 = vmatpush2.bf16.msra.mxu0 0
    %3731 = vmatprep.subr.bf16.mxu0 0
    %3732 = vmatpush2.bf16.msra.mxu0 0
    %3733 = vmatprep.subr.bf16.mxu0 0
    %3734 = vmatpush2.bf16.msra.mxu0 0
    %3735 = vmatprep.subr.bf16.mxu0 0
    %3736 = vmatpush2.bf16.msra.mxu0 0
    %3737 = vmatprep.subr.bf16.mxu0 0
    %3738 = vmatpush2.bf16.msra.mxu0 0
    %3739 = vmatprep.mubr.bf16.mxu0 0
    %3740 = vmatmul.mubr.bf16.gmra.mxu0 %v3705
    %v3741 = vpop.f32.mrf.mxu0
    %v3742 = vadd.f32 %v3684, %v3741
    %v3743 = vpop.f32.mrf.mxu0
    %v3744 = vpop.f32.mrf.mxu0
    %v3745 = vpop.f32.mrf.mxu0
    %3746 = vdwg.mxu0
    %v3747 = vld [vmem:[#allocation9] sm:$0x1]
    %v3749 = vlaneseq
    %v3750 = vshrl.u32 %v3749, 7
    %v3751 = vsub.s32 0, %v3750
    %v3752 = vrot.slane %v3747, %v3751
    %v3754 = vadd.f32 %v3742, %v3752
    %v3755 = vxor.u32 %v3754, 2147483648
    %v3756 = vmul.f32 %v3755, 1.442695
    %v3757 = vpow.pop %v3756
    %v3758 = vadd.f32 %v3757, 1.0
    %v3759 = vrcp.pop %v3758
    %v3760 = vmul.f32 1.0, %v3759
    %v3761 = vtanh.pop %v3754
    %v3762 = vmul.f32 %v3760, %v3114
    %3764 = vrot.lane.b32.xlu0 %v3761, 64
    %v3765 = vpop.permute.xlu0 %3764
    %v3767 = vmul.f32 %v3760, %v3765
    %3769 = vrot.lane.b32.xlu0 %v3767, 32
    %v3770 = vpop.permute.xlu0 %3769
    %v3772 = vadd.f32 %v3762, %v3770
    %v3773 = vtanh.pop %v3772
    %3775 = vrot.lane.b32.xlu0 %v3773, 64
    %v3776 = vpop.permute.xlu0 %3775
    %v3778 = vmul.f32 %v3760, %v3776
    %3780 = vrot.lane.b32.xlu0 %v3778, 32
    %v3781 = vpop.permute.xlu0 %3780
    %s3783 = scalar_lea.vmem %s14, 10
    %3784 = vst.msk [vmem:[%s3783] sm:$0x3] %vm502, %v3781
    %s3785 = scalar_lea.vmem %s1, 5
    %v3786 = vld [vmem:[%s3785] sm:$0x1]
    %v3787 = vld [vmem:[%s8] sm:$0xf]
    %v3788 = vld [vmem:[%s8 + $0x4] sm:$0xf]
    %v3789 = vld [vmem:[%s8 + $0x8] sm:$0xf]
    %v3790 = vld [vmem:[%s8 + $0xc] sm:$0xf]
    %v3791 = vld [vmem:[%s8 + $0x10] sm:$0xf]
    %v3792 = vld [vmem:[%s8 + $0x14] sm:$0xf]
    %v3793 = vld [vmem:[%s8 + $0x18] sm:$0xf]
    %v3794 = vld [vmem:[%s8 + $0x1c] sm:$0xf]
    %v3795 = vld [vmem:[#allocation10] sm:$0xf]
    %v3796 = vld [vmem:[#allocation10 + $0x4] sm:$0xf]
    %v3797 = vld [vmem:[#allocation10 + $0x8] sm:$0xf]
    %v3798 = vld [vmem:[#allocation10 + $0xc] sm:$0xf]
    %v3803 = vunpack.c.l.b16 %v3795
    %v3804 = vunpack.c.l.b16 %v3796
    %v3805 = vunpack.c.l.b16 %v3797
    %v3806 = vunpack.c.l.b16 %v3798
    %v3807 = vpack.c.b16 %v3804, %v3803
    %v3808 = vpack.c.b16 %v3806, %v3805
    %3811 = vmatprep.subr.bf16.mxu0 0
    %3812 = vmatpush1.bf16.msra.mxu0 0
    %3813 = vmatprep.subr.bf16.mxu0 0
    %3814 = vmatpush1.bf16.msra.mxu0 0
    %3815 = vmatprep.subr.bf16.mxu0 0
    %3816 = vmatpush1.bf16.msra.mxu0 0
    %3817 = vmatprep.subr.bf16.mxu0 0
    %3818 = vmatpush1.bf16.msra.mxu0 0
    %3819 = vmatprep.subr.bf16.mxu0 0
    %3820 = vmatpush1.bf16.msra.mxu0 0
    %3821 = vmatprep.subr.bf16.mxu0 0
    %3822 = vmatpush1.bf16.msra.mxu0 0
    %3823 = vmatprep.subr.bf16.mxu0 0
    %3824 = vmatpush1.bf16.msra.mxu0 %v3808
    %3825 = vmatprep.subr.bf16.mxu0 0
    %3826 = vmatpush1.bf16.msra.mxu0 %v3807
    %3827 = vmatprep.subr.bf16.mxu0 0
    %3828 = vmatpush2.bf16.msra.mxu0 0
    %3829 = vmatprep.subr.bf16.mxu0 0
    %3830 = vmatpush2.bf16.msra.mxu0 0
    %3831 = vmatprep.subr.bf16.mxu0 0
    %3832 = vmatpush2.bf16.msra.mxu0 0
    %3833 = vmatprep.subr.bf16.mxu0 0
    %3834 = vmatpush2.bf16.msra.mxu0 0
    %3835 = vmatprep.subr.bf16.mxu0 0
    %3836 = vmatpush2.bf16.msra.mxu0 0
    %3837 = vmatprep.subr.bf16.mxu0 0
    %3838 = vmatpush2.bf16.msra.mxu0 0
    %3839 = vmatprep.subr.bf16.mxu0 0
    %3840 = vmatpush2.bf16.msra.mxu0 0
    %3841 = vmatprep.subr.bf16.mxu0 0
    %3842 = vmatpush2.bf16.msra.mxu0 0
    %3843 = vmatprep.mubr.bf16.mxu0 0
    %3844 = vmatmul.mubr.bf16.gmra.mxu0 %v3376
    %v3845 = vpop.f32.mrf.mxu0
    %v3846 = vadd.f32 0.0, %v3845
    %v3847 = vpop.f32.mrf.mxu0
    %v3848 = vpop.f32.mrf.mxu0
    %v3849 = vpop.f32.mrf.mxu0
    %3850 = vdwg.mxu0
    %v3859 = vunpack.c.l.b16 %v3787
    %v3860 = vunpack.c.l.b16 %v3788
    %v3861 = vunpack.c.l.b16 %v3789
    %v3862 = vunpack.c.l.b16 %v3790
    %v3863 = vunpack.c.l.b16 %v3791
    %v3864 = vunpack.c.l.b16 %v3792
    %v3865 = vunpack.c.l.b16 %v3793
    %v3866 = vunpack.c.l.b16 %v3794
    %v3867 = vpack.c.b16 %v3860, %v3859
    %v3868 = vpack.c.b16 %v3862, %v3861
    %v3869 = vpack.c.b16 %v3864, %v3863
    %v3870 = vpack.c.b16 %v3866, %v3865
    %v3876 = vsel %vm271, %v3786, 0
    %3878 = vmatprep.subr.bf16.mxu0 0
    %3879 = vmatpush1.bf16.msra.mxu0 0
    %3880 = vmatprep.subr.bf16.mxu0 0
    %3881 = vmatpush1.bf16.msra.mxu0 0
    %3882 = vmatprep.subr.bf16.mxu0 0
    %3883 = vmatpush1.bf16.msra.mxu0 0
    %3884 = vmatprep.subr.bf16.mxu0 0
    %3885 = vmatpush1.bf16.msra.mxu0 0
    %3886 = vmatprep.subr.bf16.mxu0 0
    %3887 = vmatpush1.bf16.msra.mxu0 %v3870
    %3888 = vmatprep.subr.bf16.mxu0 0
    %3889 = vmatpush1.bf16.msra.mxu0 %v3869
    %3890 = vmatprep.subr.bf16.mxu0 0
    %3891 = vmatpush1.bf16.msra.mxu0 %v3868
    %3892 = vmatprep.subr.bf16.mxu0 0
    %3893 = vmatpush1.bf16.msra.mxu0 %v3867
    %3894 = vmatprep.subr.bf16.mxu0 0
    %3895 = vmatpush2.bf16.msra.mxu0 0
    %3896 = vmatprep.subr.bf16.mxu0 0
    %3897 = vmatpush2.bf16.msra.mxu0 0
    %3898 = vmatprep.subr.bf16.mxu0 0
    %3899 = vmatpush2.bf16.msra.mxu0 0
    %3900 = vmatprep.subr.bf16.mxu0 0
    %3901 = vmatpush2.bf16.msra.mxu0 0
    %3902 = vmatprep.subr.bf16.mxu0 0
    %3903 = vmatpush2.bf16.msra.mxu0 0
    %3904 = vmatprep.subr.bf16.mxu0 0
    %3905 = vmatpush2.bf16.msra.mxu0 0
    %3906 = vmatprep.subr.bf16.mxu0 0
    %3907 = vmatpush2.bf16.msra.mxu0 0
    %3908 = vmatprep.subr.bf16.mxu0 0
    %3909 = vmatpush2.bf16.msra.mxu0 0
    %3910 = vmatprep.mubr.bf16.mxu0 0
    %3911 = vmatmul.mubr.bf16.gmra.mxu0 %v3876
    %v3912 = vpop.f32.mrf.mxu0
    %v3913 = vadd.f32 %v3846, %v3912
    %v3914 = vpop.f32.mrf.mxu0
    %v3915 = vpop.f32.mrf.mxu0
    %v3916 = vpop.f32.mrf.mxu0
    %3917 = vdwg.mxu0
    %v3918 = vld [vmem:[#allocation12] sm:$0x1]
    %v3920 = vlaneseq
    %v3921 = vshrl.u32 %v3920, 7
    %v3922 = vsub.s32 0, %v3921
    %v3923 = vrot.slane %v3918, %v3922
    %v3925 = vadd.f32 %v3913, %v3923
    %v3926 = vxor.u32 %v3925, 2147483648
    %v3927 = vmul.f32 %v3926, 1.442695
    %v3928 = vpow.pop %v3927
    %v3929 = vadd.f32 %v3928, 1.0
    %v3930 = vrcp.pop %v3929
    %v3931 = vmul.f32 1.0, %v3930
    %v3932 = vtanh.pop %v3925
    %v3933 = vmul.f32 %v3931, %v3285
    %3935 = vrot.lane.b32.xlu0 %v3932, 64
    %v3936 = vpop.permute.xlu0 %3935
    %v3938 = vmul.f32 %v3931, %v3936
    %3940 = vrot.lane.b32.xlu0 %v3938, 32
    %v3941 = vpop.permute.xlu0 %3940
    %v3943 = vadd.f32 %v3933, %v3941
    %v3944 = vtanh.pop %v3943
    %3946 = vrot.lane.b32.xlu0 %v3944, 64
    %v3947 = vpop.permute.xlu0 %3946
    %v3949 = vmul.f32 %v3931, %v3947
    %v3950 = vpack.c.bf16 %v3949, %v3949
    %v3951 = vld [vmem:[#allocation13] sm:$0xf]
    %v3952 = vld [vmem:[#allocation13 + $0x4] sm:$0xf]
    %v3953 = vld [vmem:[#allocation13 + $0x8] sm:$0xf]
    %v3954 = vld [vmem:[#allocation13 + $0xc] sm:$0xf]
    %v3955 = vpack.c.bf16 %v3449, %v3449
    %v3956 = vld [vmem:[#allocation15] sm:$0xf]
    %v3957 = vld [vmem:[#allocation15 + $0x4] sm:$0xf]
    %v3958 = vld [vmem:[#allocation15 + $0x8] sm:$0xf]
    %v3959 = vld [vmem:[#allocation15 + $0xc] sm:$0xf]
    %3961 = vrot.lane.b32.xlu0 %v3955, 32
    %v3962 = vpop.permute.xlu0 %3961
    %v3967 = vunpack.c.l.b16 %v3956
    %v3968 = vunpack.c.l.b16 %v3957
    %v3969 = vunpack.c.l.b16 %v3958
    %v3970 = vunpack.c.l.b16 %v3959
    %v3971 = vpack.c.b16 %v3968, %v3967
    %v3972 = vpack.c.b16 %v3970, %v3969
    %v3976 = vsel %vm203, %v3962, 0
    %3978 = vmatprep.subr.bf16.mxu0 0
    %3979 = vmatpush1.bf16.msra.mxu0 0
    %3980 = vmatprep.subr.bf16.mxu0 0
    %3981 = vmatpush1.bf16.msra.mxu0 0
    %3982 = vmatprep.subr.bf16.mxu0 0
    %3983 = vmatpush1.bf16.msra.mxu0 0
    %3984 = vmatprep.subr.bf16.mxu0 0
    %3985 = vmatpush1.bf16.msra.mxu0 0
    %3986 = vmatprep.subr.bf16.mxu0 0
    %3987 = vmatpush1.bf16.msra.mxu0 0
    %3988 = vmatprep.subr.bf16.mxu0 0
    %3989 = vmatpush1.bf16.msra.mxu0 0
    %3990 = vmatprep.subr.bf16.mxu0 0
    %3991 = vmatpush1.bf16.msra.mxu0 %v3972
    %3992 = vmatprep.subr.bf16.mxu0 0
    %3993 = vmatpush1.bf16.msra.mxu0 %v3971
    %3994 = vmatprep.subr.bf16.mxu0 0
    %3995 = vmatpush2.bf16.msra.mxu0 0
    %3996 = vmatprep.subr.bf16.mxu0 0
    %3997 = vmatpush2.bf16.msra.mxu0 0
    %3998 = vmatprep.subr.bf16.mxu0 0
    %3999 = vmatpush2.bf16.msra.mxu0 0
    %4000 = vmatprep.subr.bf16.mxu0 0
    %4001 = vmatpush2.bf16.msra.mxu0 0
    %4002 = vmatprep.subr.bf16.mxu0 0
    %4003 = vmatpush2.bf16.msra.mxu0 0
    %4004 = vmatprep.subr.bf16.mxu0 0
    %4005 = vmatpush2.bf16.msra.mxu0 0
    %4006 = vmatprep.subr.bf16.mxu0 0
    %4007 = vmatpush2.bf16.msra.mxu0 0
    %4008 = vmatprep.subr.bf16.mxu0 0
    %4009 = vmatpush2.bf16.msra.mxu0 0
    %4010 = vmatprep.mubr.bf16.mxu0 0
    %4011 = vmatmul.mubr.bf16.gmra.mxu0 %v3976
    %v4012 = vpop.f32.mrf.mxu0
    %v4013 = vadd.f32 0.0, %v4012
    %v4014 = vpop.f32.mrf.mxu0
    %v4015 = vpop.f32.mrf.mxu0
    %v4016 = vpop.f32.mrf.mxu0
    %4017 = vdwg.mxu0
    %4019 = vrot.lane.b32.xlu0 %v3950, 32
    %v4020 = vpop.permute.xlu0 %4019
    %v4025 = vunpack.c.l.b16 %v3951
    %v4026 = vunpack.c.l.b16 %v3952
    %v4027 = vunpack.c.l.b16 %v3953
    %v4028 = vunpack.c.l.b16 %v3954
    %v4029 = vpack.c.b16 %v4026, %v4025
    %v4030 = vpack.c.b16 %v4028, %v4027
    %v4034 = vsel %vm203, %v4020, 0
    %4036 = vmatprep.subr.bf16.mxu0 0
    %4037 = vmatpush1.bf16.msra.mxu0 0
    %4038 = vmatprep.subr.bf16.mxu0 0
    %4039 = vmatpush1.bf16.msra.mxu0 0
    %4040 = vmatprep.subr.bf16.mxu0 0
    %4041 = vmatpush1.bf16.msra.mxu0 0
    %4042 = vmatprep.subr.bf16.mxu0 0
    %4043 = vmatpush1.bf16.msra.mxu0 0
    %4044 = vmatprep.subr.bf16.mxu0 0
    %4045 = vmatpush1.bf16.msra.mxu0 0
    %4046 = vmatprep.subr.bf16.mxu0 0
    %4047 = vmatpush1.bf16.msra.mxu0 0
    %4048 = vmatprep.subr.bf16.mxu0 0
    %4049 = vmatpush1.bf16.msra.mxu0 %v4030
    %4050 = vmatprep.subr.bf16.mxu0 0
    %4051 = vmatpush1.bf16.msra.mxu0 %v4029
    %4052 = vmatprep.subr.bf16.mxu0 0
    %4053 = vmatpush2.bf16.msra.mxu0 0
    %4054 = vmatprep.subr.bf16.mxu0 0
    %4055 = vmatpush2.bf16.msra.mxu0 0
    %4056 = vmatprep.subr.bf16.mxu0 0
    %4057 = vmatpush2.bf16.msra.mxu0 0
    %4058 = vmatprep.subr.bf16.mxu0 0
    %4059 = vmatpush2.bf16.msra.mxu0 0
    %4060 = vmatprep.subr.bf16.mxu0 0
    %4061 = vmatpush2.bf16.msra.mxu0 0
    %4062 = vmatprep.subr.bf16.mxu0 0
    %4063 = vmatpush2.bf16.msra.mxu0 0
    %4064 = vmatprep.subr.bf16.mxu0 0
    %4065 = vmatpush2.bf16.msra.mxu0 0
    %4066 = vmatprep.subr.bf16.mxu0 0
    %4067 = vmatpush2.bf16.msra.mxu0 0
    %4068 = vmatprep.mubr.bf16.mxu0 0
    %4069 = vmatmul.mubr.bf16.gmra.mxu0 %v4034
    %v4070 = vpop.f32.mrf.mxu0
    %v4071 = vadd.f32 %v4013, %v4070
    %v4072 = vpop.f32.mrf.mxu0
    %v4073 = vpop.f32.mrf.mxu0
    %v4074 = vpop.f32.mrf.mxu0
    %4075 = vdwg.mxu0
    %v4076 = vld [vmem:[#allocation16] sm:$0x1]
    %v4078 = vlaneseq
    %v4079 = vshrl.u32 %v4078, 7
    %v4080 = vsub.s32 0, %v4079
    %v4081 = vrot.slane %v4076, %v4080
    %v4083 = vadd.f32 %v4071, %v4081
    %v4084 = vxor.u32 %v4083, 2147483648
    %v4085 = vmul.f32 %v4084, 1.442695
    %v4086 = vpow.pop %v4085
    %v4087 = vadd.f32 %v4086, 1.0
    %v4088 = vrcp.pop %v4087
    %v4089 = vmul.f32 1.0, %v4088
    %v4090 = vtanh.pop %v4083
    %v4091 = vmul.f32 %v4089, %v3443
    %4093 = vrot.lane.b32.xlu0 %v4090, 64
    %v4094 = vpop.permute.xlu0 %4093
    %v4096 = vmul.f32 %v4089, %v4094
    %4098 = vrot.lane.b32.xlu0 %v4096, 32
    %v4099 = vpop.permute.xlu0 %4098
    %v4101 = vadd.f32 %v4091, %v4099
    %v4102 = vtanh.pop %v4101
    %4104 = vrot.lane.b32.xlu0 %v4102, 64
    %v4105 = vpop.permute.xlu0 %4104
    %v4107 = vmul.f32 %v4089, %v4105
    %4109 = vrot.lane.b32.xlu0 %v4107, 32
    %v4110 = vpop.permute.xlu0 %4109
    %s4112 = scalar_lea.vmem %s15, 10
    %4113 = vst.msk [vmem:[%s4112] sm:$0x3] %vm502, %v4110
    %s4114 = scalar_lea.vmem %s0, 6
    %v4115 = vld [vmem:[%s4114] sm:$0x1]
    %v4116 = vld [vmem:[%s2] sm:$0xf]
    %v4117 = vld [vmem:[%s2 + $0x4] sm:$0xf]
    %v4118 = vld [vmem:[%s2 + $0x8] sm:$0xf]
    %v4119 = vld [vmem:[%s2 + $0xc] sm:$0xf]
    %v4120 = vld [vmem:[%s2 + $0x10] sm:$0xf]
    %v4121 = vld [vmem:[%s2 + $0x14] sm:$0xf]
    %v4122 = vld [vmem:[%s2 + $0x18] sm:$0xf]
    %v4123 = vld [vmem:[%s2 + $0x1c] sm:$0xf]
    %v4124 = vld [vmem:[#allocation2] sm:$0xf]
    %v4125 = vld [vmem:[#allocation2 + $0x4] sm:$0xf]
    %v4126 = vld [vmem:[#allocation2 + $0x8] sm:$0xf]
    %v4127 = vld [vmem:[#allocation2 + $0xc] sm:$0xf]
    %v4132 = vunpack.c.l.b16 %v4124
    %v4133 = vunpack.c.l.b16 %v4125
    %v4134 = vunpack.c.l.b16 %v4126
    %v4135 = vunpack.c.l.b16 %v4127
    %v4136 = vpack.c.b16 %v4133, %v4132
    %v4137 = vpack.c.b16 %v4135, %v4134
    %4140 = vmatprep.subr.bf16.mxu0 0
    %4141 = vmatpush1.bf16.msra.mxu0 0
    %4142 = vmatprep.subr.bf16.mxu0 0
    %4143 = vmatpush1.bf16.msra.mxu0 0
    %4144 = vmatprep.subr.bf16.mxu0 0
    %4145 = vmatpush1.bf16.msra.mxu0 0
    %4146 = vmatprep.subr.bf16.mxu0 0
    %4147 = vmatpush1.bf16.msra.mxu0 0
    %4148 = vmatprep.subr.bf16.mxu0 0
    %4149 = vmatpush1.bf16.msra.mxu0 0
    %4150 = vmatprep.subr.bf16.mxu0 0
    %4151 = vmatpush1.bf16.msra.mxu0 0
    %4152 = vmatprep.subr.bf16.mxu0 0
    %4153 = vmatpush1.bf16.msra.mxu0 %v4137
    %4154 = vmatprep.subr.bf16.mxu0 0
    %4155 = vmatpush1.bf16.msra.mxu0 %v4136
    %4156 = vmatprep.subr.bf16.mxu0 0
    %4157 = vmatpush2.bf16.msra.mxu0 0
    %4158 = vmatprep.subr.bf16.mxu0 0
    %4159 = vmatpush2.bf16.msra.mxu0 0
    %4160 = vmatprep.subr.bf16.mxu0 0
    %4161 = vmatpush2.bf16.msra.mxu0 0
    %4162 = vmatprep.subr.bf16.mxu0 0
    %4163 = vmatpush2.bf16.msra.mxu0 0
    %4164 = vmatprep.subr.bf16.mxu0 0
    %4165 = vmatpush2.bf16.msra.mxu0 0
    %4166 = vmatprep.subr.bf16.mxu0 0
    %4167 = vmatpush2.bf16.msra.mxu0 0
    %4168 = vmatprep.subr.bf16.mxu0 0
    %4169 = vmatpush2.bf16.msra.mxu0 0
    %4170 = vmatprep.subr.bf16.mxu0 0
    %4171 = vmatpush2.bf16.msra.mxu0 0
    %4172 = vmatprep.mubr.bf16.mxu0 0
    %4173 = vmatmul.mubr.bf16.gmra.mxu0 %v3705
    %v4174 = vpop.f32.mrf.mxu0
    %v4175 = vadd.f32 0.0, %v4174
    %v4176 = vpop.f32.mrf.mxu0
    %v4177 = vpop.f32.mrf.mxu0
    %v4178 = vpop.f32.mrf.mxu0
    %4179 = vdwg.mxu0
    %v4188 = vunpack.c.l.b16 %v4116
    %v4189 = vunpack.c.l.b16 %v4117
    %v4190 = vunpack.c.l.b16 %v4118
    %v4191 = vunpack.c.l.b16 %v4119
    %v4192 = vunpack.c.l.b16 %v4120
    %v4193 = vunpack.c.l.b16 %v4121
    %v4194 = vunpack.c.l.b16 %v4122
    %v4195 = vunpack.c.l.b16 %v4123
    %v4196 = vpack.c.b16 %v4189, %v4188
    %v4197 = vpack.c.b16 %v4191, %v4190
    %v4198 = vpack.c.b16 %v4193, %v4192
    %v4199 = vpack.c.b16 %v4195, %v4194
    %v4205 = vsel %vm271, %v4115, 0
    %4207 = vmatprep.subr.bf16.mxu0 0
    %4208 = vmatpush1.bf16.msra.mxu0 0
    %4209 = vmatprep.subr.bf16.mxu0 0
    %4210 = vmatpush1.bf16.msra.mxu0 0
    %4211 = vmatprep.subr.bf16.mxu0 0
    %4212 = vmatpush1.bf16.msra.mxu0 0
    %4213 = vmatprep.subr.bf16.mxu0 0
    %4214 = vmatpush1.bf16.msra.mxu0 0
    %4215 = vmatprep.subr.bf16.mxu0 0
    %4216 = vmatpush1.bf16.msra.mxu0 %v4199
    %4217 = vmatprep.subr.bf16.mxu0 0
    %4218 = vmatpush1.bf16.msra.mxu0 %v4198
    %4219 = vmatprep.subr.bf16.mxu0 0
    %4220 = vmatpush1.bf16.msra.mxu0 %v4197
    %4221 = vmatprep.subr.bf16.mxu0 0
    %4222 = vmatpush1.bf16.msra.mxu0 %v4196
    %4223 = vmatprep.subr.bf16.mxu0 0
    %4224 = vmatpush2.bf16.msra.mxu0 0
    %4225 = vmatprep.subr.bf16.mxu0 0
    %4226 = vmatpush2.bf16.msra.mxu0 0
    %4227 = vmatprep.subr.bf16.mxu0 0
    %4228 = vmatpush2.bf16.msra.mxu0 0
    %4229 = vmatprep.subr.bf16.mxu0 0
    %4230 = vmatpush2.bf16.msra.mxu0 0
    %4231 = vmatprep.subr.bf16.mxu0 0
    %4232 = vmatpush2.bf16.msra.mxu0 0
    %4233 = vmatprep.subr.bf16.mxu0 0
    %4234 = vmatpush2.bf16.msra.mxu0 0
    %4235 = vmatprep.subr.bf16.mxu0 0
    %4236 = vmatpush2.bf16.msra.mxu0 0
    %4237 = vmatprep.subr.bf16.mxu0 0
    %4238 = vmatpush2.bf16.msra.mxu0 0
    %4239 = vmatprep.mubr.bf16.mxu0 0
    %4240 = vmatmul.mubr.bf16.gmra.mxu0 %v4205
    %v4241 = vpop.f32.mrf.mxu0
    %v4242 = vadd.f32 %v4175, %v4241
    %v4243 = vpop.f32.mrf.mxu0
    %v4244 = vpop.f32.mrf.mxu0
    %v4245 = vpop.f32.mrf.mxu0
    %4246 = vdwg.mxu0
    %v4247 = vld [vmem:[#allocation4] sm:$0x1]
    %v4249 = vlaneseq
    %v4250 = vshrl.u32 %v4249, 7
    %v4251 = vsub.s32 0, %v4250
    %v4252 = vrot.slane %v4247, %v4251
    %v4254 = vadd.f32 %v4242, %v4252
    %v4255 = vxor.u32 %v4254, 2147483648
    %v4256 = vmul.f32 %v4255, 1.442695
    %v4257 = vpow.pop %v4256
    %v4258 = vadd.f32 %v4257, 1.0
    %v4259 = vrcp.pop %v4258
    %v4260 = vmul.f32 1.0, %v4259
    %v4261 = vtanh.pop %v4254
    %v4262 = vmul.f32 %v4260, %v3614
    %4264 = vrot.lane.b32.xlu0 %v4261, 64
    %v4265 = vpop.permute.xlu0 %4264
    %v4267 = vmul.f32 %v4260, %v4265
    %4269 = vrot.lane.b32.xlu0 %v4267, 32
    %v4270 = vpop.permute.xlu0 %4269
    %v4272 = vadd.f32 %v4262, %v4270
    %v4273 = vtanh.pop %v4272
    %4275 = vrot.lane.b32.xlu0 %v4273, 64
    %v4276 = vpop.permute.xlu0 %4275
    %v4278 = vmul.f32 %v4260, %v4276
    %v4279 = vpack.c.bf16 %v4278, %v4278
    %v4280 = vld [vmem:[#allocation6] sm:$0xf]
    %v4281 = vld [vmem:[#allocation6 + $0x4] sm:$0xf]
    %v4282 = vld [vmem:[#allocation6 + $0x8] sm:$0xf]
    %v4283 = vld [vmem:[#allocation6 + $0xc] sm:$0xf]
    %v4284 = vpack.c.bf16 %v3778, %v3778
    %v4285 = vld [vmem:[#allocation7] sm:$0xf]
    %v4286 = vld [vmem:[#allocation7 + $0x4] sm:$0xf]
    %v4287 = vld [vmem:[#allocation7 + $0x8] sm:$0xf]
    %v4288 = vld [vmem:[#allocation7 + $0xc] sm:$0xf]
    %4290 = vrot.lane.b32.xlu0 %v4284, 32
    %v4291 = vpop.permute.xlu0 %4290
    %v4296 = vunpack.c.l.b16 %v4285
    %v4297 = vunpack.c.l.b16 %v4286
    %v4298 = vunpack.c.l.b16 %v4287
    %v4299 = vunpack.c.l.b16 %v4288
    %v4300 = vpack.c.b16 %v4297, %v4296
    %v4301 = vpack.c.b16 %v4299, %v4298
    %v4305 = vsel %vm203, %v4291, 0
    %4307 = vmatprep.subr.bf16.mxu0 0
    %4308 = vmatpush1.bf16.msra.mxu0 0
    %4309 = vmatprep.subr.bf16.mxu0 0
    %4310 = vmatpush1.bf16.msra.mxu0 0
    %4311 = vmatprep.subr.bf16.mxu0 0
    %4312 = vmatpush1.bf16.msra.mxu0 0
    %4313 = vmatprep.subr.bf16.mxu0 0
    %4314 = vmatpush1.bf16.msra.mxu0 0
    %4315 = vmatprep.subr.bf16.mxu0 0
    %4316 = vmatpush1.bf16.msra.mxu0 0
    %4317 = vmatprep.subr.bf16.mxu0 0
    %4318 = vmatpush1.bf16.msra.mxu0 0
    %4319 = vmatprep.subr.bf16.mxu0 0
    %4320 = vmatpush1.bf16.msra.mxu0 %v4301
    %4321 = vmatprep.subr.bf16.mxu0 0
    %4322 = vmatpush1.bf16.msra.mxu0 %v4300
    %4323 = vmatprep.subr.bf16.mxu0 0
    %4324 = vmatpush2.bf16.msra.mxu0 0
    %4325 = vmatprep.subr.bf16.mxu0 0
    %4326 = vmatpush2.bf16.msra.mxu0 0
    %4327 = vmatprep.subr.bf16.mxu0 0
    %4328 = vmatpush2.bf16.msra.mxu0 0
    %4329 = vmatprep.subr.bf16.mxu0 0
    %4330 = vmatpush2.bf16.msra.mxu0 0
    %4331 = vmatprep.subr.bf16.mxu0 0
    %4332 = vmatpush2.bf16.msra.mxu0 0
    %4333 = vmatprep.subr.bf16.mxu0 0
    %4334 = vmatpush2.bf16.msra.mxu0 0
    %4335 = vmatprep.subr.bf16.mxu0 0
    %4336 = vmatpush2.bf16.msra.mxu0 0
    %4337 = vmatprep.subr.bf16.mxu0 0
    %4338 = vmatpush2.bf16.msra.mxu0 0
    %4339 = vmatprep.mubr.bf16.mxu0 0
    %4340 = vmatmul.mubr.bf16.gmra.mxu0 %v4305
    %v4341 = vpop.f32.mrf.mxu0
    %v4342 = vadd.f32 0.0, %v4341
    %v4343 = vpop.f32.mrf.mxu0
    %v4344 = vpop.f32.mrf.mxu0
    %v4345 = vpop.f32.mrf.mxu0
    %4346 = vdwg.mxu0
    %4348 = vrot.lane.b32.xlu0 %v4279, 32
    %v4349 = vpop.permute.xlu0 %4348
    %v4354 = vunpack.c.l.b16 %v4280
    %v4355 = vunpack.c.l.b16 %v4281
    %v4356 = vunpack.c.l.b16 %v4282
    %v4357 = vunpack.c.l.b16 %v4283
    %v4358 = vpack.c.b16 %v4355, %v4354
    %v4359 = vpack.c.b16 %v4357, %v4356
    %v4363 = vsel %vm203, %v4349, 0
    %4365 = vmatprep.subr.bf16.mxu0 0
    %4366 = vmatpush1.bf16.msra.mxu0 0
    %4367 = vmatprep.subr.bf16.mxu0 0
    %4368 = vmatpush1.bf16.msra.mxu0 0
    %4369 = vmatprep.subr.bf16.mxu0 0
    %4370 = vmatpush1.bf16.msra.mxu0 0
    %4371 = vmatprep.subr.bf16.mxu0 0
    %4372 = vmatpush1.bf16.msra.mxu0 0
    %4373 = vmatprep.subr.bf16.mxu0 0
    %4374 = vmatpush1.bf16.msra.mxu0 0
    %4375 = vmatprep.subr.bf16.mxu0 0
    %4376 = vmatpush1.bf16.msra.mxu0 0
    %4377 = vmatprep.subr.bf16.mxu0 0
    %4378 = vmatpush1.bf16.msra.mxu0 %v4359
    %4379 = vmatprep.subr.bf16.mxu0 0
    %4380 = vmatpush1.bf16.msra.mxu0 %v4358
    %4381 = vmatprep.subr.bf16.mxu0 0
    %4382 = vmatpush2.bf16.msra.mxu0 0
    %4383 = vmatprep.subr.bf16.mxu0 0
    %4384 = vmatpush2.bf16.msra.mxu0 0
    %4385 = vmatprep.subr.bf16.mxu0 0
    %4386 = vmatpush2.bf16.msra.mxu0 0
    %4387 = vmatprep.subr.bf16.mxu0 0
    %4388 = vmatpush2.bf16.msra.mxu0 0
    %4389 = vmatprep.subr.bf16.mxu0 0
    %4390 = vmatpush2.bf16.msra.mxu0 0
    %4391 = vmatprep.subr.bf16.mxu0 0
    %4392 = vmatpush2.bf16.msra.mxu0 0
    %4393 = vmatprep.subr.bf16.mxu0 0
    %4394 = vmatpush2.bf16.msra.mxu0 0
    %4395 = vmatprep.subr.bf16.mxu0 0
    %4396 = vmatpush2.bf16.msra.mxu0 0
    %4397 = vmatprep.mubr.bf16.mxu0 0
    %4398 = vmatmul.mubr.bf16.gmra.mxu0 %v4363
    %v4399 = vpop.f32.mrf.mxu0
    %v4400 = vadd.f32 %v4342, %v4399
    %v4401 = vpop.f32.mrf.mxu0
    %v4402 = vpop.f32.mrf.mxu0
    %v4403 = vpop.f32.mrf.mxu0
    %4404 = vdwg.mxu0
    %v4405 = vld [vmem:[#allocation9] sm:$0x1]
    %v4407 = vlaneseq
    %v4408 = vshrl.u32 %v4407, 7
    %v4409 = vsub.s32 0, %v4408
    %v4410 = vrot.slane %v4405, %v4409
    %v4412 = vadd.f32 %v4400, %v4410
    %v4413 = vxor.u32 %v4412, 2147483648
    %v4414 = vmul.f32 %v4413, 1.442695
    %v4415 = vpow.pop %v4414
    %v4416 = vadd.f32 %v4415, 1.0
    %v4417 = vrcp.pop %v4416
    %v4418 = vmul.f32 1.0, %v4417
    %v4419 = vtanh.pop %v4412
    %v4420 = vmul.f32 %v4418, %v3772
    %4422 = vrot.lane.b32.xlu0 %v4419, 64
    %v4423 = vpop.permute.xlu0 %4422
    %v4425 = vmul.f32 %v4418, %v4423
    %4427 = vrot.lane.b32.xlu0 %v4425, 32
    %v4428 = vpop.permute.xlu0 %4427
    %v4430 = vadd.f32 %v4420, %v4428
    %v4431 = vtanh.pop %v4430
    %4433 = vrot.lane.b32.xlu0 %v4431, 64
    %v4434 = vpop.permute.xlu0 %4433
    %v4436 = vmul.f32 %v4418, %v4434
    %4438 = vrot.lane.b32.xlu0 %v4436, 32
    %v4439 = vpop.permute.xlu0 %4438
    %s4441 = scalar_lea.vmem %s14, 12
    %4442 = vst.msk [vmem:[%s4441] sm:$0x3] %vm502, %v4439
    %s4443 = scalar_lea.vmem %s1, 6
    %v4444 = vld [vmem:[%s4443] sm:$0x1]
    %v4445 = vld [vmem:[%s8] sm:$0xf]
    %v4446 = vld [vmem:[%s8 + $0x4] sm:$0xf]
    %v4447 = vld [vmem:[%s8 + $0x8] sm:$0xf]
    %v4448 = vld [vmem:[%s8 + $0xc] sm:$0xf]
    %v4449 = vld [vmem:[%s8 + $0x10] sm:$0xf]
    %v4450 = vld [vmem:[%s8 + $0x14] sm:$0xf]
    %v4451 = vld [vmem:[%s8 + $0x18] sm:$0xf]
    %v4452 = vld [vmem:[%s8 + $0x1c] sm:$0xf]
    %v4453 = vld [vmem:[#allocation10] sm:$0xf]
    %v4454 = vld [vmem:[#allocation10 + $0x4] sm:$0xf]
    %v4455 = vld [vmem:[#allocation10 + $0x8] sm:$0xf]
    %v4456 = vld [vmem:[#allocation10 + $0xc] sm:$0xf]
    %v4461 = vunpack.c.l.b16 %v4453
    %v4462 = vunpack.c.l.b16 %v4454
    %v4463 = vunpack.c.l.b16 %v4455
    %v4464 = vunpack.c.l.b16 %v4456
    %v4465 = vpack.c.b16 %v4462, %v4461
    %v4466 = vpack.c.b16 %v4464, %v4463
    %4469 = vmatprep.subr.bf16.mxu0 0
    %4470 = vmatpush1.bf16.msra.mxu0 0
    %4471 = vmatprep.subr.bf16.mxu0 0
    %4472 = vmatpush1.bf16.msra.mxu0 0
    %4473 = vmatprep.subr.bf16.mxu0 0
    %4474 = vmatpush1.bf16.msra.mxu0 0
    %4475 = vmatprep.subr.bf16.mxu0 0
    %4476 = vmatpush1.bf16.msra.mxu0 0
    %4477 = vmatprep.subr.bf16.mxu0 0
    %4478 = vmatpush1.bf16.msra.mxu0 0
    %4479 = vmatprep.subr.bf16.mxu0 0
    %4480 = vmatpush1.bf16.msra.mxu0 0
    %4481 = vmatprep.subr.bf16.mxu0 0
    %4482 = vmatpush1.bf16.msra.mxu0 %v4466
    %4483 = vmatprep.subr.bf16.mxu0 0
    %4484 = vmatpush1.bf16.msra.mxu0 %v4465
    %4485 = vmatprep.subr.bf16.mxu0 0
    %4486 = vmatpush2.bf16.msra.mxu0 0
    %4487 = vmatprep.subr.bf16.mxu0 0
    %4488 = vmatpush2.bf16.msra.mxu0 0
    %4489 = vmatprep.subr.bf16.mxu0 0
    %4490 = vmatpush2.bf16.msra.mxu0 0
    %4491 = vmatprep.subr.bf16.mxu0 0
    %4492 = vmatpush2.bf16.msra.mxu0 0
    %4493 = vmatprep.subr.bf16.mxu0 0
    %4494 = vmatpush2.bf16.msra.mxu0 0
    %4495 = vmatprep.subr.bf16.mxu0 0
    %4496 = vmatpush2.bf16.msra.mxu0 0
    %4497 = vmatprep.subr.bf16.mxu0 0
    %4498 = vmatpush2.bf16.msra.mxu0 0
    %4499 = vmatprep.subr.bf16.mxu0 0
    %4500 = vmatpush2.bf16.msra.mxu0 0
    %4501 = vmatprep.mubr.bf16.mxu0 0
    %4502 = vmatmul.mubr.bf16.gmra.mxu0 %v4034
    %v4503 = vpop.f32.mrf.mxu0
    %v4504 = vadd.f32 0.0, %v4503
    %v4505 = vpop.f32.mrf.mxu0
    %v4506 = vpop.f32.mrf.mxu0
    %v4507 = vpop.f32.mrf.mxu0
    %4508 = vdwg.mxu0
    %v4517 = vunpack.c.l.b16 %v4445
    %v4518 = vunpack.c.l.b16 %v4446
    %v4519 = vunpack.c.l.b16 %v4447
    %v4520 = vunpack.c.l.b16 %v4448
    %v4521 = vunpack.c.l.b16 %v4449
    %v4522 = vunpack.c.l.b16 %v4450
    %v4523 = vunpack.c.l.b16 %v4451
    %v4524 = vunpack.c.l.b16 %v4452
    %v4525 = vpack.c.b16 %v4518, %v4517
    %v4526 = vpack.c.b16 %v4520, %v4519
    %v4527 = vpack.c.b16 %v4522, %v4521
    %v4528 = vpack.c.b16 %v4524, %v4523
    %v4534 = vsel %vm271, %v4444, 0
    %4536 = vmatprep.subr.bf16.mxu0 0
    %4537 = vmatpush1.bf16.msra.mxu0 0
    %4538 = vmatprep.subr.bf16.mxu0 0
    %4539 = vmatpush1.bf16.msra.mxu0 0
    %4540 = vmatprep.subr.bf16.mxu0 0
    %4541 = vmatpush1.bf16.msra.mxu0 0
    %4542 = vmatprep.subr.bf16.mxu0 0
    %4543 = vmatpush1.bf16.msra.mxu0 0
    %4544 = vmatprep.subr.bf16.mxu0 0
    %4545 = vmatpush1.bf16.msra.mxu0 %v4528
    %4546 = vmatprep.subr.bf16.mxu0 0
    %4547 = vmatpush1.bf16.msra.mxu0 %v4527
    %4548 = vmatprep.subr.bf16.mxu0 0
    %4549 = vmatpush1.bf16.msra.mxu0 %v4526
    %4550 = vmatprep.subr.bf16.mxu0 0
    %4551 = vmatpush1.bf16.msra.mxu0 %v4525
    %4552 = vmatprep.subr.bf16.mxu0 0
    %4553 = vmatpush2.bf16.msra.mxu0 0
    %4554 = vmatprep.subr.bf16.mxu0 0
    %4555 = vmatpush2.bf16.msra.mxu0 0
    %4556 = vmatprep.subr.bf16.mxu0 0
    %4557 = vmatpush2.bf16.msra.mxu0 0
    %4558 = vmatprep.subr.bf16.mxu0 0
    %4559 = vmatpush2.bf16.msra.mxu0 0
    %4560 = vmatprep.subr.bf16.mxu0 0
    %4561 = vmatpush2.bf16.msra.mxu0 0
    %4562 = vmatprep.subr.bf16.mxu0 0
    %4563 = vmatpush2.bf16.msra.mxu0 0
    %4564 = vmatprep.subr.bf16.mxu0 0
    %4565 = vmatpush2.bf16.msra.mxu0 0
    %4566 = vmatprep.subr.bf16.mxu0 0
    %4567 = vmatpush2.bf16.msra.mxu0 0
    %4568 = vmatprep.mubr.bf16.mxu0 0
    %4569 = vmatmul.mubr.bf16.gmra.mxu0 %v4534
    %v4570 = vpop.f32.mrf.mxu0
    %v4571 = vadd.f32 %v4504, %v4570
    %v4572 = vpop.f32.mrf.mxu0
    %v4573 = vpop.f32.mrf.mxu0
    %v4574 = vpop.f32.mrf.mxu0
    %4575 = vdwg.mxu0
    %v4576 = vld [vmem:[#allocation12] sm:$0x1]
    %v4578 = vlaneseq
    %v4579 = vshrl.u32 %v4578, 7
    %v4580 = vsub.s32 0, %v4579
    %v4581 = vrot.slane %v4576, %v4580
    %v4583 = vadd.f32 %v4571, %v4581
    %v4584 = vxor.u32 %v4583, 2147483648
    %v4585 = vmul.f32 %v4584, 1.442695
    %v4586 = vpow.pop %v4585
    %v4587 = vadd.f32 %v4586, 1.0
    %v4588 = vrcp.pop %v4587
    %v4589 = vmul.f32 1.0, %v4588
    %v4590 = vtanh.pop %v4583
    %v4591 = vmul.f32 %v4589, %v3943
    %4593 = vrot.lane.b32.xlu0 %v4590, 64
    %v4594 = vpop.permute.xlu0 %4593
    %v4596 = vmul.f32 %v4589, %v4594
    %4598 = vrot.lane.b32.xlu0 %v4596, 32
    %v4599 = vpop.permute.xlu0 %4598
    %v4601 = vadd.f32 %v4591, %v4599
    %v4602 = vtanh.pop %v4601
    %4604 = vrot.lane.b32.xlu0 %v4602, 64
    %v4605 = vpop.permute.xlu0 %4604
    %v4607 = vmul.f32 %v4589, %v4605
    %v4608 = vpack.c.bf16 %v4607, %v4607
    %v4609 = vld [vmem:[#allocation13] sm:$0xf]
    %v4610 = vld [vmem:[#allocation13 + $0x4] sm:$0xf]
    %v4611 = vld [vmem:[#allocation13 + $0x8] sm:$0xf]
    %v4612 = vld [vmem:[#allocation13 + $0xc] sm:$0xf]
    %v4613 = vpack.c.bf16 %v4107, %v4107
    %v4614 = vld [vmem:[#allocation15] sm:$0xf]
    %v4615 = vld [vmem:[#allocation15 + $0x4] sm:$0xf]
    %v4616 = vld [vmem:[#allocation15 + $0x8] sm:$0xf]
    %v4617 = vld [vmem:[#allocation15 + $0xc] sm:$0xf]
    %4619 = vrot.lane.b32.xlu0 %v4613, 32
    %v4620 = vpop.permute.xlu0 %4619
    %v4625 = vunpack.c.l.b16 %v4614
    %v4626 = vunpack.c.l.b16 %v4615
    %v4627 = vunpack.c.l.b16 %v4616
    %v4628 = vunpack.c.l.b16 %v4617
    %v4629 = vpack.c.b16 %v4626, %v4625
    %v4630 = vpack.c.b16 %v4628, %v4627
    %v4634 = vsel %vm203, %v4620, 0
    %4636 = vmatprep.subr.bf16.mxu0 0
    %4637 = vmatpush1.bf16.msra.mxu0 0
    %4638 = vmatprep.subr.bf16.mxu0 0
    %4639 = vmatpush1.bf16.msra.mxu0 0
    %4640 = vmatprep.subr.bf16.mxu0 0
    %4641 = vmatpush1.bf16.msra.mxu0 0
    %4642 = vmatprep.subr.bf16.mxu0 0
    %4643 = vmatpush1.bf16.msra.mxu0 0
    %4644 = vmatprep.subr.bf16.mxu0 0
    %4645 = vmatpush1.bf16.msra.mxu0 0
    %4646 = vmatprep.subr.bf16.mxu0 0
    %4647 = vmatpush1.bf16.msra.mxu0 0
    %4648 = vmatprep.subr.bf16.mxu0 0
    %4649 = vmatpush1.bf16.msra.mxu0 %v4630
    %4650 = vmatprep.subr.bf16.mxu0 0
    %4651 = vmatpush1.bf16.msra.mxu0 %v4629
    %4652 = vmatprep.subr.bf16.mxu0 0
    %4653 = vmatpush2.bf16.msra.mxu0 0
    %4654 = vmatprep.subr.bf16.mxu0 0
    %4655 = vmatpush2.bf16.msra.mxu0 0
    %4656 = vmatprep.subr.bf16.mxu0 0
    %4657 = vmatpush2.bf16.msra.mxu0 0
    %4658 = vmatprep.subr.bf16.mxu0 0
    %4659 = vmatpush2.bf16.msra.mxu0 0
    %4660 = vmatprep.subr.bf16.mxu0 0
    %4661 = vmatpush2.bf16.msra.mxu0 0
    %4662 = vmatprep.subr.bf16.mxu0 0
    %4663 = vmatpush2.bf16.msra.mxu0 0
    %4664 = vmatprep.subr.bf16.mxu0 0
    %4665 = vmatpush2.bf16.msra.mxu0 0
    %4666 = vmatprep.subr.bf16.mxu0 0
    %4667 = vmatpush2.bf16.msra.mxu0 0
    %4668 = vmatprep.mubr.bf16.mxu0 0
    %4669 = vmatmul.mubr.bf16.gmra.mxu0 %v4634
    %v4670 = vpop.f32.mrf.mxu0
    %v4671 = vadd.f32 0.0, %v4670
    %v4672 = vpop.f32.mrf.mxu0
    %v4673 = vpop.f32.mrf.mxu0
    %v4674 = vpop.f32.mrf.mxu0
    %4675 = vdwg.mxu0
    %4677 = vrot.lane.b32.xlu0 %v4608, 32
    %v4678 = vpop.permute.xlu0 %4677
    %v4683 = vunpack.c.l.b16 %v4609
    %v4684 = vunpack.c.l.b16 %v4610
    %v4685 = vunpack.c.l.b16 %v4611
    %v4686 = vunpack.c.l.b16 %v4612
    %v4687 = vpack.c.b16 %v4684, %v4683
    %v4688 = vpack.c.b16 %v4686, %v4685
    %v4692 = vsel %vm203, %v4678, 0
    %4694 = vmatprep.subr.bf16.mxu0 0
    %4695 = vmatpush1.bf16.msra.mxu0 0
    %4696 = vmatprep.subr.bf16.mxu0 0
    %4697 = vmatpush1.bf16.msra.mxu0 0
    %4698 = vmatprep.subr.bf16.mxu0 0
    %4699 = vmatpush1.bf16.msra.mxu0 0
    %4700 = vmatprep.subr.bf16.mxu0 0
    %4701 = vmatpush1.bf16.msra.mxu0 0
    %4702 = vmatprep.subr.bf16.mxu0 0
    %4703 = vmatpush1.bf16.msra.mxu0 0
    %4704 = vmatprep.subr.bf16.mxu0 0
    %4705 = vmatpush1.bf16.msra.mxu0 0
    %4706 = vmatprep.subr.bf16.mxu0 0
    %4707 = vmatpush1.bf16.msra.mxu0 %v4688
    %4708 = vmatprep.subr.bf16.mxu0 0
    %4709 = vmatpush1.bf16.msra.mxu0 %v4687
    %4710 = vmatprep.subr.bf16.mxu0 0
    %4711 = vmatpush2.bf16.msra.mxu0 0
    %4712 = vmatprep.subr.bf16.mxu0 0
    %4713 = vmatpush2.bf16.msra.mxu0 0
    %4714 = vmatprep.subr.bf16.mxu0 0
    %4715 = vmatpush2.bf16.msra.mxu0 0
    %4716 = vmatprep.subr.bf16.mxu0 0
    %4717 = vmatpush2.bf16.msra.mxu0 0
    %4718 = vmatprep.subr.bf16.mxu0 0
    %4719 = vmatpush2.bf16.msra.mxu0 0
    %4720 = vmatprep.subr.bf16.mxu0 0
    %4721 = vmatpush2.bf16.msra.mxu0 0
    %4722 = vmatprep.subr.bf16.mxu0 0
    %4723 = vmatpush2.bf16.msra.mxu0 0
    %4724 = vmatprep.subr.bf16.mxu0 0
    %4725 = vmatpush2.bf16.msra.mxu0 0
    %4726 = vmatprep.mubr.bf16.mxu0 0
    %4727 = vmatmul.mubr.bf16.gmra.mxu0 %v4692
    %v4728 = vpop.f32.mrf.mxu0
    %v4729 = vadd.f32 %v4671, %v4728
    %v4730 = vpop.f32.mrf.mxu0
    %v4731 = vpop.f32.mrf.mxu0
    %v4732 = vpop.f32.mrf.mxu0
    %4733 = vdwg.mxu0
    %v4734 = vld [vmem:[#allocation16] sm:$0x1]
    %v4736 = vlaneseq
    %v4737 = vshrl.u32 %v4736, 7
    %v4738 = vsub.s32 0, %v4737
    %v4739 = vrot.slane %v4734, %v4738
    %v4741 = vadd.f32 %v4729, %v4739
    %v4742 = vxor.u32 %v4741, 2147483648
    %v4743 = vmul.f32 %v4742, 1.442695
    %v4744 = vpow.pop %v4743
    %v4745 = vadd.f32 %v4744, 1.0
    %v4746 = vrcp.pop %v4745
    %v4747 = vmul.f32 1.0, %v4746
    %v4748 = vtanh.pop %v4741
    %v4749 = vmul.f32 %v4747, %v4101
    %4751 = vrot.lane.b32.xlu0 %v4748, 64
    %v4752 = vpop.permute.xlu0 %4751
    %v4754 = vmul.f32 %v4747, %v4752
    %4756 = vrot.lane.b32.xlu0 %v4754, 32
    %v4757 = vpop.permute.xlu0 %4756
    %v4759 = vadd.f32 %v4749, %v4757
    %v4760 = vtanh.pop %v4759
    %4762 = vrot.lane.b32.xlu0 %v4760, 64
    %v4763 = vpop.permute.xlu0 %4762
    %v4765 = vmul.f32 %v4747, %v4763
    %4767 = vrot.lane.b32.xlu0 %v4765, 32
    %v4768 = vpop.permute.xlu0 %4767
    %s4770 = scalar_lea.vmem %s15, 12
    %4771 = vst.msk [vmem:[%s4770] sm:$0x3] %vm502, %v4768
    %s4772 = scalar_lea.vmem %s0, 7
    %v4773 = vld [vmem:[%s4772] sm:$0x1]
    %v4774 = vld [vmem:[%s2] sm:$0xf]
    %v4775 = vld [vmem:[%s2 + $0x4] sm:$0xf]
    %v4776 = vld [vmem:[%s2 + $0x8] sm:$0xf]
    %v4777 = vld [vmem:[%s2 + $0xc] sm:$0xf]
    %v4778 = vld [vmem:[%s2 + $0x10] sm:$0xf]
    %v4779 = vld [vmem:[%s2 + $0x14] sm:$0xf]
    %v4780 = vld [vmem:[%s2 + $0x18] sm:$0xf]
    %v4781 = vld [vmem:[%s2 + $0x1c] sm:$0xf]
    %v4782 = vld [vmem:[#allocation2] sm:$0xf]
    %v4783 = vld [vmem:[#allocation2 + $0x4] sm:$0xf]
    %v4784 = vld [vmem:[#allocation2 + $0x8] sm:$0xf]
    %v4785 = vld [vmem:[#allocation2 + $0xc] sm:$0xf]
    %v4790 = vunpack.c.l.b16 %v4782
    %v4791 = vunpack.c.l.b16 %v4783
    %v4792 = vunpack.c.l.b16 %v4784
    %v4793 = vunpack.c.l.b16 %v4785
    %v4794 = vpack.c.b16 %v4791, %v4790
    %v4795 = vpack.c.b16 %v4793, %v4792
    %4798 = vmatprep.subr.bf16.mxu0 0
    %4799 = vmatpush1.bf16.msra.mxu0 0
    %4800 = vmatprep.subr.bf16.mxu0 0
    %4801 = vmatpush1.bf16.msra.mxu0 0
    %4802 = vmatprep.subr.bf16.mxu0 0
    %4803 = vmatpush1.bf16.msra.mxu0 0
    %4804 = vmatprep.subr.bf16.mxu0 0
    %4805 = vmatpush1.bf16.msra.mxu0 0
    %4806 = vmatprep.subr.bf16.mxu0 0
    %4807 = vmatpush1.bf16.msra.mxu0 0
    %4808 = vmatprep.subr.bf16.mxu0 0
    %4809 = vmatpush1.bf16.msra.mxu0 0
    %4810 = vmatprep.subr.bf16.mxu0 0
    %4811 = vmatpush1.bf16.msra.mxu0 %v4795
    %4812 = vmatprep.subr.bf16.mxu0 0
    %4813 = vmatpush1.bf16.msra.mxu0 %v4794
    %4814 = vmatprep.subr.bf16.mxu0 0
    %4815 = vmatpush2.bf16.msra.mxu0 0
    %4816 = vmatprep.subr.bf16.mxu0 0
    %4817 = vmatpush2.bf16.msra.mxu0 0
    %4818 = vmatprep.subr.bf16.mxu0 0
    %4819 = vmatpush2.bf16.msra.mxu0 0
    %4820 = vmatprep.subr.bf16.mxu0 0
    %4821 = vmatpush2.bf16.msra.mxu0 0
    %4822 = vmatprep.subr.bf16.mxu0 0
    %4823 = vmatpush2.bf16.msra.mxu0 0
    %4824 = vmatprep.subr.bf16.mxu0 0
    %4825 = vmatpush2.bf16.msra.mxu0 0
    %4826 = vmatprep.subr.bf16.mxu0 0
    %4827 = vmatpush2.bf16.msra.mxu0 0
    %4828 = vmatprep.subr.bf16.mxu0 0
    %4829 = vmatpush2.bf16.msra.mxu0 0
    %4830 = vmatprep.mubr.bf16.mxu0 0
    %4831 = vmatmul.mubr.bf16.gmra.mxu0 %v4363
    %v4832 = vpop.f32.mrf.mxu0
    %v4833 = vadd.f32 0.0, %v4832
    %v4834 = vpop.f32.mrf.mxu0
    %v4835 = vpop.f32.mrf.mxu0
    %v4836 = vpop.f32.mrf.mxu0
    %4837 = vdwg.mxu0
    %v4846 = vunpack.c.l.b16 %v4774
    %v4847 = vunpack.c.l.b16 %v4775
    %v4848 = vunpack.c.l.b16 %v4776
    %v4849 = vunpack.c.l.b16 %v4777
    %v4850 = vunpack.c.l.b16 %v4778
    %v4851 = vunpack.c.l.b16 %v4779
    %v4852 = vunpack.c.l.b16 %v4780
    %v4853 = vunpack.c.l.b16 %v4781
    %v4854 = vpack.c.b16 %v4847, %v4846
    %v4855 = vpack.c.b16 %v4849, %v4848
    %v4856 = vpack.c.b16 %v4851, %v4850
    %v4857 = vpack.c.b16 %v4853, %v4852
    %v4863 = vsel %vm271, %v4773, 0
    %4865 = vmatprep.subr.bf16.mxu0 0
    %4866 = vmatpush1.bf16.msra.mxu0 0
    %4867 = vmatprep.subr.bf16.mxu0 0
    %4868 = vmatpush1.bf16.msra.mxu0 0
    %4869 = vmatprep.subr.bf16.mxu0 0
    %4870 = vmatpush1.bf16.msra.mxu0 0
    %4871 = vmatprep.subr.bf16.mxu0 0
    %4872 = vmatpush1.bf16.msra.mxu0 0
    %4873 = vmatprep.subr.bf16.mxu0 0
    %4874 = vmatpush1.bf16.msra.mxu0 %v4857
    %4875 = vmatprep.subr.bf16.mxu0 0
    %4876 = vmatpush1.bf16.msra.mxu0 %v4856
    %4877 = vmatprep.subr.bf16.mxu0 0
    %4878 = vmatpush1.bf16.msra.mxu0 %v4855
    %4879 = vmatprep.subr.bf16.mxu0 0
    %4880 = vmatpush1.bf16.msra.mxu0 %v4854
    %4881 = vmatprep.subr.bf16.mxu0 0
    %4882 = vmatpush2.bf16.msra.mxu0 0
    %4883 = vmatprep.subr.bf16.mxu0 0
    %4884 = vmatpush2.bf16.msra.mxu0 0
    %4885 = vmatprep.subr.bf16.mxu0 0
    %4886 = vmatpush2.bf16.msra.mxu0 0
    %4887 = vmatprep.subr.bf16.mxu0 0
    %4888 = vmatpush2.bf16.msra.mxu0 0
    %4889 = vmatprep.subr.bf16.mxu0 0
    %4890 = vmatpush2.bf16.msra.mxu0 0
    %4891 = vmatprep.subr.bf16.mxu0 0
    %4892 = vmatpush2.bf16.msra.mxu0 0
    %4893 = vmatprep.subr.bf16.mxu0 0
    %4894 = vmatpush2.bf16.msra.mxu0 0
    %4895 = vmatprep.subr.bf16.mxu0 0
    %4896 = vmatpush2.bf16.msra.mxu0 0
    %4897 = vmatprep.mubr.bf16.mxu0 0
    %4898 = vmatmul.mubr.bf16.gmra.mxu0 %v4863
    %v4899 = vpop.f32.mrf.mxu0
    %v4900 = vadd.f32 %v4833, %v4899
    %v4901 = vpop.f32.mrf.mxu0
    %v4902 = vpop.f32.mrf.mxu0
    %v4903 = vpop.f32.mrf.mxu0
    %4904 = vdwg.mxu0
    %v4905 = vld [vmem:[#allocation4] sm:$0x1]
    %v4907 = vlaneseq
    %v4908 = vshrl.u32 %v4907, 7
    %v4909 = vsub.s32 0, %v4908
    %v4910 = vrot.slane %v4905, %v4909
    %v4912 = vadd.f32 %v4900, %v4910
    %v4913 = vxor.u32 %v4912, 2147483648
    %v4914 = vmul.f32 %v4913, 1.442695
    %v4915 = vpow.pop %v4914
    %v4916 = vadd.f32 %v4915, 1.0
    %v4917 = vrcp.pop %v4916
    %v4918 = vmul.f32 1.0, %v4917
    %v4919 = vtanh.pop %v4912
    %v4920 = vmul.f32 %v4918, %v4272
    %4922 = vrot.lane.b32.xlu0 %v4919, 64
    %v4923 = vpop.permute.xlu0 %4922
    %v4925 = vmul.f32 %v4918, %v4923
    %4927 = vrot.lane.b32.xlu0 %v4925, 32
    %v4928 = vpop.permute.xlu0 %4927
    %v4930 = vadd.f32 %v4920, %v4928
    %v4931 = vtanh.pop %v4930
    %4933 = vrot.lane.b32.xlu0 %v4931, 64
    %v4934 = vpop.permute.xlu0 %4933
    %v4936 = vmul.f32 %v4918, %v4934
    %v4937 = vpack.c.bf16 %v4936, %v4936
    %v4938 = vld [vmem:[#allocation6] sm:$0xf]
    %v4939 = vld [vmem:[#allocation6 + $0x4] sm:$0xf]
    %v4940 = vld [vmem:[#allocation6 + $0x8] sm:$0xf]
    %v4941 = vld [vmem:[#allocation6 + $0xc] sm:$0xf]
    %v4942 = vpack.c.bf16 %v4436, %v4436
    %v4943 = vld [vmem:[#allocation7] sm:$0xf]
    %v4944 = vld [vmem:[#allocation7 + $0x4] sm:$0xf]
    %v4945 = vld [vmem:[#allocation7 + $0x8] sm:$0xf]
    %v4946 = vld [vmem:[#allocation7 + $0xc] sm:$0xf]
    %4948 = vrot.lane.b32.xlu0 %v4942, 32
    %v4949 = vpop.permute.xlu0 %4948
    %v4954 = vunpack.c.l.b16 %v4943
    %v4955 = vunpack.c.l.b16 %v4944
    %v4956 = vunpack.c.l.b16 %v4945
    %v4957 = vunpack.c.l.b16 %v4946
    %v4958 = vpack.c.b16 %v4955, %v4954
    %v4959 = vpack.c.b16 %v4957, %v4956
    %v4963 = vsel %vm203, %v4949, 0
    %4965 = vmatprep.subr.bf16.mxu0 0
    %4966 = vmatpush1.bf16.msra.mxu0 0
    %4967 = vmatprep.subr.bf16.mxu0 0
    %4968 = vmatpush1.bf16.msra.mxu0 0
    %4969 = vmatprep.subr.bf16.mxu0 0
    %4970 = vmatpush1.bf16.msra.mxu0 0
    %4971 = vmatprep.subr.bf16.mxu0 0
    %4972 = vmatpush1.bf16.msra.mxu0 0
    %4973 = vmatprep.subr.bf16.mxu0 0
    %4974 = vmatpush1.bf16.msra.mxu0 0
    %4975 = vmatprep.subr.bf16.mxu0 0
    %4976 = vmatpush1.bf16.msra.mxu0 0
    %4977 = vmatprep.subr.bf16.mxu0 0
    %4978 = vmatpush1.bf16.msra.mxu0 %v4959
    %4979 = vmatprep.subr.bf16.mxu0 0
    %4980 = vmatpush1.bf16.msra.mxu0 %v4958
    %4981 = vmatprep.subr.bf16.mxu0 0
    %4982 = vmatpush2.bf16.msra.mxu0 0
    %4983 = vmatprep.subr.bf16.mxu0 0
    %4984 = vmatpush2.bf16.msra.mxu0 0
    %4985 = vmatprep.subr.bf16.mxu0 0
    %4986 = vmatpush2.bf16.msra.mxu0 0
    %4987 = vmatprep.subr.bf16.mxu0 0
    %4988 = vmatpush2.bf16.msra.mxu0 0
    %4989 = vmatprep.subr.bf16.mxu0 0
    %4990 = vmatpush2.bf16.msra.mxu0 0
    %4991 = vmatprep.subr.bf16.mxu0 0
    %4992 = vmatpush2.bf16.msra.mxu0 0
    %4993 = vmatprep.subr.bf16.mxu0 0
    %4994 = vmatpush2.bf16.msra.mxu0 0
    %4995 = vmatprep.subr.bf16.mxu0 0
    %4996 = vmatpush2.bf16.msra.mxu0 0
    %4997 = vmatprep.mubr.bf16.mxu0 0
    %4998 = vmatmul.mubr.bf16.gmra.mxu0 %v4963
    %v4999 = vpop.f32.mrf.mxu0
    %v5000 = vadd.f32 0.0, %v4999
    %v5001 = vpop.f32.mrf.mxu0
    %v5002 = vpop.f32.mrf.mxu0
    %v5003 = vpop.f32.mrf.mxu0
    %5004 = vdwg.mxu0
    %5006 = vrot.lane.b32.xlu0 %v4937, 32
    %v5007 = vpop.permute.xlu0 %5006
    %v5012 = vunpack.c.l.b16 %v4938
    %v5013 = vunpack.c.l.b16 %v4939
    %v5014 = vunpack.c.l.b16 %v4940
    %v5015 = vunpack.c.l.b16 %v4941
    %v5016 = vpack.c.b16 %v5013, %v5012
    %v5017 = vpack.c.b16 %v5015, %v5014
    %v5021 = vsel %vm203, %v5007, 0
    %5023 = vmatprep.subr.bf16.mxu0 0
    %5024 = vmatpush1.bf16.msra.mxu0 0
    %5025 = vmatprep.subr.bf16.mxu0 0
    %5026 = vmatpush1.bf16.msra.mxu0 0
    %5027 = vmatprep.subr.bf16.mxu0 0
    %5028 = vmatpush1.bf16.msra.mxu0 0
    %5029 = vmatprep.subr.bf16.mxu0 0
    %5030 = vmatpush1.bf16.msra.mxu0 0
    %5031 = vmatprep.subr.bf16.mxu0 0
    %5032 = vmatpush1.bf16.msra.mxu0 0
    %5033 = vmatprep.subr.bf16.mxu0 0
    %5034 = vmatpush1.bf16.msra.mxu0 0
    %5035 = vmatprep.subr.bf16.mxu0 0
    %5036 = vmatpush1.bf16.msra.mxu0 %v5017
    %5037 = vmatprep.subr.bf16.mxu0 0
    %5038 = vmatpush1.bf16.msra.mxu0 %v5016
    %5039 = vmatprep.subr.bf16.mxu0 0
    %5040 = vmatpush2.bf16.msra.mxu0 0
    %5041 = vmatprep.subr.bf16.mxu0 0
    %5042 = vmatpush2.bf16.msra.mxu0 0
    %5043 = vmatprep.subr.bf16.mxu0 0
    %5044 = vmatpush2.bf16.msra.mxu0 0
    %5045 = vmatprep.subr.bf16.mxu0 0
    %5046 = vmatpush2.bf16.msra.mxu0 0
    %5047 = vmatprep.subr.bf16.mxu0 0
    %5048 = vmatpush2.bf16.msra.mxu0 0
    %5049 = vmatprep.subr.bf16.mxu0 0
    %5050 = vmatpush2.bf16.msra.mxu0 0
    %5051 = vmatprep.subr.bf16.mxu0 0
    %5052 = vmatpush2.bf16.msra.mxu0 0
    %5053 = vmatprep.subr.bf16.mxu0 0
    %5054 = vmatpush2.bf16.msra.mxu0 0
    %5055 = vmatprep.mubr.bf16.mxu0 0
    %5056 = vmatmul.mubr.bf16.gmra.mxu0 %v5021
    %v5057 = vpop.f32.mrf.mxu0
    %v5058 = vadd.f32 %v5000, %v5057
    %v5059 = vpop.f32.mrf.mxu0
    %v5060 = vpop.f32.mrf.mxu0
    %v5061 = vpop.f32.mrf.mxu0
    %5062 = vdwg.mxu0
    %v5063 = vld [vmem:[#allocation9] sm:$0x1]
    %v5065 = vlaneseq
    %v5066 = vshrl.u32 %v5065, 7
    %v5067 = vsub.s32 0, %v5066
    %v5068 = vrot.slane %v5063, %v5067
    %v5070 = vadd.f32 %v5058, %v5068
    %v5071 = vxor.u32 %v5070, 2147483648
    %v5072 = vmul.f32 %v5071, 1.442695
    %v5073 = vpow.pop %v5072
    %v5074 = vadd.f32 %v5073, 1.0
    %v5075 = vrcp.pop %v5074
    %v5076 = vmul.f32 1.0, %v5075
    %v5077 = vtanh.pop %v5070
    %v5078 = vmul.f32 %v5076, %v4430
    %5080 = vrot.lane.b32.xlu0 %v5077, 64
    %v5081 = vpop.permute.xlu0 %5080
    %v5083 = vmul.f32 %v5076, %v5081
    %5085 = vrot.lane.b32.xlu0 %v5083, 32
    %v5086 = vpop.permute.xlu0 %5085
    %v5088 = vadd.f32 %v5078, %v5086
    %v5089 = vtanh.pop %v5088
    %5091 = vrot.lane.b32.xlu0 %v5089, 64
    %v5092 = vpop.permute.xlu0 %5091
    %v5094 = vmul.f32 %v5076, %v5092
    %5096 = vrot.lane.b32.xlu0 %v5094, 32
    %v5097 = vpop.permute.xlu0 %5096
    %s5099 = scalar_lea.vmem %s14, 14
    %5100 = vst.msk [vmem:[%s5099] sm:$0x3] %vm502, %v5097
    %s5101 = scalar_lea.vmem %s1, 7
    %v5102 = vld [vmem:[%s5101] sm:$0x1]
    %v5103 = vld [vmem:[%s8] sm:$0xf]
    %v5104 = vld [vmem:[%s8 + $0x4] sm:$0xf]
    %v5105 = vld [vmem:[%s8 + $0x8] sm:$0xf]
    %v5106 = vld [vmem:[%s8 + $0xc] sm:$0xf]
    %v5107 = vld [vmem:[%s8 + $0x10] sm:$0xf]
    %v5108 = vld [vmem:[%s8 + $0x14] sm:$0xf]
    %v5109 = vld [vmem:[%s8 + $0x18] sm:$0xf]
    %v5110 = vld [vmem:[%s8 + $0x1c] sm:$0xf]
    %v5111 = vld [vmem:[#allocation10] sm:$0xf]
    %v5112 = vld [vmem:[#allocation10 + $0x4] sm:$0xf]
    %v5113 = vld [vmem:[#allocation10 + $0x8] sm:$0xf]
    %v5114 = vld [vmem:[#allocation10 + $0xc] sm:$0xf]
    %v5119 = vunpack.c.l.b16 %v5111
    %v5120 = vunpack.c.l.b16 %v5112
    %v5121 = vunpack.c.l.b16 %v5113
    %v5122 = vunpack.c.l.b16 %v5114
    %v5123 = vpack.c.b16 %v5120, %v5119
    %v5124 = vpack.c.b16 %v5122, %v5121
    %5127 = vmatprep.subr.bf16.mxu0 0
    %5128 = vmatpush1.bf16.msra.mxu0 0
    %5129 = vmatprep.subr.bf16.mxu0 0
    %5130 = vmatpush1.bf16.msra.mxu0 0
    %5131 = vmatprep.subr.bf16.mxu0 0
    %5132 = vmatpush1.bf16.msra.mxu0 0
    %5133 = vmatprep.subr.bf16.mxu0 0
    %5134 = vmatpush1.bf16.msra.mxu0 0
    %5135 = vmatprep.subr.bf16.mxu0 0
    %5136 = vmatpush1.bf16.msra.mxu0 0
    %5137 = vmatprep.subr.bf16.mxu0 0
    %5138 = vmatpush1.bf16.msra.mxu0 0
    %5139 = vmatprep.subr.bf16.mxu0 0
    %5140 = vmatpush1.bf16.msra.mxu0 %v5124
    %5141 = vmatprep.subr.bf16.mxu0 0
    %5142 = vmatpush1.bf16.msra.mxu0 %v5123
    %5143 = vmatprep.subr.bf16.mxu0 0
    %5144 = vmatpush2.bf16.msra.mxu0 0
    %5145 = vmatprep.subr.bf16.mxu0 0
    %5146 = vmatpush2.bf16.msra.mxu0 0
    %5147 = vmatprep.subr.bf16.mxu0 0
    %5148 = vmatpush2.bf16.msra.mxu0 0
    %5149 = vmatprep.subr.bf16.mxu0 0
    %5150 = vmatpush2.bf16.msra.mxu0 0
    %5151 = vmatprep.subr.bf16.mxu0 0
    %5152 = vmatpush2.bf16.msra.mxu0 0
    %5153 = vmatprep.subr.bf16.mxu0 0
    %5154 = vmatpush2.bf16.msra.mxu0 0
    %5155 = vmatprep.subr.bf16.mxu0 0
    %5156 = vmatpush2.bf16.msra.mxu0 0
    %5157 = vmatprep.subr.bf16.mxu0 0
    %5158 = vmatpush2.bf16.msra.mxu0 0
    %5159 = vmatprep.mubr.bf16.mxu0 0
    %5160 = vmatmul.mubr.bf16.gmra.mxu0 %v4692
    %v5161 = vpop.f32.mrf.mxu0
    %v5162 = vadd.f32 0.0, %v5161
    %v5163 = vpop.f32.mrf.mxu0
    %v5164 = vpop.f32.mrf.mxu0
    %v5165 = vpop.f32.mrf.mxu0
    %5166 = vdwg.mxu0
    %v5175 = vunpack.c.l.b16 %v5103
    %v5176 = vunpack.c.l.b16 %v5104
    %v5177 = vunpack.c.l.b16 %v5105
    %v5178 = vunpack.c.l.b16 %v5106
    %v5179 = vunpack.c.l.b16 %v5107
    %v5180 = vunpack.c.l.b16 %v5108
    %v5181 = vunpack.c.l.b16 %v5109
    %v5182 = vunpack.c.l.b16 %v5110
    %v5183 = vpack.c.b16 %v5176, %v5175
    %v5184 = vpack.c.b16 %v5178, %v5177
    %v5185 = vpack.c.b16 %v5180, %v5179
    %v5186 = vpack.c.b16 %v5182, %v5181
    %v5192 = vsel %vm271, %v5102, 0
    %5194 = vmatprep.subr.bf16.mxu0 0
    %5195 = vmatpush1.bf16.msra.mxu0 0
    %5196 = vmatprep.subr.bf16.mxu0 0
    %5197 = vmatpush1.bf16.msra.mxu0 0
    %5198 = vmatprep.subr.bf16.mxu0 0
    %5199 = vmatpush1.bf16.msra.mxu0 0
    %5200 = vmatprep.subr.bf16.mxu0 0
    %5201 = vmatpush1.bf16.msra.mxu0 0
    %5202 = vmatprep.subr.bf16.mxu0 0
    %5203 = vmatpush1.bf16.msra.mxu0 %v5186
    %5204 = vmatprep.subr.bf16.mxu0 0
    %5205 = vmatpush1.bf16.msra.mxu0 %v5185
    %5206 = vmatprep.subr.bf16.mxu0 0
    %5207 = vmatpush1.bf16.msra.mxu0 %v5184
    %5208 = vmatprep.subr.bf16.mxu0 0
    %5209 = vmatpush1.bf16.msra.mxu0 %v5183
    %5210 = vmatprep.subr.bf16.mxu0 0
    %5211 = vmatpush2.bf16.msra.mxu0 0
    %5212 = vmatprep.subr.bf16.mxu0 0
    %5213 = vmatpush2.bf16.msra.mxu0 0
    %5214 = vmatprep.subr.bf16.mxu0 0
    %5215 = vmatpush2.bf16.msra.mxu0 0
    %5216 = vmatprep.subr.bf16.mxu0 0
    %5217 = vmatpush2.bf16.msra.mxu0 0
    %5218 = vmatprep.subr.bf16.mxu0 0
    %5219 = vmatpush2.bf16.msra.mxu0 0
    %5220 = vmatprep.subr.bf16.mxu0 0
    %5221 = vmatpush2.bf16.msra.mxu0 0
    %5222 = vmatprep.subr.bf16.mxu0 0
    %5223 = vmatpush2.bf16.msra.mxu0 0
    %5224 = vmatprep.subr.bf16.mxu0 0
    %5225 = vmatpush2.bf16.msra.mxu0 0
    %5226 = vmatprep.mubr.bf16.mxu0 0
    %5227 = vmatmul.mubr.bf16.gmra.mxu0 %v5192
    %v5228 = vpop.f32.mrf.mxu0
    %v5229 = vadd.f32 %v5162, %v5228
    %v5230 = vpop.f32.mrf.mxu0
    %v5231 = vpop.f32.mrf.mxu0
    %v5232 = vpop.f32.mrf.mxu0
    %5233 = vdwg.mxu0
    %v5234 = vld [vmem:[#allocation12] sm:$0x1]
    %v5236 = vlaneseq
    %v5237 = vshrl.u32 %v5236, 7
    %v5238 = vsub.s32 0, %v5237
    %v5239 = vrot.slane %v5234, %v5238
    %v5241 = vadd.f32 %v5229, %v5239
    %v5242 = vxor.u32 %v5241, 2147483648
    %v5243 = vmul.f32 %v5242, 1.442695
    %v5244 = vpow.pop %v5243
    %v5245 = vadd.f32 %v5244, 1.0
    %v5246 = vrcp.pop %v5245
    %v5247 = vmul.f32 1.0, %v5246
    %v5248 = vtanh.pop %v5241
    %v5249 = vmul.f32 %v5247, %v4601
    %5251 = vrot.lane.b32.xlu0 %v5248, 64
    %v5252 = vpop.permute.xlu0 %5251
    %v5254 = vmul.f32 %v5247, %v5252
    %5256 = vrot.lane.b32.xlu0 %v5254, 32
    %v5257 = vpop.permute.xlu0 %5256
    %v5259 = vadd.f32 %v5249, %v5257
    %v5260 = vtanh.pop %v5259
    %5262 = vrot.lane.b32.xlu0 %v5260, 64
    %v5263 = vpop.permute.xlu0 %5262
    %v5265 = vmul.f32 %v5247, %v5263
    %v5266 = vpack.c.bf16 %v5265, %v5265
    %v5267 = vld [vmem:[#allocation13] sm:$0xf]
    %v5268 = vld [vmem:[#allocation13 + $0x4] sm:$0xf]
    %v5269 = vld [vmem:[#allocation13 + $0x8] sm:$0xf]
    %v5270 = vld [vmem:[#allocation13 + $0xc] sm:$0xf]
    %v5271 = vpack.c.bf16 %v4765, %v4765
    %v5272 = vld [vmem:[#allocation15] sm:$0xf]
    %v5273 = vld [vmem:[#allocation15 + $0x4] sm:$0xf]
    %v5274 = vld [vmem:[#allocation15 + $0x8] sm:$0xf]
    %v5275 = vld [vmem:[#allocation15 + $0xc] sm:$0xf]
    %5277 = vrot.lane.b32.xlu0 %v5271, 32
    %v5278 = vpop.permute.xlu0 %5277
    %v5283 = vunpack.c.l.b16 %v5272
    %v5284 = vunpack.c.l.b16 %v5273
    %v5285 = vunpack.c.l.b16 %v5274
    %v5286 = vunpack.c.l.b16 %v5275
    %v5287 = vpack.c.b16 %v5284, %v5283
    %v5288 = vpack.c.b16 %v5286, %v5285
    %v5292 = vsel %vm203, %v5278, 0
    %5294 = vmatprep.subr.bf16.mxu0 0
    %5295 = vmatpush1.bf16.msra.mxu0 0
    %5296 = vmatprep.subr.bf16.mxu0 0
    %5297 = vmatpush1.bf16.msra.mxu0 0
    %5298 = vmatprep.subr.bf16.mxu0 0
    %5299 = vmatpush1.bf16.msra.mxu0 0
    %5300 = vmatprep.subr.bf16.mxu0 0
    %5301 = vmatpush1.bf16.msra.mxu0 0
    %5302 = vmatprep.subr.bf16.mxu0 0
    %5303 = vmatpush1.bf16.msra.mxu0 0
    %5304 = vmatprep.subr.bf16.mxu0 0
    %5305 = vmatpush1.bf16.msra.mxu0 0
    %5306 = vmatprep.subr.bf16.mxu0 0
    %5307 = vmatpush1.bf16.msra.mxu0 %v5288
    %5308 = vmatprep.subr.bf16.mxu0 0
    %5309 = vmatpush1.bf16.msra.mxu0 %v5287
    %5310 = vmatprep.subr.bf16.mxu0 0
    %5311 = vmatpush2.bf16.msra.mxu0 0
    %5312 = vmatprep.subr.bf16.mxu0 0
    %5313 = vmatpush2.bf16.msra.mxu0 0
    %5314 = vmatprep.subr.bf16.mxu0 0
    %5315 = vmatpush2.bf16.msra.mxu0 0
    %5316 = vmatprep.subr.bf16.mxu0 0
    %5317 = vmatpush2.bf16.msra.mxu0 0
    %5318 = vmatprep.subr.bf16.mxu0 0
    %5319 = vmatpush2.bf16.msra.mxu0 0
    %5320 = vmatprep.subr.bf16.mxu0 0
    %5321 = vmatpush2.bf16.msra.mxu0 0
    %5322 = vmatprep.subr.bf16.mxu0 0
    %5323 = vmatpush2.bf16.msra.mxu0 0
    %5324 = vmatprep.subr.bf16.mxu0 0
    %5325 = vmatpush2.bf16.msra.mxu0 0
    %5326 = vmatprep.mubr.bf16.mxu0 0
    %5327 = vmatmul.mubr.bf16.gmra.mxu0 %v5292
    %v5328 = vpop.f32.mrf.mxu0
    %v5329 = vadd.f32 0.0, %v5328
    %v5330 = vpop.f32.mrf.mxu0
    %v5331 = vpop.f32.mrf.mxu0
    %v5332 = vpop.f32.mrf.mxu0
    %5333 = vdwg.mxu0
    %5335 = vrot.lane.b32.xlu0 %v5266, 32
    %v5336 = vpop.permute.xlu0 %5335
    %v5341 = vunpack.c.l.b16 %v5267
    %v5342 = vunpack.c.l.b16 %v5268
    %v5343 = vunpack.c.l.b16 %v5269
    %v5344 = vunpack.c.l.b16 %v5270
    %v5345 = vpack.c.b16 %v5342, %v5341
    %v5346 = vpack.c.b16 %v5344, %v5343
    %v5350 = vsel %vm203, %v5336, 0
    %5352 = vmatprep.subr.bf16.mxu0 0
    %5353 = vmatpush1.bf16.msra.mxu0 0
    %5354 = vmatprep.subr.bf16.mxu0 0
    %5355 = vmatpush1.bf16.msra.mxu0 0
    %5356 = vmatprep.subr.bf16.mxu0 0
    %5357 = vmatpush1.bf16.msra.mxu0 0
    %5358 = vmatprep.subr.bf16.mxu0 0
    %5359 = vmatpush1.bf16.msra.mxu0 0
    %5360 = vmatprep.subr.bf16.mxu0 0
    %5361 = vmatpush1.bf16.msra.mxu0 0
    %5362 = vmatprep.subr.bf16.mxu0 0
    %5363 = vmatpush1.bf16.msra.mxu0 0
    %5364 = vmatprep.subr.bf16.mxu0 0
    %5365 = vmatpush1.bf16.msra.mxu0 %v5346
    %5366 = vmatprep.subr.bf16.mxu0 0
    %5367 = vmatpush1.bf16.msra.mxu0 %v5345
    %5368 = vmatprep.subr.bf16.mxu0 0
    %5369 = vmatpush2.bf16.msra.mxu0 0
    %5370 = vmatprep.subr.bf16.mxu0 0
    %5371 = vmatpush2.bf16.msra.mxu0 0
    %5372 = vmatprep.subr.bf16.mxu0 0
    %5373 = vmatpush2.bf16.msra.mxu0 0
    %5374 = vmatprep.subr.bf16.mxu0 0
    %5375 = vmatpush2.bf16.msra.mxu0 0
    %5376 = vmatprep.subr.bf16.mxu0 0
    %5377 = vmatpush2.bf16.msra.mxu0 0
    %5378 = vmatprep.subr.bf16.mxu0 0
    %5379 = vmatpush2.bf16.msra.mxu0 0
    %5380 = vmatprep.subr.bf16.mxu0 0
    %5381 = vmatpush2.bf16.msra.mxu0 0
    %5382 = vmatprep.subr.bf16.mxu0 0
    %5383 = vmatpush2.bf16.msra.mxu0 0
    %5384 = vmatprep.mubr.bf16.mxu0 0
    %5385 = vmatmul.mubr.bf16.gmra.mxu0 %v5350
    %v5386 = vpop.f32.mrf.mxu0
    %v5387 = vadd.f32 %v5329, %v5386
    %v5388 = vpop.f32.mrf.mxu0
    %v5389 = vpop.f32.mrf.mxu0
    %v5390 = vpop.f32.mrf.mxu0
    %5391 = vdwg.mxu0
    %v5392 = vld [vmem:[#allocation16] sm:$0x1]
    %v5394 = vlaneseq
    %v5395 = vshrl.u32 %v5394, 7
    %v5396 = vsub.s32 0, %v5395
    %v5397 = vrot.slane %v5392, %v5396
    %v5399 = vadd.f32 %v5387, %v5397
    %v5400 = vxor.u32 %v5399, 2147483648
    %v5401 = vmul.f32 %v5400, 1.442695
    %v5402 = vpow.pop %v5401
    %v5403 = vadd.f32 %v5402, 1.0
    %v5404 = vrcp.pop %v5403
    %v5405 = vmul.f32 1.0, %v5404
    %v5406 = vtanh.pop %v5399
    %v5407 = vmul.f32 %v5405, %v4759
    %5409 = vrot.lane.b32.xlu0 %v5406, 64
    %v5410 = vpop.permute.xlu0 %5409
    %v5412 = vmul.f32 %v5405, %v5410
    %5414 = vrot.lane.b32.xlu0 %v5412, 32
    %v5415 = vpop.permute.xlu0 %5414
    %v5417 = vadd.f32 %v5407, %v5415
    %v5418 = vtanh.pop %v5417
    %5420 = vrot.lane.b32.xlu0 %v5418, 64
    %v5421 = vpop.permute.xlu0 %5420
    %v5423 = vmul.f32 %v5405, %v5421
    %5425 = vrot.lane.b32.xlu0 %v5423, 32
    %v5426 = vpop.permute.xlu0 %5425
    %s5428 = scalar_lea.vmem %s15, 14
    %5429 = vst.msk [vmem:[%s5428] sm:$0x3] %vm502, %v5426
    // Predicated region
    $region98: #{video_encoder_memory.1} parent=1 // pred_check
      _
    $region99: #{video_encoder_memory.1} parent=1 // pred_check_branch
      %5431 = sbr.rel (0) target = $region101
    $region100: #{video_encoder_memory.1} parent=1 // pred_region
      _
    $region101: #{video_encoder_memory.1} parent=1 // pred_fallthru
      _
    // Predicated region
    $region102: #{video_encoder_memory.1} parent=1 // pred_check
      _
    $region103: #{video_encoder_memory.1} parent=1 // pred_check_branch
      %5433 = sbr.rel (0) target = $region105
    $region104: #{video_encoder_memory.1} parent=1 // pred_region
      _
    $region105: #{video_encoder_memory.1} parent=1 // pred_fallthru
      _
    // Predicated region
    $region106: #{video_encoder_memory.1} parent=1 // pred_check
      _
    $region107: #{video_encoder_memory.1} parent=1 // pred_check_branch
      %5435 = sbr.rel (0) target = $region109
    $region108: #{video_encoder_memory.1} parent=1 // pred_region
      _
    $region109: #{video_encoder_memory.1} parent=1 // pred_fallthru
      _
    // Predicated region
    $region110: #{video_encoder_memory.1} parent=1 // pred_check
      _
    $region111: #{video_encoder_memory.1} parent=1 // pred_check_branch
      %5437 = sbr.rel (0) target = $region113
    $region112: #{video_encoder_memory.1} parent=1 // pred_region
      _
    $region113: #{video_encoder_memory.1} parent=1 // pred_fallthru
      _
    %5438 = vsyncpa [#allocation3], 1
    %5439 = vsyncpa [#allocation5], 1
    %5440 = vsyncpa [#allocation8], 1
    %5441 = vsyncpa [#allocation11], 1
    %5442 = vsyncpa [#allocation14], 1
    %5443 = vsyncpa [#allocation17], 1

</llo_original>
